<compile_context>
chip_gen: v6e
topology: v6e:2x2x1
jax: 0.10.0
libtpu: 0.0.40
codegen_flags: <defaults>
</compile_context>

<pallas_src>
import numpy as np

import jax
import jax.numpy as jnp
from jax import lax
from jax.experimental import pallas as pl
from jax.experimental.pallas import tpu as pltpu

LATENT_DIM = 32
HIDDEN_DIM = 256
RESHAPE_SIZE = (64, 2, 2)            # (C, H, W) fed to the conv-transpose stack
INTERMEDIATE_SIZE = 64 * 2 * 2       # 256
LEAKY_SLOPE = 0.01
BN_EPS = 1e-5


# ------------------------- BatchNorm2d (training mode) ----------------------
def _bn_train(xf, sel, sel_t, gamma, beta, count):
    """BatchNorm on a channels-flattened activation.

    xf:    (R, CF) where CF = P*C, lane layout [position*C + channel]
    sel:   (CF, C) 0/1 selector (sums positions per channel)
    sel_t: (C, CF) its transpose (broadcasts per-channel values back)
    """
    f32 = jnp.float32
    mean = jnp.dot(jnp.sum(xf, axis=0, keepdims=True), sel,
                   preferred_element_type=f32) / count                    # (1, C)
    xc = xf - jnp.dot(mean, sel_t, preferred_element_type=f32)            # (R, CF)
    var = jnp.dot(jnp.sum(xc * xc, axis=0, keepdims=True), sel,
                  preferred_element_type=f32) / count                     # (1, C), biased
    scale = gamma * lax.rsqrt(var + BN_EPS)                               # (1, C)
    return (xc * jnp.dot(scale, sel_t, preferred_element_type=f32)
            + jnp.dot(beta, sel_t, preferred_element_type=f32))


# ---------------- fused MLP + BN1 + convT1 + LeakyReLU + BN2 ----------------
def _make_head_kernel(batch):
    cnt1 = float(batch * 4)      # BN1 count: B * 2 * 2
    cnt2 = float(batch * 36)     # BN2 count: B * 6 * 6

    def kernel(x_ref, w1_ref, b1_ref, w2_ref, b2_ref, w3_ref, b3_ref,
               s1_ref, s1t_ref, g1_ref, be1_ref,
               m1_ref, c1b_ref, s2_ref, s2t_ref, g2_ref, be2_ref, o_ref):
        f32, bf16 = jnp.float32, jnp.bfloat16
        # flat_embeds MLP, bf16 MXU operands / f32 accumulation
        # (w3 columns pre-permuted so output layout is [(h*2+w)*64 + c]).
        h = jnp.dot(x_ref[...].astype(bf16), w1_ref[...],
                    preferred_element_type=f32) + b1_ref[...]
        h = jnp.maximum(h, 0.0)
        h = jnp.dot(h.astype(bf16), w2_ref[...],
                    preferred_element_type=f32) + b2_ref[...]
        h = jnp.maximum(h, 0.0)
        h = jnp.dot(h.astype(bf16), w3_ref[...],
                    preferred_element_type=f32) + b3_ref[...]                      # (B, 256)
        # BatchNorm2d(64) in training mode (f32)
        h = _bn_train(h, s1_ref[...], s1t_ref[...], g1_ref[...], be1_ref[...], cnt1)
        # ConvTranspose2d(64->32, k4, s2) as one dense bf16 matmul -> layout [(y*6+x)*32+co]
        h = jnp.dot(h.astype(bf16), m1_ref[...],
                    preferred_element_type=f32) + c1b_ref[...]                     # (B, 1152)
        h = jnp.where(h >= 0.0, h, LEAKY_SLOPE * h)                                # LeakyReLU
        # BatchNorm2d(32) in training mode (f32)
        o_ref[...] = _bn_train(h, s2_ref[...], s2t_ref[...],
                               g2_ref[...], be2_ref[...], cnt2)

    return kernel


# -------------------- convT2 / convT3 phase-matmul kernels ------------------
def _convt2_kernel(g_ref, w_ref, b_ref, o_ref):
    y = jnp.dot(g_ref[...], w_ref[...], preferred_element_type=jnp.float32) + b_ref[...]
    o_ref[...] = jnp.where(y >= 0.0, y, LEAKY_SLOPE * y).astype(o_ref.dtype)   # LeakyReLU


def _convt3_kernel(g_ref, w_ref, b_ref, o_ref):
    # Weight/bias are zero-padded to 128 output columns -> lane-dense stores.
    y = jnp.dot(g_ref[...], w_ref[...], preferred_element_type=jnp.float32) + b_ref[...]
    # Sigmoid: exp on the EUP, divide via EUP reciprocal (approx) instead of a VALU sequence.
    o_ref[...] = pl.reciprocal(1.0 + jnp.exp(-y), approx=True).astype(o_ref.dtype)


# ----------------------- XLA layout glue (tiny tensors) ---------------------
def _gather_ct2_input(h_flat):
    """(B, 1152) [(y*6+x)*32+ci] -> (B*64, 128) bf16 im2col for convT2 (k8, s4)."""
    B = h_flat.shape[0]
    h = h_flat.reshape(B, 6, 6, 32)
    hp = jnp.pad(h, ((0, 0), (1, 2), (1, 2), (0, 0)))                      # (B, 9, 9, 32)
    pieces = [hp[:, 1 - d:9 - d, 1 - e:9 - e, :] for d in range(2) for e in range(2)]
    g = jnp.concatenate(pieces, axis=-1)                                   # (B, 8, 8, 128)
    return g.reshape(B * 64, 128).astype(jnp.bfloat16)


def _gather_ct3_input(r2, batch):
    """convT2 phase output (B*64, 256) bf16 -> (B*1024, 256) bf16 im2col for convT3."""
    r = r2.reshape(batch, 8, 8, 4, 4, 16)                                  # (b,q,p,rh,rw,co)
    sp = jnp.transpose(r, (0, 1, 3, 2, 4, 5)).reshape(batch, 32, 32, 16)   # depth-to-space
    sp = sp[:, :29, :29, :]                                                # valid 29x29
    spp = jnp.pad(sp, ((0, 0), (3, 4), (3, 4), (0, 0)))                    # (B, 36, 36, 16)
    pieces = [spp[:, 3 - D:35 - D, 3 - E:35 - E, :] for D in range(4) for E in range(4)]
    g = jnp.concatenate(pieces, axis=-1)                                   # (B, 32, 32, 256)
    return g.reshape(batch * 1024, 256).astype(jnp.bfloat16)


def _phase_to_nchw(r3, batch):
    """(B*1024, 128) lane-dense phase output -> (B, 3, 128, 128) f32 NCHW."""
    r = r3[:, :48].astype(jnp.float32).reshape(batch, 32, 32, 4, 4, 3)     # (b,Q,P,Rh,Rw,co)
    return jnp.transpose(r, (0, 5, 1, 3, 2, 4)).reshape(batch, 3, 128, 128)


# --------------------------------- forward ----------------------------------
def raw_image_decoder_forward(x, kp):
    B = x.shape[0]

    # Fused MLP + BN1 + ConvTranspose2d(64->32,k4,s2) + LeakyReLU + BN2.
    # NOTE: ungridded (BN needs full-batch statistics); at much larger B raise
    # vmem_limit_bytes or switch to a two-pass BN over a batch grid.
    h = pl.pallas_call(
        _make_head_kernel(B),
        out_shape=jax.ShapeDtypeStruct((B, 1152), jnp.float32),
    )(x, kp["w1"], kp["b1"], kp["w2"], kp["b2"], kp["w3p"], kp["b3p"],
      kp["s1"], kp["s1t"], kp["bn1_g"], kp["bn1_b"],
      kp["m1"], kp["ct1_bias"], kp["s2"], kp["s2t"], kp["bn2_g"], kp["bn2_b"])

    # ConvTranspose2d(32->16, k8, s4, output_padding=1) + LeakyReLU (sub-pixel form),
    # batch-parallel grid so v7x can use both TensorCores.
    g2 = _gather_ct2_input(h)                                              # (B*64, 128) bf16
    r2 = pl.pallas_call(
        _convt2_kernel,
        out_shape=jax.ShapeDtypeStruct((B * 64, 256), jnp.bfloat16),
        grid=(B,),
        in_specs=[pl.BlockSpec((64, 128), lambda i: (i, 0)),
                  pl.BlockSpec((128, 256), lambda i: (0, 0)),
                  pl.BlockSpec((1, 256), lambda i: (0, 0))],
        out_specs=pl.BlockSpec((64, 256), lambda i: (i, 0)),
        compiler_params=pltpu.CompilerParams(dimension_semantics=("parallel",)),
    )(g2, kp["w2all"], kp["ct2_bias"])

    # ConvTranspose2d(16->3, k16, s4) + Sigmoid (sub-pixel form, batch-parallel grid,
    # lane-dense 128-wide output, bf16 in/out).
    g3 = _gather_ct3_input(r2, B)                                          # (B*1024, 256) bf16
    g3_spec = pl.BlockSpec((1024, 256), lambda i: (i, 0))
    if B >= 3:  # deeper buffering only pays (and only exists) with >=3 grid steps
        g3_spec = pl.BlockSpec((1024, 256), lambda i: (i, 0),
                               pipeline_mode=pl.Buffered(3))
    r3 = pl.pallas_call(
        _convt3_kernel,
        out_shape=jax.ShapeDtypeStruct((B * 1024, 128), jnp.bfloat16),
        grid=(B,),
        in_specs=[g3_spec,
                  pl.BlockSpec((256, 128), lambda i: (0, 0)),
                  pl.BlockSpec((1, 128), lambda i: (0, 0))],
        out_specs=pl.BlockSpec((1024, 128), lambda i: (i, 0)),
        compiler_params=pltpu.CompilerParams(dimension_semantics=("parallel",)),
    )(g3, kp["w3all"], kp["ct3_bias"])

    # TODO(synk): BatchNorm2d running-stat buffer updates (training side effect) are not modeled.
    return _phase_to_nchw(r3, B)


# --------------------- one-time parameter preparation -----------------------
def prepare_params(p):
    """Transform raw PyTorch-layout parameters into small dense kernel matrices.

    Runs ONCE outside the jitted forward (conv weights are static), so no
    weight reshuffling or scatter HLOs appear in the per-call trace.
    """
    # Permute MLP output columns so kernel-A output layout is [(h*2+w)*64 + c]
    # (PyTorch layout after reshape(-1, 64, 2, 2) is [c*4 + h*2 + w]).
    w3 = np.asarray(p["w3"], np.float32)
    b3 = np.asarray(p["b3"], np.float32).reshape(-1)
    idx = np.array([(j % 64) * 4 + (j // 64) for j in range(256)], np.int64)
    w3p = w3[:, idx]
    b3p = b3[idx][None, :]

    def selector(cflat, c):
        s = np.zeros((cflat, c), np.float32)
        s[np.arange(cflat), np.arange(cflat) % c] = 1.0
        return s

    s1 = selector(256, 64)      # BN1: 4 positions x 64 channels
    s2 = selector(1152, 32)     # BN2: 36 positions x 32 channels

    # ConvTranspose2d(64->32, k4, s2): dense (256, 1152) matrix.
    # rows = [(h*2+w)*64 + ci], cols = [(y*6+x)*32 + co].
    w1c = np.asarray(p["ct1_w"], np.float32)
    m1 = np.zeros((256, 1152), np.float32)
    for i in range(2):
        for j in range(2):
            for kh in range(4):
                for kw in range(4):
                    y, x = 2 * i + kh, 2 * j + kw
                    r0, c0 = (i * 2 + j) * 64, (y * 6 + x) * 32
                    m1[r0:r0 + 64, c0:c0 + 32] += w1c[:, :, kh, kw]
    ct1_bias = np.tile(np.asarray(p["ct1_b"], np.float32), 36)[None, :]    # (1, 1152)

    # ConvTranspose2d(32->16, k8, s4, out_pad=1): sub-pixel form, dense (128, 256).
    # rows = [(d*2+e)*32 + ci], cols = [(rh*4+rw)*16 + co];  out[4q+rh,4p+rw,co] =
    # sum_{d,e,ci} in[q-d, p-e, ci] * w[ci, co, 4d+rh, 4e+rw].
    w2c = np.asarray(p["ct2_w"], np.float32)
    w2all = np.zeros((128, 256), np.float32)
    for d in range(2):
        for e in range(2):
            for rh in range(4):
                for rw in range(4):
                    r0, c0 = (d * 2 + e) * 32, (rh * 4 + rw) * 16
                    w2all[r0:r0 + 32, c0:c0 + 16] = w2c[:, :, 4 * d + rh, 4 * e + rw]
    ct2_bias = np.tile(np.asarray(p["ct2_b"], np.float32), 16)[None, :]    # (1, 256)

    # ConvTranspose2d(16->3, k16, s4): sub-pixel form, dense (256, 48) zero-padded to
    # (256, 128) so the kernel's output stores are lane-dense.
    # rows = [(D*4+E)*16 + ci], cols = [(Rh*4+Rw)*3 + co] (cols 48..127 are zero).
    w3c = np.asarray(p["ct3_w"], np.float32)
    w3all = np.zeros((256, 128), np.float32)
    for D in range(4):
        for E in range(4):
            for Rh in range(4):
                for Rw in range(4):
                    r0, c0 = (D * 4 + E) * 16, (Rh * 4 + Rw) * 3
                    w3all[r0:r0 + 16, c0:c0 + 3] = w3c[:, :, 4 * D + Rh, 4 * E + Rw]
    ct3_bias = np.zeros((1, 128), np.float32)
    ct3_bias[0, :48] = np.tile(np.asarray(p["ct3_b"], np.float32), 16)     # (1, 128)

    bf16 = jnp.bfloat16
    return {
        "w1": jnp.asarray(p["w1"], dtype=bf16), "b1": jnp.asarray(p["b1"]).reshape(1, -1),
        "w2": jnp.asarray(p["w2"], dtype=bf16), "b2": jnp.asarray(p["b2"]).reshape(1, -1),
        "w3p": jnp.asarray(w3p, dtype=bf16), "b3p": jnp.asarray(b3p),
        "s1": jnp.asarray(s1), "s1t": jnp.asarray(s1.T.copy()),
        "bn1_g": jnp.asarray(p["bn1_g"]).reshape(1, -1),
        "bn1_b": jnp.asarray(p["bn1_b"]).reshape(1, -1),
        "m1": jnp.asarray(m1, dtype=bf16), "ct1_bias": jnp.asarray(ct1_bias),
        "s2": jnp.asarray(s2), "s2t": jnp.asarray(s2.T.copy()),
        "bn2_g": jnp.asarray(p["bn2_g"]).reshape(1, -1),
        "bn2_b": jnp.asarray(p["bn2_b"]).reshape(1, -1),
        "w2all": jnp.asarray(w2all, dtype=bf16), "ct2_bias": jnp.asarray(ct2_bias),
        "w3all": jnp.asarray(w3all, dtype=bf16), "ct3_bias": jnp.asarray(ct3_bias),
    }


# ------------------------------ parameter init ------------------------------
def init_params(key):
    ks = jax.random.split(key, 16)

    def nrm(k, shape, s=0.05):
        return (s * jax.random.normal(k, shape)).astype(jnp.float32)

    p = {}
    p["w1"] = nrm(ks[0], (LATENT_DIM, HIDDEN_DIM), 0.15)
    p["b1"] = nrm(ks[1], (1, HIDDEN_DIM))
    p["w2"] = nrm(ks[2], (HIDDEN_DIM, HIDDEN_DIM), 0.06)
    p["b2"] = nrm(ks[3], (1, HIDDEN_DIM))
    p["w3"] = nrm(ks[4], (HIDDEN_DIM, INTERMEDIATE_SIZE), 0.06)
    p["b3"] = nrm(ks[5], (1, INTERMEDIATE_SIZE))
    p["bn1_g"] = (1.0 + nrm(ks[6], (64,), 0.1)).astype(jnp.float32)
    p["bn1_b"] = nrm(ks[7], (64,), 0.1)
    p["ct1_w"] = nrm(ks[8], (64, 32, 4, 4), 0.08)         # (Cin, Cout, kH, kW)
    p["ct1_b"] = nrm(ks[9], (32,))
    p["bn2_g"] = (1.0 + nrm(ks[10], (32,), 0.1)).astype(jnp.float32)
    p["bn2_b"] = nrm(ks[11], (32,), 0.1)
    p["ct2_w"] = nrm(ks[12], (32, 16, 8, 8), 0.05)
    p["ct2_b"] = nrm(ks[13], (16,))
    p["ct3_w"] = nrm(ks[14], (16, 3, 16, 16), 0.03)
    p["ct3_b"] = nrm(ks[15], (3,))
    return p


# --------------------- pure-JAX reference (sanity check) --------------------
def _bn_ref(x, g, b):
    mean = jnp.mean(x, axis=(0, 2, 3), keepdims=True)
    var = jnp.mean((x - mean) ** 2, axis=(0, 2, 3), keepdims=True)
    return (x - mean) * lax.rsqrt(var + BN_EPS) * g.reshape(1, -1, 1, 1) + b.reshape(1, -1, 1, 1)


def _convt_ref(x, w, b, stride, out_pad):
    K = w.shape[2]
    wf = w[:, :, ::-1, ::-1]
    y = lax.conv_general_dilated(
        x, wf, window_strides=(1, 1),
        padding=((K - 1, K - 1 + out_pad[0]), (K - 1, K - 1 + out_pad[1])),
        lhs_dilation=(stride, stride),
        dimension_numbers=("NCHW", "IOHW", "NCHW"),
        precision=lax.Precision.HIGHEST)
    return y + b.reshape(1, -1, 1, 1)


def _reference_forward(x, p):
    hi = lax.Precision.HIGHEST
    h = jnp.maximum(jnp.dot(x, p["w1"], precision=hi) + p["b1"], 0.0)
    h = jnp.maximum(jnp.dot(h, p["w2"], precision=hi) + p["b2"], 0.0)
    h = jnp.dot(h, p["w3"], precision=hi) + p["b3"]
    h = h.reshape(-1, *RESHAPE_SIZE)
    h = _bn_ref(h, p["bn1_g"], p["bn1_b"])
    h = _convt_ref(h, p["ct1_w"], p["ct1_b"], 2, (0, 0))
    h = jnp.where(h >= 0, h, LEAKY_SLOPE * h)
    h = _bn_ref(h, p["bn2_g"], p["bn2_b"])
    h = _convt_ref(h, p["ct2_w"], p["ct2_b"], 4, (1, 1))
    h = jnp.where(h >= 0, h, LEAKY_SLOPE * h)
    h = _convt_ref(h, p["ct3_w"], p["ct3_b"], 4, (0, 0))
    return jax.nn.sigmoid(h)


if __name__ == "__main__":
    key = jax.random.PRNGKey(0)
    kx, kp = jax.random.split(key)
    raw_params = init_params(kp)
    kernel_params = prepare_params(raw_params)            # one-time, outside jit
    x = jax.random.normal(kx, (2, LATENT_DIM), jnp.float32)

    fwd = jax.jit(raw_image_decoder_forward)
    out = jax.block_until_ready(fwd(x, kernel_params))

    assert out.shape == (2, 3, 128, 128), out.shape
    assert bool(jnp.all(jnp.isfinite(out)))
    assert bool(jnp.all((out >= 0.0) & (out <= 1.0)))      # sigmoid output range

    ref = jax.block_until_ready(jax.jit(_reference_forward)(x, raw_params))
    err = float(jnp.max(jnp.abs(out - ref)))
    assert err < 5e-2, f"max abs err vs reference = {err}"  # bf16 MXU / bf16 store tolerance

    print("KERNEL_OK")
</pallas_src>

<mosaic_0001>
module attributes {stable_mosaic.version = 11 : i64} {
  func.func @kernel(%arg0: memref<2x32xf32, #tpu.memory_space<vmem>>, %arg1: memref<32x256xbf16, #tpu.memory_space<vmem>>, %arg2: memref<1x256xf32, #tpu.memory_space<vmem>>, %arg3: memref<256x256xbf16, #tpu.memory_space<vmem>>, %arg4: memref<1x256xf32, #tpu.memory_space<vmem>>, %arg5: memref<256x256xbf16, #tpu.memory_space<vmem>>, %arg6: memref<1x256xf32, #tpu.memory_space<vmem>>, %arg7: memref<256x64xf32, #tpu.memory_space<vmem>>, %arg8: memref<64x256xf32, #tpu.memory_space<vmem>>, %arg9: memref<1x64xf32, #tpu.memory_space<vmem>>, %arg10: memref<1x64xf32, #tpu.memory_space<vmem>>, %arg11: memref<256x1152xbf16, #tpu.memory_space<vmem>>, %arg12: memref<1x1152xf32, #tpu.memory_space<vmem>>, %arg13: memref<1152x32xf32, #tpu.memory_space<vmem>>, %arg14: memref<32x1152xf32, #tpu.memory_space<vmem>>, %arg15: memref<1x32xf32, #tpu.memory_space<vmem>>, %arg16: memref<1x32xf32, #tpu.memory_space<vmem>>, %arg17: memref<2x1152xf32, #tpu.memory_space<vmem>>) attributes {dimension_semantics = [], scalar_prefetch = 0 : i64, scratch_operands = 0 : i64, tpu.core_type = #tpu.core_type<tc>} {
    %c0 = arith.constant 0 : index
    %c0_0 = arith.constant 0 : index
    %0 = vector.load %arg0[%c0, %c0_0] : memref<2x32xf32, #tpu.memory_space<vmem>>, vector<2x32xf32>
    %1 = arith.truncf %0 : vector<2x32xf32> to vector<2x32xbf16>
    %c0_1 = arith.constant 0 : index
    %c0_2 = arith.constant 0 : index
    %2 = vector.load %arg1[%c0_1, %c0_2] : memref<32x256xbf16, #tpu.memory_space<vmem>>, vector<32x256xbf16>
    %cst = arith.constant dense<0.000000e+00> : vector<2x256xf32>
    %3 = tpu.matmul %1, %2, %cst {dimension_numbers = #tpu.dot_dimension_numbers<[1], [0], [0], [1], [0, 0, 1, 1], [], []>} : vector<2x32xbf16>, vector<32x256xbf16>, vector<2x256xf32> -> vector<2x256xf32>
    %c0_3 = arith.constant 0 : index
    %c0_4 = arith.constant 0 : index
    %4 = vector.load %arg2[%c0_3, %c0_4] : memref<1x256xf32, #tpu.memory_space<vmem>>, vector<1x256xf32>
    %5 = vector.broadcast %4 : vector<1x256xf32> to vector<2x256xf32>
    %6 = arith.addf %3, %5 : vector<2x256xf32>
    %cst_5 = arith.constant 0.000000e+00 : f32
    %7 = vector.broadcast %cst_5 : f32 to vector<2x256xf32>
    %8 = arith.maximumf %6, %7 : vector<2x256xf32>
    %9 = arith.truncf %8 : vector<2x256xf32> to vector<2x256xbf16>
    %c0_6 = arith.constant 0 : index
    %c0_7 = arith.constant 0 : index
    %10 = vector.load %arg3[%c0_6, %c0_7] : memref<256x256xbf16, #tpu.memory_space<vmem>>, vector<256x256xbf16>
    %cst_8 = arith.constant dense<0.000000e+00> : vector<2x256xf32>
    %11 = tpu.matmul %9, %10, %cst_8 {dimension_numbers = #tpu.dot_dimension_numbers<[1], [0], [0], [1], [0, 0, 1, 1], [], []>} : vector<2x256xbf16>, vector<256x256xbf16>, vector<2x256xf32> -> vector<2x256xf32>
    %c0_9 = arith.constant 0 : index
    %c0_10 = arith.constant 0 : index
    %12 = vector.load %arg4[%c0_9, %c0_10] : memref<1x256xf32, #tpu.memory_space<vmem>>, vector<1x256xf32>
    %13 = vector.broadcast %12 : vector<1x256xf32> to vector<2x256xf32>
    %14 = arith.addf %11, %13 : vector<2x256xf32>
    %cst_11 = arith.constant 0.000000e+00 : f32
    %15 = vector.broadcast %cst_11 : f32 to vector<2x256xf32>
    %16 = arith.maximumf %14, %15 : vector<2x256xf32>
    %17 = arith.truncf %16 : vector<2x256xf32> to vector<2x256xbf16>
    %c0_12 = arith.constant 0 : index
    %c0_13 = arith.constant 0 : index
    %18 = vector.load %arg5[%c0_12, %c0_13] : memref<256x256xbf16, #tpu.memory_space<vmem>>, vector<256x256xbf16>
    %cst_14 = arith.constant dense<0.000000e+00> : vector<2x256xf32>
    %19 = tpu.matmul %17, %18, %cst_14 {dimension_numbers = #tpu.dot_dimension_numbers<[1], [0], [0], [1], [0, 0, 1, 1], [], []>} : vector<2x256xbf16>, vector<256x256xbf16>, vector<2x256xf32> -> vector<2x256xf32>
    %c0_15 = arith.constant 0 : index
    %c0_16 = arith.constant 0 : index
    %20 = vector.load %arg6[%c0_15, %c0_16] : memref<1x256xf32, #tpu.memory_space<vmem>>, vector<1x256xf32>
    %21 = vector.broadcast %20 : vector<1x256xf32> to vector<2x256xf32>
    %22 = arith.addf %19, %21 : vector<2x256xf32>
    %c0_17 = arith.constant 0 : index
    %c0_18 = arith.constant 0 : index
    %23 = vector.load %arg7[%c0_17, %c0_18] : memref<256x64xf32, #tpu.memory_space<vmem>>, vector<256x64xf32>
    %c0_19 = arith.constant 0 : index
    %c0_20 = arith.constant 0 : index
    %24 = vector.load %arg8[%c0_19, %c0_20] : memref<64x256xf32, #tpu.memory_space<vmem>>, vector<64x256xf32>
    %c0_21 = arith.constant 0 : index
    %c0_22 = arith.constant 0 : index
    %25 = vector.load %arg9[%c0_21, %c0_22] : memref<1x64xf32, #tpu.memory_space<vmem>>, vector<1x64xf32>
    %c0_23 = arith.constant 0 : index
    %c0_24 = arith.constant 0 : index
    %26 = vector.load %arg10[%c0_23, %c0_24] : memref<1x64xf32, #tpu.memory_space<vmem>>, vector<1x64xf32>
    %cst_25 = arith.constant dense<0.000000e+00> : vector<256xf32>
    %27 = vector.multi_reduction <add>, %22, %cst_25 [0] : vector<2x256xf32> to vector<256xf32>
    %28 = vector.shape_cast %27 : vector<256xf32> to vector<1x256xf32>
    %cst_26 = arith.constant dense<0.000000e+00> : vector<1x64xf32>
    %29 = tpu.matmul %28, %23, %cst_26 {dimension_numbers = #tpu.dot_dimension_numbers<[1], [0], [0], [1], [0, 0, 1, 1], [], []>} : vector<1x256xf32>, vector<256x64xf32>, vector<1x64xf32> -> vector<1x64xf32>
    %cst_27 = arith.constant 8.000000e+00 : f32
    %30 = vector.broadcast %cst_27 : f32 to vector<1x64xf32>
    %31 = arith.divf %29, %30 : vector<1x64xf32>
    %cst_28 = arith.constant dense<0.000000e+00> : vector<1x256xf32>
    %32 = tpu.matmul %31, %24, %cst_28 {dimension_numbers = #tpu.dot_dimension_numbers<[1], [0], [0], [1], [0, 0, 1, 1], [], []>} : vector<1x64xf32>, vector<64x256xf32>, vector<1x256xf32> -> vector<1x256xf32>
    %33 = vector.broadcast %32 : vector<1x256xf32> to vector<2x256xf32>
    %34 = arith.subf %22, %33 : vector<2x256xf32>
    %35 = arith.mulf %34, %34 : vector<2x256xf32>
    %cst_29 = arith.constant dense<0.000000e+00> : vector<256xf32>
    %36 = vector.multi_reduction <add>, %35, %cst_29 [0] : vector<2x256xf32> to vector<256xf32>
    %37 = vector.shape_cast %36 : vector<256xf32> to vector<1x256xf32>
    %cst_30 = arith.constant dense<0.000000e+00> : vector<1x64xf32>
    %38 = tpu.matmul %37, %23, %cst_30 {dimension_numbers = #tpu.dot_dimension_numbers<[1], [0], [0], [1], [0, 0, 1, 1], [], []>} : vector<1x256xf32>, vector<256x64xf32>, vector<1x64xf32> -> vector<1x64xf32>
    %cst_31 = arith.constant 8.000000e+00 : f32
    %39 = vector.broadcast %cst_31 : f32 to vector<1x64xf32>
    %40 = arith.divf %38, %39 : vector<1x64xf32>
    %cst_32 = arith.constant 9.99999974E-6 : f32
    %41 = vector.broadcast %cst_32 : f32 to vector<1x64xf32>
    %42 = arith.addf %40, %41 : vector<1x64xf32>
    %43 = math.rsqrt %42 : vector<1x64xf32>
    %44 = arith.mulf %25, %43 : vector<1x64xf32>
    %cst_33 = arith.constant dense<0.000000e+00> : vector<1x256xf32>
    %45 = tpu.matmul %44, %24, %cst_33 {dimension_numbers = #tpu.dot_dimension_numbers<[1], [0], [0], [1], [0, 0, 1, 1], [], []>} : vector<1x64xf32>, vector<64x256xf32>, vector<1x256xf32> -> vector<1x256xf32>
    %46 = vector.broadcast %45 : vector<1x256xf32> to vector<2x256xf32>
    %47 = arith.mulf %34, %46 : vector<2x256xf32>
    %cst_34 = arith.constant dense<0.000000e+00> : vector<1x256xf32>
    %48 = tpu.matmul %26, %24, %cst_34 {dimension_numbers = #tpu.dot_dimension_numbers<[1], [0], [0], [1], [0, 0, 1, 1], [], []>} : vector<1x64xf32>, vector<64x256xf32>, vector<1x256xf32> -> vector<1x256xf32>
    %49 = vector.broadcast %48 : vector<1x256xf32> to vector<2x256xf32>
    %50 = arith.addf %47, %49 : vector<2x256xf32>
    %51 = arith.truncf %50 : vector<2x256xf32> to vector<2x256xbf16>
    %c0_35 = arith.constant 0 : index
    %c0_36 = arith.constant 0 : index
    %52 = vector.load %arg11[%c0_35, %c0_36] : memref<256x1152xbf16, #tpu.memory_space<vmem>>, vector<256x1152xbf16>
    %cst_37 = arith.constant dense<0.000000e+00> : vector<2x1152xf32>
    %53 = tpu.matmul %51, %52, %cst_37 {dimension_numbers = #tpu.dot_dimension_numbers<[1], [0], [0], [1], [0, 0, 1, 1], [], []>} : vector<2x256xbf16>, vector<256x1152xbf16>, vector<2x1152xf32> -> vector<2x1152xf32>
    %c0_38 = arith.constant 0 : index
    %c0_39 = arith.constant 0 : index
    %54 = vector.load %arg12[%c0_38, %c0_39] : memref<1x1152xf32, #tpu.memory_space<vmem>>, vector<1x1152xf32>
    %55 = vector.broadcast %54 : vector<1x1152xf32> to vector<2x1152xf32>
    %56 = arith.addf %53, %55 : vector<2x1152xf32>
    %cst_40 = arith.constant 0.000000e+00 : f32
    %57 = vector.broadcast %cst_40 : f32 to vector<2x1152xf32>
    %58 = arith.cmpf oge, %56, %57 : vector<2x1152xf32>
    %cst_41 = arith.constant 0.00999999977 : f32
    %59 = vector.broadcast %cst_41 : f32 to vector<2x1152xf32>
    %60 = arith.mulf %59, %56 : vector<2x1152xf32>
    %61 = arith.select %58, %56, %60 : vector<2x1152xi1>, vector<2x1152xf32>
    %c0_42 = arith.constant 0 : index
    %c0_43 = arith.constant 0 : index
    %62 = vector.load %arg13[%c0_42, %c0_43] : memref<1152x32xf32, #tpu.memory_space<vmem>>, vector<1152x32xf32>
    %c0_44 = arith.constant 0 : index
    %c0_45 = arith.constant 0 : index
    %63 = vector.load %arg14[%c0_44, %c0_45] : memref<32x1152xf32, #tpu.memory_space<vmem>>, vector<32x1152xf32>
    %c0_46 = arith.constant 0 : index
    %c0_47 = arith.constant 0 : index
    %64 = vector.load %arg15[%c0_46, %c0_47] : memref<1x32xf32, #tpu.memory_space<vmem>>, vector<1x32xf32>
    %c0_48 = arith.constant 0 : index
    %c0_49 = arith.constant 0 : index
    %65 = vector.load %arg16[%c0_48, %c0_49] : memref<1x32xf32, #tpu.memory_space<vmem>>, vector<1x32xf32>
    %cst_50 = arith.constant dense<0.000000e+00> : vector<1152xf32>
    %66 = vector.multi_reduction <add>, %61, %cst_50 [0] : vector<2x1152xf32> to vector<1152xf32>
    %67 = vector.shape_cast %66 : vector<1152xf32> to vector<1x1152xf32>
    %cst_51 = arith.constant dense<0.000000e+00> : vector<1x32xf32>
    %68 = tpu.matmul %67, %62, %cst_51 {dimension_numbers = #tpu.dot_dimension_numbers<[1], [0], [0], [1], [0, 0, 1, 1], [], []>} : vector<1x1152xf32>, vector<1152x32xf32>, vector<1x32xf32> -> vector<1x32xf32>
    %cst_52 = arith.constant 7.200000e+01 : f32
    %69 = vector.broadcast %cst_52 : f32 to vector<1x32xf32>
    %70 = arith.divf %68, %69 : vector<1x32xf32>
    %cst_53 = arith.constant dense<0.000000e+00> : vector<1x1152xf32>
    %71 = tpu.matmul %70, %63, %cst_53 {dimension_numbers = #tpu.dot_dimension_numbers<[1], [0], [0], [1], [0, 0, 1, 1], [], []>} : vector<1x32xf32>, vector<32x1152xf32>, vector<1x1152xf32> -> vector<1x1152xf32>
    %72 = vector.broadcast %71 : vector<1x1152xf32> to vector<2x1152xf32>
    %73 = arith.subf %61, %72 : vector<2x1152xf32>
    %74 = arith.mulf %73, %73 : vector<2x1152xf32>
    %cst_54 = arith.constant dense<0.000000e+00> : vector<1152xf32>
    %75 = vector.multi_reduction <add>, %74, %cst_54 [0] : vector<2x1152xf32> to vector<1152xf32>
    %76 = vector.shape_cast %75 : vector<1152xf32> to vector<1x1152xf32>
    %cst_55 = arith.constant dense<0.000000e+00> : vector<1x32xf32>
    %77 = tpu.matmul %76, %62, %cst_55 {dimension_numbers = #tpu.dot_dimension_numbers<[1], [0], [0], [1], [0, 0, 1, 1], [], []>} : vector<1x1152xf32>, vector<1152x32xf32>, vector<1x32xf32> -> vector<1x32xf32>
    %cst_56 = arith.constant 7.200000e+01 : f32
    %78 = vector.broadcast %cst_56 : f32 to vector<1x32xf32>
    %79 = arith.divf %77, %78 : vector<1x32xf32>
    %cst_57 = arith.constant 9.99999974E-6 : f32
    %80 = vector.broadcast %cst_57 : f32 to vector<1x32xf32>
    %81 = arith.addf %79, %80 : vector<1x32xf32>
    %82 = math.rsqrt %81 : vector<1x32xf32>
    %83 = arith.mulf %64, %82 : vector<1x32xf32>
    %cst_58 = arith.constant dense<0.000000e+00> : vector<1x1152xf32>
    %84 = tpu.matmul %83, %63, %cst_58 {dimension_numbers = #tpu.dot_dimension_numbers<[1], [0], [0], [1], [0, 0, 1, 1], [], []>} : vector<1x32xf32>, vector<32x1152xf32>, vector<1x1152xf32> -> vector<1x1152xf32>
    %85 = vector.broadcast %84 : vector<1x1152xf32> to vector<2x1152xf32>
    %86 = arith.mulf %73, %85 : vector<2x1152xf32>
    %cst_59 = arith.constant dense<0.000000e+00> : vector<1x1152xf32>
    %87 = tpu.matmul %65, %63, %cst_59 {dimension_numbers = #tpu.dot_dimension_numbers<[1], [0], [0], [1], [0, 0, 1, 1], [], []>} : vector<1x32xf32>, vector<32x1152xf32>, vector<1x1152xf32> -> vector<1x1152xf32>
    %88 = vector.broadcast %87 : vector<1x1152xf32> to vector<2x1152xf32>
    %89 = arith.addf %86, %88 : vector<2x1152xf32>
    %c0_60 = arith.constant 0 : index
    %c0_61 = arith.constant 0 : index
    %90 = vector.load %arg17[%c0_60, %c0_61] : memref<2x1152xf32, #tpu.memory_space<vmem>>, vector<2x1152xf32>
    tpu.vector_store %arg17[%c0_60, %c0_61], %89 {strides = array<i32>} : memref<2x1152xf32, #tpu.memory_space<vmem>>, vector<2x1152xf32>,
    return
  }
}

module attributes {stable_mosaic.version = 11 : i64} {
  func.func @_convt2_kernel(%arg0: i32, %arg1: memref<64x128xbf16, #tpu.memory_space<vmem>>, %arg2: memref<128x256xbf16, #tpu.memory_space<vmem>>, %arg3: memref<1x256xf32, #tpu.memory_space<vmem>>, %arg4: memref<64x256xbf16, #tpu.memory_space<vmem>>) attributes {dimension_semantics = [#tpu.dimension_semantics<parallel>], iteration_bounds = array<i64: 2>, scalar_prefetch = 0 : i64, scratch_operands = 0 : i64, tpu.core_type = #tpu.core_type<tc>, window_params = [{transform_indices = @transform_0, window_bounds = array<i64: 64, 128>}, {pipeline_mode = #tpu.pipeline_mode<synchronous>, transform_indices = @transform_1, window_bounds = array<i64: 128, 256>}, {pipeline_mode = #tpu.pipeline_mode<synchronous>, transform_indices = @transform_2, window_bounds = array<i64: 1, 256>}, {transform_indices = @transform_3, window_bounds = array<i64: 64, 256>}]} {
    %c0 = arith.constant 0 : index
    %c0_0 = arith.constant 0 : index
    %0 = vector.load %arg1[%c0, %c0_0] : memref<64x128xbf16, #tpu.memory_space<vmem>>, vector<64x128xbf16>
    %c0_1 = arith.constant 0 : index
    %c0_2 = arith.constant 0 : index
    %1 = vector.load %arg2[%c0_1, %c0_2] : memref<128x256xbf16, #tpu.memory_space<vmem>>, vector<128x256xbf16>
    %cst = arith.constant dense<0.000000e+00> : vector<64x256xf32>
    %2 = tpu.matmul %0, %1, %cst {dimension_numbers = #tpu.dot_dimension_numbers<[1], [0], [0], [1], [0, 0, 1, 1], [], []>} : vector<64x128xbf16>, vector<128x256xbf16>, vector<64x256xf32> -> vector<64x256xf32>
    %c0_3 = arith.constant 0 : index
    %c0_4 = arith.constant 0 : index
    %3 = vector.load %arg3[%c0_3, %c0_4] : memref<1x256xf32, #tpu.memory_space<vmem>>, vector<1x256xf32>
    %4 = vector.broadcast %3 : vector<1x256xf32> to vector<64x256xf32>
    %5 = arith.addf %2, %4 : vector<64x256xf32>
    %cst_5 = arith.constant 0.000000e+00 : f32
    %6 = vector.broadcast %cst_5 : f32 to vector<64x256xf32>
    %7 = arith.cmpf oge, %5, %6 : vector<64x256xf32>
    %cst_6 = arith.constant 0.00999999977 : f32
    %8 = vector.broadcast %cst_6 : f32 to vector<64x256xf32>
    %9 = arith.mulf %8, %5 : vector<64x256xf32>
    %10 = arith.select %7, %5, %9 : vector<64x256xi1>, vector<64x256xf32>
    %11 = arith.truncf %10 : vector<64x256xf32> to vector<64x256xbf16>
    %c0_7 = arith.constant 0 : index
    %c0_8 = arith.constant 0 : index
    %12 = vector.load %arg4[%c0_7, %c0_8] : memref<64x256xbf16, #tpu.memory_space<vmem>>, vector<64x256xbf16>
    tpu.vector_store %arg4[%c0_7, %c0_8], %11 {strides = array<i32>} : memref<64x256xbf16, #tpu.memory_space<vmem>>, vector<64x256xbf16>,
    return
  }
  func.func @transform_0(%arg0: i32) -> (i32, i32) {
    %c0_i32 = arith.constant 0 : i32
    %c0_i32_0 = arith.constant 0 : i32
    return %arg0, %c0_i32 : i32, i32
  }
  func.func @transform_1(%arg0: i32) -> (i32, i32) {
    %c0_i32 = arith.constant 0 : i32
    %c0_i32_0 = arith.constant 0 : i32
    %c0_i32_1 = arith.constant 0 : i32
    return %c0_i32, %c0_i32_0 : i32, i32
  }
  func.func @transform_2(%arg0: i32) -> (i32, i32) {
    %c0_i32 = arith.constant 0 : i32
    %c0_i32_0 = arith.constant 0 : i32
    %c0_i32_1 = arith.constant 0 : i32
    return %c0_i32, %c0_i32_0 : i32, i32
  }
  func.func @transform_3(%arg0: i32) -> (i32, i32) {
    %c0_i32 = arith.constant 0 : i32
    %c0_i32_0 = arith.constant 0 : i32
    return %arg0, %c0_i32 : i32, i32
  }
}

module attributes {stable_mosaic.version = 11 : i64} {
  func.func @_convt3_kernel(%arg0: i32, %arg1: memref<1024x256xbf16, #tpu.memory_space<vmem>>, %arg2: memref<256x128xbf16, #tpu.memory_space<vmem>>, %arg3: memref<1x128xf32, #tpu.memory_space<vmem>>, %arg4: memref<1024x128xbf16, #tpu.memory_space<vmem>>) attributes {dimension_semantics = [#tpu.dimension_semantics<parallel>], iteration_bounds = array<i64: 2>, scalar_prefetch = 0 : i64, scratch_operands = 0 : i64, tpu.core_type = #tpu.core_type<tc>, window_params = [{transform_indices = @transform_0, window_bounds = array<i64: 1024, 256>}, {pipeline_mode = #tpu.pipeline_mode<synchronous>, transform_indices = @transform_1, window_bounds = array<i64: 256, 128>}, {pipeline_mode = #tpu.pipeline_mode<synchronous>, transform_indices = @transform_2, window_bounds = array<i64: 1, 128>}, {transform_indices = @transform_3, window_bounds = array<i64: 1024, 128>}]} {
    %c0 = arith.constant 0 : index
    %c0_0 = arith.constant 0 : index
    %0 = vector.load %arg1[%c0, %c0_0] : memref<1024x256xbf16, #tpu.memory_space<vmem>>, vector<1024x256xbf16>
    %c0_1 = arith.constant 0 : index
    %c0_2 = arith.constant 0 : index
    %1 = vector.load %arg2[%c0_1, %c0_2] : memref<256x128xbf16, #tpu.memory_space<vmem>>, vector<256x128xbf16>
    %cst = arith.constant dense<0.000000e+00> : vector<1024x128xf32>
    %2 = tpu.matmul %0, %1, %cst {dimension_numbers = #tpu.dot_dimension_numbers<[1], [0], [0], [1], [0, 0, 1, 1], [], []>} : vector<1024x256xbf16>, vector<256x128xbf16>, vector<1024x128xf32> -> vector<1024x128xf32>
    %c0_3 = arith.constant 0 : index
    %c0_4 = arith.constant 0 : index
    %3 = vector.load %arg3[%c0_3, %c0_4] : memref<1x128xf32, #tpu.memory_space<vmem>>, vector<1x128xf32>
    %4 = vector.broadcast %3 : vector<1x128xf32> to vector<1024x128xf32>
    %5 = arith.addf %2, %4 : vector<1024x128xf32>
    %cst_5 = arith.constant 0.000000e+00 : f32
    %6 = vector.broadcast %cst_5 : f32 to vector<1024x128xf32>
    %7 = arith.subf %6, %5 : vector<1024x128xf32>
    %8 = math.exp %7 : vector<1024x128xf32>
    %cst_6 = arith.constant 1.000000e+00 : f32
    %9 = vector.broadcast %cst_6 : f32 to vector<1024x128xf32>
    %10 = arith.addf %9, %8 : vector<1024x128xf32>
    %11 = tpu.reciprocal %10 {approx = true} : vector<1024x128xf32> -> vector<1024x128xf32>
    %12 = arith.truncf %11 : vector<1024x128xf32> to vector<1024x128xbf16>
    %c0_7 = arith.constant 0 : index
    %c0_8 = arith.constant 0 : index
    %13 = vector.load %arg4[%c0_7, %c0_8] : memref<1024x128xbf16, #tpu.memory_space<vmem>>, vector<1024x128xbf16>
    tpu.vector_store %arg4[%c0_7, %c0_8], %12 {strides = array<i32>} : memref<1024x128xbf16, #tpu.memory_space<vmem>>, vector<1024x128xbf16>,
    return
  }
  func.func @transform_0(%arg0: i32) -> (i32, i32) {
    %c0_i32 = arith.constant 0 : i32
    %c0_i32_0 = arith.constant 0 : i32
    return %arg0, %c0_i32 : i32, i32
  }
  func.func @transform_1(%arg0: i32) -> (i32, i32) {
    %c0_i32 = arith.constant 0 : i32
    %c0_i32_0 = arith.constant 0 : i32
    %c0_i32_1 = arith.constant 0 : i32
    return %c0_i32, %c0_i32_0 : i32, i32
  }
  func.func @transform_2(%arg0: i32) -> (i32, i32) {
    %c0_i32 = arith.constant 0 : i32
    %c0_i32_0 = arith.constant 0 : i32
    %c0_i32_1 = arith.constant 0 : i32
    return %c0_i32, %c0_i32_0 : i32, i32
  }
  func.func @transform_3(%arg0: i32) -> (i32, i32) {
    %c0_i32 = arith.constant 0 : i32
    %c0_i32_0 = arith.constant 0 : i32
    return %arg0, %c0_i32 : i32, i32
  }
}

</mosaic_0001>

<llo_original>
// kernel: raw_image_decoder_forward.4
$region0: #{raw_image_decoder_forward.4}
  #allocation0 [shape = 'u32[]', space=smem, size = 0x4, offset = 0x4, fixed_abs, tag = 'smem constant byte address 0x4 - core index']
  #allocation1 [shape = 'u32[144,128]{1,0:T(1,128)}', space=vmem, size = 0x12000, scoped, tag = 'internal scratch']
  %s0 = inlined_call_operand.vmem [shape: bf16[128,128], index: 0, kind: input, shape index: {}]
  %s1 = inlined_call_operand.hbm [shape: bf16[128,256], index: 1, kind: input, shape index: {}]
  %s2 = inlined_call_operand.hbm [shape: f32[1,256], index: 2, kind: input, shape index: {}]
  %s3 = inlined_call_operand.vmem [shape: bf16[128,256], index: 3, kind: output, shape index: {}]
  %s4 = sld [smem:[#allocation0]]
  $region53: #{raw_image_decoder_forward.4} parent=0
    _
  %s6 = ssub.s32 1, %s4
  %s7 = scalar_select 0, %s6, %s4
  $region1: #{raw_image_decoder_forward.4} parent=0
    #allocation2 [shape = 'u8[65536]{0}', space=vmem, size = 0x10000, scoped, tag = 'input window, operand 1, single buffered']
    #allocation3 [shape = 's32[2]{0}', space=sflag, size = 0x8, scoped, tag = 'scoped memory for raw_image_decoder_forward.4']
    #allocation4 [shape = 'u8[1024]{0}', space=vmem, size = 0x400, scoped, tag = 'input window, operand 2, single buffered']
    #allocation5 [shape = 's32[1]{0}', space=sflag, size = 0x4, scoped, tag = 'scoped memory for raw_image_decoder_forward.4']
    %8 = vsyncpa [#allocation3], 0
    %9 = vsyncpa [#allocation5], 0
    loop: start=0, step=1, limit=4
    $region2: #{raw_image_decoder_forward.4} parent=1 // loop_pre_header
      _
    $region3: #{raw_image_decoder_forward.4} parent=1 // loop_header
      %s11 = sphi 0, %s15
      %p12 = scmp.ge.s32.totalorder %s11, 4
      %s21 = sphi 0, %s23
      %s24 = sphi 0, %s21
      %s25 = sphi 0, %s24
      %s41 = sphi 0, %s25
      %s45 = sphi 0, %s45
      %s47 = sphi 0, %s45
      %s48 = sphi 0, %s47
      %s62 = sphi 0, %s48
      %s66 = sphi 0, %s66
      %s68 = sphi 0, %s66
      %s69 = sphi 0, %s68
      %s83 = sphi 0, %s69
      %s89 = sphi 0, %s91
      %s92 = sphi 0, %s89
      %s93 = sphi 0, %s92
      %s109 = sphi 0, %s93
    $region4: #{raw_image_decoder_forward.4} parent=1 // loop_header_branch
      %14 = sbr.rel (%p12) target = $region8
    $region5: #{raw_image_decoder_forward.4} parent=1 // loop_body
      %s16 = ssub.s32 %s11, 1
      %s17 = ssub.s32 %s11, 2
      %s18 = sadd.s32 %s11, 1
      %s19 = ssub.s32 %s11, %s18
      %p20 = scmp.eq.s32.totalorder %s19, 0
      %s22 = sadd.s32 %s21, 1
      %s23 = scalar_select %p20, %s21, %s22
      %p26 = pneg %p20
      %p27 = scmp.eq.s32.totalorder %s11, 1
      %p28 = por %p26, %p27
      %p29 = scmp.ne.s32.totalorder %s21, %s24
      %p30 = scmp.eq.s32.totalorder %s11, 0
      %p31 = por %p29, %p30
      %p32 = scmp.ne.s32.totalorder %s21, %s24
      %p33 = scmp.eq.s32.totalorder %s16, 1
      %p34 = por %p32, %p33
      %p35 = scmp.ne.s32.totalorder %s24, %s25
      %p36 = scmp.eq.s32.totalorder %s16, 0
      %p37 = por %p35, %p36
      %p38 = scmp.ne.s32.totalorder %s24, %s25
      %p39 = scmp.eq.s32.totalorder %s17, 1
      %p40 = por %p38, %p39
      %p42 = scmp.ne.s32.totalorder %s25, %s41
      %p43 = scmp.eq.s32.totalorder %s17, 0
      %p44 = por %p42, %p43
      %s46 = sadd.s32 %s45, 1
      %p49 = scmp.eq.s32.totalorder %s11, 1
      %p50 = scmp.ne.s32.totalorder %s45, %s47
      %p51 = scmp.eq.s32.totalorder %s11, 0
      %p52 = por %p50, %p51
      %p53 = scmp.ne.s32.totalorder %s45, %s47
      %p54 = scmp.eq.s32.totalorder %s16, 1
      %p55 = por %p53, %p54
      %p56 = scmp.ne.s32.totalorder %s47, %s48
      %p57 = scmp.eq.s32.totalorder %s16, 0
      %p58 = por %p56, %p57
      %p59 = scmp.ne.s32.totalorder %s47, %s48
      %p60 = scmp.eq.s32.totalorder %s17, 1
      %p61 = por %p59, %p60
      %p63 = scmp.ne.s32.totalorder %s48, %s62
      %p64 = scmp.eq.s32.totalorder %s17, 0
      %p65 = por %p63, %p64
      %s67 = sadd.s32 %s66, 1
      %p70 = scmp.eq.s32.totalorder %s11, 1
      %p71 = scmp.ne.s32.totalorder %s66, %s68
      %p72 = scmp.eq.s32.totalorder %s11, 0
      %p73 = por %p71, %p72
      %p74 = scmp.ne.s32.totalorder %s66, %s68
      %p75 = scmp.eq.s32.totalorder %s16, 1
      %p76 = por %p74, %p75
      %p77 = scmp.ne.s32.totalorder %s68, %s69
      %p78 = scmp.eq.s32.totalorder %s16, 0
      %p79 = por %p77, %p78
      %p80 = scmp.ne.s32.totalorder %s68, %s69
      %p81 = scmp.eq.s32.totalorder %s17, 1
      %p82 = por %p80, %p81
      %p84 = scmp.ne.s32.totalorder %s69, %s83
      %p85 = scmp.eq.s32.totalorder %s17, 0
      %p86 = por %p84, %p85
      %s87 = ssub.s32 %s11, %s18
      %p88 = scmp.eq.s32.totalorder %s87, 0
      %s90 = sadd.s32 %s89, 1
      %s91 = scalar_select %p88, %s89, %s90
      %p94 = pneg %p88
      %p95 = scmp.eq.s32.totalorder %s11, 1
      %p96 = por %p94, %p95
      %p97 = scmp.ne.s32.totalorder %s89, %s92
      %p98 = scmp.eq.s32.totalorder %s11, 0
      %p99 = por %p97, %p98
      %p100 = scmp.ne.s32.totalorder %s89, %s92
      %p101 = scmp.eq.s32.totalorder %s16, 1
      %p102 = por %p100, %p101
      %p103 = scmp.ne.s32.totalorder %s92, %s93
      %p104 = scmp.eq.s32.totalorder %s16, 0
      %p105 = por %p103, %p104
      %p106 = scmp.ne.s32.totalorder %s92, %s93
      %p107 = scmp.eq.s32.totalorder %s17, 1
      %p108 = por %p106, %p107
      %p110 = scmp.ne.s32.totalorder %s93, %s109
      %p111 = scmp.eq.s32.totalorder %s17, 0
      %p112 = por %p110, %p111
      %p113 = scmp.le.s32.totalorder 1, %s11
      %p114 = scmp.lt.s32.totalorder %s11, 3
      %p115 = pnand %p113, %p114
      %p116 = pneg %p115
      // Predicated region
      $region9: #{raw_image_decoder_forward.4} parent=5 // pred_check
        _
      $region10: #{raw_image_decoder_forward.4} parent=5 // pred_check_branch
        %118 = sbr.rel (%p115) target = $region12
      $region11: #{raw_image_decoder_forward.4} parent=5 // pred_region
        %s119 = ssub.s32 %s11, 1
        // Predicated region
        $region13: #{raw_image_decoder_forward.4} parent=11 // pred_check
          %p120 = pneg %p58
        $region14: #{raw_image_decoder_forward.4} parent=11 // pred_check_branch
          %122 = sbr.rel (%p120) target = $region16
        $region15: #{raw_image_decoder_forward.4} parent=11 // pred_region
          %s124 = ssub.s32 2048, 2048
          %125 = vsyncadd [#allocation3], %s124
          %s126 = sshll.u32 [#allocation2], 4
          %s127 = int_to_ptr.vmem [resolvable:$true] %s126
          %132 = dma.hbm_to_vmem [thread:$0]  %s1, 2048, %s127, [#allocation3], 128, 128, 8
        $region16: #{raw_image_decoder_forward.4} parent=11 // pred_fallthru
          _
        // Predicated region
        $region17: #{raw_image_decoder_forward.4} parent=11 // pred_check
          %p133 = pneg %p79
        $region18: #{raw_image_decoder_forward.4} parent=11 // pred_check_branch
          %135 = sbr.rel (%p133) target = $region20
        $region19: #{raw_image_decoder_forward.4} parent=11 // pred_region
          %s137 = ssub.s32 32, 32
          %138 = vsyncadd [#allocation5], %s137
          %s140 = sshll.u32 [#allocation4], 4
          %s141 = int_to_ptr.vmem [resolvable:$true] %s140
          %143 = dma.hbm_to_vmem [thread:$0]  %s2, 32, %s141, [#allocation5]
        $region20: #{raw_image_decoder_forward.4} parent=11 // pred_fallthru
          _
      $region12: #{raw_image_decoder_forward.4} parent=5 // pred_fallthru
        _
      %p144 = scmp.lt.s32.totalorder %s11, 2
      // Predicated region
      $region21: #{raw_image_decoder_forward.4} parent=5 // pred_check
        %p145 = pneg %p144
      $region22: #{raw_image_decoder_forward.4} parent=5 // pred_check_branch
        %147 = sbr.rel (%p145) target = $region24
      $region23: #{raw_image_decoder_forward.4} parent=5 // pred_region
        // Predicated region
        $region25: #{raw_image_decoder_forward.4} parent=23 // pred_check
          %p148 = pneg %p31
        $region26: #{raw_image_decoder_forward.4} parent=23 // pred_check_branch
          %150 = sbr.rel (%p148) target = $region28
        $region27: #{raw_image_decoder_forward.4} parent=23 // pred_region
          %s151 = smul.u32 8, %s11
          %p152 = scmp.lt.s32.totalorder %s151, 15
          %s153 = scalar_select %p152, %s151, 15
          %s154 = smul.addr %s153, 4
          %s155 = scalar_lea.vmem %s0, %s154
          %s156 = smul.u32 8, %s11
        $region28: #{raw_image_decoder_forward.4} parent=23 // pred_fallthru
          _
      $region24: #{raw_image_decoder_forward.4} parent=5 // pred_fallthru
        _
      %p157 = scmp.le.s32.totalorder 1, %s11
      %p158 = scmp.lt.s32.totalorder %s11, 3
      %p159 = pnand %p157, %p158
      %p160 = pneg %p159
      // Predicated region
      $region29: #{raw_image_decoder_forward.4} parent=5 // pred_check
        _
      $region30: #{raw_image_decoder_forward.4} parent=5 // pred_check_branch
        %162 = sbr.rel (%p159) target = $region32
      $region31: #{raw_image_decoder_forward.4} parent=5 // pred_region
        %s163 = ssub.s32 %s11, 1
        // Predicated region
        $region33: #{raw_image_decoder_forward.4} parent=31 // pred_check
          %p164 = pneg %p58
        $region34: #{raw_image_decoder_forward.4} parent=31 // pred_check_branch
          %166 = sbr.rel (%p164) target = $region36
        $region35: #{raw_image_decoder_forward.4} parent=31 // pred_region
          %167 = dma.done [#allocation3], 2048
        $region36: #{raw_image_decoder_forward.4} parent=31 // pred_fallthru
          _
        // Predicated region
        $region37: #{raw_image_decoder_forward.4} parent=31 // pred_check
          %p168 = pneg %p79
        $region38: #{raw_image_decoder_forward.4} parent=31 // pred_check_branch
          %170 = sbr.rel (%p168) target = $region40
        $region39: #{raw_image_decoder_forward.4} parent=31 // pred_region
          %171 = dma.done [#allocation5], 32
        $region40: #{raw_image_decoder_forward.4} parent=31 // pred_fallthru
          _
        %s172 = smul.u32 8, %s16
        %p173 = scmp.lt.s32.totalorder %s172, 15
        %s174 = scalar_select %p173, %s172, 15
        %s175 = smul.addr %s174, 4
        %s176 = scalar_lea.vmem %s0, %s175
        %p177 = pneg %p37
        %p178 = pneg %p34
        %p179 = pneg %p58
        %p180 = pneg %p55
        %p181 = pneg %p79
        %p182 = pneg %p76
        %p183 = pneg %p105
        %p184 = pneg %p102
        %s185 = smul.u32 8, %s16
        %p186 = scmp.lt.s32.totalorder %s185, 15
        %s187 = scalar_select %p186, %s185, 15
        %s188 = smul.addr %s187, 2
        %s189 = smul.addr %s188, 4
        %s190 = scalar_lea.vmem %s3, %s189
        %s191 = smul.u32 8, %s16
        %p192 = scmp.lt.s32.totalorder %s191, 15
        %s193 = scalar_select %p192, %s191, 15
        %s194 = smul.addr %s193, 4
        %s195 = scalar_lea.vmem %s0, %s194
        %s196 = smul.u32 8, %s16
        %s197 = smul.u32 8, %s16
        %p198 = scmp.lt.s32.totalorder %s197, 15
        %s199 = scalar_select %p198, %s197, 15
        %s200 = smul.addr %s199, 2
        %s201 = smul.addr %s200, 4
        %s202 = scalar_lea.vmem %s3, %s201
        %s203 = smul.u32 8, %s16
        %v205 = vld [vmem:[%s195] sm:$0xf]
        %v206 = vld [vmem:[%s195 + $0x4] sm:$0xf]
        %v207 = vld [vmem:[%s195 + $0x8] sm:$0xf]
        %v208 = vld [vmem:[%s195 + $0xc] sm:$0xf]
        %v209 = vld [vmem:[%s195 + $0x10] sm:$0xf]
        %v210 = vld [vmem:[%s195 + $0x14] sm:$0xf]
        %v211 = vld [vmem:[%s195 + $0x18] sm:$0xf]
        %v212 = vld [vmem:[%s195 + $0x1c] sm:$0xf]
        %v213 = vld [vmem:[#allocation2] sm:$0xff]
        %v214 = vld [vmem:[#allocation2 + $0x8] sm:$0xff]
        %v215 = vld [vmem:[#allocation2 + $0x10] sm:$0xff]
        %v216 = vld [vmem:[#allocation2 + $0x18] sm:$0xff]
        %v217 = vld [vmem:[#allocation2 + $0x20] sm:$0xff]
        %v218 = vld [vmem:[#allocation2 + $0x28] sm:$0xff]
        %v219 = vld [vmem:[#allocation2 + $0x30] sm:$0xff]
        %v220 = vld [vmem:[#allocation2 + $0x38] sm:$0xff]
        %v221 = vld [vmem:[#allocation2 + $0x40] sm:$0xff]
        %v222 = vld [vmem:[#allocation2 + $0x48] sm:$0xff]
        %v223 = vld [vmem:[#allocation2 + $0x50] sm:$0xff]
        %v224 = vld [vmem:[#allocation2 + $0x58] sm:$0xff]
        %v225 = vld [vmem:[#allocation2 + $0x60] sm:$0xff]
        %v226 = vld [vmem:[#allocation2 + $0x68] sm:$0xff]
        %v227 = vld [vmem:[#allocation2 + $0x70] sm:$0xff]
        %v228 = vld [vmem:[#allocation2 + $0x78] sm:$0xff]
        %v229 = vld [vmem:[#allocation4] sm:$0x3]
        %v231 = vlaneseq
        %v232 = vshrl.u32 %v231, 7
        %v233 = vsub.s32 0, %v232
        %v234 = vrot.slane %v229, %v233
        %v235 = vlaneseq
        %v236 = vshrl.u32 %v235, 7
        %v237 = vsub.s32 1, %v236
        %v238 = vrot.slane %v229, %v237
        %v249 = vunpack.c.l.b16 %v205
        %v250 = vunpack.c.l.b16 %v206
        %v251 = vunpack.c.l.b16 %v207
        %v252 = vunpack.c.l.b16 %v208
        %v253 = vunpack.c.l.b16 %v209
        %v254 = vunpack.c.l.b16 %v210
        %v255 = vunpack.c.l.b16 %v211
        %v256 = vunpack.c.l.b16 %v212
        %v257 = vpack.c.b16 %v250, %v249
        %v258 = vpack.c.b16 %v252, %v251
        %v259 = vpack.c.b16 %v254, %v253
        %v260 = vpack.c.b16 %v256, %v255
        %v281 = vunpack.c.l.b16 %v213
        %v282 = vunpack.c.h.b16 %v213
        %v283 = vunpack.c.l.b16 %v214
        %v284 = vunpack.c.h.b16 %v214
        %v285 = vunpack.c.l.b16 %v215
        %v286 = vunpack.c.h.b16 %v215
        %v287 = vunpack.c.l.b16 %v216
        %v288 = vunpack.c.h.b16 %v216
        %v289 = vunpack.c.l.b16 %v217
        %v290 = vunpack.c.h.b16 %v217
        %v291 = vunpack.c.l.b16 %v218
        %v292 = vunpack.c.h.b16 %v218
        %v293 = vunpack.c.l.b16 %v219
        %v294 = vunpack.c.h.b16 %v219
        %v295 = vunpack.c.l.b16 %v220
        %v296 = vunpack.c.h.b16 %v220
        %v297 = vunpack.c.l.b16 %v221
        %v298 = vunpack.c.h.b16 %v221
        %v299 = vunpack.c.l.b16 %v222
        %v300 = vunpack.c.h.b16 %v222
        %v301 = vunpack.c.l.b16 %v223
        %v302 = vunpack.c.h.b16 %v223
        %v303 = vunpack.c.l.b16 %v224
        %v304 = vunpack.c.h.b16 %v224
        %v305 = vunpack.c.l.b16 %v225
        %v306 = vunpack.c.h.b16 %v225
        %v307 = vunpack.c.l.b16 %v226
        %v308 = vunpack.c.h.b16 %v226
        %v309 = vunpack.c.l.b16 %v227
        %v310 = vunpack.c.h.b16 %v227
        %v311 = vunpack.c.l.b16 %v228
        %v312 = vunpack.c.h.b16 %v228
        %v313 = vpack.c.b16 %v283, %v281
        %v314 = vpack.c.b16 %v284, %v282
        %v315 = vpack.c.b16 %v287, %v285
        %v316 = vpack.c.b16 %v288, %v286
        %v317 = vpack.c.b16 %v291, %v289
        %v318 = vpack.c.b16 %v292, %v290
        %v319 = vpack.c.b16 %v295, %v293
        %v320 = vpack.c.b16 %v296, %v294
        %v321 = vpack.c.b16 %v299, %v297
        %v322 = vpack.c.b16 %v300, %v298
        %v323 = vpack.c.b16 %v303, %v301
        %v324 = vpack.c.b16 %v304, %v302
        %v325 = vpack.c.b16 %v307, %v305
        %v326 = vpack.c.b16 %v308, %v306
        %v327 = vpack.c.b16 %v311, %v309
        %v328 = vpack.c.b16 %v312, %v310
        %345 = vmatprep.subr.bf16.mxu0 %v328
        %346 = vmatpush1.bf16.msra.mxu0 %v327
        %347 = vmatprep.subr.bf16.mxu0 %v326
        %348 = vmatpush1.bf16.msra.mxu0 %v325
        %349 = vmatprep.subr.bf16.mxu0 %v324
        %350 = vmatpush1.bf16.msra.mxu0 %v323
        %351 = vmatprep.subr.bf16.mxu0 %v322
        %352 = vmatpush1.bf16.msra.mxu0 %v321
        %353 = vmatprep.subr.bf16.mxu0 %v320
        %354 = vmatpush1.bf16.msra.mxu0 %v319
        %355 = vmatprep.subr.bf16.mxu0 %v318
        %356 = vmatpush1.bf16.msra.mxu0 %v317
        %357 = vmatprep.subr.bf16.mxu0 %v316
        %358 = vmatpush1.bf16.msra.mxu0 %v315
        %359 = vmatprep.subr.bf16.mxu0 %v314
        %360 = vmatpush1.bf16.msra.mxu0 %v313
        %361 = vmatprep.subr.bf16.mxu0 0
        %362 = vmatpush2.bf16.msra.mxu0 0
        %363 = vmatprep.subr.bf16.mxu0 0
        %364 = vmatpush2.bf16.msra.mxu0 0
        %365 = vmatprep.subr.bf16.mxu0 0
        %366 = vmatpush2.bf16.msra.mxu0 0
        %367 = vmatprep.subr.bf16.mxu0 0
        %368 = vmatpush2.bf16.msra.mxu0 0
        %369 = vmatprep.subr.bf16.mxu0 0
        %370 = vmatpush2.bf16.msra.mxu0 0
        %371 = vmatprep.subr.bf16.mxu0 0
        %372 = vmatpush2.bf16.msra.mxu0 0
        %373 = vmatprep.subr.bf16.mxu0 0
        %374 = vmatpush2.bf16.msra.mxu0 0
        %375 = vmatprep.subr.bf16.mxu0 0
        %376 = vmatpush2.bf16.msra.mxu0 0
        %377 = vmatprep.mubr.bf16.mxu0 0
        %378 = vmatmul.mubr.bf16.gmra.mxu0 %v257
        %v379 = vpop.f32.mrf.mxu0
        %v380 = vadd.f32 %v234, %v379
        %v381 = vpop.f32.mrf.mxu0
        %v382 = vadd.f32 %v238, %v381
        %v383 = vpop.f32.mrf.mxu0
        %v384 = vadd.f32 %v234, %v383
        %v385 = vpop.f32.mrf.mxu0
        %v386 = vadd.f32 %v238, %v385
        %387 = vmatprep.mubr.bf16.mxu0 0
        %388 = vmatmul.mubr.bf16.gmra.mxu0 %v258
        %v389 = vpop.f32.mrf.mxu0
        %v390 = vadd.f32 %v234, %v389
        %v391 = vpop.f32.mrf.mxu0
        %v392 = vadd.f32 %v238, %v391
        %v393 = vpop.f32.mrf.mxu0
        %v394 = vadd.f32 %v234, %v393
        %v395 = vpop.f32.mrf.mxu0
        %v396 = vadd.f32 %v238, %v395
        %397 = vmatprep.mubr.bf16.mxu0 0
        %398 = vmatmul.mubr.bf16.gmra.mxu0 %v259
        %v399 = vpop.f32.mrf.mxu0
        %v400 = vadd.f32 %v234, %v399
        %v401 = vpop.f32.mrf.mxu0
        %v402 = vadd.f32 %v238, %v401
        %v403 = vpop.f32.mrf.mxu0
        %v404 = vadd.f32 %v234, %v403
        %v405 = vpop.f32.mrf.mxu0
        %v406 = vadd.f32 %v238, %v405
        %407 = vmatprep.mubr.bf16.mxu0 0
        %408 = vmatmul.mubr.bf16.gmra.mxu0 %v260
        %v409 = vpop.f32.mrf.mxu0
        %v410 = vadd.f32 %v234, %v409
        %v411 = vpop.f32.mrf.mxu0
        %v412 = vadd.f32 %v238, %v411
        %v413 = vpop.f32.mrf.mxu0
        %v414 = vadd.f32 %v234, %v413
        %v415 = vpop.f32.mrf.mxu0
        %v416 = vadd.f32 %v238, %v415
        %417 = vdwg.mxu0
        %vm418 = vcmp.ge.f32.partialorder %v380, 0.0
        %vm419 = vcmp.ge.f32.partialorder %v382, 0.0
        %vm420 = vcmp.ge.f32.partialorder %v384, 0.0
        %vm421 = vcmp.ge.f32.partialorder %v386, 0.0
        %vm422 = vcmp.ge.f32.partialorder %v390, 0.0
        %vm423 = vcmp.ge.f32.partialorder %v392, 0.0
        %vm424 = vcmp.ge.f32.partialorder %v394, 0.0
        %vm425 = vcmp.ge.f32.partialorder %v396, 0.0
        %vm426 = vcmp.ge.f32.partialorder %v400, 0.0
        %vm427 = vcmp.ge.f32.partialorder %v402, 0.0
        %vm428 = vcmp.ge.f32.partialorder %v404, 0.0
        %vm429 = vcmp.ge.f32.partialorder %v406, 0.0
        %vm430 = vcmp.ge.f32.partialorder %v410, 0.0
        %vm431 = vcmp.ge.f32.partialorder %v412, 0.0
        %vm432 = vcmp.ge.f32.partialorder %v414, 0.0
        %vm433 = vcmp.ge.f32.partialorder %v416, 0.0
        %v434 = vmul.f32 %v380, 0.01
        %v435 = vmul.f32 %v382, 0.01
        %v436 = vmul.f32 %v384, 0.01
        %v437 = vmul.f32 %v386, 0.01
        %v438 = vmul.f32 %v390, 0.01
        %v439 = vmul.f32 %v392, 0.01
        %v440 = vmul.f32 %v394, 0.01
        %v441 = vmul.f32 %v396, 0.01
        %v442 = vmul.f32 %v400, 0.01
        %v443 = vmul.f32 %v402, 0.01
        %v444 = vmul.f32 %v404, 0.01
        %v445 = vmul.f32 %v406, 0.01
        %v446 = vmul.f32 %v410, 0.01
        %v447 = vmul.f32 %v412, 0.01
        %v448 = vmul.f32 %v414, 0.01
        %v449 = vmul.f32 %v416, 0.01
        %v450 = vsel %vm418, %v380, %v434
        %v451 = vsel %vm419, %v382, %v435
        %v452 = vsel %vm420, %v384, %v436
        %v453 = vsel %vm421, %v386, %v437
        %v454 = vsel %vm422, %v390, %v438
        %v455 = vsel %vm423, %v392, %v439
        %v456 = vsel %vm424, %v394, %v440
        %v457 = vsel %vm425, %v396, %v441
        %v458 = vsel %vm426, %v400, %v442
        %v459 = vsel %vm427, %v402, %v443
        %v460 = vsel %vm428, %v404, %v444
        %v461 = vsel %vm429, %v406, %v445
        %v462 = vsel %vm430, %v410, %v446
        %v463 = vsel %vm431, %v412, %v447
        %v464 = vsel %vm432, %v414, %v448
        %v465 = vsel %vm433, %v416, %v449
        %v466 = vpack.c.bf16 %v452, %v450
        %v467 = vpack.c.bf16 %v453, %v451
        %v468 = vpack.c.bf16 %v456, %v454
        %v469 = vpack.c.bf16 %v457, %v455
        %v470 = vpack.c.bf16 %v460, %v458
        %v471 = vpack.c.bf16 %v461, %v459
        %v472 = vpack.c.bf16 %v464, %v462
        %v473 = vpack.c.bf16 %v465, %v463
        %v482 = vunpack.c.l.b16 %v466
        %v483 = vunpack.c.l.b16 %v467
        %v484 = vunpack.c.h.b16 %v466
        %v485 = vunpack.c.h.b16 %v467
        %v486 = vunpack.c.l.b16 %v468
        %v487 = vunpack.c.l.b16 %v469
        %v488 = vunpack.c.h.b16 %v468
        %v489 = vunpack.c.h.b16 %v469
        %v490 = vunpack.c.l.b16 %v470
        %v491 = vunpack.c.l.b16 %v471
        %v492 = vunpack.c.h.b16 %v470
        %v493 = vunpack.c.h.b16 %v471
        %v494 = vunpack.c.l.b16 %v472
        %v495 = vunpack.c.l.b16 %v473
        %v496 = vunpack.c.h.b16 %v472
        %v497 = vunpack.c.h.b16 %v473
        %v498 = vpack.c.b16 %v483, %v482
        %v499 = vpack.c.b16 %v485, %v484
        %v500 = vpack.c.b16 %v487, %v486
        %v501 = vpack.c.b16 %v489, %v488
        %v502 = vpack.c.b16 %v491, %v490
        %v503 = vpack.c.b16 %v493, %v492
        %v504 = vpack.c.b16 %v495, %v494
        %v505 = vpack.c.b16 %v497, %v496
        %514 = vst [vmem:[%s202] sm:$0xff] %v498
        %515 = vst [vmem:[%s202 + $0x8] sm:$0xff] %v499
        %516 = vst [vmem:[%s202 + $0x10] sm:$0xff] %v500
        %517 = vst [vmem:[%s202 + $0x18] sm:$0xff] %v501
        %518 = vst [vmem:[%s202 + $0x20] sm:$0xff] %v502
        %519 = vst [vmem:[%s202 + $0x28] sm:$0xff] %v503
        %520 = vst [vmem:[%s202 + $0x30] sm:$0xff] %v504
        %521 = vst [vmem:[%s202 + $0x38] sm:$0xff] %v505
        %s522 = smul.u32 8, %s16
        %p523 = scmp.lt.s32.totalorder %s522, 15
        %s524 = scalar_select %p523, %s522, 15
        %s525 = smul.addr %s524, 2
        %s526 = smul.addr %s525, 4
        %s527 = scalar_lea.vmem %s3, %s526
        // Predicated region
        $region41: #{raw_image_decoder_forward.4} parent=31 // pred_check
          %p528 = pneg %p102
        $region42: #{raw_image_decoder_forward.4} parent=31 // pred_check_branch
          %530 = sbr.rel (%p528) target = $region44
        $region43: #{raw_image_decoder_forward.4} parent=31 // pred_region
          %s531 = smul.u32 8, %s16
        $region44: #{raw_image_decoder_forward.4} parent=31 // pred_fallthru
          _
      $region32: #{raw_image_decoder_forward.4} parent=5 // pred_fallthru
        _
      %p532 = scmp.le.s32.totalorder 2, %s11
      // Predicated region
      $region45: #{raw_image_decoder_forward.4} parent=5 // pred_check
        %p533 = pneg %p532
      $region46: #{raw_image_decoder_forward.4} parent=5 // pred_check_branch
        %535 = sbr.rel (%p533) target = $region48
      $region47: #{raw_image_decoder_forward.4} parent=5 // pred_region
        %s536 = ssub.s32 %s11, 2
        // Predicated region
        $region49: #{raw_image_decoder_forward.4} parent=47 // pred_check
          %p537 = pneg %p108
        $region50: #{raw_image_decoder_forward.4} parent=47 // pred_check_branch
          %539 = sbr.rel (%p537) target = $region52
        $region51: #{raw_image_decoder_forward.4} parent=47 // pred_region
          %s540 = smul.u32 8, %s17
          %p541 = scmp.lt.s32.totalorder %s540, 15
          %s542 = scalar_select %p541, %s540, 15
          %s543 = smul.addr %s542, 2
          %s544 = smul.addr %s543, 4
          %s545 = scalar_lea.vmem %s3, %s544
        $region52: #{raw_image_decoder_forward.4} parent=47 // pred_fallthru
          _
      $region48: #{raw_image_decoder_forward.4} parent=5 // pred_fallthru
        _
    $region6: #{raw_image_decoder_forward.4} parent=1 // loop_footer
      %s15 = sadd.s32 1, %s11
    $region7: #{raw_image_decoder_forward.4} parent=1 // loop_footer_branch
      %10 = sbr.rel target = $region3
    $region8: #{raw_image_decoder_forward.4} parent=1 // loop_exit
      _
    %546 = vsyncpa [#allocation3], 1
    %s547 = scalar_lea.sflag [#allocation3], 1
    %548 = vsyncpa %s547, 1
    %549 = vsyncpa [#allocation5], 1

// kernel: raw_image_decoder_forward.3
$region0: #{raw_image_decoder_forward.3}
  #allocation0 [shape = 'u32[]', space=smem, size = 0x4, offset = 0x4, fixed_abs, tag = 'smem constant byte address 0x4 - core index']
  #allocation1 [shape = 'u32[144,128]{1,0:T(1,128)}', space=vmem, size = 0x12000, scoped, tag = 'internal scratch']
  %s0 = inlined_call_operand.hbm [shape: f32[2,32], index: 0, kind: input, shape index: {}]
  %s1 = inlined_call_operand.hbm [shape: bf16[32,256], index: 1, kind: input, shape index: {}]
  %s2 = inlined_call_operand.hbm [shape: f32[1,256], index: 2, kind: input, shape index: {}]
  %s3 = inlined_call_operand.hbm [shape: bf16[256,256], index: 3, kind: input, shape index: {}]
  %s4 = inlined_call_operand.hbm [shape: f32[1,256], index: 4, kind: input, shape index: {}]
  %s5 = inlined_call_operand.hbm [shape: bf16[256,256], index: 5, kind: input, shape index: {}]
  %s6 = inlined_call_operand.hbm [shape: f32[1,256], index: 6, kind: input, shape index: {}]
  %s7 = inlined_call_operand.vmem [shape: f32[256,64], index: 7, kind: input, shape index: {}]
  %s8 = inlined_call_operand.hbm [shape: f32[64,256], index: 8, kind: input, shape index: {}]
  %s9 = inlined_call_operand.hbm [shape: f32[1,64], index: 9, kind: input, shape index: {}]
  %s10 = inlined_call_operand.hbm [shape: f32[1,64], index: 10, kind: input, shape index: {}]
  %s11 = inlined_call_operand.hbm [shape: bf16[256,1152], index: 11, kind: input, shape index: {}]
  %s12 = inlined_call_operand.hbm [shape: f32[1,1152], index: 12, kind: input, shape index: {}]
  %s13 = inlined_call_operand.vmem [shape: f32[1152,32], index: 13, kind: input, shape index: {}]
  %s14 = inlined_call_operand.hbm [shape: f32[32,1152], index: 14, kind: input, shape index: {}]
  %s15 = inlined_call_operand.hbm [shape: f32[1,32], index: 15, kind: input, shape index: {}]
  %s16 = inlined_call_operand.hbm [shape: f32[1,32], index: 16, kind: input, shape index: {}]
  %s17 = inlined_call_operand.vmem [shape: f32[2,1152], index: 17, kind: output, shape index: {}]
  %s18 = sld [smem:[#allocation0]]
  $region138: #{raw_image_decoder_forward.3} parent=0
    _
  %s20 = ssub.s32 1, %s18
  %s21 = scalar_select 0, %s20, %s18
  $region1: #{raw_image_decoder_forward.3} parent=0
    #allocation2 [shape = 'u8[1024]{0}', space=vmem, size = 0x400, scoped, tag = 'input window, operand 0, single buffered']
    #allocation3 [shape = 's32[1]{0}', space=sflag, size = 0x4, scoped, tag = 'scoped memory for raw_image_decoder_forward.3']
    #allocation4 [shape = 'u8[16384]{0}', space=vmem, size = 0x4000, scoped, tag = 'input window, operand 1, single buffered']
    #allocation5 [shape = 's32[1]{0}', space=sflag, size = 0x4, scoped, tag = 'scoped memory for raw_image_decoder_forward.3']
    #allocation6 [shape = 'u8[1024]{0}', space=vmem, size = 0x400, scoped, tag = 'input window, operand 2, single buffered']
    #allocation7 [shape = 'u8[131072]{0}', space=vmem, size = 0x20000, scoped, tag = 'input window, operand 3, single buffered']
    #allocation8 [shape = 's32[1]{0}', space=sflag, size = 0x4, scoped, tag = 'scoped memory for raw_image_decoder_forward.3']
    #allocation9 [shape = 'u8[1024]{0}', space=vmem, size = 0x400, scoped, tag = 'input window, operand 4, single buffered']
    #allocation10 [shape = 'u8[131072]{0}', space=vmem, size = 0x20000, scoped, tag = 'input window, operand 5, single buffered']
    #allocation11 [shape = 's32[1]{0}', space=sflag, size = 0x4, scoped, tag = 'scoped memory for raw_image_decoder_forward.3']
    #allocation12 [shape = 'u8[1024]{0}', space=vmem, size = 0x400, scoped, tag = 'input window, operand 6, single buffered']
    #allocation13 [shape = 'u8[65536]{0}', space=vmem, size = 0x10000, scoped, tag = 'input window, operand 8, single buffered']
    #allocation14 [shape = 's32[1]{0}', space=sflag, size = 0x4, scoped, tag = 'scoped memory for raw_image_decoder_forward.3']
    #allocation15 [shape = 'u8[512]{0}', space=vmem, size = 0x400, scoped, tag = 'input window, operand 9, single buffered']
    #allocation16 [shape = 'u8[512]{0}', space=vmem, size = 0x400, scoped, tag = 'input window, operand 10, single buffered']
    #allocation17 [shape = 's32[1]{0}', space=sflag, size = 0x4, scoped, tag = 'scoped memory for raw_image_decoder_forward.3']
    #allocation18 [shape = 'u8[589824]{0}', space=vmem, size = 0x90000, scoped, tag = 'input window, operand 11, single buffered']
    #allocation19 [shape = 'u8[4608]{0}', space=vmem, size = 0x1400, scoped, tag = 'input window, operand 12, single buffered']
    #allocation20 [shape = 's32[1]{0}', space=sflag, size = 0x4, scoped, tag = 'scoped memory for raw_image_decoder_forward.3']
    #allocation21 [shape = 'u8[147456]{0}', space=vmem, size = 0x24000, scoped, tag = 'input window, operand 14, single buffered']
    #allocation22 [shape = 'u8[512]{0}', space=vmem, size = 0x400, scoped, tag = 'input window, operand 15, single buffered']
    #allocation23 [shape = 's32[1]{0}', space=sflag, size = 0x4, scoped, tag = 'scoped memory for raw_image_decoder_forward.3']
    #allocation24 [shape = 'u8[512]{0}', space=vmem, size = 0x400, scoped, tag = 'input window, operand 16, single buffered']
    %22 = vsyncpa [#allocation3], 0
    %23 = vsyncpa [#allocation5], 0
    %24 = vsyncpa [#allocation8], 0
    %25 = vsyncpa [#allocation11], 0
    %26 = vsyncpa [#allocation14], 0
    %27 = vsyncpa [#allocation17], 0
    %28 = vsyncpa [#allocation20], 0
    %29 = vsyncpa [#allocation23], 0
    // Predicated region
    $region2: #{raw_image_decoder_forward.3} parent=1 // pred_check
      _
    $region3: #{raw_image_decoder_forward.3} parent=1 // pred_check_branch
      %31 = sbr.rel (0) target = $region5
    $region4: #{raw_image_decoder_forward.3} parent=1 // pred_region
      %s33 = ssub.s32 32, 32
      %34 = vsyncadd [#allocation3], %s33
      %s36 = sshll.u32 [#allocation2], 4
      %s37 = int_to_ptr.vmem [resolvable:$true] %s36
      %39 = dma.hbm_to_vmem [thread:$0]  %s0, 32, %s37, [#allocation3]
    $region5: #{raw_image_decoder_forward.3} parent=1 // pred_fallthru
      _
    // Predicated region
    $region6: #{raw_image_decoder_forward.3} parent=1 // pred_check
      _
    $region7: #{raw_image_decoder_forward.3} parent=1 // pred_check_branch
      %41 = sbr.rel (0) target = $region9
    $region8: #{raw_image_decoder_forward.3} parent=1 // pred_region
      %s43 = ssub.s32 512, 512
      %44 = vsyncadd [#allocation5], %s43
      %s45 = sshll.u32 [#allocation4], 4
      %s46 = int_to_ptr.vmem [resolvable:$true] %s45
      %51 = dma.hbm_to_vmem [thread:$0]  %s1, 512, %s46, [#allocation5], 128, 128, 8
    $region9: #{raw_image_decoder_forward.3} parent=1 // pred_fallthru
      _
    // Predicated region
    $region10: #{raw_image_decoder_forward.3} parent=1 // pred_check
      _
    $region11: #{raw_image_decoder_forward.3} parent=1 // pred_check_branch
      %53 = sbr.rel (0) target = $region13
    $region12: #{raw_image_decoder_forward.3} parent=1 // pred_region
      %s55 = ssub.s32 32, 32
      %56 = vsyncadd [#allocation5], %s55
      %s58 = sshll.u32 [#allocation6], 4
      %s59 = int_to_ptr.vmem [resolvable:$true] %s58
      %61 = dma.hbm_to_vmem [thread:$0]  %s2, 32, %s59, [#allocation5]
    $region13: #{raw_image_decoder_forward.3} parent=1 // pred_fallthru
      _
    // Predicated region
    $region14: #{raw_image_decoder_forward.3} parent=1 // pred_check
      _
    $region15: #{raw_image_decoder_forward.3} parent=1 // pred_check_branch
      %63 = sbr.rel (0) target = $region17
    $region16: #{raw_image_decoder_forward.3} parent=1 // pred_region
      %s65 = ssub.s32 4096, 4096
      %66 = vsyncadd [#allocation8], %s65
      %s67 = sshll.u32 [#allocation7], 4
      %s68 = int_to_ptr.vmem [resolvable:$true] %s67
      %73 = dma.hbm_to_vmem [thread:$0]  %s3, 4096, %s68, [#allocation8], 128, 128, 8
    $region17: #{raw_image_decoder_forward.3} parent=1 // pred_fallthru
      _
    // Predicated region
    $region18: #{raw_image_decoder_forward.3} parent=1 // pred_check
      _
    $region19: #{raw_image_decoder_forward.3} parent=1 // pred_check_branch
      %75 = sbr.rel (0) target = $region21
    $region20: #{raw_image_decoder_forward.3} parent=1 // pred_region
      %s77 = ssub.s32 32, 32
      %78 = vsyncadd [#allocation8], %s77
      %s80 = sshll.u32 [#allocation9], 4
      %s81 = int_to_ptr.vmem [resolvable:$true] %s80
      %83 = dma.hbm_to_vmem [thread:$0]  %s4, 32, %s81, [#allocation8]
    $region21: #{raw_image_decoder_forward.3} parent=1 // pred_fallthru
      _
    // Predicated region
    $region22: #{raw_image_decoder_forward.3} parent=1 // pred_check
      _
    $region23: #{raw_image_decoder_forward.3} parent=1 // pred_check_branch
      %85 = sbr.rel (0) target = $region25
    $region24: #{raw_image_decoder_forward.3} parent=1 // pred_region
      %s87 = ssub.s32 4096, 4096
      %88 = vsyncadd [#allocation11], %s87
      %s89 = sshll.u32 [#allocation10], 4
      %s90 = int_to_ptr.vmem [resolvable:$true] %s89
      %95 = dma.hbm_to_vmem [thread:$0]  %s5, 4096, %s90, [#allocation11], 128, 128, 8
    $region25: #{raw_image_decoder_forward.3} parent=1 // pred_fallthru
      _
    // Predicated region
    $region26: #{raw_image_decoder_forward.3} parent=1 // pred_check
      _
    $region27: #{raw_image_decoder_forward.3} parent=1 // pred_check_branch
      %97 = sbr.rel (0) target = $region29
    $region28: #{raw_image_decoder_forward.3} parent=1 // pred_region
      %s99 = ssub.s32 32, 32
      %100 = vsyncadd [#allocation11], %s99
      %s102 = sshll.u32 [#allocation12], 4
      %s103 = int_to_ptr.vmem [resolvable:$true] %s102
      %105 = dma.hbm_to_vmem [thread:$0]  %s6, 32, %s103, [#allocation11]
    $region29: #{raw_image_decoder_forward.3} parent=1 // pred_fallthru
      _
    // Predicated region
    $region30: #{raw_image_decoder_forward.3} parent=1 // pred_check
      _
    $region31: #{raw_image_decoder_forward.3} parent=1 // pred_check_branch
      %107 = sbr.rel (0) target = $region33
    $region32: #{raw_image_decoder_forward.3} parent=1 // pred_region
      _
    $region33: #{raw_image_decoder_forward.3} parent=1 // pred_fallthru
      _
    // Predicated region
    $region34: #{raw_image_decoder_forward.3} parent=1 // pred_check
      _
    $region35: #{raw_image_decoder_forward.3} parent=1 // pred_check_branch
      %109 = sbr.rel (0) target = $region37
    $region36: #{raw_image_decoder_forward.3} parent=1 // pred_region
      %s111 = ssub.s32 2048, 2048
      %112 = vsyncadd [#allocation14], %s111
      %s113 = sshll.u32 [#allocation13], 4
      %s114 = int_to_ptr.vmem [resolvable:$true] %s113
      %119 = dma.hbm_to_vmem [thread:$0]  %s8, 2048, %s114, [#allocation14], 256, 256, 16
    $region37: #{raw_image_decoder_forward.3} parent=1 // pred_fallthru
      _
    // Predicated region
    $region38: #{raw_image_decoder_forward.3} parent=1 // pred_check
      _
    $region39: #{raw_image_decoder_forward.3} parent=1 // pred_check_branch
      %121 = sbr.rel (0) target = $region41
    $region40: #{raw_image_decoder_forward.3} parent=1 // pred_region
      %s123 = ssub.s32 16, 16
      %124 = vsyncadd [#allocation14], %s123
      %s126 = sshll.u32 [#allocation15], 4
      %s127 = int_to_ptr.vmem [resolvable:$true] %s126
      %129 = dma.hbm_to_vmem [thread:$0]  %s9, 16, %s127, [#allocation14]
    $region41: #{raw_image_decoder_forward.3} parent=1 // pred_fallthru
      _
    // Predicated region
    $region42: #{raw_image_decoder_forward.3} parent=1 // pred_check
      _
    $region43: #{raw_image_decoder_forward.3} parent=1 // pred_check_branch
      %131 = sbr.rel (0) target = $region45
    $region44: #{raw_image_decoder_forward.3} parent=1 // pred_region
      %s133 = ssub.s32 16, 16
      %134 = vsyncadd [#allocation17], %s133
      %s136 = sshll.u32 [#allocation16], 4
      %s137 = int_to_ptr.vmem [resolvable:$true] %s136
      %139 = dma.hbm_to_vmem [thread:$0]  %s10, 16, %s137, [#allocation17]
    $region45: #{raw_image_decoder_forward.3} parent=1 // pred_fallthru
      _
    // Predicated region
    $region46: #{raw_image_decoder_forward.3} parent=1 // pred_check
      _
    $region47: #{raw_image_decoder_forward.3} parent=1 // pred_check_branch
      %141 = sbr.rel (0) target = $region49
    $region48: #{raw_image_decoder_forward.3} parent=1 // pred_region
      %s143 = ssub.s32 18432, 18432
      %144 = vsyncadd [#allocation17], %s143
      %s145 = sshll.u32 [#allocation18], 4
      %s146 = int_to_ptr.vmem [resolvable:$true] %s145
      %151 = dma.hbm_to_vmem [thread:$0]  %s11, 18432, %s146, [#allocation17], 576, 576, 36
    $region49: #{raw_image_decoder_forward.3} parent=1 // pred_fallthru
      _
    // Predicated region
    $region50: #{raw_image_decoder_forward.3} parent=1 // pred_check
      _
    $region51: #{raw_image_decoder_forward.3} parent=1 // pred_check_branch
      %153 = sbr.rel (0) target = $region53
    $region52: #{raw_image_decoder_forward.3} parent=1 // pred_region
      %s155 = ssub.s32 144, 144
      %156 = vsyncadd [#allocation20], %s155
      %s158 = sshll.u32 [#allocation19], 4
      %s159 = int_to_ptr.vmem [resolvable:$true] %s158
      %161 = dma.hbm_to_vmem [thread:$0]  %s12, 144, %s159, [#allocation20]
    $region53: #{raw_image_decoder_forward.3} parent=1 // pred_fallthru
      _
    // Predicated region
    $region54: #{raw_image_decoder_forward.3} parent=1 // pred_check
      _
    $region55: #{raw_image_decoder_forward.3} parent=1 // pred_check_branch
      %163 = sbr.rel (0) target = $region57
    $region56: #{raw_image_decoder_forward.3} parent=1 // pred_region
      _
    $region57: #{raw_image_decoder_forward.3} parent=1 // pred_fallthru
      _
    // Predicated region
    $region58: #{raw_image_decoder_forward.3} parent=1 // pred_check
      _
    $region59: #{raw_image_decoder_forward.3} parent=1 // pred_check_branch
      %165 = sbr.rel (0) target = $region61
    $region60: #{raw_image_decoder_forward.3} parent=1 // pred_region
      %s167 = ssub.s32 4608, 4608
      %168 = vsyncadd [#allocation20], %s167
      %s169 = sshll.u32 [#allocation21], 4
      %s170 = int_to_ptr.vmem [resolvable:$true] %s169
      %175 = dma.hbm_to_vmem [thread:$0]  %s14, 4608, %s170, [#allocation20], 1152, 1152, 72
    $region61: #{raw_image_decoder_forward.3} parent=1 // pred_fallthru
      _
    // Predicated region
    $region62: #{raw_image_decoder_forward.3} parent=1 // pred_check
      _
    $region63: #{raw_image_decoder_forward.3} parent=1 // pred_check_branch
      %177 = sbr.rel (0) target = $region65
    $region64: #{raw_image_decoder_forward.3} parent=1 // pred_region
      %s179 = ssub.s32 16, 16
      %180 = vsyncadd [#allocation23], %s179
      %s182 = sshll.u32 [#allocation22], 4
      %s183 = int_to_ptr.vmem [resolvable:$true] %s182
      %185 = dma.hbm_to_vmem [thread:$0]  %s15, 16, %s183, [#allocation23]
    $region65: #{raw_image_decoder_forward.3} parent=1 // pred_fallthru
      _
    // Predicated region
    $region66: #{raw_image_decoder_forward.3} parent=1 // pred_check
      _
    $region67: #{raw_image_decoder_forward.3} parent=1 // pred_check_branch
      %187 = sbr.rel (0) target = $region69
    $region68: #{raw_image_decoder_forward.3} parent=1 // pred_region
      %s189 = ssub.s32 16, 16
      %190 = vsyncadd [#allocation23], %s189
      %s192 = sshll.u32 [#allocation24], 4
      %s193 = int_to_ptr.vmem [resolvable:$true] %s192
      %195 = dma.hbm_to_vmem [thread:$0]  %s16, 16, %s193, [#allocation23]
    $region69: #{raw_image_decoder_forward.3} parent=1 // pred_fallthru
      _
    // Predicated region
    $region70: #{raw_image_decoder_forward.3} parent=1 // pred_check
      _
    $region71: #{raw_image_decoder_forward.3} parent=1 // pred_check_branch
      %197 = sbr.rel (0) target = $region73
    $region72: #{raw_image_decoder_forward.3} parent=1 // pred_region
      %198 = dma.done [#allocation3], 32
    $region73: #{raw_image_decoder_forward.3} parent=1 // pred_fallthru
      _
    // Predicated region
    $region74: #{raw_image_decoder_forward.3} parent=1 // pred_check
      _
    $region75: #{raw_image_decoder_forward.3} parent=1 // pred_check_branch
      %200 = sbr.rel (0) target = $region77
    $region76: #{raw_image_decoder_forward.3} parent=1 // pred_region
      %201 = dma.done [#allocation5], 512
    $region77: #{raw_image_decoder_forward.3} parent=1 // pred_fallthru
      _
    // Predicated region
    $region78: #{raw_image_decoder_forward.3} parent=1 // pred_check
      _
    $region79: #{raw_image_decoder_forward.3} parent=1 // pred_check_branch
      %203 = sbr.rel (0) target = $region81
    $region80: #{raw_image_decoder_forward.3} parent=1 // pred_region
      %204 = dma.done [#allocation5], 32
    $region81: #{raw_image_decoder_forward.3} parent=1 // pred_fallthru
      _
    // Predicated region
    $region82: #{raw_image_decoder_forward.3} parent=1 // pred_check
      _
    $region83: #{raw_image_decoder_forward.3} parent=1 // pred_check_branch
      %206 = sbr.rel (0) target = $region85
    $region84: #{raw_image_decoder_forward.3} parent=1 // pred_region
      %207 = dma.done [#allocation8], 4096
    $region85: #{raw_image_decoder_forward.3} parent=1 // pred_fallthru
      _
    // Predicated region
    $region86: #{raw_image_decoder_forward.3} parent=1 // pred_check
      _
    $region87: #{raw_image_decoder_forward.3} parent=1 // pred_check_branch
      %209 = sbr.rel (0) target = $region89
    $region88: #{raw_image_decoder_forward.3} parent=1 // pred_region
      %210 = dma.done [#allocation8], 32
    $region89: #{raw_image_decoder_forward.3} parent=1 // pred_fallthru
      _
    // Predicated region
    $region90: #{raw_image_decoder_forward.3} parent=1 // pred_check
      _
    $region91: #{raw_image_decoder_forward.3} parent=1 // pred_check_branch
      %212 = sbr.rel (0) target = $region93
    $region92: #{raw_image_decoder_forward.3} parent=1 // pred_region
      %213 = dma.done [#allocation11], 4096
    $region93: #{raw_image_decoder_forward.3} parent=1 // pred_fallthru
      _
    // Predicated region
    $region94: #{raw_image_decoder_forward.3} parent=1 // pred_check
      _
    $region95: #{raw_image_decoder_forward.3} parent=1 // pred_check_branch
      %215 = sbr.rel (0) target = $region97
    $region96: #{raw_image_decoder_forward.3} parent=1 // pred_region
      %216 = dma.done [#allocation11], 32
    $region97: #{raw_image_decoder_forward.3} parent=1 // pred_fallthru
      _
    // Predicated region
    $region98: #{raw_image_decoder_forward.3} parent=1 // pred_check
      _
    $region99: #{raw_image_decoder_forward.3} parent=1 // pred_check_branch
      %218 = sbr.rel (0) target = $region101
    $region100: #{raw_image_decoder_forward.3} parent=1 // pred_region
      %219 = dma.done [#allocation14], 2048
    $region101: #{raw_image_decoder_forward.3} parent=1 // pred_fallthru
      _
    // Predicated region
    $region102: #{raw_image_decoder_forward.3} parent=1 // pred_check
      _
    $region103: #{raw_image_decoder_forward.3} parent=1 // pred_check_branch
      %221 = sbr.rel (0) target = $region105
    $region104: #{raw_image_decoder_forward.3} parent=1 // pred_region
      %222 = dma.done [#allocation14], 16
    $region105: #{raw_image_decoder_forward.3} parent=1 // pred_fallthru
      _
    // Predicated region
    $region106: #{raw_image_decoder_forward.3} parent=1 // pred_check
      _
    $region107: #{raw_image_decoder_forward.3} parent=1 // pred_check_branch
      %224 = sbr.rel (0) target = $region109
    $region108: #{raw_image_decoder_forward.3} parent=1 // pred_region
      %225 = dma.done [#allocation17], 16
    $region109: #{raw_image_decoder_forward.3} parent=1 // pred_fallthru
      _
    // Predicated region
    $region110: #{raw_image_decoder_forward.3} parent=1 // pred_check
      _
    $region111: #{raw_image_decoder_forward.3} parent=1 // pred_check_branch
      %227 = sbr.rel (0) target = $region113
    $region112: #{raw_image_decoder_forward.3} parent=1 // pred_region
      %228 = dma.done [#allocation17], 18432
    $region113: #{raw_image_decoder_forward.3} parent=1 // pred_fallthru
      _
    // Predicated region
    $region114: #{raw_image_decoder_forward.3} parent=1 // pred_check
      _
    $region115: #{raw_image_decoder_forward.3} parent=1 // pred_check_branch
      %230 = sbr.rel (0) target = $region117
    $region116: #{raw_image_decoder_forward.3} parent=1 // pred_region
      %231 = dma.done [#allocation20], 144
    $region117: #{raw_image_decoder_forward.3} parent=1 // pred_fallthru
      _
    // Predicated region
    $region118: #{raw_image_decoder_forward.3} parent=1 // pred_check
      _
    $region119: #{raw_image_decoder_forward.3} parent=1 // pred_check_branch
      %233 = sbr.rel (0) target = $region121
    $region120: #{raw_image_decoder_forward.3} parent=1 // pred_region
      %234 = dma.done [#allocation20], 4608
    $region121: #{raw_image_decoder_forward.3} parent=1 // pred_fallthru
      _
    // Predicated region
    $region122: #{raw_image_decoder_forward.3} parent=1 // pred_check
      _
    $region123: #{raw_image_decoder_forward.3} parent=1 // pred_check_branch
      %236 = sbr.rel (0) target = $region125
    $region124: #{raw_image_decoder_forward.3} parent=1 // pred_region
      %237 = dma.done [#allocation23], 16
    $region125: #{raw_image_decoder_forward.3} parent=1 // pred_fallthru
      _
    // Predicated region
    $region126: #{raw_image_decoder_forward.3} parent=1 // pred_check
      _
    $region127: #{raw_image_decoder_forward.3} parent=1 // pred_check_branch
      %239 = sbr.rel (0) target = $region129
    $region128: #{raw_image_decoder_forward.3} parent=1 // pred_region
      %240 = dma.done [#allocation23], 16
    $region129: #{raw_image_decoder_forward.3} parent=1 // pred_fallthru
      _
    %v242 = vld [vmem:[#allocation2] sm:$0x3]
    %v243 = vpack.c.bf16 %v242, %v242
    %v244 = vld [vmem:[#allocation4] sm:$0xff]
    %v245 = vld [vmem:[#allocation4 + $0x8] sm:$0xff]
    %v246 = vld [vmem:[#allocation4 + $0x10] sm:$0xff]
    %v247 = vld [vmem:[#allocation4 + $0x18] sm:$0xff]
    %v248 = vld [vmem:[#allocation6] sm:$0x3]
    %v250 = vlaneseq
    %v251 = vshrl.u32 %v250, 7
    %v252 = vsub.s32 0, %v251
    %v253 = vrot.slane %v248, %v252
    %v254 = vlaneseq
    %v255 = vshrl.u32 %v254, 7
    %v256 = vsub.s32 1, %v255
    %v257 = vrot.slane %v248, %v256
    %v264 = vunpack.c.l.b16 %v244
    %v265 = vunpack.c.h.b16 %v244
    %v266 = vunpack.c.l.b16 %v245
    %v267 = vunpack.c.h.b16 %v245
    %v268 = vunpack.c.l.b16 %v246
    %v269 = vunpack.c.h.b16 %v246
    %v270 = vunpack.c.l.b16 %v247
    %v271 = vunpack.c.h.b16 %v247
    %v272 = vpack.c.b16 %v266, %v264
    %v273 = vpack.c.b16 %v267, %v265
    %v274 = vpack.c.b16 %v270, %v268
    %v275 = vpack.c.b16 %v271, %v269
    %vm280 = vcmask 261120
    %v282 = vsel %vm280, %v243, 0
    %284 = vmatprep.subr.bf16.mxu0 0
    %285 = vmatpush1.bf16.msra.mxu0 0
    %286 = vmatprep.subr.bf16.mxu0 0
    %287 = vmatpush1.bf16.msra.mxu0 0
    %288 = vmatprep.subr.bf16.mxu0 0
    %289 = vmatpush1.bf16.msra.mxu0 0
    %290 = vmatprep.subr.bf16.mxu0 0
    %291 = vmatpush1.bf16.msra.mxu0 0
    %292 = vmatprep.subr.bf16.mxu0 0
    %293 = vmatpush1.bf16.msra.mxu0 0
    %294 = vmatprep.subr.bf16.mxu0 0
    %295 = vmatpush1.bf16.msra.mxu0 0
    %296 = vmatprep.subr.bf16.mxu0 %v275
    %297 = vmatpush1.bf16.msra.mxu0 %v274
    %298 = vmatprep.subr.bf16.mxu0 %v273
    %299 = vmatpush1.bf16.msra.mxu0 %v272
    %300 = vmatprep.subr.bf16.mxu0 0
    %301 = vmatpush2.bf16.msra.mxu0 0
    %302 = vmatprep.subr.bf16.mxu0 0
    %303 = vmatpush2.bf16.msra.mxu0 0
    %304 = vmatprep.subr.bf16.mxu0 0
    %305 = vmatpush2.bf16.msra.mxu0 0
    %306 = vmatprep.subr.bf16.mxu0 0
    %307 = vmatpush2.bf16.msra.mxu0 0
    %308 = vmatprep.subr.bf16.mxu0 0
    %309 = vmatpush2.bf16.msra.mxu0 0
    %310 = vmatprep.subr.bf16.mxu0 0
    %311 = vmatpush2.bf16.msra.mxu0 0
    %312 = vmatprep.subr.bf16.mxu0 0
    %313 = vmatpush2.bf16.msra.mxu0 0
    %314 = vmatprep.subr.bf16.mxu0 0
    %315 = vmatpush2.bf16.msra.mxu0 0
    %316 = vmatprep.mubr.bf16.mxu0 0
    %317 = vmatmul.mubr.bf16.gmra.mxu0 %v282
    %v318 = vpop.f32.mrf.mxu0
    %v319 = vadd.f32 %v253, %v318
    %v320 = vpop.f32.mrf.mxu0
    %v321 = vadd.f32 %v257, %v320
    %v322 = vpop.f32.mrf.mxu0
    %v323 = vpop.f32.mrf.mxu0
    %324 = vdwg.mxu0
    %v325 = vmax.f32 %v319, 0.0
    %v326 = vmax.f32 %v321, 0.0
    %v327 = vpack.c.bf16 %v325, %v325
    %v328 = vpack.c.bf16 %v326, %v326
    %v329 = vld [vmem:[#allocation7] sm:$0xff]
    %v330 = vld [vmem:[#allocation7 + $0x8] sm:$0xff]
    %v331 = vld [vmem:[#allocation7 + $0x10] sm:$0xff]
    %v332 = vld [vmem:[#allocation7 + $0x18] sm:$0xff]
    %v333 = vld [vmem:[#allocation7 + $0x20] sm:$0xff]
    %v334 = vld [vmem:[#allocation7 + $0x28] sm:$0xff]
    %v335 = vld [vmem:[#allocation7 + $0x30] sm:$0xff]
    %v336 = vld [vmem:[#allocation7 + $0x38] sm:$0xff]
    %v337 = vld [vmem:[#allocation7 + $0x40] sm:$0xff]
    %v338 = vld [vmem:[#allocation7 + $0x48] sm:$0xff]
    %v339 = vld [vmem:[#allocation7 + $0x50] sm:$0xff]
    %v340 = vld [vmem:[#allocation7 + $0x58] sm:$0xff]
    %v341 = vld [vmem:[#allocation7 + $0x60] sm:$0xff]
    %v342 = vld [vmem:[#allocation7 + $0x68] sm:$0xff]
    %v343 = vld [vmem:[#allocation7 + $0x70] sm:$0xff]
    %v344 = vld [vmem:[#allocation7 + $0x78] sm:$0xff]
    %v345 = vld [vmem:[#allocation7 + $0x80] sm:$0xff]
    %v346 = vld [vmem:[#allocation7 + $0x88] sm:$0xff]
    %v347 = vld [vmem:[#allocation7 + $0x90] sm:$0xff]
    %v348 = vld [vmem:[#allocation7 + $0x98] sm:$0xff]
    %v349 = vld [vmem:[#allocation7 + $0xa0] sm:$0xff]
    %v350 = vld [vmem:[#allocation7 + $0xa8] sm:$0xff]
    %v351 = vld [vmem:[#allocation7 + $0xb0] sm:$0xff]
    %v352 = vld [vmem:[#allocation7 + $0xb8] sm:$0xff]
    %v353 = vld [vmem:[#allocation7 + $0xc0] sm:$0xff]
    %v354 = vld [vmem:[#allocation7 + $0xc8] sm:$0xff]
    %v355 = vld [vmem:[#allocation7 + $0xd0] sm:$0xff]
    %v356 = vld [vmem:[#allocation7 + $0xd8] sm:$0xff]
    %v357 = vld [vmem:[#allocation7 + $0xe0] sm:$0xff]
    %v358 = vld [vmem:[#allocation7 + $0xe8] sm:$0xff]
    %v359 = vld [vmem:[#allocation7 + $0xf0] sm:$0xff]
    %v360 = vld [vmem:[#allocation7 + $0xf8] sm:$0xff]
    %v361 = vld [vmem:[#allocation9] sm:$0x3]
    %v363 = vlaneseq
    %v364 = vshrl.u32 %v363, 7
    %v365 = vsub.s32 0, %v364
    %v366 = vrot.slane %v361, %v365
    %v367 = vlaneseq
    %v368 = vshrl.u32 %v367, 7
    %v369 = vsub.s32 1, %v368
    %v370 = vrot.slane %v361, %v369
    %v405 = vunpack.c.l.b16 %v329
    %v406 = vunpack.c.h.b16 %v329
    %v407 = vunpack.c.l.b16 %v330
    %v408 = vunpack.c.h.b16 %v330
    %v409 = vunpack.c.l.b16 %v331
    %v410 = vunpack.c.h.b16 %v331
    %v411 = vunpack.c.l.b16 %v332
    %v412 = vunpack.c.h.b16 %v332
    %v413 = vunpack.c.l.b16 %v333
    %v414 = vunpack.c.h.b16 %v333
    %v415 = vunpack.c.l.b16 %v334
    %v416 = vunpack.c.h.b16 %v334
    %v417 = vunpack.c.l.b16 %v335
    %v418 = vunpack.c.h.b16 %v335
    %v419 = vunpack.c.l.b16 %v336
    %v420 = vunpack.c.h.b16 %v336
    %v421 = vunpack.c.l.b16 %v337
    %v422 = vunpack.c.h.b16 %v337
    %v423 = vunpack.c.l.b16 %v338
    %v424 = vunpack.c.h.b16 %v338
    %v425 = vunpack.c.l.b16 %v339
    %v426 = vunpack.c.h.b16 %v339
    %v427 = vunpack.c.l.b16 %v340
    %v428 = vunpack.c.h.b16 %v340
    %v429 = vunpack.c.l.b16 %v341
    %v430 = vunpack.c.h.b16 %v341
    %v431 = vunpack.c.l.b16 %v342
    %v432 = vunpack.c.h.b16 %v342
    %v433 = vunpack.c.l.b16 %v343
    %v434 = vunpack.c.h.b16 %v343
    %v435 = vunpack.c.l.b16 %v344
    %v436 = vunpack.c.h.b16 %v344
    %v437 = vunpack.c.l.b16 %v345
    %v438 = vunpack.c.h.b16 %v345
    %v439 = vunpack.c.l.b16 %v346
    %v440 = vunpack.c.h.b16 %v346
    %v441 = vunpack.c.l.b16 %v347
    %v442 = vunpack.c.h.b16 %v347
    %v443 = vunpack.c.l.b16 %v348
    %v444 = vunpack.c.h.b16 %v348
    %v445 = vunpack.c.l.b16 %v349
    %v446 = vunpack.c.h.b16 %v349
    %v447 = vunpack.c.l.b16 %v350
    %v448 = vunpack.c.h.b16 %v350
    %v449 = vunpack.c.l.b16 %v351
    %v450 = vunpack.c.h.b16 %v351
    %v451 = vunpack.c.l.b16 %v352
    %v452 = vunpack.c.h.b16 %v352
    %v453 = vunpack.c.l.b16 %v353
    %v454 = vunpack.c.h.b16 %v353
    %v455 = vunpack.c.l.b16 %v354
    %v456 = vunpack.c.h.b16 %v354
    %v457 = vunpack.c.l.b16 %v355
    %v458 = vunpack.c.h.b16 %v355
    %v459 = vunpack.c.l.b16 %v356
    %v460 = vunpack.c.h.b16 %v356
    %v461 = vunpack.c.l.b16 %v357
    %v462 = vunpack.c.h.b16 %v357
    %v463 = vunpack.c.l.b16 %v358
    %v464 = vunpack.c.h.b16 %v358
    %v465 = vunpack.c.l.b16 %v359
    %v466 = vunpack.c.h.b16 %v359
    %v467 = vunpack.c.l.b16 %v360
    %v468 = vunpack.c.h.b16 %v360
    %v469 = vpack.c.b16 %v407, %v405
    %v470 = vpack.c.b16 %v408, %v406
    %v471 = vpack.c.b16 %v411, %v409
    %v472 = vpack.c.b16 %v412, %v410
    %v473 = vpack.c.b16 %v415, %v413
    %v474 = vpack.c.b16 %v416, %v414
    %v475 = vpack.c.b16 %v419, %v417
    %v476 = vpack.c.b16 %v420, %v418
    %v477 = vpack.c.b16 %v423, %v421
    %v478 = vpack.c.b16 %v424, %v422
    %v479 = vpack.c.b16 %v427, %v425
    %v480 = vpack.c.b16 %v428, %v426
    %v481 = vpack.c.b16 %v431, %v429
    %v482 = vpack.c.b16 %v432, %v430
    %v483 = vpack.c.b16 %v435, %v433
    %v484 = vpack.c.b16 %v436, %v434
    %v485 = vpack.c.b16 %v439, %v437
    %v486 = vpack.c.b16 %v440, %v438
    %v487 = vpack.c.b16 %v443, %v441
    %v488 = vpack.c.b16 %v444, %v442
    %v489 = vpack.c.b16 %v447, %v445
    %v490 = vpack.c.b16 %v448, %v446
    %v491 = vpack.c.b16 %v451, %v449
    %v492 = vpack.c.b16 %v452, %v450
    %v493 = vpack.c.b16 %v455, %v453
    %v494 = vpack.c.b16 %v456, %v454
    %v495 = vpack.c.b16 %v459, %v457
    %v496 = vpack.c.b16 %v460, %v458
    %v497 = vpack.c.b16 %v463, %v461
    %v498 = vpack.c.b16 %v464, %v462
    %v499 = vpack.c.b16 %v467, %v465
    %v500 = vpack.c.b16 %v468, %v466
    %533 = vmatprep.subr.bf16.mxu0 %v484
    %534 = vmatpush1.bf16.msra.mxu0 %v483
    %535 = vmatprep.subr.bf16.mxu0 %v482
    %536 = vmatpush1.bf16.msra.mxu0 %v481
    %537 = vmatprep.subr.bf16.mxu0 %v480
    %538 = vmatpush1.bf16.msra.mxu0 %v479
    %539 = vmatprep.subr.bf16.mxu0 %v478
    %540 = vmatpush1.bf16.msra.mxu0 %v477
    %541 = vmatprep.subr.bf16.mxu0 %v476
    %542 = vmatpush1.bf16.msra.mxu0 %v475
    %543 = vmatprep.subr.bf16.mxu0 %v474
    %544 = vmatpush1.bf16.msra.mxu0 %v473
    %545 = vmatprep.subr.bf16.mxu0 %v472
    %546 = vmatpush1.bf16.msra.mxu0 %v471
    %547 = vmatprep.subr.bf16.mxu0 %v470
    %548 = vmatpush1.bf16.msra.mxu0 %v469
    %549 = vmatprep.subr.bf16.mxu0 %v500
    %550 = vmatpush2.bf16.msra.mxu0 %v499
    %551 = vmatprep.subr.bf16.mxu0 %v498
    %552 = vmatpush2.bf16.msra.mxu0 %v497
    %553 = vmatprep.subr.bf16.mxu0 %v496
    %554 = vmatpush2.bf16.msra.mxu0 %v495
    %555 = vmatprep.subr.bf16.mxu0 %v494
    %556 = vmatpush2.bf16.msra.mxu0 %v493
    %557 = vmatprep.subr.bf16.mxu0 %v492
    %558 = vmatpush2.bf16.msra.mxu0 %v491
    %559 = vmatprep.subr.bf16.mxu0 %v490
    %560 = vmatpush2.bf16.msra.mxu0 %v489
    %561 = vmatprep.subr.bf16.mxu0 %v488
    %562 = vmatpush2.bf16.msra.mxu0 %v487
    %563 = vmatprep.subr.bf16.mxu0 %v486
    %564 = vmatpush2.bf16.msra.mxu0 %v485
    %565 = vmatprep.mubr.bf16.mxu0 %v328
    %566 = vmatmul.mubr.bf16.gmra.mxu0 %v327
    %v567 = vpop.f32.mrf.mxu0
    %v568 = vadd.f32 %v366, %v567
    %v569 = vpop.f32.mrf.mxu0
    %v570 = vadd.f32 %v370, %v569
    %v571 = vpop.f32.mrf.mxu0
    %v572 = vpop.f32.mrf.mxu0
    %573 = vdwg.mxu0
    %v574 = vmax.f32 %v568, 0.0
    %v575 = vmax.f32 %v570, 0.0
    %v576 = vpack.c.bf16 %v574, %v574
    %v577 = vpack.c.bf16 %v575, %v575
    %v578 = vld [vmem:[#allocation10] sm:$0xff]
    %v579 = vld [vmem:[#allocation10 + $0x8] sm:$0xff]
    %v580 = vld [vmem:[#allocation10 + $0x10] sm:$0xff]
    %v581 = vld [vmem:[#allocation10 + $0x18] sm:$0xff]
    %v582 = vld [vmem:[#allocation10 + $0x20] sm:$0xff]
    %v583 = vld [vmem:[#allocation10 + $0x28] sm:$0xff]
    %v584 = vld [vmem:[#allocation10 + $0x30] sm:$0xff]
    %v585 = vld [vmem:[#allocation10 + $0x38] sm:$0xff]
    %v586 = vld [vmem:[#allocation10 + $0x40] sm:$0xff]
    %v587 = vld [vmem:[#allocation10 + $0x48] sm:$0xff]
    %v588 = vld [vmem:[#allocation10 + $0x50] sm:$0xff]
    %v589 = vld [vmem:[#allocation10 + $0x58] sm:$0xff]
    %v590 = vld [vmem:[#allocation10 + $0x60] sm:$0xff]
    %v591 = vld [vmem:[#allocation10 + $0x68] sm:$0xff]
    %v592 = vld [vmem:[#allocation10 + $0x70] sm:$0xff]
    %v593 = vld [vmem:[#allocation10 + $0x78] sm:$0xff]
    %v594 = vld [vmem:[#allocation10 + $0x80] sm:$0xff]
    %v595 = vld [vmem:[#allocation10 + $0x88] sm:$0xff]
    %v596 = vld [vmem:[#allocation10 + $0x90] sm:$0xff]
    %v597 = vld [vmem:[#allocation10 + $0x98] sm:$0xff]
    %v598 = vld [vmem:[#allocation10 + $0xa0] sm:$0xff]
    %v599 = vld [vmem:[#allocation10 + $0xa8] sm:$0xff]
    %v600 = vld [vmem:[#allocation10 + $0xb0] sm:$0xff]
    %v601 = vld [vmem:[#allocation10 + $0xb8] sm:$0xff]
    %v602 = vld [vmem:[#allocation10 + $0xc0] sm:$0xff]
    %v603 = vld [vmem:[#allocation10 + $0xc8] sm:$0xff]
    %v604 = vld [vmem:[#allocation10 + $0xd0] sm:$0xff]
    %v605 = vld [vmem:[#allocation10 + $0xd8] sm:$0xff]
    %v606 = vld [vmem:[#allocation10 + $0xe0] sm:$0xff]
    %v607 = vld [vmem:[#allocation10 + $0xe8] sm:$0xff]
    %v608 = vld [vmem:[#allocation10 + $0xf0] sm:$0xff]
    %v609 = vld [vmem:[#allocation10 + $0xf8] sm:$0xff]
    %v610 = vld [vmem:[#allocation12] sm:$0x3]
    %v612 = vlaneseq
    %v613 = vshrl.u32 %v612, 7
    %v614 = vsub.s32 0, %v613
    %v615 = vrot.slane %v610, %v614
    %v616 = vlaneseq
    %v617 = vshrl.u32 %v616, 7
    %v618 = vsub.s32 1, %v617
    %v619 = vrot.slane %v610, %v618
    %v654 = vunpack.c.l.b16 %v578
    %v655 = vunpack.c.h.b16 %v578
    %v656 = vunpack.c.l.b16 %v579
    %v657 = vunpack.c.h.b16 %v579
    %v658 = vunpack.c.l.b16 %v580
    %v659 = vunpack.c.h.b16 %v580
    %v660 = vunpack.c.l.b16 %v581
    %v661 = vunpack.c.h.b16 %v581
    %v662 = vunpack.c.l.b16 %v582
    %v663 = vunpack.c.h.b16 %v582
    %v664 = vunpack.c.l.b16 %v583
    %v665 = vunpack.c.h.b16 %v583
    %v666 = vunpack.c.l.b16 %v584
    %v667 = vunpack.c.h.b16 %v584
    %v668 = vunpack.c.l.b16 %v585
    %v669 = vunpack.c.h.b16 %v585
    %v670 = vunpack.c.l.b16 %v586
    %v671 = vunpack.c.h.b16 %v586
    %v672 = vunpack.c.l.b16 %v587
    %v673 = vunpack.c.h.b16 %v587
    %v674 = vunpack.c.l.b16 %v588
    %v675 = vunpack.c.h.b16 %v588
    %v676 = vunpack.c.l.b16 %v589
    %v677 = vunpack.c.h.b16 %v589
    %v678 = vunpack.c.l.b16 %v590
    %v679 = vunpack.c.h.b16 %v590
    %v680 = vunpack.c.l.b16 %v591
    %v681 = vunpack.c.h.b16 %v591
    %v682 = vunpack.c.l.b16 %v592
    %v683 = vunpack.c.h.b16 %v592
    %v684 = vunpack.c.l.b16 %v593
    %v685 = vunpack.c.h.b16 %v593
    %v686 = vunpack.c.l.b16 %v594
    %v687 = vunpack.c.h.b16 %v594
    %v688 = vunpack.c.l.b16 %v595
    %v689 = vunpack.c.h.b16 %v595
    %v690 = vunpack.c.l.b16 %v596
    %v691 = vunpack.c.h.b16 %v596
    %v692 = vunpack.c.l.b16 %v597
    %v693 = vunpack.c.h.b16 %v597
    %v694 = vunpack.c.l.b16 %v598
    %v695 = vunpack.c.h.b16 %v598
    %v696 = vunpack.c.l.b16 %v599
    %v697 = vunpack.c.h.b16 %v599
    %v698 = vunpack.c.l.b16 %v600
    %v699 = vunpack.c.h.b16 %v600
    %v700 = vunpack.c.l.b16 %v601
    %v701 = vunpack.c.h.b16 %v601
    %v702 = vunpack.c.l.b16 %v602
    %v703 = vunpack.c.h.b16 %v602
    %v704 = vunpack.c.l.b16 %v603
    %v705 = vunpack.c.h.b16 %v603
    %v706 = vunpack.c.l.b16 %v604
    %v707 = vunpack.c.h.b16 %v604
    %v708 = vunpack.c.l.b16 %v605
    %v709 = vunpack.c.h.b16 %v605
    %v710 = vunpack.c.l.b16 %v606
    %v711 = vunpack.c.h.b16 %v606
    %v712 = vunpack.c.l.b16 %v607
    %v713 = vunpack.c.h.b16 %v607
    %v714 = vunpack.c.l.b16 %v608
    %v715 = vunpack.c.h.b16 %v608
    %v716 = vunpack.c.l.b16 %v609
    %v717 = vunpack.c.h.b16 %v609
    %v718 = vpack.c.b16 %v656, %v654
    %v719 = vpack.c.b16 %v657, %v655
    %v720 = vpack.c.b16 %v660, %v658
    %v721 = vpack.c.b16 %v661, %v659
    %v722 = vpack.c.b16 %v664, %v662
    %v723 = vpack.c.b16 %v665, %v663
    %v724 = vpack.c.b16 %v668, %v666
    %v725 = vpack.c.b16 %v669, %v667
    %v726 = vpack.c.b16 %v672, %v670
    %v727 = vpack.c.b16 %v673, %v671
    %v728 = vpack.c.b16 %v676, %v674
    %v729 = vpack.c.b16 %v677, %v675
    %v730 = vpack.c.b16 %v680, %v678
    %v731 = vpack.c.b16 %v681, %v679
    %v732 = vpack.c.b16 %v684, %v682
    %v733 = vpack.c.b16 %v685, %v683
    %v734 = vpack.c.b16 %v688, %v686
    %v735 = vpack.c.b16 %v689, %v687
    %v736 = vpack.c.b16 %v692, %v690
    %v737 = vpack.c.b16 %v693, %v691
    %v738 = vpack.c.b16 %v696, %v694
    %v739 = vpack.c.b16 %v697, %v695
    %v740 = vpack.c.b16 %v700, %v698
    %v741 = vpack.c.b16 %v701, %v699
    %v742 = vpack.c.b16 %v704, %v702
    %v743 = vpack.c.b16 %v705, %v703
    %v744 = vpack.c.b16 %v708, %v706
    %v745 = vpack.c.b16 %v709, %v707
    %v746 = vpack.c.b16 %v712, %v710
    %v747 = vpack.c.b16 %v713, %v711
    %v748 = vpack.c.b16 %v716, %v714
    %v749 = vpack.c.b16 %v717, %v715
    %782 = vmatprep.subr.bf16.mxu0 %v733
    %783 = vmatpush1.bf16.msra.mxu0 %v732
    %784 = vmatprep.subr.bf16.mxu0 %v731
    %785 = vmatpush1.bf16.msra.mxu0 %v730
    %786 = vmatprep.subr.bf16.mxu0 %v729
    %787 = vmatpush1.bf16.msra.mxu0 %v728
    %788 = vmatprep.subr.bf16.mxu0 %v727
    %789 = vmatpush1.bf16.msra.mxu0 %v726
    %790 = vmatprep.subr.bf16.mxu0 %v725
    %791 = vmatpush1.bf16.msra.mxu0 %v724
    %792 = vmatprep.subr.bf16.mxu0 %v723
    %793 = vmatpush1.bf16.msra.mxu0 %v722
    %794 = vmatprep.subr.bf16.mxu0 %v721
    %795 = vmatpush1.bf16.msra.mxu0 %v720
    %796 = vmatprep.subr.bf16.mxu0 %v719
    %797 = vmatpush1.bf16.msra.mxu0 %v718
    %798 = vmatprep.subr.bf16.mxu0 %v749
    %799 = vmatpush2.bf16.msra.mxu0 %v748
    %800 = vmatprep.subr.bf16.mxu0 %v747
    %801 = vmatpush2.bf16.msra.mxu0 %v746
    %802 = vmatprep.subr.bf16.mxu0 %v745
    %803 = vmatpush2.bf16.msra.mxu0 %v744
    %804 = vmatprep.subr.bf16.mxu0 %v743
    %805 = vmatpush2.bf16.msra.mxu0 %v742
    %806 = vmatprep.subr.bf16.mxu0 %v741
    %807 = vmatpush2.bf16.msra.mxu0 %v740
    %808 = vmatprep.subr.bf16.mxu0 %v739
    %809 = vmatpush2.bf16.msra.mxu0 %v738
    %810 = vmatprep.subr.bf16.mxu0 %v737
    %811 = vmatpush2.bf16.msra.mxu0 %v736
    %812 = vmatprep.subr.bf16.mxu0 %v735
    %813 = vmatpush2.bf16.msra.mxu0 %v734
    %814 = vmatprep.mubr.bf16.mxu0 %v577
    %815 = vmatmul.mubr.bf16.gmra.mxu0 %v576
    %v816 = vpop.f32.mrf.mxu0
    %v817 = vadd.f32 %v615, %v816
    %v818 = vpop.f32.mrf.mxu0
    %v819 = vadd.f32 %v619, %v818
    %v820 = vpop.f32.mrf.mxu0
    %v821 = vpop.f32.mrf.mxu0
    %822 = vdwg.mxu0
    %v823 = vld [vmem:[%s7] sm:$0xff]
    %v824 = vld [vmem:[%s7 + $0x8] sm:$0xff]
    %v825 = vld [vmem:[%s7 + $0x10] sm:$0xff]
    %v826 = vld [vmem:[%s7 + $0x18] sm:$0xff]
    %v827 = vld [vmem:[%s7 + $0x20] sm:$0xff]
    %v828 = vld [vmem:[%s7 + $0x28] sm:$0xff]
    %v829 = vld [vmem:[%s7 + $0x30] sm:$0xff]
    %v830 = vld [vmem:[%s7 + $0x38] sm:$0xff]
    %v831 = vld [vmem:[%s7 + $0x40] sm:$0xff]
    %v832 = vld [vmem:[%s7 + $0x48] sm:$0xff]
    %v833 = vld [vmem:[%s7 + $0x50] sm:$0xff]
    %v834 = vld [vmem:[%s7 + $0x58] sm:$0xff]
    %v835 = vld [vmem:[%s7 + $0x60] sm:$0xff]
    %v836 = vld [vmem:[%s7 + $0x68] sm:$0xff]
    %v837 = vld [vmem:[%s7 + $0x70] sm:$0xff]
    %v838 = vld [vmem:[%s7 + $0x78] sm:$0xff]
    %v839 = vld [vmem:[%s7 + $0x80] sm:$0xff]
    %v840 = vld [vmem:[%s7 + $0x88] sm:$0xff]
    %v841 = vld [vmem:[%s7 + $0x90] sm:$0xff]
    %v842 = vld [vmem:[%s7 + $0x98] sm:$0xff]
    %v843 = vld [vmem:[%s7 + $0xa0] sm:$0xff]
    %v844 = vld [vmem:[%s7 + $0xa8] sm:$0xff]
    %v845 = vld [vmem:[%s7 + $0xb0] sm:$0xff]
    %v846 = vld [vmem:[%s7 + $0xb8] sm:$0xff]
    %v847 = vld [vmem:[%s7 + $0xc0] sm:$0xff]
    %v848 = vld [vmem:[%s7 + $0xc8] sm:$0xff]
    %v849 = vld [vmem:[%s7 + $0xd0] sm:$0xff]
    %v850 = vld [vmem:[%s7 + $0xd8] sm:$0xff]
    %v851 = vld [vmem:[%s7 + $0xe0] sm:$0xff]
    %v852 = vld [vmem:[%s7 + $0xe8] sm:$0xff]
    %v853 = vld [vmem:[%s7 + $0xf0] sm:$0xff]
    %v854 = vld [vmem:[%s7 + $0xf8] sm:$0xff]
    %v855 = vld [vmem:[#allocation13] sm:$0xff]
    %v856 = vld [vmem:[#allocation13 + $0x8] sm:$0xff]
    %v857 = vld [vmem:[#allocation13 + $0x10] sm:$0xff]
    %v858 = vld [vmem:[#allocation13 + $0x18] sm:$0xff]
    %v859 = vld [vmem:[#allocation13 + $0x20] sm:$0xff]
    %v860 = vld [vmem:[#allocation13 + $0x28] sm:$0xff]
    %v861 = vld [vmem:[#allocation13 + $0x30] sm:$0xff]
    %v862 = vld [vmem:[#allocation13 + $0x38] sm:$0xff]
    %v863 = vld [vmem:[#allocation13 + $0x40] sm:$0xff]
    %v864 = vld [vmem:[#allocation13 + $0x48] sm:$0xff]
    %v865 = vld [vmem:[#allocation13 + $0x50] sm:$0xff]
    %v866 = vld [vmem:[#allocation13 + $0x58] sm:$0xff]
    %v867 = vld [vmem:[#allocation13 + $0x60] sm:$0xff]
    %v868 = vld [vmem:[#allocation13 + $0x68] sm:$0xff]
    %v869 = vld [vmem:[#allocation13 + $0x70] sm:$0xff]
    %v870 = vld [vmem:[#allocation13 + $0x78] sm:$0xff]
    %v871 = vld [vmem:[#allocation15] sm:$0x1]
    %v872 = vld [vmem:[#allocation16] sm:$0x1]
    %vm873 = vcmask 1041408
    %v874 = vsel %vm873, %v817, 0.0
    %v875 = vrot.slane %v874, 4
    %v876 = vadd.f32 %v874, %v875
    %v877 = vrot.slane %v876, 2
    %v878 = vadd.f32 %v876, %v877
    %v879 = vrot.slane %v878, 1
    %v880 = vadd.f32 %v878, %v879
    %v881 = vsel %vm873, %v819, 0.0
    %v882 = vrot.slane %v881, 4
    %v883 = vadd.f32 %v881, %v882
    %v884 = vrot.slane %v883, 2
    %v885 = vadd.f32 %v883, %v884
    %v886 = vrot.slane %v885, 1
    %v887 = vadd.f32 %v885, %v886
    %888 = vmatprep.subr.mxu0 0.0
    %889 = vmatpush1.msra.mxu0 %v838
    %890 = vmatprep.subr.mxu0 0.0
    %891 = vmatpush1.msra.mxu0 %v837
    %892 = vmatprep.subr.mxu0 0.0
    %893 = vmatpush1.msra.mxu0 %v836
    %894 = vmatprep.subr.mxu0 0.0
    %895 = vmatpush1.msra.mxu0 %v835
    %896 = vmatprep.subr.mxu0 0.0
    %897 = vmatpush1.msra.mxu0 %v834
    %898 = vmatprep.subr.mxu0 0.0
    %899 = vmatpush1.msra.mxu0 %v833
    %900 = vmatprep.subr.mxu0 0.0
    %901 = vmatpush1.msra.mxu0 %v832
    %902 = vmatprep.subr.mxu0 0.0
    %903 = vmatpush1.msra.mxu0 %v831
    %904 = vmatprep.subr.mxu0 0.0
    %905 = vmatpush1.msra.mxu0 %v830
    %906 = vmatprep.subr.mxu0 0.0
    %907 = vmatpush1.msra.mxu0 %v829
    %908 = vmatprep.subr.mxu0 0.0
    %909 = vmatpush1.msra.mxu0 %v828
    %910 = vmatprep.subr.mxu0 0.0
    %911 = vmatpush1.msra.mxu0 %v827
    %912 = vmatprep.subr.mxu0 0.0
    %913 = vmatpush1.msra.mxu0 %v826
    %914 = vmatprep.subr.mxu0 0.0
    %915 = vmatpush1.msra.mxu0 %v825
    %916 = vmatprep.subr.mxu0 0.0
    %917 = vmatpush1.msra.mxu0 %v824
    %918 = vmatprep.subr.mxu0 0.0
    %919 = vmatpush1.msra.mxu0 %v823
    %920 = vmatprep.subr.mxu0 0.0
    %921 = vmatpush2.msra.mxu0 %v854
    %922 = vmatprep.subr.mxu0 0.0
    %923 = vmatpush2.msra.mxu0 %v853
    %924 = vmatprep.subr.mxu0 0.0
    %925 = vmatpush2.msra.mxu0 %v852
    %926 = vmatprep.subr.mxu0 0.0
    %927 = vmatpush2.msra.mxu0 %v851
    %928 = vmatprep.subr.mxu0 0.0
    %929 = vmatpush2.msra.mxu0 %v850
    %930 = vmatprep.subr.mxu0 0.0
    %931 = vmatpush2.msra.mxu0 %v849
    %932 = vmatprep.subr.mxu0 0.0
    %933 = vmatpush2.msra.mxu0 %v848
    %934 = vmatprep.subr.mxu0 0.0
    %935 = vmatpush2.msra.mxu0 %v847
    %936 = vmatprep.subr.mxu0 0.0
    %937 = vmatpush2.msra.mxu0 %v846
    %938 = vmatprep.subr.mxu0 0.0
    %939 = vmatpush2.msra.mxu0 %v845
    %940 = vmatprep.subr.mxu0 0.0
    %941 = vmatpush2.msra.mxu0 %v844
    %942 = vmatprep.subr.mxu0 0.0
    %943 = vmatpush2.msra.mxu0 %v843
    %944 = vmatprep.subr.mxu0 0.0
    %945 = vmatpush2.msra.mxu0 %v842
    %946 = vmatprep.subr.mxu0 0.0
    %947 = vmatpush2.msra.mxu0 %v841
    %948 = vmatprep.subr.mxu0 0.0
    %949 = vmatpush2.msra.mxu0 %v840
    %950 = vmatprep.subr.mxu0 0.0
    %951 = vmatpush2.msra.mxu0 %v839
    %952 = vmatprep.mubr.f32.mxu0 %v887
    %953 = vmatmul.mubr.f32.gmra.mxu0 %v880
    %v954 = vpop.f32.mrf.mxu0
    %v955 = vadd.f32 0.0, %v954
    %v956 = vpop.f32.mrf.mxu0
    %957 = vdwg.mxu0
    %v958 = vrcp.pop 8.0
    %v959 = vmul.f32 %v955, %v958
    %vm960 = vcmask 523264
    %v962 = vsel %vm960, %v959, 0
    %964 = vmatprep.subr.mxu0 0.0
    %965 = vmatpush1.msra.mxu0 0.0
    %966 = vmatprep.subr.mxu0 0.0
    %967 = vmatpush1.msra.mxu0 0.0
    %968 = vmatprep.subr.mxu0 0.0
    %969 = vmatpush1.msra.mxu0 0.0
    %970 = vmatprep.subr.mxu0 0.0
    %971 = vmatpush1.msra.mxu0 0.0
    %972 = vmatprep.subr.mxu0 0.0
    %973 = vmatpush1.msra.mxu0 0.0
    %974 = vmatprep.subr.mxu0 0.0
    %975 = vmatpush1.msra.mxu0 0.0
    %976 = vmatprep.subr.mxu0 0.0
    %977 = vmatpush1.msra.mxu0 0.0
    %978 = vmatprep.subr.mxu0 0.0
    %979 = vmatpush1.msra.mxu0 0.0
    %980 = vmatprep.subr.mxu0 %v870
    %981 = vmatpush1.msra.mxu0 %v869
    %982 = vmatprep.subr.mxu0 %v868
    %983 = vmatpush1.msra.mxu0 %v867
    %984 = vmatprep.subr.mxu0 %v866
    %985 = vmatpush1.msra.mxu0 %v865
    %986 = vmatprep.subr.mxu0 %v864
    %987 = vmatpush1.msra.mxu0 %v863
    %988 = vmatprep.subr.mxu0 %v862
    %989 = vmatpush1.msra.mxu0 %v861
    %990 = vmatprep.subr.mxu0 %v860
    %991 = vmatpush1.msra.mxu0 %v859
    %992 = vmatprep.subr.mxu0 %v858
    %993 = vmatpush1.msra.mxu0 %v857
    %994 = vmatprep.subr.mxu0 %v856
    %995 = vmatpush1.msra.mxu0 %v855
    %996 = vmatprep.subr.mxu0 0.0
    %997 = vmatpush2.msra.mxu0 0.0
    %998 = vmatprep.subr.mxu0 0.0
    %999 = vmatpush2.msra.mxu0 0.0
    %1000 = vmatprep.subr.mxu0 0.0
    %1001 = vmatpush2.msra.mxu0 0.0
    %1002 = vmatprep.subr.mxu0 0.0
    %1003 = vmatpush2.msra.mxu0 0.0
    %1004 = vmatprep.subr.mxu0 0.0
    %1005 = vmatpush2.msra.mxu0 0.0
    %1006 = vmatprep.subr.mxu0 0.0
    %1007 = vmatpush2.msra.mxu0 0.0
    %1008 = vmatprep.subr.mxu0 0.0
    %1009 = vmatpush2.msra.mxu0 0.0
    %1010 = vmatprep.subr.mxu0 0.0
    %1011 = vmatpush2.msra.mxu0 0.0
    %1012 = vmatprep.subr.mxu0 0.0
    %1013 = vmatpush2.msra.mxu0 0.0
    %1014 = vmatprep.subr.mxu0 0.0
    %1015 = vmatpush2.msra.mxu0 0.0
    %1016 = vmatprep.subr.mxu0 0.0
    %1017 = vmatpush2.msra.mxu0 0.0
    %1018 = vmatprep.subr.mxu0 0.0
    %1019 = vmatpush2.msra.mxu0 0.0
    %1020 = vmatprep.subr.mxu0 0.0
    %1021 = vmatpush2.msra.mxu0 0.0
    %1022 = vmatprep.subr.mxu0 0.0
    %1023 = vmatpush2.msra.mxu0 0.0
    %1024 = vmatprep.subr.mxu0 0.0
    %1025 = vmatpush2.msra.mxu0 0.0
    %1026 = vmatprep.subr.mxu0 0.0
    %1027 = vmatpush2.msra.mxu0 0.0
    %1028 = vmatprep.mubr.f32.mxu0 0.0
    %1029 = vmatmul.mubr.f32.gmra.mxu0 %v962
    %v1030 = vpop.f32.mrf.mxu0
    %v1031 = vadd.f32 0.0, %v1030
    %v1032 = vpop.f32.mrf.mxu0
    %v1033 = vadd.f32 0.0, %v1032
    %1034 = vdwg.mxu0
    %v1035 = vlaneseq
    %v1036 = vshrl.u32 %v1035, 7
    %v1037 = vsub.s32 0, %v1036
    %v1038 = vrot.slane %v1031, %v1037
    %v1039 = vlaneseq
    %v1040 = vshrl.u32 %v1039, 7
    %v1041 = vsub.s32 0, %v1040
    %v1042 = vrot.slane %v1033, %v1041
    %v1043 = vsub.f32 %v817, %v1038
    %v1044 = vsub.f32 %v819, %v1042
    %v1045 = vmul.f32 %v1043, %v1043
    %v1046 = vmul.f32 %v1044, %v1044
    %v1047 = vsel %vm873, %v1045, 0.0
    %v1048 = vrot.slane %v1047, 4
    %v1049 = vadd.f32 %v1047, %v1048
    %v1050 = vrot.slane %v1049, 2
    %v1051 = vadd.f32 %v1049, %v1050
    %v1052 = vrot.slane %v1051, 1
    %v1053 = vadd.f32 %v1051, %v1052
    %v1054 = vsel %vm873, %v1046, 0.0
    %v1055 = vrot.slane %v1054, 4
    %v1056 = vadd.f32 %v1054, %v1055
    %v1057 = vrot.slane %v1056, 2
    %v1058 = vadd.f32 %v1056, %v1057
    %v1059 = vrot.slane %v1058, 1
    %v1060 = vadd.f32 %v1058, %v1059
    %1061 = vmatprep.subr.mxu0 0.0
    %1062 = vmatpush1.msra.mxu0 %v838
    %1063 = vmatprep.subr.mxu0 0.0
    %1064 = vmatpush1.msra.mxu0 %v837
    %1065 = vmatprep.subr.mxu0 0.0
    %1066 = vmatpush1.msra.mxu0 %v836
    %1067 = vmatprep.subr.mxu0 0.0
    %1068 = vmatpush1.msra.mxu0 %v835
    %1069 = vmatprep.subr.mxu0 0.0
    %1070 = vmatpush1.msra.mxu0 %v834
    %1071 = vmatprep.subr.mxu0 0.0
    %1072 = vmatpush1.msra.mxu0 %v833
    %1073 = vmatprep.subr.mxu0 0.0
    %1074 = vmatpush1.msra.mxu0 %v832
    %1075 = vmatprep.subr.mxu0 0.0
    %1076 = vmatpush1.msra.mxu0 %v831
    %1077 = vmatprep.subr.mxu0 0.0
    %1078 = vmatpush1.msra.mxu0 %v830
    %1079 = vmatprep.subr.mxu0 0.0
    %1080 = vmatpush1.msra.mxu0 %v829
    %1081 = vmatprep.subr.mxu0 0.0
    %1082 = vmatpush1.msra.mxu0 %v828
    %1083 = vmatprep.subr.mxu0 0.0
    %1084 = vmatpush1.msra.mxu0 %v827
    %1085 = vmatprep.subr.mxu0 0.0
    %1086 = vmatpush1.msra.mxu0 %v826
    %1087 = vmatprep.subr.mxu0 0.0
    %1088 = vmatpush1.msra.mxu0 %v825
    %1089 = vmatprep.subr.mxu0 0.0
    %1090 = vmatpush1.msra.mxu0 %v824
    %1091 = vmatprep.subr.mxu0 0.0
    %1092 = vmatpush1.msra.mxu0 %v823
    %1093 = vmatprep.subr.mxu0 0.0
    %1094 = vmatpush2.msra.mxu0 %v854
    %1095 = vmatprep.subr.mxu0 0.0
    %1096 = vmatpush2.msra.mxu0 %v853
    %1097 = vmatprep.subr.mxu0 0.0
    %1098 = vmatpush2.msra.mxu0 %v852
    %1099 = vmatprep.subr.mxu0 0.0
    %1100 = vmatpush2.msra.mxu0 %v851
    %1101 = vmatprep.subr.mxu0 0.0
    %1102 = vmatpush2.msra.mxu0 %v850
    %1103 = vmatprep.subr.mxu0 0.0
    %1104 = vmatpush2.msra.mxu0 %v849
    %1105 = vmatprep.subr.mxu0 0.0
    %1106 = vmatpush2.msra.mxu0 %v848
    %1107 = vmatprep.subr.mxu0 0.0
    %1108 = vmatpush2.msra.mxu0 %v847
    %1109 = vmatprep.subr.mxu0 0.0
    %1110 = vmatpush2.msra.mxu0 %v846
    %1111 = vmatprep.subr.mxu0 0.0
    %1112 = vmatpush2.msra.mxu0 %v845
    %1113 = vmatprep.subr.mxu0 0.0
    %1114 = vmatpush2.msra.mxu0 %v844
    %1115 = vmatprep.subr.mxu0 0.0
    %1116 = vmatpush2.msra.mxu0 %v843
    %1117 = vmatprep.subr.mxu0 0.0
    %1118 = vmatpush2.msra.mxu0 %v842
    %1119 = vmatprep.subr.mxu0 0.0
    %1120 = vmatpush2.msra.mxu0 %v841
    %1121 = vmatprep.subr.mxu0 0.0
    %1122 = vmatpush2.msra.mxu0 %v840
    %1123 = vmatprep.subr.mxu0 0.0
    %1124 = vmatpush2.msra.mxu0 %v839
    %1125 = vmatprep.mubr.f32.mxu0 %v1060
    %1126 = vmatmul.mubr.f32.gmra.mxu0 %v1053
    %v1127 = vpop.f32.mrf.mxu0
    %v1128 = vadd.f32 0.0, %v1127
    %v1129 = vpop.f32.mrf.mxu0
    %1130 = vdwg.mxu0
    %v1131 = vmul.f32 %v1128, %v958
    %v1132 = vadd.f32 %v1131, 1e-05
    %v1133 = vrsqrt.pop %v1132
    %v1134 = vmul.f32 %v871, %v1133
    %v1136 = vsel %vm960, %v1134, 0
    %1138 = vmatprep.subr.mxu0 0.0
    %1139 = vmatpush1.msra.mxu0 0.0
    %1140 = vmatprep.subr.mxu0 0.0
    %1141 = vmatpush1.msra.mxu0 0.0
    %1142 = vmatprep.subr.mxu0 0.0
    %1143 = vmatpush1.msra.mxu0 0.0
    %1144 = vmatprep.subr.mxu0 0.0
    %1145 = vmatpush1.msra.mxu0 0.0
    %1146 = vmatprep.subr.mxu0 0.0
    %1147 = vmatpush1.msra.mxu0 0.0
    %1148 = vmatprep.subr.mxu0 0.0
    %1149 = vmatpush1.msra.mxu0 0.0
    %1150 = vmatprep.subr.mxu0 0.0
    %1151 = vmatpush1.msra.mxu0 0.0
    %1152 = vmatprep.subr.mxu0 0.0
    %1153 = vmatpush1.msra.mxu0 0.0
    %1154 = vmatprep.subr.mxu0 %v870
    %1155 = vmatpush1.msra.mxu0 %v869
    %1156 = vmatprep.subr.mxu0 %v868
    %1157 = vmatpush1.msra.mxu0 %v867
    %1158 = vmatprep.subr.mxu0 %v866
    %1159 = vmatpush1.msra.mxu0 %v865
    %1160 = vmatprep.subr.mxu0 %v864
    %1161 = vmatpush1.msra.mxu0 %v863
    %1162 = vmatprep.subr.mxu0 %v862
    %1163 = vmatpush1.msra.mxu0 %v861
    %1164 = vmatprep.subr.mxu0 %v860
    %1165 = vmatpush1.msra.mxu0 %v859
    %1166 = vmatprep.subr.mxu0 %v858
    %1167 = vmatpush1.msra.mxu0 %v857
    %1168 = vmatprep.subr.mxu0 %v856
    %1169 = vmatpush1.msra.mxu0 %v855
    %1170 = vmatprep.subr.mxu0 0.0
    %1171 = vmatpush2.msra.mxu0 0.0
    %1172 = vmatprep.subr.mxu0 0.0
    %1173 = vmatpush2.msra.mxu0 0.0
    %1174 = vmatprep.subr.mxu0 0.0
    %1175 = vmatpush2.msra.mxu0 0.0
    %1176 = vmatprep.subr.mxu0 0.0
    %1177 = vmatpush2.msra.mxu0 0.0
    %1178 = vmatprep.subr.mxu0 0.0
    %1179 = vmatpush2.msra.mxu0 0.0
    %1180 = vmatprep.subr.mxu0 0.0
    %1181 = vmatpush2.msra.mxu0 0.0
    %1182 = vmatprep.subr.mxu0 0.0
    %1183 = vmatpush2.msra.mxu0 0.0
    %1184 = vmatprep.subr.mxu0 0.0
    %1185 = vmatpush2.msra.mxu0 0.0
    %1186 = vmatprep.subr.mxu0 0.0
    %1187 = vmatpush2.msra.mxu0 0.0
    %1188 = vmatprep.subr.mxu0 0.0
    %1189 = vmatpush2.msra.mxu0 0.0
    %1190 = vmatprep.subr.mxu0 0.0
    %1191 = vmatpush2.msra.mxu0 0.0
    %1192 = vmatprep.subr.mxu0 0.0
    %1193 = vmatpush2.msra.mxu0 0.0
    %1194 = vmatprep.subr.mxu0 0.0
    %1195 = vmatpush2.msra.mxu0 0.0
    %1196 = vmatprep.subr.mxu0 0.0
    %1197 = vmatpush2.msra.mxu0 0.0
    %1198 = vmatprep.subr.mxu0 0.0
    %1199 = vmatpush2.msra.mxu0 0.0
    %1200 = vmatprep.subr.mxu0 0.0
    %1201 = vmatpush2.msra.mxu0 0.0
    %1202 = vmatprep.mubr.f32.mxu0 0.0
    %1203 = vmatmul.mubr.f32.gmra.mxu0 %v1136
    %v1204 = vpop.f32.mrf.mxu0
    %v1205 = vadd.f32 0.0, %v1204
    %v1206 = vpop.f32.mrf.mxu0
    %v1207 = vadd.f32 0.0, %v1206
    %1208 = vdwg.mxu0
    %v1209 = vlaneseq
    %v1210 = vshrl.u32 %v1209, 7
    %v1211 = vsub.s32 0, %v1210
    %v1212 = vrot.slane %v1205, %v1211
    %v1213 = vlaneseq
    %v1214 = vshrl.u32 %v1213, 7
    %v1215 = vsub.s32 0, %v1214
    %v1216 = vrot.slane %v1207, %v1215
    %v1217 = vmul.f32 %v1043, %v1212
    %v1218 = vmul.f32 %v1044, %v1216
    %v1220 = vsel %vm960, %v872, 0
    %1222 = vmatprep.subr.mxu0 0.0
    %1223 = vmatpush1.msra.mxu0 0.0
    %1224 = vmatprep.subr.mxu0 0.0
    %1225 = vmatpush1.msra.mxu0 0.0
    %1226 = vmatprep.subr.mxu0 0.0
    %1227 = vmatpush1.msra.mxu0 0.0
    %1228 = vmatprep.subr.mxu0 0.0
    %1229 = vmatpush1.msra.mxu0 0.0
    %1230 = vmatprep.subr.mxu0 0.0
    %1231 = vmatpush1.msra.mxu0 0.0
    %1232 = vmatprep.subr.mxu0 0.0
    %1233 = vmatpush1.msra.mxu0 0.0
    %1234 = vmatprep.subr.mxu0 0.0
    %1235 = vmatpush1.msra.mxu0 0.0
    %1236 = vmatprep.subr.mxu0 0.0
    %1237 = vmatpush1.msra.mxu0 0.0
    %1238 = vmatprep.subr.mxu0 %v870
    %1239 = vmatpush1.msra.mxu0 %v869
    %1240 = vmatprep.subr.mxu0 %v868
    %1241 = vmatpush1.msra.mxu0 %v867
    %1242 = vmatprep.subr.mxu0 %v866
    %1243 = vmatpush1.msra.mxu0 %v865
    %1244 = vmatprep.subr.mxu0 %v864
    %1245 = vmatpush1.msra.mxu0 %v863
    %1246 = vmatprep.subr.mxu0 %v862
    %1247 = vmatpush1.msra.mxu0 %v861
    %1248 = vmatprep.subr.mxu0 %v860
    %1249 = vmatpush1.msra.mxu0 %v859
    %1250 = vmatprep.subr.mxu0 %v858
    %1251 = vmatpush1.msra.mxu0 %v857
    %1252 = vmatprep.subr.mxu0 %v856
    %1253 = vmatpush1.msra.mxu0 %v855
    %1254 = vmatprep.subr.mxu0 0.0
    %1255 = vmatpush2.msra.mxu0 0.0
    %1256 = vmatprep.subr.mxu0 0.0
    %1257 = vmatpush2.msra.mxu0 0.0
    %1258 = vmatprep.subr.mxu0 0.0
    %1259 = vmatpush2.msra.mxu0 0.0
    %1260 = vmatprep.subr.mxu0 0.0
    %1261 = vmatpush2.msra.mxu0 0.0
    %1262 = vmatprep.subr.mxu0 0.0
    %1263 = vmatpush2.msra.mxu0 0.0
    %1264 = vmatprep.subr.mxu0 0.0
    %1265 = vmatpush2.msra.mxu0 0.0
    %1266 = vmatprep.subr.mxu0 0.0
    %1267 = vmatpush2.msra.mxu0 0.0
    %1268 = vmatprep.subr.mxu0 0.0
    %1269 = vmatpush2.msra.mxu0 0.0
    %1270 = vmatprep.subr.mxu0 0.0
    %1271 = vmatpush2.msra.mxu0 0.0
    %1272 = vmatprep.subr.mxu0 0.0
    %1273 = vmatpush2.msra.mxu0 0.0
    %1274 = vmatprep.subr.mxu0 0.0
    %1275 = vmatpush2.msra.mxu0 0.0
    %1276 = vmatprep.subr.mxu0 0.0
    %1277 = vmatpush2.msra.mxu0 0.0
    %1278 = vmatprep.subr.mxu0 0.0
    %1279 = vmatpush2.msra.mxu0 0.0
    %1280 = vmatprep.subr.mxu0 0.0
    %1281 = vmatpush2.msra.mxu0 0.0
    %1282 = vmatprep.subr.mxu0 0.0
    %1283 = vmatpush2.msra.mxu0 0.0
    %1284 = vmatprep.subr.mxu0 0.0
    %1285 = vmatpush2.msra.mxu0 0.0
    %1286 = vmatprep.mubr.f32.mxu0 0.0
    %1287 = vmatmul.mubr.f32.gmra.mxu0 %v1220
    %v1288 = vpop.f32.mrf.mxu0
    %v1289 = vadd.f32 0.0, %v1288
    %v1290 = vpop.f32.mrf.mxu0
    %v1291 = vadd.f32 0.0, %v1290
    %1292 = vdwg.mxu0
    %v1293 = vlaneseq
    %v1294 = vshrl.u32 %v1293, 7
    %v1295 = vsub.s32 0, %v1294
    %v1296 = vrot.slane %v1289, %v1295
    %v1297 = vlaneseq
    %v1298 = vshrl.u32 %v1297, 7
    %v1299 = vsub.s32 0, %v1298
    %v1300 = vrot.slane %v1291, %v1299
    %v1301 = vadd.f32 %v1217, %v1296
    %v1302 = vadd.f32 %v1218, %v1300
    %v1303 = vpack.c.bf16 %v1301, %v1301
    %v1304 = vpack.c.bf16 %v1302, %v1302
    %v1305 = vld [vmem:[#allocation18] sm:$0xff]
    %v1306 = vld [vmem:[#allocation18 + $0x8] sm:$0xff]
    %v1307 = vld [vmem:[#allocation18 + $0x10] sm:$0xff]
    %v1308 = vld [vmem:[#allocation18 + $0x18] sm:$0xff]
    %v1309 = vld [vmem:[#allocation18 + $0x20] sm:$0xf]
    %v1310 = vld [vmem:[#allocation18 + $0x24] sm:$0xff]
    %v1311 = vld [vmem:[#allocation18 + $0x2c] sm:$0xff]
    %v1312 = vld [vmem:[#allocation18 + $0x34] sm:$0xff]
    %v1313 = vld [vmem:[#allocation18 + $0x3c] sm:$0xff]
    %v1314 = vld [vmem:[#allocation18 + $0x44] sm:$0xf]
    %v1315 = vld [vmem:[#allocation18 + $0x48] sm:$0xff]
    %v1316 = vld [vmem:[#allocation18 + $0x50] sm:$0xff]
    %v1317 = vld [vmem:[#allocation18 + $0x58] sm:$0xff]
    %v1318 = vld [vmem:[#allocation18 + $0x60] sm:$0xff]
    %v1319 = vld [vmem:[#allocation18 + $0x68] sm:$0xf]
    %v1320 = vld [vmem:[#allocation18 + $0x6c] sm:$0xff]
    %v1321 = vld [vmem:[#allocation18 + $0x74] sm:$0xff]
    %v1322 = vld [vmem:[#allocation18 + $0x7c] sm:$0xff]
    %v1323 = vld [vmem:[#allocation18 + $0x84] sm:$0xff]
    %v1324 = vld [vmem:[#allocation18 + $0x8c] sm:$0xf]
    %v1325 = vld [vmem:[#allocation18 + $0x90] sm:$0xff]
    %v1326 = vld [vmem:[#allocation18 + $0x98] sm:$0xff]
    %v1327 = vld [vmem:[#allocation18 + $0xa0] sm:$0xff]
    %v1328 = vld [vmem:[#allocation18 + $0xa8] sm:$0xff]
    %v1329 = vld [vmem:[#allocation18 + $0xb0] sm:$0xf]
    %v1330 = vld [vmem:[#allocation18 + $0xb4] sm:$0xff]
    %v1331 = vld [vmem:[#allocation18 + $0xbc] sm:$0xff]
    %v1332 = vld [vmem:[#allocation18 + $0xc4] sm:$0xff]
    %v1333 = vld [vmem:[#allocation18 + $0xcc] sm:$0xff]
    %v1334 = vld [vmem:[#allocation18 + $0xd4] sm:$0xf]
    %v1335 = vld [vmem:[#allocation18 + $0xd8] sm:$0xff]
    %v1336 = vld [vmem:[#allocation18 + $0xe0] sm:$0xff]
    %v1337 = vld [vmem:[#allocation18 + $0xe8] sm:$0xff]
    %v1338 = vld [vmem:[#allocation18 + $0xf0] sm:$0xff]
    %v1339 = vld [vmem:[#allocation18 + $0xf8] sm:$0xf]
    %v1340 = vld [vmem:[#allocation18 + $0xfc] sm:$0xff]
    %v1341 = vld [vmem:[#allocation18 + $0x104] sm:$0xff]
    %v1342 = vld [vmem:[#allocation18 + $0x10c] sm:$0xff]
    %v1343 = vld [vmem:[#allocation18 + $0x114] sm:$0xff]
    %v1344 = vld [vmem:[#allocation18 + $0x11c] sm:$0xf]
    %v1345 = vld [vmem:[#allocation18 + $0x120] sm:$0xff]
    %v1346 = vld [vmem:[#allocation18 + $0x128] sm:$0xff]
    %v1347 = vld [vmem:[#allocation18 + $0x130] sm:$0xff]
    %v1348 = vld [vmem:[#allocation18 + $0x138] sm:$0xff]
    %v1349 = vld [vmem:[#allocation18 + $0x140] sm:$0xf]
    %v1350 = vld [vmem:[#allocation18 + $0x144] sm:$0xff]
    %v1351 = vld [vmem:[#allocation18 + $0x14c] sm:$0xff]
    %v1352 = vld [vmem:[#allocation18 + $0x154] sm:$0xff]
    %v1353 = vld [vmem:[#allocation18 + $0x15c] sm:$0xff]
    %v1354 = vld [vmem:[#allocation18 + $0x164] sm:$0xf]
    %v1355 = vld [vmem:[#allocation18 + $0x168] sm:$0xff]
    %v1356 = vld [vmem:[#allocation18 + $0x170] sm:$0xff]
    %v1357 = vld [vmem:[#allocation18 + $0x178] sm:$0xff]
    %v1358 = vld [vmem:[#allocation18 + $0x180] sm:$0xff]
    %v1359 = vld [vmem:[#allocation18 + $0x188] sm:$0xf]
    %v1360 = vld [vmem:[#allocation18 + $0x18c] sm:$0xff]
    %v1361 = vld [vmem:[#allocation18 + $0x194] sm:$0xff]
    %v1362 = vld [vmem:[#allocation18 + $0x19c] sm:$0xff]
    %v1363 = vld [vmem:[#allocation18 + $0x1a4] sm:$0xff]
    %v1364 = vld [vmem:[#allocation18 + $0x1ac] sm:$0xf]
    %v1365 = vld [vmem:[#allocation18 + $0x1b0] sm:$0xff]
    %v1366 = vld [vmem:[#allocation18 + $0x1b8] sm:$0xff]
    %v1367 = vld [vmem:[#allocation18 + $0x1c0] sm:$0xff]
    %v1368 = vld [vmem:[#allocation18 + $0x1c8] sm:$0xff]
    %v1369 = vld [vmem:[#allocation18 + $0x1d0] sm:$0xf]
    %v1370 = vld [vmem:[#allocation18 + $0x1d4] sm:$0xff]
    %v1371 = vld [vmem:[#allocation18 + $0x1dc] sm:$0xff]
    %v1372 = vld [vmem:[#allocation18 + $0x1e4] sm:$0xff]
    %v1373 = vld [vmem:[#allocation18 + $0x1ec] sm:$0xff]
    %v1374 = vld [vmem:[#allocation18 + $0x1f4] sm:$0xf]
    %v1375 = vld [vmem:[#allocation18 + $0x1f8] sm:$0xff]
    %v1376 = vld [vmem:[#allocation18 + $0x200] sm:$0xff]
    %v1377 = vld [vmem:[#allocation18 + $0x208] sm:$0xff]
    %v1378 = vld [vmem:[#allocation18 + $0x210] sm:$0xff]
    %v1379 = vld [vmem:[#allocation18 + $0x218] sm:$0xf]
    %v1380 = vld [vmem:[#allocation18 + $0x21c] sm:$0xff]
    %v1381 = vld [vmem:[#allocation18 + $0x224] sm:$0xff]
    %v1382 = vld [vmem:[#allocation18 + $0x22c] sm:$0xff]
    %v1383 = vld [vmem:[#allocation18 + $0x234] sm:$0xff]
    %v1384 = vld [vmem:[#allocation18 + $0x23c] sm:$0xf]
    %v1385 = vld [vmem:[#allocation18 + $0x240] sm:$0xff]
    %v1386 = vld [vmem:[#allocation18 + $0x248] sm:$0xff]
    %v1387 = vld [vmem:[#allocation18 + $0x250] sm:$0xff]
    %v1388 = vld [vmem:[#allocation18 + $0x258] sm:$0xff]
    %v1389 = vld [vmem:[#allocation18 + $0x260] sm:$0xf]
    %v1390 = vld [vmem:[#allocation18 + $0x264] sm:$0xff]
    %v1391 = vld [vmem:[#allocation18 + $0x26c] sm:$0xff]
    %v1392 = vld [vmem:[#allocation18 + $0x274] sm:$0xff]
    %v1393 = vld [vmem:[#allocation18 + $0x27c] sm:$0xff]
    %v1394 = vld [vmem:[#allocation18 + $0x284] sm:$0xf]
    %v1395 = vld [vmem:[#allocation18 + $0x288] sm:$0xff]
    %v1396 = vld [vmem:[#allocation18 + $0x290] sm:$0xff]
    %v1397 = vld [vmem:[#allocation18 + $0x298] sm:$0xff]
    %v1398 = vld [vmem:[#allocation18 + $0x2a0] sm:$0xff]
    %v1399 = vld [vmem:[#allocation18 + $0x2a8] sm:$0xf]
    %v1400 = vld [vmem:[#allocation18 + $0x2ac] sm:$0xff]
    %v1401 = vld [vmem:[#allocation18 + $0x2b4] sm:$0xff]
    %v1402 = vld [vmem:[#allocation18 + $0x2bc] sm:$0xff]
    %v1403 = vld [vmem:[#allocation18 + $0x2c4] sm:$0xff]
    %v1404 = vld [vmem:[#allocation18 + $0x2cc] sm:$0xf]
    %v1405 = vld [vmem:[#allocation18 + $0x2d0] sm:$0xff]
    %v1406 = vld [vmem:[#allocation18 + $0x2d8] sm:$0xff]
    %v1407 = vld [vmem:[#allocation18 + $0x2e0] sm:$0xff]
    %v1408 = vld [vmem:[#allocation18 + $0x2e8] sm:$0xff]
    %v1409 = vld [vmem:[#allocation18 + $0x2f0] sm:$0xf]
    %v1410 = vld [vmem:[#allocation18 + $0x2f4] sm:$0xff]
    %v1411 = vld [vmem:[#allocation18 + $0x2fc] sm:$0xff]
    %v1412 = vld [vmem:[#allocation18 + $0x304] sm:$0xff]
    %v1413 = vld [vmem:[#allocation18 + $0x30c] sm:$0xff]
    %v1414 = vld [vmem:[#allocation18 + $0x314] sm:$0xf]
    %v1415 = vld [vmem:[#allocation18 + $0x318] sm:$0xff]
    %v1416 = vld [vmem:[#allocation18 + $0x320] sm:$0xff]
    %v1417 = vld [vmem:[#allocation18 + $0x328] sm:$0xff]
    %v1418 = vld [vmem:[#allocation18 + $0x330] sm:$0xff]
    %v1419 = vld [vmem:[#allocation18 + $0x338] sm:$0xf]
    %v1420 = vld [vmem:[#allocation18 + $0x33c] sm:$0xff]
    %v1421 = vld [vmem:[#allocation18 + $0x344] sm:$0xff]
    %v1422 = vld [vmem:[#allocation18 + $0x34c] sm:$0xff]
    %v1423 = vld [vmem:[#allocation18 + $0x354] sm:$0xff]
    %v1424 = vld [vmem:[#allocation18 + $0x35c] sm:$0xf]
    %v1425 = vld [vmem:[#allocation18 + $0x360] sm:$0xff]
    %v1426 = vld [vmem:[#allocation18 + $0x368] sm:$0xff]
    %v1427 = vld [vmem:[#allocation18 + $0x370] sm:$0xff]
    %v1428 = vld [vmem:[#allocation18 + $0x378] sm:$0xff]
    %v1429 = vld [vmem:[#allocation18 + $0x380] sm:$0xf]
    %v1430 = vld [vmem:[#allocation18 + $0x384] sm:$0xff]
    %v1431 = vld [vmem:[#allocation18 + $0x38c] sm:$0xff]
    %v1432 = vld [vmem:[#allocation18 + $0x394] sm:$0xff]
    %v1433 = vld [vmem:[#allocation18 + $0x39c] sm:$0xff]
    %v1434 = vld [vmem:[#allocation18 + $0x3a4] sm:$0xf]
    %v1435 = vld [vmem:[#allocation18 + $0x3a8] sm:$0xff]
    %v1436 = vld [vmem:[#allocation18 + $0x3b0] sm:$0xff]
    %v1437 = vld [vmem:[#allocation18 + $0x3b8] sm:$0xff]
    %v1438 = vld [vmem:[#allocation18 + $0x3c0] sm:$0xff]
    %v1439 = vld [vmem:[#allocation18 + $0x3c8] sm:$0xf]
    %v1440 = vld [vmem:[#allocation18 + $0x3cc] sm:$0xff]
    %v1441 = vld [vmem:[#allocation18 + $0x3d4] sm:$0xff]
    %v1442 = vld [vmem:[#allocation18 + $0x3dc] sm:$0xff]
    %v1443 = vld [vmem:[#allocation18 + $0x3e4] sm:$0xff]
    %v1444 = vld [vmem:[#allocation18 + $0x3ec] sm:$0xf]
    %v1445 = vld [vmem:[#allocation18 + $0x3f0] sm:$0xff]
    %v1446 = vld [vmem:[#allocation18 + $0x3f8] sm:$0xff]
    %v1447 = vld [vmem:[#allocation18 + $0x400] sm:$0xff]
    %v1448 = vld [vmem:[#allocation18 + $0x408] sm:$0xff]
    %v1449 = vld [vmem:[#allocation18 + $0x410] sm:$0xf]
    %v1450 = vld [vmem:[#allocation18 + $0x414] sm:$0xff]
    %v1451 = vld [vmem:[#allocation18 + $0x41c] sm:$0xff]
    %v1452 = vld [vmem:[#allocation18 + $0x424] sm:$0xff]
    %v1453 = vld [vmem:[#allocation18 + $0x42c] sm:$0xff]
    %v1454 = vld [vmem:[#allocation18 + $0x434] sm:$0xf]
    %v1455 = vld [vmem:[#allocation18 + $0x438] sm:$0xff]
    %v1456 = vld [vmem:[#allocation18 + $0x440] sm:$0xff]
    %v1457 = vld [vmem:[#allocation18 + $0x448] sm:$0xff]
    %v1458 = vld [vmem:[#allocation18 + $0x450] sm:$0xff]
    %v1459 = vld [vmem:[#allocation18 + $0x458] sm:$0xf]
    %v1460 = vld [vmem:[#allocation18 + $0x45c] sm:$0xff]
    %v1461 = vld [vmem:[#allocation18 + $0x464] sm:$0xff]
    %v1462 = vld [vmem:[#allocation18 + $0x46c] sm:$0xff]
    %v1463 = vld [vmem:[#allocation18 + $0x474] sm:$0xff]
    %v1464 = vld [vmem:[#allocation18 + $0x47c] sm:$0xf]
    %v1465 = vld [vmem:[#allocation19] sm:$0xff]
    %v1466 = vld [vmem:[#allocation19 + $0x8] sm:$0x1]
    %v1469 = vlaneseq
    %v1470 = vshrl.u32 %v1469, 7
    %v1471 = vsub.s32 0, %v1470
    %v1472 = vrot.slane %v1465, %v1471
    %v1473 = vlaneseq
    %v1474 = vshrl.u32 %v1473, 7
    %v1475 = vsub.s32 1, %v1474
    %v1476 = vrot.slane %v1465, %v1475
    %v1477 = vlaneseq
    %v1478 = vshrl.u32 %v1477, 7
    %v1479 = vsub.s32 2, %v1478
    %v1480 = vrot.slane %v1465, %v1479
    %v1481 = vlaneseq
    %v1482 = vshrl.u32 %v1481, 7
    %v1483 = vsub.s32 3, %v1482
    %v1484 = vrot.slane %v1465, %v1483
    %v1485 = vlaneseq
    %v1486 = vshrl.u32 %v1485, 7
    %v1487 = vsub.s32 4, %v1486
    %v1488 = vrot.slane %v1465, %v1487
    %v1489 = vlaneseq
    %v1490 = vshrl.u32 %v1489, 7
    %v1491 = vsub.s32 5, %v1490
    %v1492 = vrot.slane %v1465, %v1491
    %v1493 = vlaneseq
    %v1494 = vshrl.u32 %v1493, 7
    %v1495 = vsub.s32 6, %v1494
    %v1496 = vrot.slane %v1465, %v1495
    %v1497 = vlaneseq
    %v1498 = vshrl.u32 %v1497, 7
    %v1499 = vsub.s32 7, %v1498
    %v1500 = vrot.slane %v1465, %v1499
    %v1501 = vlaneseq
    %v1502 = vshrl.u32 %v1501, 7
    %v1503 = vsub.s32 0, %v1502
    %v1504 = vrot.slane %v1466, %v1503
    %v1674 = vunpack.c.l.b16 %v1305
    %v1675 = vunpack.c.h.b16 %v1305
    %v1676 = vunpack.c.l.b16 %v1306
    %v1677 = vunpack.c.h.b16 %v1306
    %v1678 = vunpack.c.l.b16 %v1307
    %v1679 = vunpack.c.h.b16 %v1307
    %v1680 = vunpack.c.l.b16 %v1308
    %v1681 = vunpack.c.h.b16 %v1308
    %v1682 = vunpack.c.l.b16 %v1309
    %v1683 = vunpack.c.l.b16 %v1310
    %v1684 = vunpack.c.h.b16 %v1310
    %v1685 = vunpack.c.l.b16 %v1311
    %v1686 = vunpack.c.h.b16 %v1311
    %v1687 = vunpack.c.l.b16 %v1312
    %v1688 = vunpack.c.h.b16 %v1312
    %v1689 = vunpack.c.l.b16 %v1313
    %v1690 = vunpack.c.h.b16 %v1313
    %v1691 = vunpack.c.l.b16 %v1314
    %v1692 = vunpack.c.l.b16 %v1315
    %v1693 = vunpack.c.h.b16 %v1315
    %v1694 = vunpack.c.l.b16 %v1316
    %v1695 = vunpack.c.h.b16 %v1316
    %v1696 = vunpack.c.l.b16 %v1317
    %v1697 = vunpack.c.h.b16 %v1317
    %v1698 = vunpack.c.l.b16 %v1318
    %v1699 = vunpack.c.h.b16 %v1318
    %v1700 = vunpack.c.l.b16 %v1319
    %v1701 = vunpack.c.l.b16 %v1320
    %v1702 = vunpack.c.h.b16 %v1320
    %v1703 = vunpack.c.l.b16 %v1321
    %v1704 = vunpack.c.h.b16 %v1321
    %v1705 = vunpack.c.l.b16 %v1322
    %v1706 = vunpack.c.h.b16 %v1322
    %v1707 = vunpack.c.l.b16 %v1323
    %v1708 = vunpack.c.h.b16 %v1323
    %v1709 = vunpack.c.l.b16 %v1324
    %v1710 = vunpack.c.l.b16 %v1325
    %v1711 = vunpack.c.h.b16 %v1325
    %v1712 = vunpack.c.l.b16 %v1326
    %v1713 = vunpack.c.h.b16 %v1326
    %v1714 = vunpack.c.l.b16 %v1327
    %v1715 = vunpack.c.h.b16 %v1327
    %v1716 = vunpack.c.l.b16 %v1328
    %v1717 = vunpack.c.h.b16 %v1328
    %v1718 = vunpack.c.l.b16 %v1329
    %v1719 = vunpack.c.l.b16 %v1330
    %v1720 = vunpack.c.h.b16 %v1330
    %v1721 = vunpack.c.l.b16 %v1331
    %v1722 = vunpack.c.h.b16 %v1331
    %v1723 = vunpack.c.l.b16 %v1332
    %v1724 = vunpack.c.h.b16 %v1332
    %v1725 = vunpack.c.l.b16 %v1333
    %v1726 = vunpack.c.h.b16 %v1333
    %v1727 = vunpack.c.l.b16 %v1334
    %v1728 = vunpack.c.l.b16 %v1335
    %v1729 = vunpack.c.h.b16 %v1335
    %v1730 = vunpack.c.l.b16 %v1336
    %v1731 = vunpack.c.h.b16 %v1336
    %v1732 = vunpack.c.l.b16 %v1337
    %v1733 = vunpack.c.h.b16 %v1337
    %v1734 = vunpack.c.l.b16 %v1338
    %v1735 = vunpack.c.h.b16 %v1338
    %v1736 = vunpack.c.l.b16 %v1339
    %v1737 = vunpack.c.l.b16 %v1340
    %v1738 = vunpack.c.h.b16 %v1340
    %v1739 = vunpack.c.l.b16 %v1341
    %v1740 = vunpack.c.h.b16 %v1341
    %v1741 = vunpack.c.l.b16 %v1342
    %v1742 = vunpack.c.h.b16 %v1342
    %v1743 = vunpack.c.l.b16 %v1343
    %v1744 = vunpack.c.h.b16 %v1343
    %v1745 = vunpack.c.l.b16 %v1344
    %v1746 = vunpack.c.l.b16 %v1345
    %v1747 = vunpack.c.h.b16 %v1345
    %v1748 = vunpack.c.l.b16 %v1346
    %v1749 = vunpack.c.h.b16 %v1346
    %v1750 = vunpack.c.l.b16 %v1347
    %v1751 = vunpack.c.h.b16 %v1347
    %v1752 = vunpack.c.l.b16 %v1348
    %v1753 = vunpack.c.h.b16 %v1348
    %v1754 = vunpack.c.l.b16 %v1349
    %v1755 = vunpack.c.l.b16 %v1350
    %v1756 = vunpack.c.h.b16 %v1350
    %v1757 = vunpack.c.l.b16 %v1351
    %v1758 = vunpack.c.h.b16 %v1351
    %v1759 = vunpack.c.l.b16 %v1352
    %v1760 = vunpack.c.h.b16 %v1352
    %v1761 = vunpack.c.l.b16 %v1353
    %v1762 = vunpack.c.h.b16 %v1353
    %v1763 = vunpack.c.l.b16 %v1354
    %v1764 = vunpack.c.l.b16 %v1355
    %v1765 = vunpack.c.h.b16 %v1355
    %v1766 = vunpack.c.l.b16 %v1356
    %v1767 = vunpack.c.h.b16 %v1356
    %v1768 = vunpack.c.l.b16 %v1357
    %v1769 = vunpack.c.h.b16 %v1357
    %v1770 = vunpack.c.l.b16 %v1358
    %v1771 = vunpack.c.h.b16 %v1358
    %v1772 = vunpack.c.l.b16 %v1359
    %v1773 = vunpack.c.l.b16 %v1360
    %v1774 = vunpack.c.h.b16 %v1360
    %v1775 = vunpack.c.l.b16 %v1361
    %v1776 = vunpack.c.h.b16 %v1361
    %v1777 = vunpack.c.l.b16 %v1362
    %v1778 = vunpack.c.h.b16 %v1362
    %v1779 = vunpack.c.l.b16 %v1363
    %v1780 = vunpack.c.h.b16 %v1363
    %v1781 = vunpack.c.l.b16 %v1364
    %v1782 = vunpack.c.l.b16 %v1365
    %v1783 = vunpack.c.h.b16 %v1365
    %v1784 = vunpack.c.l.b16 %v1366
    %v1785 = vunpack.c.h.b16 %v1366
    %v1786 = vunpack.c.l.b16 %v1367
    %v1787 = vunpack.c.h.b16 %v1367
    %v1788 = vunpack.c.l.b16 %v1368
    %v1789 = vunpack.c.h.b16 %v1368
    %v1790 = vunpack.c.l.b16 %v1369
    %v1791 = vunpack.c.l.b16 %v1370
    %v1792 = vunpack.c.h.b16 %v1370
    %v1793 = vunpack.c.l.b16 %v1371
    %v1794 = vunpack.c.h.b16 %v1371
    %v1795 = vunpack.c.l.b16 %v1372
    %v1796 = vunpack.c.h.b16 %v1372
    %v1797 = vunpack.c.l.b16 %v1373
    %v1798 = vunpack.c.h.b16 %v1373
    %v1799 = vunpack.c.l.b16 %v1374
    %v1800 = vunpack.c.l.b16 %v1375
    %v1801 = vunpack.c.h.b16 %v1375
    %v1802 = vunpack.c.l.b16 %v1376
    %v1803 = vunpack.c.h.b16 %v1376
    %v1804 = vunpack.c.l.b16 %v1377
    %v1805 = vunpack.c.h.b16 %v1377
    %v1806 = vunpack.c.l.b16 %v1378
    %v1807 = vunpack.c.h.b16 %v1378
    %v1808 = vunpack.c.l.b16 %v1379
    %v1809 = vunpack.c.l.b16 %v1380
    %v1810 = vunpack.c.h.b16 %v1380
    %v1811 = vunpack.c.l.b16 %v1381
    %v1812 = vunpack.c.h.b16 %v1381
    %v1813 = vunpack.c.l.b16 %v1382
    %v1814 = vunpack.c.h.b16 %v1382
    %v1815 = vunpack.c.l.b16 %v1383
    %v1816 = vunpack.c.h.b16 %v1383
    %v1817 = vunpack.c.l.b16 %v1384
    %v1818 = vunpack.c.l.b16 %v1385
    %v1819 = vunpack.c.h.b16 %v1385
    %v1820 = vunpack.c.l.b16 %v1386
    %v1821 = vunpack.c.h.b16 %v1386
    %v1822 = vunpack.c.l.b16 %v1387
    %v1823 = vunpack.c.h.b16 %v1387
    %v1824 = vunpack.c.l.b16 %v1388
    %v1825 = vunpack.c.h.b16 %v1388
    %v1826 = vunpack.c.l.b16 %v1389
    %v1827 = vunpack.c.l.b16 %v1390
    %v1828 = vunpack.c.h.b16 %v1390
    %v1829 = vunpack.c.l.b16 %v1391
    %v1830 = vunpack.c.h.b16 %v1391
    %v1831 = vunpack.c.l.b16 %v1392
    %v1832 = vunpack.c.h.b16 %v1392
    %v1833 = vunpack.c.l.b16 %v1393
    %v1834 = vunpack.c.h.b16 %v1393
    %v1835 = vunpack.c.l.b16 %v1394
    %v1836 = vunpack.c.l.b16 %v1395
    %v1837 = vunpack.c.h.b16 %v1395
    %v1838 = vunpack.c.l.b16 %v1396
    %v1839 = vunpack.c.h.b16 %v1396
    %v1840 = vunpack.c.l.b16 %v1397
    %v1841 = vunpack.c.h.b16 %v1397
    %v1842 = vunpack.c.l.b16 %v1398
    %v1843 = vunpack.c.h.b16 %v1398
    %v1844 = vunpack.c.l.b16 %v1399
    %v1845 = vunpack.c.l.b16 %v1400
    %v1846 = vunpack.c.h.b16 %v1400
    %v1847 = vunpack.c.l.b16 %v1401
    %v1848 = vunpack.c.h.b16 %v1401
    %v1849 = vunpack.c.l.b16 %v1402
    %v1850 = vunpack.c.h.b16 %v1402
    %v1851 = vunpack.c.l.b16 %v1403
    %v1852 = vunpack.c.h.b16 %v1403
    %v1853 = vunpack.c.l.b16 %v1404
    %v1854 = vunpack.c.l.b16 %v1405
    %v1855 = vunpack.c.h.b16 %v1405
    %v1856 = vunpack.c.l.b16 %v1406
    %v1857 = vunpack.c.h.b16 %v1406
    %v1858 = vunpack.c.l.b16 %v1407
    %v1859 = vunpack.c.h.b16 %v1407
    %v1860 = vunpack.c.l.b16 %v1408
    %v1861 = vunpack.c.h.b16 %v1408
    %v1862 = vunpack.c.l.b16 %v1409
    %v1863 = vunpack.c.l.b16 %v1410
    %v1864 = vunpack.c.h.b16 %v1410
    %v1865 = vunpack.c.l.b16 %v1411
    %v1866 = vunpack.c.h.b16 %v1411
    %v1867 = vunpack.c.l.b16 %v1412
    %v1868 = vunpack.c.h.b16 %v1412
    %v1869 = vunpack.c.l.b16 %v1413
    %v1870 = vunpack.c.h.b16 %v1413
    %v1871 = vunpack.c.l.b16 %v1414
    %v1872 = vunpack.c.l.b16 %v1415
    %v1873 = vunpack.c.h.b16 %v1415
    %v1874 = vunpack.c.l.b16 %v1416
    %v1875 = vunpack.c.h.b16 %v1416
    %v1876 = vunpack.c.l.b16 %v1417
    %v1877 = vunpack.c.h.b16 %v1417
    %v1878 = vunpack.c.l.b16 %v1418
    %v1879 = vunpack.c.h.b16 %v1418
    %v1880 = vunpack.c.l.b16 %v1419
    %v1881 = vunpack.c.l.b16 %v1420
    %v1882 = vunpack.c.h.b16 %v1420
    %v1883 = vunpack.c.l.b16 %v1421
    %v1884 = vunpack.c.h.b16 %v1421
    %v1885 = vunpack.c.l.b16 %v1422
    %v1886 = vunpack.c.h.b16 %v1422
    %v1887 = vunpack.c.l.b16 %v1423
    %v1888 = vunpack.c.h.b16 %v1423
    %v1889 = vunpack.c.l.b16 %v1424
    %v1890 = vunpack.c.l.b16 %v1425
    %v1891 = vunpack.c.h.b16 %v1425
    %v1892 = vunpack.c.l.b16 %v1426
    %v1893 = vunpack.c.h.b16 %v1426
    %v1894 = vunpack.c.l.b16 %v1427
    %v1895 = vunpack.c.h.b16 %v1427
    %v1896 = vunpack.c.l.b16 %v1428
    %v1897 = vunpack.c.h.b16 %v1428
    %v1898 = vunpack.c.l.b16 %v1429
    %v1899 = vunpack.c.l.b16 %v1430
    %v1900 = vunpack.c.h.b16 %v1430
    %v1901 = vunpack.c.l.b16 %v1431
    %v1902 = vunpack.c.h.b16 %v1431
    %v1903 = vunpack.c.l.b16 %v1432
    %v1904 = vunpack.c.h.b16 %v1432
    %v1905 = vunpack.c.l.b16 %v1433
    %v1906 = vunpack.c.h.b16 %v1433
    %v1907 = vunpack.c.l.b16 %v1434
    %v1908 = vunpack.c.l.b16 %v1435
    %v1909 = vunpack.c.h.b16 %v1435
    %v1910 = vunpack.c.l.b16 %v1436
    %v1911 = vunpack.c.h.b16 %v1436
    %v1912 = vunpack.c.l.b16 %v1437
    %v1913 = vunpack.c.h.b16 %v1437
    %v1914 = vunpack.c.l.b16 %v1438
    %v1915 = vunpack.c.h.b16 %v1438
    %v1916 = vunpack.c.l.b16 %v1439
    %v1917 = vunpack.c.l.b16 %v1440
    %v1918 = vunpack.c.h.b16 %v1440
    %v1919 = vunpack.c.l.b16 %v1441
    %v1920 = vunpack.c.h.b16 %v1441
    %v1921 = vunpack.c.l.b16 %v1442
    %v1922 = vunpack.c.h.b16 %v1442
    %v1923 = vunpack.c.l.b16 %v1443
    %v1924 = vunpack.c.h.b16 %v1443
    %v1925 = vunpack.c.l.b16 %v1444
    %v1926 = vunpack.c.l.b16 %v1445
    %v1927 = vunpack.c.h.b16 %v1445
    %v1928 = vunpack.c.l.b16 %v1446
    %v1929 = vunpack.c.h.b16 %v1446
    %v1930 = vunpack.c.l.b16 %v1447
    %v1931 = vunpack.c.h.b16 %v1447
    %v1932 = vunpack.c.l.b16 %v1448
    %v1933 = vunpack.c.h.b16 %v1448
    %v1934 = vunpack.c.l.b16 %v1449
    %v1935 = vunpack.c.l.b16 %v1450
    %v1936 = vunpack.c.h.b16 %v1450
    %v1937 = vunpack.c.l.b16 %v1451
    %v1938 = vunpack.c.h.b16 %v1451
    %v1939 = vunpack.c.l.b16 %v1452
    %v1940 = vunpack.c.h.b16 %v1452
    %v1941 = vunpack.c.l.b16 %v1453
    %v1942 = vunpack.c.h.b16 %v1453
    %v1943 = vunpack.c.l.b16 %v1454
    %v1944 = vunpack.c.l.b16 %v1455
    %v1945 = vunpack.c.h.b16 %v1455
    %v1946 = vunpack.c.l.b16 %v1456
    %v1947 = vunpack.c.h.b16 %v1456
    %v1948 = vunpack.c.l.b16 %v1457
    %v1949 = vunpack.c.h.b16 %v1457
    %v1950 = vunpack.c.l.b16 %v1458
    %v1951 = vunpack.c.h.b16 %v1458
    %v1952 = vunpack.c.l.b16 %v1459
    %v1953 = vunpack.c.l.b16 %v1460
    %v1954 = vunpack.c.h.b16 %v1460
    %v1955 = vunpack.c.l.b16 %v1461
    %v1956 = vunpack.c.h.b16 %v1461
    %v1957 = vunpack.c.l.b16 %v1462
    %v1958 = vunpack.c.h.b16 %v1462
    %v1959 = vunpack.c.l.b16 %v1463
    %v1960 = vunpack.c.h.b16 %v1463
    %v1961 = vunpack.c.l.b16 %v1464
    %v1962 = vpack.c.b16 %v1683, %v1674
    %v1963 = vpack.c.b16 %v1684, %v1675
    %v1964 = vpack.c.b16 %v1685, %v1676
    %v1965 = vpack.c.b16 %v1686, %v1677
    %v1966 = vpack.c.b16 %v1687, %v1678
    %v1967 = vpack.c.b16 %v1688, %v1679
    %v1968 = vpack.c.b16 %v1689, %v1680
    %v1969 = vpack.c.b16 %v1690, %v1681
    %v1970 = vpack.c.b16 %v1691, %v1682
    %v1971 = vpack.c.b16 %v1701, %v1692
    %v1972 = vpack.c.b16 %v1702, %v1693
    %v1973 = vpack.c.b16 %v1703, %v1694
    %v1974 = vpack.c.b16 %v1704, %v1695
    %v1975 = vpack.c.b16 %v1705, %v1696
    %v1976 = vpack.c.b16 %v1706, %v1697
    %v1977 = vpack.c.b16 %v1707, %v1698
    %v1978 = vpack.c.b16 %v1708, %v1699
    %v1979 = vpack.c.b16 %v1709, %v1700
    %v1980 = vpack.c.b16 %v1719, %v1710
    %v1981 = vpack.c.b16 %v1720, %v1711
    %v1982 = vpack.c.b16 %v1721, %v1712
    %v1983 = vpack.c.b16 %v1722, %v1713
    %v1984 = vpack.c.b16 %v1723, %v1714
    %v1985 = vpack.c.b16 %v1724, %v1715
    %v1986 = vpack.c.b16 %v1725, %v1716
    %v1987 = vpack.c.b16 %v1726, %v1717
    %v1988 = vpack.c.b16 %v1727, %v1718
    %v1989 = vpack.c.b16 %v1737, %v1728
    %v1990 = vpack.c.b16 %v1738, %v1729
    %v1991 = vpack.c.b16 %v1739, %v1730
    %v1992 = vpack.c.b16 %v1740, %v1731
    %v1993 = vpack.c.b16 %v1741, %v1732
    %v1994 = vpack.c.b16 %v1742, %v1733
    %v1995 = vpack.c.b16 %v1743, %v1734
    %v1996 = vpack.c.b16 %v1744, %v1735
    %v1997 = vpack.c.b16 %v1745, %v1736
    %v1998 = vpack.c.b16 %v1755, %v1746
    %v1999 = vpack.c.b16 %v1756, %v1747
    %v2000 = vpack.c.b16 %v1757, %v1748
    %v2001 = vpack.c.b16 %v1758, %v1749
    %v2002 = vpack.c.b16 %v1759, %v1750
    %v2003 = vpack.c.b16 %v1760, %v1751
    %v2004 = vpack.c.b16 %v1761, %v1752
    %v2005 = vpack.c.b16 %v1762, %v1753
    %v2006 = vpack.c.b16 %v1763, %v1754
    %v2007 = vpack.c.b16 %v1773, %v1764
    %v2008 = vpack.c.b16 %v1774, %v1765
    %v2009 = vpack.c.b16 %v1775, %v1766
    %v2010 = vpack.c.b16 %v1776, %v1767
    %v2011 = vpack.c.b16 %v1777, %v1768
    %v2012 = vpack.c.b16 %v1778, %v1769
    %v2013 = vpack.c.b16 %v1779, %v1770
    %v2014 = vpack.c.b16 %v1780, %v1771
    %v2015 = vpack.c.b16 %v1781, %v1772
    %v2016 = vpack.c.b16 %v1791, %v1782
    %v2017 = vpack.c.b16 %v1792, %v1783
    %v2018 = vpack.c.b16 %v1793, %v1784
    %v2019 = vpack.c.b16 %v1794, %v1785
    %v2020 = vpack.c.b16 %v1795, %v1786
    %v2021 = vpack.c.b16 %v1796, %v1787
    %v2022 = vpack.c.b16 %v1797, %v1788
    %v2023 = vpack.c.b16 %v1798, %v1789
    %v2024 = vpack.c.b16 %v1799, %v1790
    %v2025 = vpack.c.b16 %v1809, %v1800
    %v2026 = vpack.c.b16 %v1810, %v1801
    %v2027 = vpack.c.b16 %v1811, %v1802
    %v2028 = vpack.c.b16 %v1812, %v1803
    %v2029 = vpack.c.b16 %v1813, %v1804
    %v2030 = vpack.c.b16 %v1814, %v1805
    %v2031 = vpack.c.b16 %v1815, %v1806
    %v2032 = vpack.c.b16 %v1816, %v1807
    %v2033 = vpack.c.b16 %v1817, %v1808
    %v2034 = vpack.c.b16 %v1827, %v1818
    %v2035 = vpack.c.b16 %v1828, %v1819
    %v2036 = vpack.c.b16 %v1829, %v1820
    %v2037 = vpack.c.b16 %v1830, %v1821
    %v2038 = vpack.c.b16 %v1831, %v1822
    %v2039 = vpack.c.b16 %v1832, %v1823
    %v2040 = vpack.c.b16 %v1833, %v1824
    %v2041 = vpack.c.b16 %v1834, %v1825
    %v2042 = vpack.c.b16 %v1835, %v1826
    %v2043 = vpack.c.b16 %v1845, %v1836
    %v2044 = vpack.c.b16 %v1846, %v1837
    %v2045 = vpack.c.b16 %v1847, %v1838
    %v2046 = vpack.c.b16 %v1848, %v1839
    %v2047 = vpack.c.b16 %v1849, %v1840
    %v2048 = vpack.c.b16 %v1850, %v1841
    %v2049 = vpack.c.b16 %v1851, %v1842
    %v2050 = vpack.c.b16 %v1852, %v1843
    %v2051 = vpack.c.b16 %v1853, %v1844
    %v2052 = vpack.c.b16 %v1863, %v1854
    %v2053 = vpack.c.b16 %v1864, %v1855
    %v2054 = vpack.c.b16 %v1865, %v1856
    %v2055 = vpack.c.b16 %v1866, %v1857
    %v2056 = vpack.c.b16 %v1867, %v1858
    %v2057 = vpack.c.b16 %v1868, %v1859
    %v2058 = vpack.c.b16 %v1869, %v1860
    %v2059 = vpack.c.b16 %v1870, %v1861
    %v2060 = vpack.c.b16 %v1871, %v1862
    %v2061 = vpack.c.b16 %v1881, %v1872
    %v2062 = vpack.c.b16 %v1882, %v1873
    %v2063 = vpack.c.b16 %v1883, %v1874
    %v2064 = vpack.c.b16 %v1884, %v1875
    %v2065 = vpack.c.b16 %v1885, %v1876
    %v2066 = vpack.c.b16 %v1886, %v1877
    %v2067 = vpack.c.b16 %v1887, %v1878
    %v2068 = vpack.c.b16 %v1888, %v1879
    %v2069 = vpack.c.b16 %v1889, %v1880
    %v2070 = vpack.c.b16 %v1899, %v1890
    %v2071 = vpack.c.b16 %v1900, %v1891
    %v2072 = vpack.c.b16 %v1901, %v1892
    %v2073 = vpack.c.b16 %v1902, %v1893
    %v2074 = vpack.c.b16 %v1903, %v1894
    %v2075 = vpack.c.b16 %v1904, %v1895
    %v2076 = vpack.c.b16 %v1905, %v1896
    %v2077 = vpack.c.b16 %v1906, %v1897
    %v2078 = vpack.c.b16 %v1907, %v1898
    %v2079 = vpack.c.b16 %v1917, %v1908
    %v2080 = vpack.c.b16 %v1918, %v1909
    %v2081 = vpack.c.b16 %v1919, %v1910
    %v2082 = vpack.c.b16 %v1920, %v1911
    %v2083 = vpack.c.b16 %v1921, %v1912
    %v2084 = vpack.c.b16 %v1922, %v1913
    %v2085 = vpack.c.b16 %v1923, %v1914
    %v2086 = vpack.c.b16 %v1924, %v1915
    %v2087 = vpack.c.b16 %v1925, %v1916
    %v2088 = vpack.c.b16 %v1935, %v1926
    %v2089 = vpack.c.b16 %v1936, %v1927
    %v2090 = vpack.c.b16 %v1937, %v1928
    %v2091 = vpack.c.b16 %v1938, %v1929
    %v2092 = vpack.c.b16 %v1939, %v1930
    %v2093 = vpack.c.b16 %v1940, %v1931
    %v2094 = vpack.c.b16 %v1941, %v1932
    %v2095 = vpack.c.b16 %v1942, %v1933
    %v2096 = vpack.c.b16 %v1943, %v1934
    %v2097 = vpack.c.b16 %v1953, %v1944
    %v2098 = vpack.c.b16 %v1954, %v1945
    %v2099 = vpack.c.b16 %v1955, %v1946
    %v2100 = vpack.c.b16 %v1956, %v1947
    %v2101 = vpack.c.b16 %v1957, %v1948
    %v2102 = vpack.c.b16 %v1958, %v1949
    %v2103 = vpack.c.b16 %v1959, %v1950
    %v2104 = vpack.c.b16 %v1960, %v1951
    %v2105 = vpack.c.b16 %v1961, %v1952
    %2250 = vmatprep.subr.bf16.mxu0 %v2026
    %2251 = vmatpush1.bf16.msra.mxu0 %v2025
    %2252 = vmatprep.subr.bf16.mxu0 %v2017
    %2253 = vmatpush1.bf16.msra.mxu0 %v2016
    %2254 = vmatprep.subr.bf16.mxu0 %v2008
    %2255 = vmatpush1.bf16.msra.mxu0 %v2007
    %2256 = vmatprep.subr.bf16.mxu0 %v1999
    %2257 = vmatpush1.bf16.msra.mxu0 %v1998
    %2258 = vmatprep.subr.bf16.mxu0 %v1990
    %2259 = vmatpush1.bf16.msra.mxu0 %v1989
    %2260 = vmatprep.subr.bf16.mxu0 %v1981
    %2261 = vmatpush1.bf16.msra.mxu0 %v1980
    %2262 = vmatprep.subr.bf16.mxu0 %v1972
    %2263 = vmatpush1.bf16.msra.mxu0 %v1971
    %2264 = vmatprep.subr.bf16.mxu0 %v1963
    %2265 = vmatpush1.bf16.msra.mxu0 %v1962
    %2266 = vmatprep.subr.bf16.mxu0 %v2098
    %2267 = vmatpush2.bf16.msra.mxu0 %v2097
    %2268 = vmatprep.subr.bf16.mxu0 %v2089
    %2269 = vmatpush2.bf16.msra.mxu0 %v2088
    %2270 = vmatprep.subr.bf16.mxu0 %v2080
    %2271 = vmatpush2.bf16.msra.mxu0 %v2079
    %2272 = vmatprep.subr.bf16.mxu0 %v2071
    %2273 = vmatpush2.bf16.msra.mxu0 %v2070
    %2274 = vmatprep.subr.bf16.mxu0 %v2062
    %2275 = vmatpush2.bf16.msra.mxu0 %v2061
    %2276 = vmatprep.subr.bf16.mxu0 %v2053
    %2277 = vmatpush2.bf16.msra.mxu0 %v2052
    %2278 = vmatprep.subr.bf16.mxu0 %v2044
    %2279 = vmatpush2.bf16.msra.mxu0 %v2043
    %2280 = vmatprep.subr.bf16.mxu0 %v2035
    %2281 = vmatpush2.bf16.msra.mxu0 %v2034
    %2282 = vmatprep.mubr.bf16.mxu0 %v1304
    %2283 = vmatmul.mubr.bf16.gmra.mxu0 %v1303
    %v2284 = vpop.f32.mrf.mxu0
    %v2285 = vadd.f32 %v1472, %v2284
    %v2286 = vpop.f32.mrf.mxu0
    %v2287 = vadd.f32 %v1476, %v2286
    %v2288 = vpop.f32.mrf.mxu0
    %v2289 = vpop.f32.mrf.mxu0
    %2290 = vdwg.mxu0
    %2291 = vmatprep.subr.bf16.mxu0 %v2028
    %2292 = vmatpush1.bf16.msra.mxu0 %v2027
    %2293 = vmatprep.subr.bf16.mxu0 %v2019
    %2294 = vmatpush1.bf16.msra.mxu0 %v2018
    %2295 = vmatprep.subr.bf16.mxu0 %v2010
    %2296 = vmatpush1.bf16.msra.mxu0 %v2009
    %2297 = vmatprep.subr.bf16.mxu0 %v2001
    %2298 = vmatpush1.bf16.msra.mxu0 %v2000
    %2299 = vmatprep.subr.bf16.mxu0 %v1992
    %2300 = vmatpush1.bf16.msra.mxu0 %v1991
    %2301 = vmatprep.subr.bf16.mxu0 %v1983
    %2302 = vmatpush1.bf16.msra.mxu0 %v1982
    %2303 = vmatprep.subr.bf16.mxu0 %v1974
    %2304 = vmatpush1.bf16.msra.mxu0 %v1973
    %2305 = vmatprep.subr.bf16.mxu0 %v1965
    %2306 = vmatpush1.bf16.msra.mxu0 %v1964
    %2307 = vmatprep.subr.bf16.mxu0 %v2100
    %2308 = vmatpush2.bf16.msra.mxu0 %v2099
    %2309 = vmatprep.subr.bf16.mxu0 %v2091
    %2310 = vmatpush2.bf16.msra.mxu0 %v2090
    %2311 = vmatprep.subr.bf16.mxu0 %v2082
    %2312 = vmatpush2.bf16.msra.mxu0 %v2081
    %2313 = vmatprep.subr.bf16.mxu0 %v2073
    %2314 = vmatpush2.bf16.msra.mxu0 %v2072
    %2315 = vmatprep.subr.bf16.mxu0 %v2064
    %2316 = vmatpush2.bf16.msra.mxu0 %v2063
    %2317 = vmatprep.subr.bf16.mxu0 %v2055
    %2318 = vmatpush2.bf16.msra.mxu0 %v2054
    %2319 = vmatprep.subr.bf16.mxu0 %v2046
    %2320 = vmatpush2.bf16.msra.mxu0 %v2045
    %2321 = vmatprep.subr.bf16.mxu0 %v2037
    %2322 = vmatpush2.bf16.msra.mxu0 %v2036
    %2323 = vmatprep.mubr.bf16.mxu0 %v1304
    %2324 = vmatmul.mubr.bf16.gmra.mxu0 %v1303
    %v2325 = vpop.f32.mrf.mxu0
    %v2326 = vadd.f32 %v1480, %v2325
    %v2327 = vpop.f32.mrf.mxu0
    %v2328 = vadd.f32 %v1484, %v2327
    %v2329 = vpop.f32.mrf.mxu0
    %v2330 = vpop.f32.mrf.mxu0
    %2331 = vdwg.mxu0
    %2332 = vmatprep.subr.bf16.mxu0 %v2030
    %2333 = vmatpush1.bf16.msra.mxu0 %v2029
    %2334 = vmatprep.subr.bf16.mxu0 %v2021
    %2335 = vmatpush1.bf16.msra.mxu0 %v2020
    %2336 = vmatprep.subr.bf16.mxu0 %v2012
    %2337 = vmatpush1.bf16.msra.mxu0 %v2011
    %2338 = vmatprep.subr.bf16.mxu0 %v2003
    %2339 = vmatpush1.bf16.msra.mxu0 %v2002
    %2340 = vmatprep.subr.bf16.mxu0 %v1994
    %2341 = vmatpush1.bf16.msra.mxu0 %v1993
    %2342 = vmatprep.subr.bf16.mxu0 %v1985
    %2343 = vmatpush1.bf16.msra.mxu0 %v1984
    %2344 = vmatprep.subr.bf16.mxu0 %v1976
    %2345 = vmatpush1.bf16.msra.mxu0 %v1975
    %2346 = vmatprep.subr.bf16.mxu0 %v1967
    %2347 = vmatpush1.bf16.msra.mxu0 %v1966
    %2348 = vmatprep.subr.bf16.mxu0 %v2102
    %2349 = vmatpush2.bf16.msra.mxu0 %v2101
    %2350 = vmatprep.subr.bf16.mxu0 %v2093
    %2351 = vmatpush2.bf16.msra.mxu0 %v2092
    %2352 = vmatprep.subr.bf16.mxu0 %v2084
    %2353 = vmatpush2.bf16.msra.mxu0 %v2083
    %2354 = vmatprep.subr.bf16.mxu0 %v2075
    %2355 = vmatpush2.bf16.msra.mxu0 %v2074
    %2356 = vmatprep.subr.bf16.mxu0 %v2066
    %2357 = vmatpush2.bf16.msra.mxu0 %v2065
    %2358 = vmatprep.subr.bf16.mxu0 %v2057
    %2359 = vmatpush2.bf16.msra.mxu0 %v2056
    %2360 = vmatprep.subr.bf16.mxu0 %v2048
    %2361 = vmatpush2.bf16.msra.mxu0 %v2047
    %2362 = vmatprep.subr.bf16.mxu0 %v2039
    %2363 = vmatpush2.bf16.msra.mxu0 %v2038
    %2364 = vmatprep.mubr.bf16.mxu0 %v1304
    %2365 = vmatmul.mubr.bf16.gmra.mxu0 %v1303
    %v2366 = vpop.f32.mrf.mxu0
    %v2367 = vadd.f32 %v1488, %v2366
    %v2368 = vpop.f32.mrf.mxu0
    %v2369 = vadd.f32 %v1492, %v2368
    %v2370 = vpop.f32.mrf.mxu0
    %v2371 = vpop.f32.mrf.mxu0
    %2372 = vdwg.mxu0
    %2373 = vmatprep.subr.bf16.mxu0 %v2032
    %2374 = vmatpush1.bf16.msra.mxu0 %v2031
    %2375 = vmatprep.subr.bf16.mxu0 %v2023
    %2376 = vmatpush1.bf16.msra.mxu0 %v2022
    %2377 = vmatprep.subr.bf16.mxu0 %v2014
    %2378 = vmatpush1.bf16.msra.mxu0 %v2013
    %2379 = vmatprep.subr.bf16.mxu0 %v2005
    %2380 = vmatpush1.bf16.msra.mxu0 %v2004
    %2381 = vmatprep.subr.bf16.mxu0 %v1996
    %2382 = vmatpush1.bf16.msra.mxu0 %v1995
    %2383 = vmatprep.subr.bf16.mxu0 %v1987
    %2384 = vmatpush1.bf16.msra.mxu0 %v1986
    %2385 = vmatprep.subr.bf16.mxu0 %v1978
    %2386 = vmatpush1.bf16.msra.mxu0 %v1977
    %2387 = vmatprep.subr.bf16.mxu0 %v1969
    %2388 = vmatpush1.bf16.msra.mxu0 %v1968
    %2389 = vmatprep.subr.bf16.mxu0 %v2104
    %2390 = vmatpush2.bf16.msra.mxu0 %v2103
    %2391 = vmatprep.subr.bf16.mxu0 %v2095
    %2392 = vmatpush2.bf16.msra.mxu0 %v2094
    %2393 = vmatprep.subr.bf16.mxu0 %v2086
    %2394 = vmatpush2.bf16.msra.mxu0 %v2085
    %2395 = vmatprep.subr.bf16.mxu0 %v2077
    %2396 = vmatpush2.bf16.msra.mxu0 %v2076
    %2397 = vmatprep.subr.bf16.mxu0 %v2068
    %2398 = vmatpush2.bf16.msra.mxu0 %v2067
    %2399 = vmatprep.subr.bf16.mxu0 %v2059
    %2400 = vmatpush2.bf16.msra.mxu0 %v2058
    %2401 = vmatprep.subr.bf16.mxu0 %v2050
    %2402 = vmatpush2.bf16.msra.mxu0 %v2049
    %2403 = vmatprep.subr.bf16.mxu0 %v2041
    %2404 = vmatpush2.bf16.msra.mxu0 %v2040
    %2405 = vmatprep.mubr.bf16.mxu0 %v1304
    %2406 = vmatmul.mubr.bf16.gmra.mxu0 %v1303
    %v2407 = vpop.f32.mrf.mxu0
    %v2408 = vadd.f32 %v1496, %v2407
    %v2409 = vpop.f32.mrf.mxu0
    %v2410 = vadd.f32 %v1500, %v2409
    %v2411 = vpop.f32.mrf.mxu0
    %v2412 = vpop.f32.mrf.mxu0
    %2413 = vdwg.mxu0
    %2414 = vmatprep.subr.bf16.mxu0 0
    %2415 = vmatpush1.bf16.msra.mxu0 %v2033
    %2416 = vmatprep.subr.bf16.mxu0 0
    %2417 = vmatpush1.bf16.msra.mxu0 %v2024
    %2418 = vmatprep.subr.bf16.mxu0 0
    %2419 = vmatpush1.bf16.msra.mxu0 %v2015
    %2420 = vmatprep.subr.bf16.mxu0 0
    %2421 = vmatpush1.bf16.msra.mxu0 %v2006
    %2422 = vmatprep.subr.bf16.mxu0 0
    %2423 = vmatpush1.bf16.msra.mxu0 %v1997
    %2424 = vmatprep.subr.bf16.mxu0 0
    %2425 = vmatpush1.bf16.msra.mxu0 %v1988
    %2426 = vmatprep.subr.bf16.mxu0 0
    %2427 = vmatpush1.bf16.msra.mxu0 %v1979
    %2428 = vmatprep.subr.bf16.mxu0 0
    %2429 = vmatpush1.bf16.msra.mxu0 %v1970
    %2430 = vmatprep.subr.bf16.mxu0 0
    %2431 = vmatpush2.bf16.msra.mxu0 %v2105
    %2432 = vmatprep.subr.bf16.mxu0 0
    %2433 = vmatpush2.bf16.msra.mxu0 %v2096
    %2434 = vmatprep.subr.bf16.mxu0 0
    %2435 = vmatpush2.bf16.msra.mxu0 %v2087
    %2436 = vmatprep.subr.bf16.mxu0 0
    %2437 = vmatpush2.bf16.msra.mxu0 %v2078
    %2438 = vmatprep.subr.bf16.mxu0 0
    %2439 = vmatpush2.bf16.msra.mxu0 %v2069
    %2440 = vmatprep.subr.bf16.mxu0 0
    %2441 = vmatpush2.bf16.msra.mxu0 %v2060
    %2442 = vmatprep.subr.bf16.mxu0 0
    %2443 = vmatpush2.bf16.msra.mxu0 %v2051
    %2444 = vmatprep.subr.bf16.mxu0 0
    %2445 = vmatpush2.bf16.msra.mxu0 %v2042
    %2446 = vmatprep.mubr.bf16.mxu0 %v1304
    %2447 = vmatmul.mubr.bf16.gmra.mxu0 %v1303
    %v2448 = vpop.f32.mrf.mxu0
    %v2449 = vadd.f32 %v1504, %v2448
    %v2450 = vpop.f32.mrf.mxu0
    %v2451 = vpop.f32.mrf.mxu0
    %v2452 = vpop.f32.mrf.mxu0
    %2453 = vdwg.mxu0
    %vm2454 = vcmp.ge.f32.partialorder %v2285, 0.0
    %vm2455 = vcmp.ge.f32.partialorder %v2287, 0.0
    %vm2456 = vcmp.ge.f32.partialorder %v2326, 0.0
    %vm2457 = vcmp.ge.f32.partialorder %v2328, 0.0
    %vm2458 = vcmp.ge.f32.partialorder %v2367, 0.0
    %vm2459 = vcmp.ge.f32.partialorder %v2369, 0.0
    %vm2460 = vcmp.ge.f32.partialorder %v2408, 0.0
    %vm2461 = vcmp.ge.f32.partialorder %v2410, 0.0
    %vm2462 = vcmp.ge.f32.partialorder %v2449, 0.0
    %v2463 = vmul.f32 %v2285, 0.01
    %v2464 = vmul.f32 %v2287, 0.01
    %v2465 = vmul.f32 %v2326, 0.01
    %v2466 = vmul.f32 %v2328, 0.01
    %v2467 = vmul.f32 %v2367, 0.01
    %v2468 = vmul.f32 %v2369, 0.01
    %v2469 = vmul.f32 %v2408, 0.01
    %v2470 = vmul.f32 %v2410, 0.01
    %v2471 = vmul.f32 %v2449, 0.01
    %v2472 = vsel %vm2454, %v2285, %v2463
    %v2473 = vsel %vm2455, %v2287, %v2464
    %v2474 = vsel %vm2456, %v2326, %v2465
    %v2475 = vsel %vm2457, %v2328, %v2466
    %v2476 = vsel %vm2458, %v2367, %v2467
    %v2477 = vsel %vm2459, %v2369, %v2468
    %v2478 = vsel %vm2460, %v2408, %v2469
    %v2479 = vsel %vm2461, %v2410, %v2470
    %v2480 = vsel %vm2462, %v2449, %v2471
    %v2481 = vld [vmem:[%s13] sm:$0xff]
    %v2482 = vld [vmem:[%s13 + $0x8] sm:$0xff]
    %v2483 = vld [vmem:[%s13 + $0x10] sm:$0xff]
    %v2484 = vld [vmem:[%s13 + $0x18] sm:$0xff]
    %v2485 = vld [vmem:[%s13 + $0x20] sm:$0xff]
    %v2486 = vld [vmem:[%s13 + $0x28] sm:$0xff]
    %v2487 = vld [vmem:[%s13 + $0x30] sm:$0xff]
    %v2488 = vld [vmem:[%s13 + $0x38] sm:$0xff]
    %v2489 = vld [vmem:[%s13 + $0x40] sm:$0xff]
    %v2490 = vld [vmem:[%s13 + $0x48] sm:$0xff]
    %v2491 = vld [vmem:[%s13 + $0x50] sm:$0xff]
    %v2492 = vld [vmem:[%s13 + $0x58] sm:$0xff]
    %v2493 = vld [vmem:[%s13 + $0x60] sm:$0xff]
    %v2494 = vld [vmem:[%s13 + $0x68] sm:$0xff]
    %v2495 = vld [vmem:[%s13 + $0x70] sm:$0xff]
    %v2496 = vld [vmem:[%s13 + $0x78] sm:$0xff]
    %v2497 = vld [vmem:[%s13 + $0x80] sm:$0xff]
    %v2498 = vld [vmem:[%s13 + $0x88] sm:$0xff]
    %v2499 = vld [vmem:[%s13 + $0x90] sm:$0xff]
    %v2500 = vld [vmem:[%s13 + $0x98] sm:$0xff]
    %v2501 = vld [vmem:[%s13 + $0xa0] sm:$0xff]
    %v2502 = vld [vmem:[%s13 + $0xa8] sm:$0xff]
    %v2503 = vld [vmem:[%s13 + $0xb0] sm:$0xff]
    %v2504 = vld [vmem:[%s13 + $0xb8] sm:$0xff]
    %v2505 = vld [vmem:[%s13 + $0xc0] sm:$0xff]
    %v2506 = vld [vmem:[%s13 + $0xc8] sm:$0xff]
    %v2507 = vld [vmem:[%s13 + $0xd0] sm:$0xff]
    %v2508 = vld [vmem:[%s13 + $0xd8] sm:$0xff]
    %v2509 = vld [vmem:[%s13 + $0xe0] sm:$0xff]
    %v2510 = vld [vmem:[%s13 + $0xe8] sm:$0xff]
    %v2511 = vld [vmem:[%s13 + $0xf0] sm:$0xff]
    %v2512 = vld [vmem:[%s13 + $0xf8] sm:$0xff]
    %v2513 = vld [vmem:[%s13 + $0x100] sm:$0xff]
    %v2514 = vld [vmem:[%s13 + $0x108] sm:$0xff]
    %v2515 = vld [vmem:[%s13 + $0x110] sm:$0xff]
    %v2516 = vld [vmem:[%s13 + $0x118] sm:$0xff]
    %v2517 = vld [vmem:[%s13 + $0x120] sm:$0xff]
    %v2518 = vld [vmem:[%s13 + $0x128] sm:$0xff]
    %v2519 = vld [vmem:[%s13 + $0x130] sm:$0xff]
    %v2520 = vld [vmem:[%s13 + $0x138] sm:$0xff]
    %v2521 = vld [vmem:[%s13 + $0x140] sm:$0xff]
    %v2522 = vld [vmem:[%s13 + $0x148] sm:$0xff]
    %v2523 = vld [vmem:[%s13 + $0x150] sm:$0xff]
    %v2524 = vld [vmem:[%s13 + $0x158] sm:$0xff]
    %v2525 = vld [vmem:[%s13 + $0x160] sm:$0xff]
    %v2526 = vld [vmem:[%s13 + $0x168] sm:$0xff]
    %v2527 = vld [vmem:[%s13 + $0x170] sm:$0xff]
    %v2528 = vld [vmem:[%s13 + $0x178] sm:$0xff]
    %v2529 = vld [vmem:[%s13 + $0x180] sm:$0xff]
    %v2530 = vld [vmem:[%s13 + $0x188] sm:$0xff]
    %v2531 = vld [vmem:[%s13 + $0x190] sm:$0xff]
    %v2532 = vld [vmem:[%s13 + $0x198] sm:$0xff]
    %v2533 = vld [vmem:[%s13 + $0x1a0] sm:$0xff]
    %v2534 = vld [vmem:[%s13 + $0x1a8] sm:$0xff]
    %v2535 = vld [vmem:[%s13 + $0x1b0] sm:$0xff]
    %v2536 = vld [vmem:[%s13 + $0x1b8] sm:$0xff]
    %v2537 = vld [vmem:[%s13 + $0x1c0] sm:$0xff]
    %v2538 = vld [vmem:[%s13 + $0x1c8] sm:$0xff]
    %v2539 = vld [vmem:[%s13 + $0x1d0] sm:$0xff]
    %v2540 = vld [vmem:[%s13 + $0x1d8] sm:$0xff]
    %v2541 = vld [vmem:[%s13 + $0x1e0] sm:$0xff]
    %v2542 = vld [vmem:[%s13 + $0x1e8] sm:$0xff]
    %v2543 = vld [vmem:[%s13 + $0x1f0] sm:$0xff]
    %v2544 = vld [vmem:[%s13 + $0x1f8] sm:$0xff]
    %v2545 = vld [vmem:[%s13 + $0x200] sm:$0xff]
    %v2546 = vld [vmem:[%s13 + $0x208] sm:$0xff]
    %v2547 = vld [vmem:[%s13 + $0x210] sm:$0xff]
    %v2548 = vld [vmem:[%s13 + $0x218] sm:$0xff]
    %v2549 = vld [vmem:[%s13 + $0x220] sm:$0xff]
    %v2550 = vld [vmem:[%s13 + $0x228] sm:$0xff]
    %v2551 = vld [vmem:[%s13 + $0x230] sm:$0xff]
    %v2552 = vld [vmem:[%s13 + $0x238] sm:$0xff]
    %v2553 = vld [vmem:[%s13 + $0x240] sm:$0xff]
    %v2554 = vld [vmem:[%s13 + $0x248] sm:$0xff]
    %v2555 = vld [vmem:[%s13 + $0x250] sm:$0xff]
    %v2556 = vld [vmem:[%s13 + $0x258] sm:$0xff]
    %v2557 = vld [vmem:[%s13 + $0x260] sm:$0xff]
    %v2558 = vld [vmem:[%s13 + $0x268] sm:$0xff]
    %v2559 = vld [vmem:[%s13 + $0x270] sm:$0xff]
    %v2560 = vld [vmem:[%s13 + $0x278] sm:$0xff]
    %v2561 = vld [vmem:[%s13 + $0x280] sm:$0xff]
    %v2562 = vld [vmem:[%s13 + $0x288] sm:$0xff]
    %v2563 = vld [vmem:[%s13 + $0x290] sm:$0xff]
    %v2564 = vld [vmem:[%s13 + $0x298] sm:$0xff]
    %v2565 = vld [vmem:[%s13 + $0x2a0] sm:$0xff]
    %v2566 = vld [vmem:[%s13 + $0x2a8] sm:$0xff]
    %v2567 = vld [vmem:[%s13 + $0x2b0] sm:$0xff]
    %v2568 = vld [vmem:[%s13 + $0x2b8] sm:$0xff]
    %v2569 = vld [vmem:[%s13 + $0x2c0] sm:$0xff]
    %v2570 = vld [vmem:[%s13 + $0x2c8] sm:$0xff]
    %v2571 = vld [vmem:[%s13 + $0x2d0] sm:$0xff]
    %v2572 = vld [vmem:[%s13 + $0x2d8] sm:$0xff]
    %v2573 = vld [vmem:[%s13 + $0x2e0] sm:$0xff]
    %v2574 = vld [vmem:[%s13 + $0x2e8] sm:$0xff]
    %v2575 = vld [vmem:[%s13 + $0x2f0] sm:$0xff]
    %v2576 = vld [vmem:[%s13 + $0x2f8] sm:$0xff]
    %v2577 = vld [vmem:[%s13 + $0x300] sm:$0xff]
    %v2578 = vld [vmem:[%s13 + $0x308] sm:$0xff]
    %v2579 = vld [vmem:[%s13 + $0x310] sm:$0xff]
    %v2580 = vld [vmem:[%s13 + $0x318] sm:$0xff]
    %v2581 = vld [vmem:[%s13 + $0x320] sm:$0xff]
    %v2582 = vld [vmem:[%s13 + $0x328] sm:$0xff]
    %v2583 = vld [vmem:[%s13 + $0x330] sm:$0xff]
    %v2584 = vld [vmem:[%s13 + $0x338] sm:$0xff]
    %v2585 = vld [vmem:[%s13 + $0x340] sm:$0xff]
    %v2586 = vld [vmem:[%s13 + $0x348] sm:$0xff]
    %v2587 = vld [vmem:[%s13 + $0x350] sm:$0xff]
    %v2588 = vld [vmem:[%s13 + $0x358] sm:$0xff]
    %v2589 = vld [vmem:[%s13 + $0x360] sm:$0xff]
    %v2590 = vld [vmem:[%s13 + $0x368] sm:$0xff]
    %v2591 = vld [vmem:[%s13 + $0x370] sm:$0xff]
    %v2592 = vld [vmem:[%s13 + $0x378] sm:$0xff]
    %v2593 = vld [vmem:[%s13 + $0x380] sm:$0xff]
    %v2594 = vld [vmem:[%s13 + $0x388] sm:$0xff]
    %v2595 = vld [vmem:[%s13 + $0x390] sm:$0xff]
    %v2596 = vld [vmem:[%s13 + $0x398] sm:$0xff]
    %v2597 = vld [vmem:[%s13 + $0x3a0] sm:$0xff]
    %v2598 = vld [vmem:[%s13 + $0x3a8] sm:$0xff]
    %v2599 = vld [vmem:[%s13 + $0x3b0] sm:$0xff]
    %v2600 = vld [vmem:[%s13 + $0x3b8] sm:$0xff]
    %v2601 = vld [vmem:[%s13 + $0x3c0] sm:$0xff]
    %v2602 = vld [vmem:[%s13 + $0x3c8] sm:$0xff]
    %v2603 = vld [vmem:[%s13 + $0x3d0] sm:$0xff]
    %v2604 = vld [vmem:[%s13 + $0x3d8] sm:$0xff]
    %v2605 = vld [vmem:[%s13 + $0x3e0] sm:$0xff]
    %v2606 = vld [vmem:[%s13 + $0x3e8] sm:$0xff]
    %v2607 = vld [vmem:[%s13 + $0x3f0] sm:$0xff]
    %v2608 = vld [vmem:[%s13 + $0x3f8] sm:$0xff]
    %v2609 = vld [vmem:[%s13 + $0x400] sm:$0xff]
    %v2610 = vld [vmem:[%s13 + $0x408] sm:$0xff]
    %v2611 = vld [vmem:[%s13 + $0x410] sm:$0xff]
    %v2612 = vld [vmem:[%s13 + $0x418] sm:$0xff]
    %v2613 = vld [vmem:[%s13 + $0x420] sm:$0xff]
    %v2614 = vld [vmem:[%s13 + $0x428] sm:$0xff]
    %v2615 = vld [vmem:[%s13 + $0x430] sm:$0xff]
    %v2616 = vld [vmem:[%s13 + $0x438] sm:$0xff]
    %v2617 = vld [vmem:[%s13 + $0x440] sm:$0xff]
    %v2618 = vld [vmem:[%s13 + $0x448] sm:$0xff]
    %v2619 = vld [vmem:[%s13 + $0x450] sm:$0xff]
    %v2620 = vld [vmem:[%s13 + $0x458] sm:$0xff]
    %v2621 = vld [vmem:[%s13 + $0x460] sm:$0xff]
    %v2622 = vld [vmem:[%s13 + $0x468] sm:$0xff]
    %v2623 = vld [vmem:[%s13 + $0x470] sm:$0xff]
    %v2624 = vld [vmem:[%s13 + $0x478] sm:$0xff]
    %v2625 = vld [vmem:[#allocation21] sm:$0xff]
    %v2626 = vld [vmem:[#allocation21 + $0x8] sm:$0xff]
    %v2627 = vld [vmem:[#allocation21 + $0x10] sm:$0xff]
    %v2628 = vld [vmem:[#allocation21 + $0x18] sm:$0xff]
    %v2629 = vld [vmem:[#allocation21 + $0x20] sm:$0xff]
    %v2630 = vld [vmem:[#allocation21 + $0x28] sm:$0xff]
    %v2631 = vld [vmem:[#allocation21 + $0x30] sm:$0xff]
    %v2632 = vld [vmem:[#allocation21 + $0x38] sm:$0xff]
    %v2633 = vld [vmem:[#allocation21 + $0x40] sm:$0xff]
    %v2634 = vld [vmem:[#allocation21 + $0x48] sm:$0xff]
    %v2635 = vld [vmem:[#allocation21 + $0x50] sm:$0xff]
    %v2636 = vld [vmem:[#allocation21 + $0x58] sm:$0xff]
    %v2637 = vld [vmem:[#allocation21 + $0x60] sm:$0xff]
    %v2638 = vld [vmem:[#allocation21 + $0x68] sm:$0xff]
    %v2639 = vld [vmem:[#allocation21 + $0x70] sm:$0xff]
    %v2640 = vld [vmem:[#allocation21 + $0x78] sm:$0xff]
    %v2641 = vld [vmem:[#allocation21 + $0x80] sm:$0xff]
    %v2642 = vld [vmem:[#allocation21 + $0x88] sm:$0xff]
    %v2643 = vld [vmem:[#allocation21 + $0x90] sm:$0xff]
    %v2644 = vld [vmem:[#allocation21 + $0x98] sm:$0xff]
    %v2645 = vld [vmem:[#allocation21 + $0xa0] sm:$0xff]
    %v2646 = vld [vmem:[#allocation21 + $0xa8] sm:$0xff]
    %v2647 = vld [vmem:[#allocation21 + $0xb0] sm:$0xff]
    %v2648 = vld [vmem:[#allocation21 + $0xb8] sm:$0xff]
    %v2649 = vld [vmem:[#allocation21 + $0xc0] sm:$0xff]
    %v2650 = vld [vmem:[#allocation21 + $0xc8] sm:$0xff]
    %v2651 = vld [vmem:[#allocation21 + $0xd0] sm:$0xff]
    %v2652 = vld [vmem:[#allocation21 + $0xd8] sm:$0xff]
    %v2653 = vld [vmem:[#allocation21 + $0xe0] sm:$0xff]
    %v2654 = vld [vmem:[#allocation21 + $0xe8] sm:$0xff]
    %v2655 = vld [vmem:[#allocation21 + $0xf0] sm:$0xff]
    %v2656 = vld [vmem:[#allocation21 + $0xf8] sm:$0xff]
    %v2657 = vld [vmem:[#allocation21 + $0x100] sm:$0xff]
    %v2658 = vld [vmem:[#allocation21 + $0x108] sm:$0xff]
    %v2659 = vld [vmem:[#allocation21 + $0x110] sm:$0xff]
    %v2660 = vld [vmem:[#allocation21 + $0x118] sm:$0xff]
    %v2661 = vld [vmem:[#allocation22] sm:$0x1]
    %v2662 = vld [vmem:[#allocation24] sm:$0x1]
    %v2663 = vsel %vm873, %v2472, 0.0
    %v2664 = vrot.slane %v2663, 4
    %v2665 = vadd.f32 %v2663, %v2664
    %v2666 = vrot.slane %v2665, 2
    %v2667 = vadd.f32 %v2665, %v2666
    %v2668 = vrot.slane %v2667, 1
    %v2669 = vadd.f32 %v2667, %v2668
    %v2670 = vsel %vm873, %v2473, 0.0
    %v2671 = vrot.slane %v2670, 4
    %v2672 = vadd.f32 %v2670, %v2671
    %v2673 = vrot.slane %v2672, 2
    %v2674 = vadd.f32 %v2672, %v2673
    %v2675 = vrot.slane %v2674, 1
    %v2676 = vadd.f32 %v2674, %v2675
    %v2677 = vsel %vm873, %v2474, 0.0
    %v2678 = vrot.slane %v2677, 4
    %v2679 = vadd.f32 %v2677, %v2678
    %v2680 = vrot.slane %v2679, 2
    %v2681 = vadd.f32 %v2679, %v2680
    %v2682 = vrot.slane %v2681, 1
    %v2683 = vadd.f32 %v2681, %v2682
    %v2684 = vsel %vm873, %v2475, 0.0
    %v2685 = vrot.slane %v2684, 4
    %v2686 = vadd.f32 %v2684, %v2685
    %v2687 = vrot.slane %v2686, 2
    %v2688 = vadd.f32 %v2686, %v2687
    %v2689 = vrot.slane %v2688, 1
    %v2690 = vadd.f32 %v2688, %v2689
    %v2691 = vsel %vm873, %v2476, 0.0
    %v2692 = vrot.slane %v2691, 4
    %v2693 = vadd.f32 %v2691, %v2692
    %v2694 = vrot.slane %v2693, 2
    %v2695 = vadd.f32 %v2693, %v2694
    %v2696 = vrot.slane %v2695, 1
    %v2697 = vadd.f32 %v2695, %v2696
    %v2698 = vsel %vm873, %v2477, 0.0
    %v2699 = vrot.slane %v2698, 4
    %v2700 = vadd.f32 %v2698, %v2699
    %v2701 = vrot.slane %v2700, 2
    %v2702 = vadd.f32 %v2700, %v2701
    %v2703 = vrot.slane %v2702, 1
    %v2704 = vadd.f32 %v2702, %v2703
    %v2705 = vsel %vm873, %v2478, 0.0
    %v2706 = vrot.slane %v2705, 4
    %v2707 = vadd.f32 %v2705, %v2706
    %v2708 = vrot.slane %v2707, 2
    %v2709 = vadd.f32 %v2707, %v2708
    %v2710 = vrot.slane %v2709, 1
    %v2711 = vadd.f32 %v2709, %v2710
    %v2712 = vsel %vm873, %v2479, 0.0
    %v2713 = vrot.slane %v2712, 4
    %v2714 = vadd.f32 %v2712, %v2713
    %v2715 = vrot.slane %v2714, 2
    %v2716 = vadd.f32 %v2714, %v2715
    %v2717 = vrot.slane %v2716, 1
    %v2718 = vadd.f32 %v2716, %v2717
    %v2719 = vsel %vm873, %v2480, 0.0
    %v2720 = vrot.slane %v2719, 4
    %v2721 = vadd.f32 %v2719, %v2720
    %v2722 = vrot.slane %v2721, 2
    %v2723 = vadd.f32 %v2721, %v2722
    %v2724 = vrot.slane %v2723, 1
    %v2725 = vadd.f32 %v2723, %v2724
    %2726 = vmatprep.subr.mxu0 0.0
    %2727 = vmatpush1.msra.mxu0 %v2496
    %2728 = vmatprep.subr.mxu0 0.0
    %2729 = vmatpush1.msra.mxu0 %v2495
    %2730 = vmatprep.subr.mxu0 0.0
    %2731 = vmatpush1.msra.mxu0 %v2494
    %2732 = vmatprep.subr.mxu0 0.0
    %2733 = vmatpush1.msra.mxu0 %v2493
    %2734 = vmatprep.subr.mxu0 0.0
    %2735 = vmatpush1.msra.mxu0 %v2492
    %2736 = vmatprep.subr.mxu0 0.0
    %2737 = vmatpush1.msra.mxu0 %v2491
    %2738 = vmatprep.subr.mxu0 0.0
    %2739 = vmatpush1.msra.mxu0 %v2490
    %2740 = vmatprep.subr.mxu0 0.0
    %2741 = vmatpush1.msra.mxu0 %v2489
    %2742 = vmatprep.subr.mxu0 0.0
    %2743 = vmatpush1.msra.mxu0 %v2488
    %2744 = vmatprep.subr.mxu0 0.0
    %2745 = vmatpush1.msra.mxu0 %v2487
    %2746 = vmatprep.subr.mxu0 0.0
    %2747 = vmatpush1.msra.mxu0 %v2486
    %2748 = vmatprep.subr.mxu0 0.0
    %2749 = vmatpush1.msra.mxu0 %v2485
    %2750 = vmatprep.subr.mxu0 0.0
    %2751 = vmatpush1.msra.mxu0 %v2484
    %2752 = vmatprep.subr.mxu0 0.0
    %2753 = vmatpush1.msra.mxu0 %v2483
    %2754 = vmatprep.subr.mxu0 0.0
    %2755 = vmatpush1.msra.mxu0 %v2482
    %2756 = vmatprep.subr.mxu0 0.0
    %2757 = vmatpush1.msra.mxu0 %v2481
    %2758 = vmatprep.subr.mxu0 0.0
    %2759 = vmatpush2.msra.mxu0 %v2512
    %2760 = vmatprep.subr.mxu0 0.0
    %2761 = vmatpush2.msra.mxu0 %v2511
    %2762 = vmatprep.subr.mxu0 0.0
    %2763 = vmatpush2.msra.mxu0 %v2510
    %2764 = vmatprep.subr.mxu0 0.0
    %2765 = vmatpush2.msra.mxu0 %v2509
    %2766 = vmatprep.subr.mxu0 0.0
    %2767 = vmatpush2.msra.mxu0 %v2508
    %2768 = vmatprep.subr.mxu0 0.0
    %2769 = vmatpush2.msra.mxu0 %v2507
    %2770 = vmatprep.subr.mxu0 0.0
    %2771 = vmatpush2.msra.mxu0 %v2506
    %2772 = vmatprep.subr.mxu0 0.0
    %2773 = vmatpush2.msra.mxu0 %v2505
    %2774 = vmatprep.subr.mxu0 0.0
    %2775 = vmatpush2.msra.mxu0 %v2504
    %2776 = vmatprep.subr.mxu0 0.0
    %2777 = vmatpush2.msra.mxu0 %v2503
    %2778 = vmatprep.subr.mxu0 0.0
    %2779 = vmatpush2.msra.mxu0 %v2502
    %2780 = vmatprep.subr.mxu0 0.0
    %2781 = vmatpush2.msra.mxu0 %v2501
    %2782 = vmatprep.subr.mxu0 0.0
    %2783 = vmatpush2.msra.mxu0 %v2500
    %2784 = vmatprep.subr.mxu0 0.0
    %2785 = vmatpush2.msra.mxu0 %v2499
    %2786 = vmatprep.subr.mxu0 0.0
    %2787 = vmatpush2.msra.mxu0 %v2498
    %2788 = vmatprep.subr.mxu0 0.0
    %2789 = vmatpush2.msra.mxu0 %v2497
    %2790 = vmatprep.mubr.f32.mxu0 %v2676
    %2791 = vmatmul.mubr.f32.gmra.mxu0 %v2669
    %v2792 = vpop.f32.mrf.mxu0
    %v2793 = vadd.f32 0.0, %v2792
    %v2794 = vpop.f32.mrf.mxu0
    %2795 = vdwg.mxu0
    %2796 = vmatprep.subr.mxu0 0.0
    %2797 = vmatpush1.msra.mxu0 %v2528
    %2798 = vmatprep.subr.mxu0 0.0
    %2799 = vmatpush1.msra.mxu0 %v2527
    %2800 = vmatprep.subr.mxu0 0.0
    %2801 = vmatpush1.msra.mxu0 %v2526
    %2802 = vmatprep.subr.mxu0 0.0
    %2803 = vmatpush1.msra.mxu0 %v2525
    %2804 = vmatprep.subr.mxu0 0.0
    %2805 = vmatpush1.msra.mxu0 %v2524
    %2806 = vmatprep.subr.mxu0 0.0
    %2807 = vmatpush1.msra.mxu0 %v2523
    %2808 = vmatprep.subr.mxu0 0.0
    %2809 = vmatpush1.msra.mxu0 %v2522
    %2810 = vmatprep.subr.mxu0 0.0
    %2811 = vmatpush1.msra.mxu0 %v2521
    %2812 = vmatprep.subr.mxu0 0.0
    %2813 = vmatpush1.msra.mxu0 %v2520
    %2814 = vmatprep.subr.mxu0 0.0
    %2815 = vmatpush1.msra.mxu0 %v2519
    %2816 = vmatprep.subr.mxu0 0.0
    %2817 = vmatpush1.msra.mxu0 %v2518
    %2818 = vmatprep.subr.mxu0 0.0
    %2819 = vmatpush1.msra.mxu0 %v2517
    %2820 = vmatprep.subr.mxu0 0.0
    %2821 = vmatpush1.msra.mxu0 %v2516
    %2822 = vmatprep.subr.mxu0 0.0
    %2823 = vmatpush1.msra.mxu0 %v2515
    %2824 = vmatprep.subr.mxu0 0.0
    %2825 = vmatpush1.msra.mxu0 %v2514
    %2826 = vmatprep.subr.mxu0 0.0
    %2827 = vmatpush1.msra.mxu0 %v2513
    %2828 = vmatprep.subr.mxu0 0.0
    %2829 = vmatpush2.msra.mxu0 %v2544
    %2830 = vmatprep.subr.mxu0 0.0
    %2831 = vmatpush2.msra.mxu0 %v2543
    %2832 = vmatprep.subr.mxu0 0.0
    %2833 = vmatpush2.msra.mxu0 %v2542
    %2834 = vmatprep.subr.mxu0 0.0
    %2835 = vmatpush2.msra.mxu0 %v2541
    %2836 = vmatprep.subr.mxu0 0.0
    %2837 = vmatpush2.msra.mxu0 %v2540
    %2838 = vmatprep.subr.mxu0 0.0
    %2839 = vmatpush2.msra.mxu0 %v2539
    %2840 = vmatprep.subr.mxu0 0.0
    %2841 = vmatpush2.msra.mxu0 %v2538
    %2842 = vmatprep.subr.mxu0 0.0
    %2843 = vmatpush2.msra.mxu0 %v2537
    %2844 = vmatprep.subr.mxu0 0.0
    %2845 = vmatpush2.msra.mxu0 %v2536
    %2846 = vmatprep.subr.mxu0 0.0
    %2847 = vmatpush2.msra.mxu0 %v2535
    %2848 = vmatprep.subr.mxu0 0.0
    %2849 = vmatpush2.msra.mxu0 %v2534
    %2850 = vmatprep.subr.mxu0 0.0
    %2851 = vmatpush2.msra.mxu0 %v2533
    %2852 = vmatprep.subr.mxu0 0.0
    %2853 = vmatpush2.msra.mxu0 %v2532
    %2854 = vmatprep.subr.mxu0 0.0
    %2855 = vmatpush2.msra.mxu0 %v2531
    %2856 = vmatprep.subr.mxu0 0.0
    %2857 = vmatpush2.msra.mxu0 %v2530
    %2858 = vmatprep.subr.mxu0 0.0
    %2859 = vmatpush2.msra.mxu0 %v2529
    %2860 = vmatprep.mubr.f32.mxu0 %v2690
    %2861 = vmatmul.mubr.f32.gmra.mxu0 %v2683
    %v2862 = vpop.f32.mrf.mxu0
    %v2863 = vadd.f32 %v2793, %v2862
    %v2864 = vpop.f32.mrf.mxu0
    %2865 = vdwg.mxu0
    %2866 = vmatprep.subr.mxu0 0.0
    %2867 = vmatpush1.msra.mxu0 %v2560
    %2868 = vmatprep.subr.mxu0 0.0
    %2869 = vmatpush1.msra.mxu0 %v2559
    %2870 = vmatprep.subr.mxu0 0.0
    %2871 = vmatpush1.msra.mxu0 %v2558
    %2872 = vmatprep.subr.mxu0 0.0
    %2873 = vmatpush1.msra.mxu0 %v2557
    %2874 = vmatprep.subr.mxu0 0.0
    %2875 = vmatpush1.msra.mxu0 %v2556
    %2876 = vmatprep.subr.mxu0 0.0
    %2877 = vmatpush1.msra.mxu0 %v2555
    %2878 = vmatprep.subr.mxu0 0.0
    %2879 = vmatpush1.msra.mxu0 %v2554
    %2880 = vmatprep.subr.mxu0 0.0
    %2881 = vmatpush1.msra.mxu0 %v2553
    %2882 = vmatprep.subr.mxu0 0.0
    %2883 = vmatpush1.msra.mxu0 %v2552
    %2884 = vmatprep.subr.mxu0 0.0
    %2885 = vmatpush1.msra.mxu0 %v2551
    %2886 = vmatprep.subr.mxu0 0.0
    %2887 = vmatpush1.msra.mxu0 %v2550
    %2888 = vmatprep.subr.mxu0 0.0
    %2889 = vmatpush1.msra.mxu0 %v2549
    %2890 = vmatprep.subr.mxu0 0.0
    %2891 = vmatpush1.msra.mxu0 %v2548
    %2892 = vmatprep.subr.mxu0 0.0
    %2893 = vmatpush1.msra.mxu0 %v2547
    %2894 = vmatprep.subr.mxu0 0.0
    %2895 = vmatpush1.msra.mxu0 %v2546
    %2896 = vmatprep.subr.mxu0 0.0
    %2897 = vmatpush1.msra.mxu0 %v2545
    %2898 = vmatprep.subr.mxu0 0.0
    %2899 = vmatpush2.msra.mxu0 %v2576
    %2900 = vmatprep.subr.mxu0 0.0
    %2901 = vmatpush2.msra.mxu0 %v2575
    %2902 = vmatprep.subr.mxu0 0.0
    %2903 = vmatpush2.msra.mxu0 %v2574
    %2904 = vmatprep.subr.mxu0 0.0
    %2905 = vmatpush2.msra.mxu0 %v2573
    %2906 = vmatprep.subr.mxu0 0.0
    %2907 = vmatpush2.msra.mxu0 %v2572
    %2908 = vmatprep.subr.mxu0 0.0
    %2909 = vmatpush2.msra.mxu0 %v2571
    %2910 = vmatprep.subr.mxu0 0.0
    %2911 = vmatpush2.msra.mxu0 %v2570
    %2912 = vmatprep.subr.mxu0 0.0
    %2913 = vmatpush2.msra.mxu0 %v2569
    %2914 = vmatprep.subr.mxu0 0.0
    %2915 = vmatpush2.msra.mxu0 %v2568
    %2916 = vmatprep.subr.mxu0 0.0
    %2917 = vmatpush2.msra.mxu0 %v2567
    %2918 = vmatprep.subr.mxu0 0.0
    %2919 = vmatpush2.msra.mxu0 %v2566
    %2920 = vmatprep.subr.mxu0 0.0
    %2921 = vmatpush2.msra.mxu0 %v2565
    %2922 = vmatprep.subr.mxu0 0.0
    %2923 = vmatpush2.msra.mxu0 %v2564
    %2924 = vmatprep.subr.mxu0 0.0
    %2925 = vmatpush2.msra.mxu0 %v2563
    %2926 = vmatprep.subr.mxu0 0.0
    %2927 = vmatpush2.msra.mxu0 %v2562
    %2928 = vmatprep.subr.mxu0 0.0
    %2929 = vmatpush2.msra.mxu0 %v2561
    %2930 = vmatprep.mubr.f32.mxu0 %v2704
    %2931 = vmatmul.mubr.f32.gmra.mxu0 %v2697
    %v2932 = vpop.f32.mrf.mxu0
    %v2933 = vadd.f32 %v2863, %v2932
    %v2934 = vpop.f32.mrf.mxu0
    %2935 = vdwg.mxu0
    %2936 = vmatprep.subr.mxu0 0.0
    %2937 = vmatpush1.msra.mxu0 %v2592
    %2938 = vmatprep.subr.mxu0 0.0
    %2939 = vmatpush1.msra.mxu0 %v2591
    %2940 = vmatprep.subr.mxu0 0.0
    %2941 = vmatpush1.msra.mxu0 %v2590
    %2942 = vmatprep.subr.mxu0 0.0
    %2943 = vmatpush1.msra.mxu0 %v2589
    %2944 = vmatprep.subr.mxu0 0.0
    %2945 = vmatpush1.msra.mxu0 %v2588
    %2946 = vmatprep.subr.mxu0 0.0
    %2947 = vmatpush1.msra.mxu0 %v2587
    %2948 = vmatprep.subr.mxu0 0.0
    %2949 = vmatpush1.msra.mxu0 %v2586
    %2950 = vmatprep.subr.mxu0 0.0
    %2951 = vmatpush1.msra.mxu0 %v2585
    %2952 = vmatprep.subr.mxu0 0.0
    %2953 = vmatpush1.msra.mxu0 %v2584
    %2954 = vmatprep.subr.mxu0 0.0
    %2955 = vmatpush1.msra.mxu0 %v2583
    %2956 = vmatprep.subr.mxu0 0.0
    %2957 = vmatpush1.msra.mxu0 %v2582
    %2958 = vmatprep.subr.mxu0 0.0
    %2959 = vmatpush1.msra.mxu0 %v2581
    %2960 = vmatprep.subr.mxu0 0.0
    %2961 = vmatpush1.msra.mxu0 %v2580
    %2962 = vmatprep.subr.mxu0 0.0
    %2963 = vmatpush1.msra.mxu0 %v2579
    %2964 = vmatprep.subr.mxu0 0.0
    %2965 = vmatpush1.msra.mxu0 %v2578
    %2966 = vmatprep.subr.mxu0 0.0
    %2967 = vmatpush1.msra.mxu0 %v2577
    %2968 = vmatprep.subr.mxu0 0.0
    %2969 = vmatpush2.msra.mxu0 %v2608
    %2970 = vmatprep.subr.mxu0 0.0
    %2971 = vmatpush2.msra.mxu0 %v2607
    %2972 = vmatprep.subr.mxu0 0.0
    %2973 = vmatpush2.msra.mxu0 %v2606
    %2974 = vmatprep.subr.mxu0 0.0
    %2975 = vmatpush2.msra.mxu0 %v2605
    %2976 = vmatprep.subr.mxu0 0.0
    %2977 = vmatpush2.msra.mxu0 %v2604
    %2978 = vmatprep.subr.mxu0 0.0
    %2979 = vmatpush2.msra.mxu0 %v2603
    %2980 = vmatprep.subr.mxu0 0.0
    %2981 = vmatpush2.msra.mxu0 %v2602
    %2982 = vmatprep.subr.mxu0 0.0
    %2983 = vmatpush2.msra.mxu0 %v2601
    %2984 = vmatprep.subr.mxu0 0.0
    %2985 = vmatpush2.msra.mxu0 %v2600
    %2986 = vmatprep.subr.mxu0 0.0
    %2987 = vmatpush2.msra.mxu0 %v2599
    %2988 = vmatprep.subr.mxu0 0.0
    %2989 = vmatpush2.msra.mxu0 %v2598
    %2990 = vmatprep.subr.mxu0 0.0
    %2991 = vmatpush2.msra.mxu0 %v2597
    %2992 = vmatprep.subr.mxu0 0.0
    %2993 = vmatpush2.msra.mxu0 %v2596
    %2994 = vmatprep.subr.mxu0 0.0
    %2995 = vmatpush2.msra.mxu0 %v2595
    %2996 = vmatprep.subr.mxu0 0.0
    %2997 = vmatpush2.msra.mxu0 %v2594
    %2998 = vmatprep.subr.mxu0 0.0
    %2999 = vmatpush2.msra.mxu0 %v2593
    %3000 = vmatprep.mubr.f32.mxu0 %v2718
    %3001 = vmatmul.mubr.f32.gmra.mxu0 %v2711
    %v3002 = vpop.f32.mrf.mxu0
    %v3003 = vadd.f32 %v2933, %v3002
    %v3004 = vpop.f32.mrf.mxu0
    %3005 = vdwg.mxu0
    %3006 = vmatprep.subr.mxu0 0.0
    %3007 = vmatpush1.msra.mxu0 %v2624
    %3008 = vmatprep.subr.mxu0 0.0
    %3009 = vmatpush1.msra.mxu0 %v2623
    %3010 = vmatprep.subr.mxu0 0.0
    %3011 = vmatpush1.msra.mxu0 %v2622
    %3012 = vmatprep.subr.mxu0 0.0
    %3013 = vmatpush1.msra.mxu0 %v2621
    %3014 = vmatprep.subr.mxu0 0.0
    %3015 = vmatpush1.msra.mxu0 %v2620
    %3016 = vmatprep.subr.mxu0 0.0
    %3017 = vmatpush1.msra.mxu0 %v2619
    %3018 = vmatprep.subr.mxu0 0.0
    %3019 = vmatpush1.msra.mxu0 %v2618
    %3020 = vmatprep.subr.mxu0 0.0
    %3021 = vmatpush1.msra.mxu0 %v2617
    %3022 = vmatprep.subr.mxu0 0.0
    %3023 = vmatpush1.msra.mxu0 %v2616
    %3024 = vmatprep.subr.mxu0 0.0
    %3025 = vmatpush1.msra.mxu0 %v2615
    %3026 = vmatprep.subr.mxu0 0.0
    %3027 = vmatpush1.msra.mxu0 %v2614
    %3028 = vmatprep.subr.mxu0 0.0
    %3029 = vmatpush1.msra.mxu0 %v2613
    %3030 = vmatprep.subr.mxu0 0.0
    %3031 = vmatpush1.msra.mxu0 %v2612
    %3032 = vmatprep.subr.mxu0 0.0
    %3033 = vmatpush1.msra.mxu0 %v2611
    %3034 = vmatprep.subr.mxu0 0.0
    %3035 = vmatpush1.msra.mxu0 %v2610
    %3036 = vmatprep.subr.mxu0 0.0
    %3037 = vmatpush1.msra.mxu0 %v2609
    %3038 = vmatprep.subr.mxu0 0.0
    %3039 = vmatpush2.msra.mxu0 0.0
    %3040 = vmatprep.subr.mxu0 0.0
    %3041 = vmatpush2.msra.mxu0 0.0
    %3042 = vmatprep.subr.mxu0 0.0
    %3043 = vmatpush2.msra.mxu0 0.0
    %3044 = vmatprep.subr.mxu0 0.0
    %3045 = vmatpush2.msra.mxu0 0.0
    %3046 = vmatprep.subr.mxu0 0.0
    %3047 = vmatpush2.msra.mxu0 0.0
    %3048 = vmatprep.subr.mxu0 0.0
    %3049 = vmatpush2.msra.mxu0 0.0
    %3050 = vmatprep.subr.mxu0 0.0
    %3051 = vmatpush2.msra.mxu0 0.0
    %3052 = vmatprep.subr.mxu0 0.0
    %3053 = vmatpush2.msra.mxu0 0.0
    %3054 = vmatprep.subr.mxu0 0.0
    %3055 = vmatpush2.msra.mxu0 0.0
    %3056 = vmatprep.subr.mxu0 0.0
    %3057 = vmatpush2.msra.mxu0 0.0
    %3058 = vmatprep.subr.mxu0 0.0
    %3059 = vmatpush2.msra.mxu0 0.0
    %3060 = vmatprep.subr.mxu0 0.0
    %3061 = vmatpush2.msra.mxu0 0.0
    %3062 = vmatprep.subr.mxu0 0.0
    %3063 = vmatpush2.msra.mxu0 0.0
    %3064 = vmatprep.subr.mxu0 0.0
    %3065 = vmatpush2.msra.mxu0 0.0
    %3066 = vmatprep.subr.mxu0 0.0
    %3067 = vmatpush2.msra.mxu0 0.0
    %3068 = vmatprep.subr.mxu0 0.0
    %3069 = vmatpush2.msra.mxu0 0.0
    %3070 = vmatprep.mubr.f32.mxu0 0.0
    %3071 = vmatmul.mubr.f32.gmra.mxu0 %v2725
    %v3072 = vpop.f32.mrf.mxu0
    %v3073 = vadd.f32 %v3003, %v3072
    %v3074 = vpop.f32.mrf.mxu0
    %3075 = vdwg.mxu0
    %v3076 = vrcp.pop 72.0
    %v3077 = vmul.f32 %v3073, %v3076
    %v3079 = vsel %vm280, %v3077, 0
    %3081 = vmatprep.subr.mxu0 0.0
    %3082 = vmatpush1.msra.mxu0 0.0
    %3083 = vmatprep.subr.mxu0 0.0
    %3084 = vmatpush1.msra.mxu0 0.0
    %3085 = vmatprep.subr.mxu0 0.0
    %3086 = vmatpush1.msra.mxu0 0.0
    %3087 = vmatprep.subr.mxu0 0.0
    %3088 = vmatpush1.msra.mxu0 0.0
    %3089 = vmatprep.subr.mxu0 0.0
    %3090 = vmatpush1.msra.mxu0 0.0
    %3091 = vmatprep.subr.mxu0 0.0
    %3092 = vmatpush1.msra.mxu0 0.0
    %3093 = vmatprep.subr.mxu0 0.0
    %3094 = vmatpush1.msra.mxu0 0.0
    %3095 = vmatprep.subr.mxu0 0.0
    %3096 = vmatpush1.msra.mxu0 0.0
    %3097 = vmatprep.subr.mxu0 0.0
    %3098 = vmatpush1.msra.mxu0 0.0
    %3099 = vmatprep.subr.mxu0 0.0
    %3100 = vmatpush1.msra.mxu0 0.0
    %3101 = vmatprep.subr.mxu0 0.0
    %3102 = vmatpush1.msra.mxu0 0.0
    %3103 = vmatprep.subr.mxu0 0.0
    %3104 = vmatpush1.msra.mxu0 0.0
    %3105 = vmatprep.subr.mxu0 %v2653
    %3106 = vmatpush1.msra.mxu0 %v2652
    %3107 = vmatprep.subr.mxu0 %v2644
    %3108 = vmatpush1.msra.mxu0 %v2643
    %3109 = vmatprep.subr.mxu0 %v2635
    %3110 = vmatpush1.msra.mxu0 %v2634
    %3111 = vmatprep.subr.mxu0 %v2626
    %3112 = vmatpush1.msra.mxu0 %v2625
    %3113 = vmatprep.subr.mxu0 0.0
    %3114 = vmatpush2.msra.mxu0 0.0
    %3115 = vmatprep.subr.mxu0 0.0
    %3116 = vmatpush2.msra.mxu0 0.0
    %3117 = vmatprep.subr.mxu0 0.0
    %3118 = vmatpush2.msra.mxu0 0.0
    %3119 = vmatprep.subr.mxu0 0.0
    %3120 = vmatpush2.msra.mxu0 0.0
    %3121 = vmatprep.subr.mxu0 0.0
    %3122 = vmatpush2.msra.mxu0 0.0
    %3123 = vmatprep.subr.mxu0 0.0
    %3124 = vmatpush2.msra.mxu0 0.0
    %3125 = vmatprep.subr.mxu0 0.0
    %3126 = vmatpush2.msra.mxu0 0.0
    %3127 = vmatprep.subr.mxu0 0.0
    %3128 = vmatpush2.msra.mxu0 0.0
    %3129 = vmatprep.subr.mxu0 0.0
    %3130 = vmatpush2.msra.mxu0 0.0
    %3131 = vmatprep.subr.mxu0 0.0
    %3132 = vmatpush2.msra.mxu0 0.0
    %3133 = vmatprep.subr.mxu0 0.0
    %3134 = vmatpush2.msra.mxu0 0.0
    %3135 = vmatprep.subr.mxu0 0.0
    %3136 = vmatpush2.msra.mxu0 0.0
    %3137 = vmatprep.subr.mxu0 0.0
    %3138 = vmatpush2.msra.mxu0 0.0
    %3139 = vmatprep.subr.mxu0 0.0
    %3140 = vmatpush2.msra.mxu0 0.0
    %3141 = vmatprep.subr.mxu0 0.0
    %3142 = vmatpush2.msra.mxu0 0.0
    %3143 = vmatprep.subr.mxu0 0.0
    %3144 = vmatpush2.msra.mxu0 0.0
    %3145 = vmatprep.mubr.f32.mxu0 0.0
    %3146 = vmatmul.mubr.f32.gmra.mxu0 %v3079
    %v3147 = vpop.f32.mrf.mxu0
    %v3148 = vadd.f32 0.0, %v3147
    %v3149 = vpop.f32.mrf.mxu0
    %v3150 = vadd.f32 0.0, %v3149
    %3151 = vdwg.mxu0
    %3152 = vmatprep.subr.mxu0 0.0
    %3153 = vmatpush1.msra.mxu0 0.0
    %3154 = vmatprep.subr.mxu0 0.0
    %3155 = vmatpush1.msra.mxu0 0.0
    %3156 = vmatprep.subr.mxu0 0.0
    %3157 = vmatpush1.msra.mxu0 0.0
    %3158 = vmatprep.subr.mxu0 0.0
    %3159 = vmatpush1.msra.mxu0 0.0
    %3160 = vmatprep.subr.mxu0 0.0
    %3161 = vmatpush1.msra.mxu0 0.0
    %3162 = vmatprep.subr.mxu0 0.0
    %3163 = vmatpush1.msra.mxu0 0.0
    %3164 = vmatprep.subr.mxu0 0.0
    %3165 = vmatpush1.msra.mxu0 0.0
    %3166 = vmatprep.subr.mxu0 0.0
    %3167 = vmatpush1.msra.mxu0 0.0
    %3168 = vmatprep.subr.mxu0 0.0
    %3169 = vmatpush1.msra.mxu0 0.0
    %3170 = vmatprep.subr.mxu0 0.0
    %3171 = vmatpush1.msra.mxu0 0.0
    %3172 = vmatprep.subr.mxu0 0.0
    %3173 = vmatpush1.msra.mxu0 0.0
    %3174 = vmatprep.subr.mxu0 0.0
    %3175 = vmatpush1.msra.mxu0 0.0
    %3176 = vmatprep.subr.mxu0 %v2655
    %3177 = vmatpush1.msra.mxu0 %v2654
    %3178 = vmatprep.subr.mxu0 %v2646
    %3179 = vmatpush1.msra.mxu0 %v2645
    %3180 = vmatprep.subr.mxu0 %v2637
    %3181 = vmatpush1.msra.mxu0 %v2636
    %3182 = vmatprep.subr.mxu0 %v2628
    %3183 = vmatpush1.msra.mxu0 %v2627
    %3184 = vmatprep.subr.mxu0 0.0
    %3185 = vmatpush2.msra.mxu0 0.0
    %3186 = vmatprep.subr.mxu0 0.0
    %3187 = vmatpush2.msra.mxu0 0.0
    %3188 = vmatprep.subr.mxu0 0.0
    %3189 = vmatpush2.msra.mxu0 0.0
    %3190 = vmatprep.subr.mxu0 0.0
    %3191 = vmatpush2.msra.mxu0 0.0
    %3192 = vmatprep.subr.mxu0 0.0
    %3193 = vmatpush2.msra.mxu0 0.0
    %3194 = vmatprep.subr.mxu0 0.0
    %3195 = vmatpush2.msra.mxu0 0.0
    %3196 = vmatprep.subr.mxu0 0.0
    %3197 = vmatpush2.msra.mxu0 0.0
    %3198 = vmatprep.subr.mxu0 0.0
    %3199 = vmatpush2.msra.mxu0 0.0
    %3200 = vmatprep.subr.mxu0 0.0
    %3201 = vmatpush2.msra.mxu0 0.0
    %3202 = vmatprep.subr.mxu0 0.0
    %3203 = vmatpush2.msra.mxu0 0.0
    %3204 = vmatprep.subr.mxu0 0.0
    %3205 = vmatpush2.msra.mxu0 0.0
    %3206 = vmatprep.subr.mxu0 0.0
    %3207 = vmatpush2.msra.mxu0 0.0
    %3208 = vmatprep.subr.mxu0 0.0
    %3209 = vmatpush2.msra.mxu0 0.0
    %3210 = vmatprep.subr.mxu0 0.0
    %3211 = vmatpush2.msra.mxu0 0.0
    %3212 = vmatprep.subr.mxu0 0.0
    %3213 = vmatpush2.msra.mxu0 0.0
    %3214 = vmatprep.subr.mxu0 0.0
    %3215 = vmatpush2.msra.mxu0 0.0
    %3216 = vmatprep.mubr.f32.mxu0 0.0
    %3217 = vmatmul.mubr.f32.gmra.mxu0 %v3079
    %v3218 = vpop.f32.mrf.mxu0
    %v3219 = vadd.f32 0.0, %v3218
    %v3220 = vpop.f32.mrf.mxu0
    %v3221 = vadd.f32 0.0, %v3220
    %3222 = vdwg.mxu0
    %3223 = vmatprep.subr.mxu0 0.0
    %3224 = vmatpush1.msra.mxu0 0.0
    %3225 = vmatprep.subr.mxu0 0.0
    %3226 = vmatpush1.msra.mxu0 0.0
    %3227 = vmatprep.subr.mxu0 0.0
    %3228 = vmatpush1.msra.mxu0 0.0
    %3229 = vmatprep.subr.mxu0 0.0
    %3230 = vmatpush1.msra.mxu0 0.0
    %3231 = vmatprep.subr.mxu0 0.0
    %3232 = vmatpush1.msra.mxu0 0.0
    %3233 = vmatprep.subr.mxu0 0.0
    %3234 = vmatpush1.msra.mxu0 0.0
    %3235 = vmatprep.subr.mxu0 0.0
    %3236 = vmatpush1.msra.mxu0 0.0
    %3237 = vmatprep.subr.mxu0 0.0
    %3238 = vmatpush1.msra.mxu0 0.0
    %3239 = vmatprep.subr.mxu0 0.0
    %3240 = vmatpush1.msra.mxu0 0.0
    %3241 = vmatprep.subr.mxu0 0.0
    %3242 = vmatpush1.msra.mxu0 0.0
    %3243 = vmatprep.subr.mxu0 0.0
    %3244 = vmatpush1.msra.mxu0 0.0
    %3245 = vmatprep.subr.mxu0 0.0
    %3246 = vmatpush1.msra.mxu0 0.0
    %3247 = vmatprep.subr.mxu0 %v2657
    %3248 = vmatpush1.msra.mxu0 %v2656
    %3249 = vmatprep.subr.mxu0 %v2648
    %3250 = vmatpush1.msra.mxu0 %v2647
    %3251 = vmatprep.subr.mxu0 %v2639
    %3252 = vmatpush1.msra.mxu0 %v2638
    %3253 = vmatprep.subr.mxu0 %v2630
    %3254 = vmatpush1.msra.mxu0 %v2629
    %3255 = vmatprep.subr.mxu0 0.0
    %3256 = vmatpush2.msra.mxu0 0.0
    %3257 = vmatprep.subr.mxu0 0.0
    %3258 = vmatpush2.msra.mxu0 0.0
    %3259 = vmatprep.subr.mxu0 0.0
    %3260 = vmatpush2.msra.mxu0 0.0
    %3261 = vmatprep.subr.mxu0 0.0
    %3262 = vmatpush2.msra.mxu0 0.0
    %3263 = vmatprep.subr.mxu0 0.0
    %3264 = vmatpush2.msra.mxu0 0.0
    %3265 = vmatprep.subr.mxu0 0.0
    %3266 = vmatpush2.msra.mxu0 0.0
    %3267 = vmatprep.subr.mxu0 0.0
    %3268 = vmatpush2.msra.mxu0 0.0
    %3269 = vmatprep.subr.mxu0 0.0
    %3270 = vmatpush2.msra.mxu0 0.0
    %3271 = vmatprep.subr.mxu0 0.0
    %3272 = vmatpush2.msra.mxu0 0.0
    %3273 = vmatprep.subr.mxu0 0.0
    %3274 = vmatpush2.msra.mxu0 0.0
    %3275 = vmatprep.subr.mxu0 0.0
    %3276 = vmatpush2.msra.mxu0 0.0
    %3277 = vmatprep.subr.mxu0 0.0
    %3278 = vmatpush2.msra.mxu0 0.0
    %3279 = vmatprep.subr.mxu0 0.0
    %3280 = vmatpush2.msra.mxu0 0.0
    %3281 = vmatprep.subr.mxu0 0.0
    %3282 = vmatpush2.msra.mxu0 0.0
    %3283 = vmatprep.subr.mxu0 0.0
    %3284 = vmatpush2.msra.mxu0 0.0
    %3285 = vmatprep.subr.mxu0 0.0
    %3286 = vmatpush2.msra.mxu0 0.0
    %3287 = vmatprep.mubr.f32.mxu0 0.0
    %3288 = vmatmul.mubr.f32.gmra.mxu0 %v3079
    %v3289 = vpop.f32.mrf.mxu0
    %v3290 = vadd.f32 0.0, %v3289
    %v3291 = vpop.f32.mrf.mxu0
    %v3292 = vadd.f32 0.0, %v3291
    %3293 = vdwg.mxu0
    %3294 = vmatprep.subr.mxu0 0.0
    %3295 = vmatpush1.msra.mxu0 0.0
    %3296 = vmatprep.subr.mxu0 0.0
    %3297 = vmatpush1.msra.mxu0 0.0
    %3298 = vmatprep.subr.mxu0 0.0
    %3299 = vmatpush1.msra.mxu0 0.0
    %3300 = vmatprep.subr.mxu0 0.0
    %3301 = vmatpush1.msra.mxu0 0.0
    %3302 = vmatprep.subr.mxu0 0.0
    %3303 = vmatpush1.msra.mxu0 0.0
    %3304 = vmatprep.subr.mxu0 0.0
    %3305 = vmatpush1.msra.mxu0 0.0
    %3306 = vmatprep.subr.mxu0 0.0
    %3307 = vmatpush1.msra.mxu0 0.0
    %3308 = vmatprep.subr.mxu0 0.0
    %3309 = vmatpush1.msra.mxu0 0.0
    %3310 = vmatprep.subr.mxu0 0.0
    %3311 = vmatpush1.msra.mxu0 0.0
    %3312 = vmatprep.subr.mxu0 0.0
    %3313 = vmatpush1.msra.mxu0 0.0
    %3314 = vmatprep.subr.mxu0 0.0
    %3315 = vmatpush1.msra.mxu0 0.0
    %3316 = vmatprep.subr.mxu0 0.0
    %3317 = vmatpush1.msra.mxu0 0.0
    %3318 = vmatprep.subr.mxu0 %v2659
    %3319 = vmatpush1.msra.mxu0 %v2658
    %3320 = vmatprep.subr.mxu0 %v2650
    %3321 = vmatpush1.msra.mxu0 %v2649
    %3322 = vmatprep.subr.mxu0 %v2641
    %3323 = vmatpush1.msra.mxu0 %v2640
    %3324 = vmatprep.subr.mxu0 %v2632
    %3325 = vmatpush1.msra.mxu0 %v2631
    %3326 = vmatprep.subr.mxu0 0.0
    %3327 = vmatpush2.msra.mxu0 0.0
    %3328 = vmatprep.subr.mxu0 0.0
    %3329 = vmatpush2.msra.mxu0 0.0
    %3330 = vmatprep.subr.mxu0 0.0
    %3331 = vmatpush2.msra.mxu0 0.0
    %3332 = vmatprep.subr.mxu0 0.0
    %3333 = vmatpush2.msra.mxu0 0.0
    %3334 = vmatprep.subr.mxu0 0.0
    %3335 = vmatpush2.msra.mxu0 0.0
    %3336 = vmatprep.subr.mxu0 0.0
    %3337 = vmatpush2.msra.mxu0 0.0
    %3338 = vmatprep.subr.mxu0 0.0
    %3339 = vmatpush2.msra.mxu0 0.0
    %3340 = vmatprep.subr.mxu0 0.0
    %3341 = vmatpush2.msra.mxu0 0.0
    %3342 = vmatprep.subr.mxu0 0.0
    %3343 = vmatpush2.msra.mxu0 0.0
    %3344 = vmatprep.subr.mxu0 0.0
    %3345 = vmatpush2.msra.mxu0 0.0
    %3346 = vmatprep.subr.mxu0 0.0
    %3347 = vmatpush2.msra.mxu0 0.0
    %3348 = vmatprep.subr.mxu0 0.0
    %3349 = vmatpush2.msra.mxu0 0.0
    %3350 = vmatprep.subr.mxu0 0.0
    %3351 = vmatpush2.msra.mxu0 0.0
    %3352 = vmatprep.subr.mxu0 0.0
    %3353 = vmatpush2.msra.mxu0 0.0
    %3354 = vmatprep.subr.mxu0 0.0
    %3355 = vmatpush2.msra.mxu0 0.0
    %3356 = vmatprep.subr.mxu0 0.0
    %3357 = vmatpush2.msra.mxu0 0.0
    %3358 = vmatprep.mubr.f32.mxu0 0.0
    %3359 = vmatmul.mubr.f32.gmra.mxu0 %v3079
    %v3360 = vpop.f32.mrf.mxu0
    %v3361 = vadd.f32 0.0, %v3360
    %v3362 = vpop.f32.mrf.mxu0
    %v3363 = vadd.f32 0.0, %v3362
    %3364 = vdwg.mxu0
    %3365 = vmatprep.subr.mxu0 0.0
    %3366 = vmatpush1.msra.mxu0 0.0
    %3367 = vmatprep.subr.mxu0 0.0
    %3368 = vmatpush1.msra.mxu0 0.0
    %3369 = vmatprep.subr.mxu0 0.0
    %3370 = vmatpush1.msra.mxu0 0.0
    %3371 = vmatprep.subr.mxu0 0.0
    %3372 = vmatpush1.msra.mxu0 0.0
    %3373 = vmatprep.subr.mxu0 0.0
    %3374 = vmatpush1.msra.mxu0 0.0
    %3375 = vmatprep.subr.mxu0 0.0
    %3376 = vmatpush1.msra.mxu0 0.0
    %3377 = vmatprep.subr.mxu0 0.0
    %3378 = vmatpush1.msra.mxu0 0.0
    %3379 = vmatprep.subr.mxu0 0.0
    %3380 = vmatpush1.msra.mxu0 0.0
    %3381 = vmatprep.subr.mxu0 0.0
    %3382 = vmatpush1.msra.mxu0 0.0
    %3383 = vmatprep.subr.mxu0 0.0
    %3384 = vmatpush1.msra.mxu0 0.0
    %3385 = vmatprep.subr.mxu0 0.0
    %3386 = vmatpush1.msra.mxu0 0.0
    %3387 = vmatprep.subr.mxu0 0.0
    %3388 = vmatpush1.msra.mxu0 0.0
    %3389 = vmatprep.subr.mxu0 0.0
    %3390 = vmatpush1.msra.mxu0 %v2660
    %3391 = vmatprep.subr.mxu0 0.0
    %3392 = vmatpush1.msra.mxu0 %v2651
    %3393 = vmatprep.subr.mxu0 0.0
    %3394 = vmatpush1.msra.mxu0 %v2642
    %3395 = vmatprep.subr.mxu0 0.0
    %3396 = vmatpush1.msra.mxu0 %v2633
    %3397 = vmatprep.subr.mxu0 0.0
    %3398 = vmatpush2.msra.mxu0 0.0
    %3399 = vmatprep.subr.mxu0 0.0
    %3400 = vmatpush2.msra.mxu0 0.0
    %3401 = vmatprep.subr.mxu0 0.0
    %3402 = vmatpush2.msra.mxu0 0.0
    %3403 = vmatprep.subr.mxu0 0.0
    %3404 = vmatpush2.msra.mxu0 0.0
    %3405 = vmatprep.subr.mxu0 0.0
    %3406 = vmatpush2.msra.mxu0 0.0
    %3407 = vmatprep.subr.mxu0 0.0
    %3408 = vmatpush2.msra.mxu0 0.0
    %3409 = vmatprep.subr.mxu0 0.0
    %3410 = vmatpush2.msra.mxu0 0.0
    %3411 = vmatprep.subr.mxu0 0.0
    %3412 = vmatpush2.msra.mxu0 0.0
    %3413 = vmatprep.subr.mxu0 0.0
    %3414 = vmatpush2.msra.mxu0 0.0
    %3415 = vmatprep.subr.mxu0 0.0
    %3416 = vmatpush2.msra.mxu0 0.0
    %3417 = vmatprep.subr.mxu0 0.0
    %3418 = vmatpush2.msra.mxu0 0.0
    %3419 = vmatprep.subr.mxu0 0.0
    %3420 = vmatpush2.msra.mxu0 0.0
    %3421 = vmatprep.subr.mxu0 0.0
    %3422 = vmatpush2.msra.mxu0 0.0
    %3423 = vmatprep.subr.mxu0 0.0
    %3424 = vmatpush2.msra.mxu0 0.0
    %3425 = vmatprep.subr.mxu0 0.0
    %3426 = vmatpush2.msra.mxu0 0.0
    %3427 = vmatprep.subr.mxu0 0.0
    %3428 = vmatpush2.msra.mxu0 0.0
    %3429 = vmatprep.mubr.f32.mxu0 0.0
    %3430 = vmatmul.mubr.f32.gmra.mxu0 %v3079
    %v3431 = vpop.f32.mrf.mxu0
    %v3432 = vadd.f32 0.0, %v3431
    %v3433 = vpop.f32.mrf.mxu0
    %3434 = vdwg.mxu0
    %v3435 = vlaneseq
    %v3436 = vshrl.u32 %v3435, 7
    %v3437 = vsub.s32 0, %v3436
    %v3438 = vrot.slane %v3148, %v3437
    %v3439 = vlaneseq
    %v3440 = vshrl.u32 %v3439, 7
    %v3441 = vsub.s32 0, %v3440
    %v3442 = vrot.slane %v3150, %v3441
    %v3443 = vlaneseq
    %v3444 = vshrl.u32 %v3443, 7
    %v3445 = vsub.s32 0, %v3444
    %v3446 = vrot.slane %v3219, %v3445
    %v3447 = vlaneseq
    %v3448 = vshrl.u32 %v3447, 7
    %v3449 = vsub.s32 0, %v3448
    %v3450 = vrot.slane %v3221, %v3449
    %v3451 = vlaneseq
    %v3452 = vshrl.u32 %v3451, 7
    %v3453 = vsub.s32 0, %v3452
    %v3454 = vrot.slane %v3290, %v3453
    %v3455 = vlaneseq
    %v3456 = vshrl.u32 %v3455, 7
    %v3457 = vsub.s32 0, %v3456
    %v3458 = vrot.slane %v3292, %v3457
    %v3459 = vlaneseq
    %v3460 = vshrl.u32 %v3459, 7
    %v3461 = vsub.s32 0, %v3460
    %v3462 = vrot.slane %v3361, %v3461
    %v3463 = vlaneseq
    %v3464 = vshrl.u32 %v3463, 7
    %v3465 = vsub.s32 0, %v3464
    %v3466 = vrot.slane %v3363, %v3465
    %v3467 = vlaneseq
    %v3468 = vshrl.u32 %v3467, 7
    %v3469 = vsub.s32 0, %v3468
    %v3470 = vrot.slane %v3432, %v3469
    %v3471 = vsub.f32 %v2472, %v3438
    %v3472 = vsub.f32 %v2473, %v3442
    %v3473 = vsub.f32 %v2474, %v3446
    %v3474 = vsub.f32 %v2475, %v3450
    %v3475 = vsub.f32 %v2476, %v3454
    %v3476 = vsub.f32 %v2477, %v3458
    %v3477 = vsub.f32 %v2478, %v3462
    %v3478 = vsub.f32 %v2479, %v3466
    %v3479 = vsub.f32 %v2480, %v3470
    %v3480 = vmul.f32 %v3471, %v3471
    %v3481 = vmul.f32 %v3472, %v3472
    %v3482 = vmul.f32 %v3473, %v3473
    %v3483 = vmul.f32 %v3474, %v3474
    %v3484 = vmul.f32 %v3475, %v3475
    %v3485 = vmul.f32 %v3476, %v3476
    %v3486 = vmul.f32 %v3477, %v3477
    %v3487 = vmul.f32 %v3478, %v3478
    %v3488 = vmul.f32 %v3479, %v3479
    %v3489 = vsel %vm873, %v3480, 0.0
    %v3490 = vrot.slane %v3489, 4
    %v3491 = vadd.f32 %v3489, %v3490
    %v3492 = vrot.slane %v3491, 2
    %v3493 = vadd.f32 %v3491, %v3492
    %v3494 = vrot.slane %v3493, 1
    %v3495 = vadd.f32 %v3493, %v3494
    %v3496 = vsel %vm873, %v3481, 0.0
    %v3497 = vrot.slane %v3496, 4
    %v3498 = vadd.f32 %v3496, %v3497
    %v3499 = vrot.slane %v3498, 2
    %v3500 = vadd.f32 %v3498, %v3499
    %v3501 = vrot.slane %v3500, 1
    %v3502 = vadd.f32 %v3500, %v3501
    %v3503 = vsel %vm873, %v3482, 0.0
    %v3504 = vrot.slane %v3503, 4
    %v3505 = vadd.f32 %v3503, %v3504
    %v3506 = vrot.slane %v3505, 2
    %v3507 = vadd.f32 %v3505, %v3506
    %v3508 = vrot.slane %v3507, 1
    %v3509 = vadd.f32 %v3507, %v3508
    %v3510 = vsel %vm873, %v3483, 0.0
    %v3511 = vrot.slane %v3510, 4
    %v3512 = vadd.f32 %v3510, %v3511
    %v3513 = vrot.slane %v3512, 2
    %v3514 = vadd.f32 %v3512, %v3513
    %v3515 = vrot.slane %v3514, 1
    %v3516 = vadd.f32 %v3514, %v3515
    %v3517 = vsel %vm873, %v3484, 0.0
    %v3518 = vrot.slane %v3517, 4
    %v3519 = vadd.f32 %v3517, %v3518
    %v3520 = vrot.slane %v3519, 2
    %v3521 = vadd.f32 %v3519, %v3520
    %v3522 = vrot.slane %v3521, 1
    %v3523 = vadd.f32 %v3521, %v3522
    %v3524 = vsel %vm873, %v3485, 0.0
    %v3525 = vrot.slane %v3524, 4
    %v3526 = vadd.f32 %v3524, %v3525
    %v3527 = vrot.slane %v3526, 2
    %v3528 = vadd.f32 %v3526, %v3527
    %v3529 = vrot.slane %v3528, 1
    %v3530 = vadd.f32 %v3528, %v3529
    %v3531 = vsel %vm873, %v3486, 0.0
    %v3532 = vrot.slane %v3531, 4
    %v3533 = vadd.f32 %v3531, %v3532
    %v3534 = vrot.slane %v3533, 2
    %v3535 = vadd.f32 %v3533, %v3534
    %v3536 = vrot.slane %v3535, 1
    %v3537 = vadd.f32 %v3535, %v3536
    %v3538 = vsel %vm873, %v3487, 0.0
    %v3539 = vrot.slane %v3538, 4
    %v3540 = vadd.f32 %v3538, %v3539
    %v3541 = vrot.slane %v3540, 2
    %v3542 = vadd.f32 %v3540, %v3541
    %v3543 = vrot.slane %v3542, 1
    %v3544 = vadd.f32 %v3542, %v3543
    %v3545 = vsel %vm873, %v3488, 0.0
    %v3546 = vrot.slane %v3545, 4
    %v3547 = vadd.f32 %v3545, %v3546
    %v3548 = vrot.slane %v3547, 2
    %v3549 = vadd.f32 %v3547, %v3548
    %v3550 = vrot.slane %v3549, 1
    %v3551 = vadd.f32 %v3549, %v3550
    %3552 = vmatprep.subr.mxu0 0.0
    %3553 = vmatpush1.msra.mxu0 %v2496
    %3554 = vmatprep.subr.mxu0 0.0
    %3555 = vmatpush1.msra.mxu0 %v2495
    %3556 = vmatprep.subr.mxu0 0.0
    %3557 = vmatpush1.msra.mxu0 %v2494
    %3558 = vmatprep.subr.mxu0 0.0
    %3559 = vmatpush1.msra.mxu0 %v2493
    %3560 = vmatprep.subr.mxu0 0.0
    %3561 = vmatpush1.msra.mxu0 %v2492
    %3562 = vmatprep.subr.mxu0 0.0
    %3563 = vmatpush1.msra.mxu0 %v2491
    %3564 = vmatprep.subr.mxu0 0.0
    %3565 = vmatpush1.msra.mxu0 %v2490
    %3566 = vmatprep.subr.mxu0 0.0
    %3567 = vmatpush1.msra.mxu0 %v2489
    %3568 = vmatprep.subr.mxu0 0.0
    %3569 = vmatpush1.msra.mxu0 %v2488
    %3570 = vmatprep.subr.mxu0 0.0
    %3571 = vmatpush1.msra.mxu0 %v2487
    %3572 = vmatprep.subr.mxu0 0.0
    %3573 = vmatpush1.msra.mxu0 %v2486
    %3574 = vmatprep.subr.mxu0 0.0
    %3575 = vmatpush1.msra.mxu0 %v2485
    %3576 = vmatprep.subr.mxu0 0.0
    %3577 = vmatpush1.msra.mxu0 %v2484
    %3578 = vmatprep.subr.mxu0 0.0
    %3579 = vmatpush1.msra.mxu0 %v2483
    %3580 = vmatprep.subr.mxu0 0.0
    %3581 = vmatpush1.msra.mxu0 %v2482
    %3582 = vmatprep.subr.mxu0 0.0
    %3583 = vmatpush1.msra.mxu0 %v2481
    %3584 = vmatprep.subr.mxu0 0.0
    %3585 = vmatpush2.msra.mxu0 %v2512
    %3586 = vmatprep.subr.mxu0 0.0
    %3587 = vmatpush2.msra.mxu0 %v2511
    %3588 = vmatprep.subr.mxu0 0.0
    %3589 = vmatpush2.msra.mxu0 %v2510
    %3590 = vmatprep.subr.mxu0 0.0
    %3591 = vmatpush2.msra.mxu0 %v2509
    %3592 = vmatprep.subr.mxu0 0.0
    %3593 = vmatpush2.msra.mxu0 %v2508
    %3594 = vmatprep.subr.mxu0 0.0
    %3595 = vmatpush2.msra.mxu0 %v2507
    %3596 = vmatprep.subr.mxu0 0.0
    %3597 = vmatpush2.msra.mxu0 %v2506
    %3598 = vmatprep.subr.mxu0 0.0
    %3599 = vmatpush2.msra.mxu0 %v2505
    %3600 = vmatprep.subr.mxu0 0.0
    %3601 = vmatpush2.msra.mxu0 %v2504
    %3602 = vmatprep.subr.mxu0 0.0
    %3603 = vmatpush2.msra.mxu0 %v2503
    %3604 = vmatprep.subr.mxu0 0.0
    %3605 = vmatpush2.msra.mxu0 %v2502
    %3606 = vmatprep.subr.mxu0 0.0
    %3607 = vmatpush2.msra.mxu0 %v2501
    %3608 = vmatprep.subr.mxu0 0.0
    %3609 = vmatpush2.msra.mxu0 %v2500
    %3610 = vmatprep.subr.mxu0 0.0
    %3611 = vmatpush2.msra.mxu0 %v2499
    %3612 = vmatprep.subr.mxu0 0.0
    %3613 = vmatpush2.msra.mxu0 %v2498
    %3614 = vmatprep.subr.mxu0 0.0
    %3615 = vmatpush2.msra.mxu0 %v2497
    %3616 = vmatprep.mubr.f32.mxu0 %v3502
    %3617 = vmatmul.mubr.f32.gmra.mxu0 %v3495
    %v3618 = vpop.f32.mrf.mxu0
    %v3619 = vadd.f32 0.0, %v3618
    %v3620 = vpop.f32.mrf.mxu0
    %3621 = vdwg.mxu0
    %3622 = vmatprep.subr.mxu0 0.0
    %3623 = vmatpush1.msra.mxu0 %v2528
    %3624 = vmatprep.subr.mxu0 0.0
    %3625 = vmatpush1.msra.mxu0 %v2527
    %3626 = vmatprep.subr.mxu0 0.0
    %3627 = vmatpush1.msra.mxu0 %v2526
    %3628 = vmatprep.subr.mxu0 0.0
    %3629 = vmatpush1.msra.mxu0 %v2525
    %3630 = vmatprep.subr.mxu0 0.0
    %3631 = vmatpush1.msra.mxu0 %v2524
    %3632 = vmatprep.subr.mxu0 0.0
    %3633 = vmatpush1.msra.mxu0 %v2523
    %3634 = vmatprep.subr.mxu0 0.0
    %3635 = vmatpush1.msra.mxu0 %v2522
    %3636 = vmatprep.subr.mxu0 0.0
    %3637 = vmatpush1.msra.mxu0 %v2521
    %3638 = vmatprep.subr.mxu0 0.0
    %3639 = vmatpush1.msra.mxu0 %v2520
    %3640 = vmatprep.subr.mxu0 0.0
    %3641 = vmatpush1.msra.mxu0 %v2519
    %3642 = vmatprep.subr.mxu0 0.0
    %3643 = vmatpush1.msra.mxu0 %v2518
    %3644 = vmatprep.subr.mxu0 0.0
    %3645 = vmatpush1.msra.mxu0 %v2517
    %3646 = vmatprep.subr.mxu0 0.0
    %3647 = vmatpush1.msra.mxu0 %v2516
    %3648 = vmatprep.subr.mxu0 0.0
    %3649 = vmatpush1.msra.mxu0 %v2515
    %3650 = vmatprep.subr.mxu0 0.0
    %3651 = vmatpush1.msra.mxu0 %v2514
    %3652 = vmatprep.subr.mxu0 0.0
    %3653 = vmatpush1.msra.mxu0 %v2513
    %3654 = vmatprep.subr.mxu0 0.0
    %3655 = vmatpush2.msra.mxu0 %v2544
    %3656 = vmatprep.subr.mxu0 0.0
    %3657 = vmatpush2.msra.mxu0 %v2543
    %3658 = vmatprep.subr.mxu0 0.0
    %3659 = vmatpush2.msra.mxu0 %v2542
    %3660 = vmatprep.subr.mxu0 0.0
    %3661 = vmatpush2.msra.mxu0 %v2541
    %3662 = vmatprep.subr.mxu0 0.0
    %3663 = vmatpush2.msra.mxu0 %v2540
    %3664 = vmatprep.subr.mxu0 0.0
    %3665 = vmatpush2.msra.mxu0 %v2539
    %3666 = vmatprep.subr.mxu0 0.0
    %3667 = vmatpush2.msra.mxu0 %v2538
    %3668 = vmatprep.subr.mxu0 0.0
    %3669 = vmatpush2.msra.mxu0 %v2537
    %3670 = vmatprep.subr.mxu0 0.0
    %3671 = vmatpush2.msra.mxu0 %v2536
    %3672 = vmatprep.subr.mxu0 0.0
    %3673 = vmatpush2.msra.mxu0 %v2535
    %3674 = vmatprep.subr.mxu0 0.0
    %3675 = vmatpush2.msra.mxu0 %v2534
    %3676 = vmatprep.subr.mxu0 0.0
    %3677 = vmatpush2.msra.mxu0 %v2533
    %3678 = vmatprep.subr.mxu0 0.0
    %3679 = vmatpush2.msra.mxu0 %v2532
    %3680 = vmatprep.subr.mxu0 0.0
    %3681 = vmatpush2.msra.mxu0 %v2531
    %3682 = vmatprep.subr.mxu0 0.0
    %3683 = vmatpush2.msra.mxu0 %v2530
    %3684 = vmatprep.subr.mxu0 0.0
    %3685 = vmatpush2.msra.mxu0 %v2529
    %3686 = vmatprep.mubr.f32.mxu0 %v3516
    %3687 = vmatmul.mubr.f32.gmra.mxu0 %v3509
    %v3688 = vpop.f32.mrf.mxu0
    %v3689 = vadd.f32 %v3619, %v3688
    %v3690 = vpop.f32.mrf.mxu0
    %3691 = vdwg.mxu0
    %3692 = vmatprep.subr.mxu0 0.0
    %3693 = vmatpush1.msra.mxu0 %v2560
    %3694 = vmatprep.subr.mxu0 0.0
    %3695 = vmatpush1.msra.mxu0 %v2559
    %3696 = vmatprep.subr.mxu0 0.0
    %3697 = vmatpush1.msra.mxu0 %v2558
    %3698 = vmatprep.subr.mxu0 0.0
    %3699 = vmatpush1.msra.mxu0 %v2557
    %3700 = vmatprep.subr.mxu0 0.0
    %3701 = vmatpush1.msra.mxu0 %v2556
    %3702 = vmatprep.subr.mxu0 0.0
    %3703 = vmatpush1.msra.mxu0 %v2555
    %3704 = vmatprep.subr.mxu0 0.0
    %3705 = vmatpush1.msra.mxu0 %v2554
    %3706 = vmatprep.subr.mxu0 0.0
    %3707 = vmatpush1.msra.mxu0 %v2553
    %3708 = vmatprep.subr.mxu0 0.0
    %3709 = vmatpush1.msra.mxu0 %v2552
    %3710 = vmatprep.subr.mxu0 0.0
    %3711 = vmatpush1.msra.mxu0 %v2551
    %3712 = vmatprep.subr.mxu0 0.0
    %3713 = vmatpush1.msra.mxu0 %v2550
    %3714 = vmatprep.subr.mxu0 0.0
    %3715 = vmatpush1.msra.mxu0 %v2549
    %3716 = vmatprep.subr.mxu0 0.0
    %3717 = vmatpush1.msra.mxu0 %v2548
    %3718 = vmatprep.subr.mxu0 0.0
    %3719 = vmatpush1.msra.mxu0 %v2547
    %3720 = vmatprep.subr.mxu0 0.0
    %3721 = vmatpush1.msra.mxu0 %v2546
    %3722 = vmatprep.subr.mxu0 0.0
    %3723 = vmatpush1.msra.mxu0 %v2545
    %3724 = vmatprep.subr.mxu0 0.0
    %3725 = vmatpush2.msra.mxu0 %v2576
    %3726 = vmatprep.subr.mxu0 0.0
    %3727 = vmatpush2.msra.mxu0 %v2575
    %3728 = vmatprep.subr.mxu0 0.0
    %3729 = vmatpush2.msra.mxu0 %v2574
    %3730 = vmatprep.subr.mxu0 0.0
    %3731 = vmatpush2.msra.mxu0 %v2573
    %3732 = vmatprep.subr.mxu0 0.0
    %3733 = vmatpush2.msra.mxu0 %v2572
    %3734 = vmatprep.subr.mxu0 0.0
    %3735 = vmatpush2.msra.mxu0 %v2571
    %3736 = vmatprep.subr.mxu0 0.0
    %3737 = vmatpush2.msra.mxu0 %v2570
    %3738 = vmatprep.subr.mxu0 0.0
    %3739 = vmatpush2.msra.mxu0 %v2569
    %3740 = vmatprep.subr.mxu0 0.0
    %3741 = vmatpush2.msra.mxu0 %v2568
    %3742 = vmatprep.subr.mxu0 0.0
    %3743 = vmatpush2.msra.mxu0 %v2567
    %3744 = vmatprep.subr.mxu0 0.0
    %3745 = vmatpush2.msra.mxu0 %v2566
    %3746 = vmatprep.subr.mxu0 0.0
    %3747 = vmatpush2.msra.mxu0 %v2565
    %3748 = vmatprep.subr.mxu0 0.0
    %3749 = vmatpush2.msra.mxu0 %v2564
    %3750 = vmatprep.subr.mxu0 0.0
    %3751 = vmatpush2.msra.mxu0 %v2563
    %3752 = vmatprep.subr.mxu0 0.0
    %3753 = vmatpush2.msra.mxu0 %v2562
    %3754 = vmatprep.subr.mxu0 0.0
    %3755 = vmatpush2.msra.mxu0 %v2561
    %3756 = vmatprep.mubr.f32.mxu0 %v3530
    %3757 = vmatmul.mubr.f32.gmra.mxu0 %v3523
    %v3758 = vpop.f32.mrf.mxu0
    %v3759 = vadd.f32 %v3689, %v3758
    %v3760 = vpop.f32.mrf.mxu0
    %3761 = vdwg.mxu0
    %3762 = vmatprep.subr.mxu0 0.0
    %3763 = vmatpush1.msra.mxu0 %v2592
    %3764 = vmatprep.subr.mxu0 0.0
    %3765 = vmatpush1.msra.mxu0 %v2591
    %3766 = vmatprep.subr.mxu0 0.0
    %3767 = vmatpush1.msra.mxu0 %v2590
    %3768 = vmatprep.subr.mxu0 0.0
    %3769 = vmatpush1.msra.mxu0 %v2589
    %3770 = vmatprep.subr.mxu0 0.0
    %3771 = vmatpush1.msra.mxu0 %v2588
    %3772 = vmatprep.subr.mxu0 0.0
    %3773 = vmatpush1.msra.mxu0 %v2587
    %3774 = vmatprep.subr.mxu0 0.0
    %3775 = vmatpush1.msra.mxu0 %v2586
    %3776 = vmatprep.subr.mxu0 0.0
    %3777 = vmatpush1.msra.mxu0 %v2585
    %3778 = vmatprep.subr.mxu0 0.0
    %3779 = vmatpush1.msra.mxu0 %v2584
    %3780 = vmatprep.subr.mxu0 0.0
    %3781 = vmatpush1.msra.mxu0 %v2583
    %3782 = vmatprep.subr.mxu0 0.0
    %3783 = vmatpush1.msra.mxu0 %v2582
    %3784 = vmatprep.subr.mxu0 0.0
    %3785 = vmatpush1.msra.mxu0 %v2581
    %3786 = vmatprep.subr.mxu0 0.0
    %3787 = vmatpush1.msra.mxu0 %v2580
    %3788 = vmatprep.subr.mxu0 0.0
    %3789 = vmatpush1.msra.mxu0 %v2579
    %3790 = vmatprep.subr.mxu0 0.0
    %3791 = vmatpush1.msra.mxu0 %v2578
    %3792 = vmatprep.subr.mxu0 0.0
    %3793 = vmatpush1.msra.mxu0 %v2577
    %3794 = vmatprep.subr.mxu0 0.0
    %3795 = vmatpush2.msra.mxu0 %v2608
    %3796 = vmatprep.subr.mxu0 0.0
    %3797 = vmatpush2.msra.mxu0 %v2607
    %3798 = vmatprep.subr.mxu0 0.0
    %3799 = vmatpush2.msra.mxu0 %v2606
    %3800 = vmatprep.subr.mxu0 0.0
    %3801 = vmatpush2.msra.mxu0 %v2605
    %3802 = vmatprep.subr.mxu0 0.0
    %3803 = vmatpush2.msra.mxu0 %v2604
    %3804 = vmatprep.subr.mxu0 0.0
    %3805 = vmatpush2.msra.mxu0 %v2603
    %3806 = vmatprep.subr.mxu0 0.0
    %3807 = vmatpush2.msra.mxu0 %v2602
    %3808 = vmatprep.subr.mxu0 0.0
    %3809 = vmatpush2.msra.mxu0 %v2601
    %3810 = vmatprep.subr.mxu0 0.0
    %3811 = vmatpush2.msra.mxu0 %v2600
    %3812 = vmatprep.subr.mxu0 0.0
    %3813 = vmatpush2.msra.mxu0 %v2599
    %3814 = vmatprep.subr.mxu0 0.0
    %3815 = vmatpush2.msra.mxu0 %v2598
    %3816 = vmatprep.subr.mxu0 0.0
    %3817 = vmatpush2.msra.mxu0 %v2597
    %3818 = vmatprep.subr.mxu0 0.0
    %3819 = vmatpush2.msra.mxu0 %v2596
    %3820 = vmatprep.subr.mxu0 0.0
    %3821 = vmatpush2.msra.mxu0 %v2595
    %3822 = vmatprep.subr.mxu0 0.0
    %3823 = vmatpush2.msra.mxu0 %v2594
    %3824 = vmatprep.subr.mxu0 0.0
    %3825 = vmatpush2.msra.mxu0 %v2593
    %3826 = vmatprep.mubr.f32.mxu0 %v3544
    %3827 = vmatmul.mubr.f32.gmra.mxu0 %v3537
    %v3828 = vpop.f32.mrf.mxu0
    %v3829 = vadd.f32 %v3759, %v3828
    %v3830 = vpop.f32.mrf.mxu0
    %3831 = vdwg.mxu0
    %3832 = vmatprep.subr.mxu0 0.0
    %3833 = vmatpush1.msra.mxu0 %v2624
    %3834 = vmatprep.subr.mxu0 0.0
    %3835 = vmatpush1.msra.mxu0 %v2623
    %3836 = vmatprep.subr.mxu0 0.0
    %3837 = vmatpush1.msra.mxu0 %v2622
    %3838 = vmatprep.subr.mxu0 0.0
    %3839 = vmatpush1.msra.mxu0 %v2621
    %3840 = vmatprep.subr.mxu0 0.0
    %3841 = vmatpush1.msra.mxu0 %v2620
    %3842 = vmatprep.subr.mxu0 0.0
    %3843 = vmatpush1.msra.mxu0 %v2619
    %3844 = vmatprep.subr.mxu0 0.0
    %3845 = vmatpush1.msra.mxu0 %v2618
    %3846 = vmatprep.subr.mxu0 0.0
    %3847 = vmatpush1.msra.mxu0 %v2617
    %3848 = vmatprep.subr.mxu0 0.0
    %3849 = vmatpush1.msra.mxu0 %v2616
    %3850 = vmatprep.subr.mxu0 0.0
    %3851 = vmatpush1.msra.mxu0 %v2615
    %3852 = vmatprep.subr.mxu0 0.0
    %3853 = vmatpush1.msra.mxu0 %v2614
    %3854 = vmatprep.subr.mxu0 0.0
    %3855 = vmatpush1.msra.mxu0 %v2613
    %3856 = vmatprep.subr.mxu0 0.0
    %3857 = vmatpush1.msra.mxu0 %v2612
    %3858 = vmatprep.subr.mxu0 0.0
    %3859 = vmatpush1.msra.mxu0 %v2611
    %3860 = vmatprep.subr.mxu0 0.0
    %3861 = vmatpush1.msra.mxu0 %v2610
    %3862 = vmatprep.subr.mxu0 0.0
    %3863 = vmatpush1.msra.mxu0 %v2609
    %3864 = vmatprep.subr.mxu0 0.0
    %3865 = vmatpush2.msra.mxu0 0.0
    %3866 = vmatprep.subr.mxu0 0.0
    %3867 = vmatpush2.msra.mxu0 0.0
    %3868 = vmatprep.subr.mxu0 0.0
    %3869 = vmatpush2.msra.mxu0 0.0
    %3870 = vmatprep.subr.mxu0 0.0
    %3871 = vmatpush2.msra.mxu0 0.0
    %3872 = vmatprep.subr.mxu0 0.0
    %3873 = vmatpush2.msra.mxu0 0.0
    %3874 = vmatprep.subr.mxu0 0.0
    %3875 = vmatpush2.msra.mxu0 0.0
    %3876 = vmatprep.subr.mxu0 0.0
    %3877 = vmatpush2.msra.mxu0 0.0
    %3878 = vmatprep.subr.mxu0 0.0
    %3879 = vmatpush2.msra.mxu0 0.0
    %3880 = vmatprep.subr.mxu0 0.0
    %3881 = vmatpush2.msra.mxu0 0.0
    %3882 = vmatprep.subr.mxu0 0.0
    %3883 = vmatpush2.msra.mxu0 0.0
    %3884 = vmatprep.subr.mxu0 0.0
    %3885 = vmatpush2.msra.mxu0 0.0
    %3886 = vmatprep.subr.mxu0 0.0
    %3887 = vmatpush2.msra.mxu0 0.0
    %3888 = vmatprep.subr.mxu0 0.0
    %3889 = vmatpush2.msra.mxu0 0.0
    %3890 = vmatprep.subr.mxu0 0.0
    %3891 = vmatpush2.msra.mxu0 0.0
    %3892 = vmatprep.subr.mxu0 0.0
    %3893 = vmatpush2.msra.mxu0 0.0
    %3894 = vmatprep.subr.mxu0 0.0
    %3895 = vmatpush2.msra.mxu0 0.0
    %3896 = vmatprep.mubr.f32.mxu0 0.0
    %3897 = vmatmul.mubr.f32.gmra.mxu0 %v3551
    %v3898 = vpop.f32.mrf.mxu0
    %v3899 = vadd.f32 %v3829, %v3898
    %v3900 = vpop.f32.mrf.mxu0
    %3901 = vdwg.mxu0
    %v3902 = vmul.f32 %v3899, %v3076
    %v3903 = vadd.f32 %v3902, 1e-05
    %v3904 = vrsqrt.pop %v3903
    %v3905 = vmul.f32 %v2661, %v3904
    %v3907 = vsel %vm280, %v3905, 0
    %3909 = vmatprep.subr.mxu0 0.0
    %3910 = vmatpush1.msra.mxu0 0.0
    %3911 = vmatprep.subr.mxu0 0.0
    %3912 = vmatpush1.msra.mxu0 0.0
    %3913 = vmatprep.subr.mxu0 0.0
    %3914 = vmatpush1.msra.mxu0 0.0
    %3915 = vmatprep.subr.mxu0 0.0
    %3916 = vmatpush1.msra.mxu0 0.0
    %3917 = vmatprep.subr.mxu0 0.0
    %3918 = vmatpush1.msra.mxu0 0.0
    %3919 = vmatprep.subr.mxu0 0.0
    %3920 = vmatpush1.msra.mxu0 0.0
    %3921 = vmatprep.subr.mxu0 0.0
    %3922 = vmatpush1.msra.mxu0 0.0
    %3923 = vmatprep.subr.mxu0 0.0
    %3924 = vmatpush1.msra.mxu0 0.0
    %3925 = vmatprep.subr.mxu0 0.0
    %3926 = vmatpush1.msra.mxu0 0.0
    %3927 = vmatprep.subr.mxu0 0.0
    %3928 = vmatpush1.msra.mxu0 0.0
    %3929 = vmatprep.subr.mxu0 0.0
    %3930 = vmatpush1.msra.mxu0 0.0
    %3931 = vmatprep.subr.mxu0 0.0
    %3932 = vmatpush1.msra.mxu0 0.0
    %3933 = vmatprep.subr.mxu0 %v2653
    %3934 = vmatpush1.msra.mxu0 %v2652
    %3935 = vmatprep.subr.mxu0 %v2644
    %3936 = vmatpush1.msra.mxu0 %v2643
    %3937 = vmatprep.subr.mxu0 %v2635
    %3938 = vmatpush1.msra.mxu0 %v2634
    %3939 = vmatprep.subr.mxu0 %v2626
    %3940 = vmatpush1.msra.mxu0 %v2625
    %3941 = vmatprep.subr.mxu0 0.0
    %3942 = vmatpush2.msra.mxu0 0.0
    %3943 = vmatprep.subr.mxu0 0.0
    %3944 = vmatpush2.msra.mxu0 0.0
    %3945 = vmatprep.subr.mxu0 0.0
    %3946 = vmatpush2.msra.mxu0 0.0
    %3947 = vmatprep.subr.mxu0 0.0
    %3948 = vmatpush2.msra.mxu0 0.0
    %3949 = vmatprep.subr.mxu0 0.0
    %3950 = vmatpush2.msra.mxu0 0.0
    %3951 = vmatprep.subr.mxu0 0.0
    %3952 = vmatpush2.msra.mxu0 0.0
    %3953 = vmatprep.subr.mxu0 0.0
    %3954 = vmatpush2.msra.mxu0 0.0
    %3955 = vmatprep.subr.mxu0 0.0
    %3956 = vmatpush2.msra.mxu0 0.0
    %3957 = vmatprep.subr.mxu0 0.0
    %3958 = vmatpush2.msra.mxu0 0.0
    %3959 = vmatprep.subr.mxu0 0.0
    %3960 = vmatpush2.msra.mxu0 0.0
    %3961 = vmatprep.subr.mxu0 0.0
    %3962 = vmatpush2.msra.mxu0 0.0
    %3963 = vmatprep.subr.mxu0 0.0
    %3964 = vmatpush2.msra.mxu0 0.0
    %3965 = vmatprep.subr.mxu0 0.0
    %3966 = vmatpush2.msra.mxu0 0.0
    %3967 = vmatprep.subr.mxu0 0.0
    %3968 = vmatpush2.msra.mxu0 0.0
    %3969 = vmatprep.subr.mxu0 0.0
    %3970 = vmatpush2.msra.mxu0 0.0
    %3971 = vmatprep.subr.mxu0 0.0
    %3972 = vmatpush2.msra.mxu0 0.0
    %3973 = vmatprep.mubr.f32.mxu0 0.0
    %3974 = vmatmul.mubr.f32.gmra.mxu0 %v3907
    %v3975 = vpop.f32.mrf.mxu0
    %v3976 = vadd.f32 0.0, %v3975
    %v3977 = vpop.f32.mrf.mxu0
    %v3978 = vadd.f32 0.0, %v3977
    %3979 = vdwg.mxu0
    %3980 = vmatprep.subr.mxu0 0.0
    %3981 = vmatpush1.msra.mxu0 0.0
    %3982 = vmatprep.subr.mxu0 0.0
    %3983 = vmatpush1.msra.mxu0 0.0
    %3984 = vmatprep.subr.mxu0 0.0
    %3985 = vmatpush1.msra.mxu0 0.0
    %3986 = vmatprep.subr.mxu0 0.0
    %3987 = vmatpush1.msra.mxu0 0.0
    %3988 = vmatprep.subr.mxu0 0.0
    %3989 = vmatpush1.msra.mxu0 0.0
    %3990 = vmatprep.subr.mxu0 0.0
    %3991 = vmatpush1.msra.mxu0 0.0
    %3992 = vmatprep.subr.mxu0 0.0
    %3993 = vmatpush1.msra.mxu0 0.0
    %3994 = vmatprep.subr.mxu0 0.0
    %3995 = vmatpush1.msra.mxu0 0.0
    %3996 = vmatprep.subr.mxu0 0.0
    %3997 = vmatpush1.msra.mxu0 0.0
    %3998 = vmatprep.subr.mxu0 0.0
    %3999 = vmatpush1.msra.mxu0 0.0
    %4000 = vmatprep.subr.mxu0 0.0
    %4001 = vmatpush1.msra.mxu0 0.0
    %4002 = vmatprep.subr.mxu0 0.0
    %4003 = vmatpush1.msra.mxu0 0.0
    %4004 = vmatprep.subr.mxu0 %v2655
    %4005 = vmatpush1.msra.mxu0 %v2654
    %4006 = vmatprep.subr.mxu0 %v2646
    %4007 = vmatpush1.msra.mxu0 %v2645
    %4008 = vmatprep.subr.mxu0 %v2637
    %4009 = vmatpush1.msra.mxu0 %v2636
    %4010 = vmatprep.subr.mxu0 %v2628
    %4011 = vmatpush1.msra.mxu0 %v2627
    %4012 = vmatprep.subr.mxu0 0.0
    %4013 = vmatpush2.msra.mxu0 0.0
    %4014 = vmatprep.subr.mxu0 0.0
    %4015 = vmatpush2.msra.mxu0 0.0
    %4016 = vmatprep.subr.mxu0 0.0
    %4017 = vmatpush2.msra.mxu0 0.0
    %4018 = vmatprep.subr.mxu0 0.0
    %4019 = vmatpush2.msra.mxu0 0.0
    %4020 = vmatprep.subr.mxu0 0.0
    %4021 = vmatpush2.msra.mxu0 0.0
    %4022 = vmatprep.subr.mxu0 0.0
    %4023 = vmatpush2.msra.mxu0 0.0
    %4024 = vmatprep.subr.mxu0 0.0
    %4025 = vmatpush2.msra.mxu0 0.0
    %4026 = vmatprep.subr.mxu0 0.0
    %4027 = vmatpush2.msra.mxu0 0.0
    %4028 = vmatprep.subr.mxu0 0.0
    %4029 = vmatpush2.msra.mxu0 0.0
    %4030 = vmatprep.subr.mxu0 0.0
    %4031 = vmatpush2.msra.mxu0 0.0
    %4032 = vmatprep.subr.mxu0 0.0
    %4033 = vmatpush2.msra.mxu0 0.0
    %4034 = vmatprep.subr.mxu0 0.0
    %4035 = vmatpush2.msra.mxu0 0.0
    %4036 = vmatprep.subr.mxu0 0.0
    %4037 = vmatpush2.msra.mxu0 0.0
    %4038 = vmatprep.subr.mxu0 0.0
    %4039 = vmatpush2.msra.mxu0 0.0
    %4040 = vmatprep.subr.mxu0 0.0
    %4041 = vmatpush2.msra.mxu0 0.0
    %4042 = vmatprep.subr.mxu0 0.0
    %4043 = vmatpush2.msra.mxu0 0.0
    %4044 = vmatprep.mubr.f32.mxu0 0.0
    %4045 = vmatmul.mubr.f32.gmra.mxu0 %v3907
    %v4046 = vpop.f32.mrf.mxu0
    %v4047 = vadd.f32 0.0, %v4046
    %v4048 = vpop.f32.mrf.mxu0
    %v4049 = vadd.f32 0.0, %v4048
    %4050 = vdwg.mxu0
    %4051 = vmatprep.subr.mxu0 0.0
    %4052 = vmatpush1.msra.mxu0 0.0
    %4053 = vmatprep.subr.mxu0 0.0
    %4054 = vmatpush1.msra.mxu0 0.0
    %4055 = vmatprep.subr.mxu0 0.0
    %4056 = vmatpush1.msra.mxu0 0.0
    %4057 = vmatprep.subr.mxu0 0.0
    %4058 = vmatpush1.msra.mxu0 0.0
    %4059 = vmatprep.subr.mxu0 0.0
    %4060 = vmatpush1.msra.mxu0 0.0
    %4061 = vmatprep.subr.mxu0 0.0
    %4062 = vmatpush1.msra.mxu0 0.0
    %4063 = vmatprep.subr.mxu0 0.0
    %4064 = vmatpush1.msra.mxu0 0.0
    %4065 = vmatprep.subr.mxu0 0.0
    %4066 = vmatpush1.msra.mxu0 0.0
    %4067 = vmatprep.subr.mxu0 0.0
    %4068 = vmatpush1.msra.mxu0 0.0
    %4069 = vmatprep.subr.mxu0 0.0
    %4070 = vmatpush1.msra.mxu0 0.0
    %4071 = vmatprep.subr.mxu0 0.0
    %4072 = vmatpush1.msra.mxu0 0.0
    %4073 = vmatprep.subr.mxu0 0.0
    %4074 = vmatpush1.msra.mxu0 0.0
    %4075 = vmatprep.subr.mxu0 %v2657
    %4076 = vmatpush1.msra.mxu0 %v2656
    %4077 = vmatprep.subr.mxu0 %v2648
    %4078 = vmatpush1.msra.mxu0 %v2647
    %4079 = vmatprep.subr.mxu0 %v2639
    %4080 = vmatpush1.msra.mxu0 %v2638
    %4081 = vmatprep.subr.mxu0 %v2630
    %4082 = vmatpush1.msra.mxu0 %v2629
    %4083 = vmatprep.subr.mxu0 0.0
    %4084 = vmatpush2.msra.mxu0 0.0
    %4085 = vmatprep.subr.mxu0 0.0
    %4086 = vmatpush2.msra.mxu0 0.0
    %4087 = vmatprep.subr.mxu0 0.0
    %4088 = vmatpush2.msra.mxu0 0.0
    %4089 = vmatprep.subr.mxu0 0.0
    %4090 = vmatpush2.msra.mxu0 0.0
    %4091 = vmatprep.subr.mxu0 0.0
    %4092 = vmatpush2.msra.mxu0 0.0
    %4093 = vmatprep.subr.mxu0 0.0
    %4094 = vmatpush2.msra.mxu0 0.0
    %4095 = vmatprep.subr.mxu0 0.0
    %4096 = vmatpush2.msra.mxu0 0.0
    %4097 = vmatprep.subr.mxu0 0.0
    %4098 = vmatpush2.msra.mxu0 0.0
    %4099 = vmatprep.subr.mxu0 0.0
    %4100 = vmatpush2.msra.mxu0 0.0
    %4101 = vmatprep.subr.mxu0 0.0
    %4102 = vmatpush2.msra.mxu0 0.0
    %4103 = vmatprep.subr.mxu0 0.0
    %4104 = vmatpush2.msra.mxu0 0.0
    %4105 = vmatprep.subr.mxu0 0.0
    %4106 = vmatpush2.msra.mxu0 0.0
    %4107 = vmatprep.subr.mxu0 0.0
    %4108 = vmatpush2.msra.mxu0 0.0
    %4109 = vmatprep.subr.mxu0 0.0
    %4110 = vmatpush2.msra.mxu0 0.0
    %4111 = vmatprep.subr.mxu0 0.0
    %4112 = vmatpush2.msra.mxu0 0.0
    %4113 = vmatprep.subr.mxu0 0.0
    %4114 = vmatpush2.msra.mxu0 0.0
    %4115 = vmatprep.mubr.f32.mxu0 0.0
    %4116 = vmatmul.mubr.f32.gmra.mxu0 %v3907
    %v4117 = vpop.f32.mrf.mxu0
    %v4118 = vadd.f32 0.0, %v4117
    %v4119 = vpop.f32.mrf.mxu0
    %v4120 = vadd.f32 0.0, %v4119
    %4121 = vdwg.mxu0
    %4122 = vmatprep.subr.mxu0 0.0
    %4123 = vmatpush1.msra.mxu0 0.0
    %4124 = vmatprep.subr.mxu0 0.0
    %4125 = vmatpush1.msra.mxu0 0.0
    %4126 = vmatprep.subr.mxu0 0.0
    %4127 = vmatpush1.msra.mxu0 0.0
    %4128 = vmatprep.subr.mxu0 0.0
    %4129 = vmatpush1.msra.mxu0 0.0
    %4130 = vmatprep.subr.mxu0 0.0
    %4131 = vmatpush1.msra.mxu0 0.0
    %4132 = vmatprep.subr.mxu0 0.0
    %4133 = vmatpush1.msra.mxu0 0.0
    %4134 = vmatprep.subr.mxu0 0.0
    %4135 = vmatpush1.msra.mxu0 0.0
    %4136 = vmatprep.subr.mxu0 0.0
    %4137 = vmatpush1.msra.mxu0 0.0
    %4138 = vmatprep.subr.mxu0 0.0
    %4139 = vmatpush1.msra.mxu0 0.0
    %4140 = vmatprep.subr.mxu0 0.0
    %4141 = vmatpush1.msra.mxu0 0.0
    %4142 = vmatprep.subr.mxu0 0.0
    %4143 = vmatpush1.msra.mxu0 0.0
    %4144 = vmatprep.subr.mxu0 0.0
    %4145 = vmatpush1.msra.mxu0 0.0
    %4146 = vmatprep.subr.mxu0 %v2659
    %4147 = vmatpush1.msra.mxu0 %v2658
    %4148 = vmatprep.subr.mxu0 %v2650
    %4149 = vmatpush1.msra.mxu0 %v2649
    %4150 = vmatprep.subr.mxu0 %v2641
    %4151 = vmatpush1.msra.mxu0 %v2640
    %4152 = vmatprep.subr.mxu0 %v2632
    %4153 = vmatpush1.msra.mxu0 %v2631
    %4154 = vmatprep.subr.mxu0 0.0
    %4155 = vmatpush2.msra.mxu0 0.0
    %4156 = vmatprep.subr.mxu0 0.0
    %4157 = vmatpush2.msra.mxu0 0.0
    %4158 = vmatprep.subr.mxu0 0.0
    %4159 = vmatpush2.msra.mxu0 0.0
    %4160 = vmatprep.subr.mxu0 0.0
    %4161 = vmatpush2.msra.mxu0 0.0
    %4162 = vmatprep.subr.mxu0 0.0
    %4163 = vmatpush2.msra.mxu0 0.0
    %4164 = vmatprep.subr.mxu0 0.0
    %4165 = vmatpush2.msra.mxu0 0.0
    %4166 = vmatprep.subr.mxu0 0.0
    %4167 = vmatpush2.msra.mxu0 0.0
    %4168 = vmatprep.subr.mxu0 0.0
    %4169 = vmatpush2.msra.mxu0 0.0
    %4170 = vmatprep.subr.mxu0 0.0
    %4171 = vmatpush2.msra.mxu0 0.0
    %4172 = vmatprep.subr.mxu0 0.0
    %4173 = vmatpush2.msra.mxu0 0.0
    %4174 = vmatprep.subr.mxu0 0.0
    %4175 = vmatpush2.msra.mxu0 0.0
    %4176 = vmatprep.subr.mxu0 0.0
    %4177 = vmatpush2.msra.mxu0 0.0
    %4178 = vmatprep.subr.mxu0 0.0
    %4179 = vmatpush2.msra.mxu0 0.0
    %4180 = vmatprep.subr.mxu0 0.0
    %4181 = vmatpush2.msra.mxu0 0.0
    %4182 = vmatprep.subr.mxu0 0.0
    %4183 = vmatpush2.msra.mxu0 0.0
    %4184 = vmatprep.subr.mxu0 0.0
    %4185 = vmatpush2.msra.mxu0 0.0
    %4186 = vmatprep.mubr.f32.mxu0 0.0
    %4187 = vmatmul.mubr.f32.gmra.mxu0 %v3907
    %v4188 = vpop.f32.mrf.mxu0
    %v4189 = vadd.f32 0.0, %v4188
    %v4190 = vpop.f32.mrf.mxu0
    %v4191 = vadd.f32 0.0, %v4190
    %4192 = vdwg.mxu0
    %4193 = vmatprep.subr.mxu0 0.0
    %4194 = vmatpush1.msra.mxu0 0.0
    %4195 = vmatprep.subr.mxu0 0.0
    %4196 = vmatpush1.msra.mxu0 0.0
    %4197 = vmatprep.subr.mxu0 0.0
    %4198 = vmatpush1.msra.mxu0 0.0
    %4199 = vmatprep.subr.mxu0 0.0
    %4200 = vmatpush1.msra.mxu0 0.0
    %4201 = vmatprep.subr.mxu0 0.0
    %4202 = vmatpush1.msra.mxu0 0.0
    %4203 = vmatprep.subr.mxu0 0.0
    %4204 = vmatpush1.msra.mxu0 0.0
    %4205 = vmatprep.subr.mxu0 0.0
    %4206 = vmatpush1.msra.mxu0 0.0
    %4207 = vmatprep.subr.mxu0 0.0
    %4208 = vmatpush1.msra.mxu0 0.0
    %4209 = vmatprep.subr.mxu0 0.0
    %4210 = vmatpush1.msra.mxu0 0.0
    %4211 = vmatprep.subr.mxu0 0.0
    %4212 = vmatpush1.msra.mxu0 0.0
    %4213 = vmatprep.subr.mxu0 0.0
    %4214 = vmatpush1.msra.mxu0 0.0
    %4215 = vmatprep.subr.mxu0 0.0
    %4216 = vmatpush1.msra.mxu0 0.0
    %4217 = vmatprep.subr.mxu0 0.0
    %4218 = vmatpush1.msra.mxu0 %v2660
    %4219 = vmatprep.subr.mxu0 0.0
    %4220 = vmatpush1.msra.mxu0 %v2651
    %4221 = vmatprep.subr.mxu0 0.0
    %4222 = vmatpush1.msra.mxu0 %v2642
    %4223 = vmatprep.subr.mxu0 0.0
    %4224 = vmatpush1.msra.mxu0 %v2633
    %4225 = vmatprep.subr.mxu0 0.0
    %4226 = vmatpush2.msra.mxu0 0.0
    %4227 = vmatprep.subr.mxu0 0.0
    %4228 = vmatpush2.msra.mxu0 0.0
    %4229 = vmatprep.subr.mxu0 0.0
    %4230 = vmatpush2.msra.mxu0 0.0
    %4231 = vmatprep.subr.mxu0 0.0
    %4232 = vmatpush2.msra.mxu0 0.0
    %4233 = vmatprep.subr.mxu0 0.0
    %4234 = vmatpush2.msra.mxu0 0.0
    %4235 = vmatprep.subr.mxu0 0.0
    %4236 = vmatpush2.msra.mxu0 0.0
    %4237 = vmatprep.subr.mxu0 0.0
    %4238 = vmatpush2.msra.mxu0 0.0
    %4239 = vmatprep.subr.mxu0 0.0
    %4240 = vmatpush2.msra.mxu0 0.0
    %4241 = vmatprep.subr.mxu0 0.0
    %4242 = vmatpush2.msra.mxu0 0.0
    %4243 = vmatprep.subr.mxu0 0.0
    %4244 = vmatpush2.msra.mxu0 0.0
    %4245 = vmatprep.subr.mxu0 0.0
    %4246 = vmatpush2.msra.mxu0 0.0
    %4247 = vmatprep.subr.mxu0 0.0
    %4248 = vmatpush2.msra.mxu0 0.0
    %4249 = vmatprep.subr.mxu0 0.0
    %4250 = vmatpush2.msra.mxu0 0.0
    %4251 = vmatprep.subr.mxu0 0.0
    %4252 = vmatpush2.msra.mxu0 0.0
    %4253 = vmatprep.subr.mxu0 0.0
    %4254 = vmatpush2.msra.mxu0 0.0
    %4255 = vmatprep.subr.mxu0 0.0
    %4256 = vmatpush2.msra.mxu0 0.0
    %4257 = vmatprep.mubr.f32.mxu0 0.0
    %4258 = vmatmul.mubr.f32.gmra.mxu0 %v3907
    %v4259 = vpop.f32.mrf.mxu0
    %v4260 = vadd.f32 0.0, %v4259
    %v4261 = vpop.f32.mrf.mxu0
    %4262 = vdwg.mxu0
    %v4263 = vlaneseq
    %v4264 = vshrl.u32 %v4263, 7
    %v4265 = vsub.s32 0, %v4264
    %v4266 = vrot.slane %v3976, %v4265
    %v4267 = vlaneseq
    %v4268 = vshrl.u32 %v4267, 7
    %v4269 = vsub.s32 0, %v4268
    %v4270 = vrot.slane %v3978, %v4269
    %v4271 = vlaneseq
    %v4272 = vshrl.u32 %v4271, 7
    %v4273 = vsub.s32 0, %v4272
    %v4274 = vrot.slane %v4047, %v4273
    %v4275 = vlaneseq
    %v4276 = vshrl.u32 %v4275, 7
    %v4277 = vsub.s32 0, %v4276
    %v4278 = vrot.slane %v4049, %v4277
    %v4279 = vlaneseq
    %v4280 = vshrl.u32 %v4279, 7
    %v4281 = vsub.s32 0, %v4280
    %v4282 = vrot.slane %v4118, %v4281
    %v4283 = vlaneseq
    %v4284 = vshrl.u32 %v4283, 7
    %v4285 = vsub.s32 0, %v4284
    %v4286 = vrot.slane %v4120, %v4285
    %v4287 = vlaneseq
    %v4288 = vshrl.u32 %v4287, 7
    %v4289 = vsub.s32 0, %v4288
    %v4290 = vrot.slane %v4189, %v4289
    %v4291 = vlaneseq
    %v4292 = vshrl.u32 %v4291, 7
    %v4293 = vsub.s32 0, %v4292
    %v4294 = vrot.slane %v4191, %v4293
    %v4295 = vlaneseq
    %v4296 = vshrl.u32 %v4295, 7
    %v4297 = vsub.s32 0, %v4296
    %v4298 = vrot.slane %v4260, %v4297
    %v4299 = vmul.f32 %v3471, %v4266
    %v4300 = vmul.f32 %v3472, %v4270
    %v4301 = vmul.f32 %v3473, %v4274
    %v4302 = vmul.f32 %v3474, %v4278
    %v4303 = vmul.f32 %v3475, %v4282
    %v4304 = vmul.f32 %v3476, %v4286
    %v4305 = vmul.f32 %v3477, %v4290
    %v4306 = vmul.f32 %v3478, %v4294
    %v4307 = vmul.f32 %v3479, %v4298
    %v4309 = vsel %vm280, %v2662, 0
    %4311 = vmatprep.subr.mxu0 0.0
    %4312 = vmatpush1.msra.mxu0 0.0
    %4313 = vmatprep.subr.mxu0 0.0
    %4314 = vmatpush1.msra.mxu0 0.0
    %4315 = vmatprep.subr.mxu0 0.0
    %4316 = vmatpush1.msra.mxu0 0.0
    %4317 = vmatprep.subr.mxu0 0.0
    %4318 = vmatpush1.msra.mxu0 0.0
    %4319 = vmatprep.subr.mxu0 0.0
    %4320 = vmatpush1.msra.mxu0 0.0
    %4321 = vmatprep.subr.mxu0 0.0
    %4322 = vmatpush1.msra.mxu0 0.0
    %4323 = vmatprep.subr.mxu0 0.0
    %4324 = vmatpush1.msra.mxu0 0.0
    %4325 = vmatprep.subr.mxu0 0.0
    %4326 = vmatpush1.msra.mxu0 0.0
    %4327 = vmatprep.subr.mxu0 0.0
    %4328 = vmatpush1.msra.mxu0 0.0
    %4329 = vmatprep.subr.mxu0 0.0
    %4330 = vmatpush1.msra.mxu0 0.0
    %4331 = vmatprep.subr.mxu0 0.0
    %4332 = vmatpush1.msra.mxu0 0.0
    %4333 = vmatprep.subr.mxu0 0.0
    %4334 = vmatpush1.msra.mxu0 0.0
    %4335 = vmatprep.subr.mxu0 %v2653
    %4336 = vmatpush1.msra.mxu0 %v2652
    %4337 = vmatprep.subr.mxu0 %v2644
    %4338 = vmatpush1.msra.mxu0 %v2643
    %4339 = vmatprep.subr.mxu0 %v2635
    %4340 = vmatpush1.msra.mxu0 %v2634
    %4341 = vmatprep.subr.mxu0 %v2626
    %4342 = vmatpush1.msra.mxu0 %v2625
    %4343 = vmatprep.subr.mxu0 0.0
    %4344 = vmatpush2.msra.mxu0 0.0
    %4345 = vmatprep.subr.mxu0 0.0
    %4346 = vmatpush2.msra.mxu0 0.0
    %4347 = vmatprep.subr.mxu0 0.0
    %4348 = vmatpush2.msra.mxu0 0.0
    %4349 = vmatprep.subr.mxu0 0.0
    %4350 = vmatpush2.msra.mxu0 0.0
    %4351 = vmatprep.subr.mxu0 0.0
    %4352 = vmatpush2.msra.mxu0 0.0
    %4353 = vmatprep.subr.mxu0 0.0
    %4354 = vmatpush2.msra.mxu0 0.0
    %4355 = vmatprep.subr.mxu0 0.0
    %4356 = vmatpush2.msra.mxu0 0.0
    %4357 = vmatprep.subr.mxu0 0.0
    %4358 = vmatpush2.msra.mxu0 0.0
    %4359 = vmatprep.subr.mxu0 0.0
    %4360 = vmatpush2.msra.mxu0 0.0
    %4361 = vmatprep.subr.mxu0 0.0
    %4362 = vmatpush2.msra.mxu0 0.0
    %4363 = vmatprep.subr.mxu0 0.0
    %4364 = vmatpush2.msra.mxu0 0.0
    %4365 = vmatprep.subr.mxu0 0.0
    %4366 = vmatpush2.msra.mxu0 0.0
    %4367 = vmatprep.subr.mxu0 0.0
    %4368 = vmatpush2.msra.mxu0 0.0
    %4369 = vmatprep.subr.mxu0 0.0
    %4370 = vmatpush2.msra.mxu0 0.0
    %4371 = vmatprep.subr.mxu0 0.0
    %4372 = vmatpush2.msra.mxu0 0.0
    %4373 = vmatprep.subr.mxu0 0.0
    %4374 = vmatpush2.msra.mxu0 0.0
    %4375 = vmatprep.mubr.f32.mxu0 0.0
    %4376 = vmatmul.mubr.f32.gmra.mxu0 %v4309
    %v4377 = vpop.f32.mrf.mxu0
    %v4378 = vadd.f32 0.0, %v4377
    %v4379 = vpop.f32.mrf.mxu0
    %v4380 = vadd.f32 0.0, %v4379
    %4381 = vdwg.mxu0
    %4382 = vmatprep.subr.mxu0 0.0
    %4383 = vmatpush1.msra.mxu0 0.0
    %4384 = vmatprep.subr.mxu0 0.0
    %4385 = vmatpush1.msra.mxu0 0.0
    %4386 = vmatprep.subr.mxu0 0.0
    %4387 = vmatpush1.msra.mxu0 0.0
    %4388 = vmatprep.subr.mxu0 0.0
    %4389 = vmatpush1.msra.mxu0 0.0
    %4390 = vmatprep.subr.mxu0 0.0
    %4391 = vmatpush1.msra.mxu0 0.0
    %4392 = vmatprep.subr.mxu0 0.0
    %4393 = vmatpush1.msra.mxu0 0.0
    %4394 = vmatprep.subr.mxu0 0.0
    %4395 = vmatpush1.msra.mxu0 0.0
    %4396 = vmatprep.subr.mxu0 0.0
    %4397 = vmatpush1.msra.mxu0 0.0
    %4398 = vmatprep.subr.mxu0 0.0
    %4399 = vmatpush1.msra.mxu0 0.0
    %4400 = vmatprep.subr.mxu0 0.0
    %4401 = vmatpush1.msra.mxu0 0.0
    %4402 = vmatprep.subr.mxu0 0.0
    %4403 = vmatpush1.msra.mxu0 0.0
    %4404 = vmatprep.subr.mxu0 0.0
    %4405 = vmatpush1.msra.mxu0 0.0
    %4406 = vmatprep.subr.mxu0 %v2655
    %4407 = vmatpush1.msra.mxu0 %v2654
    %4408 = vmatprep.subr.mxu0 %v2646
    %4409 = vmatpush1.msra.mxu0 %v2645
    %4410 = vmatprep.subr.mxu0 %v2637
    %4411 = vmatpush1.msra.mxu0 %v2636
    %4412 = vmatprep.subr.mxu0 %v2628
    %4413 = vmatpush1.msra.mxu0 %v2627
    %4414 = vmatprep.subr.mxu0 0.0
    %4415 = vmatpush2.msra.mxu0 0.0
    %4416 = vmatprep.subr.mxu0 0.0
    %4417 = vmatpush2.msra.mxu0 0.0
    %4418 = vmatprep.subr.mxu0 0.0
    %4419 = vmatpush2.msra.mxu0 0.0
    %4420 = vmatprep.subr.mxu0 0.0
    %4421 = vmatpush2.msra.mxu0 0.0
    %4422 = vmatprep.subr.mxu0 0.0
    %4423 = vmatpush2.msra.mxu0 0.0
    %4424 = vmatprep.subr.mxu0 0.0
    %4425 = vmatpush2.msra.mxu0 0.0
    %4426 = vmatprep.subr.mxu0 0.0
    %4427 = vmatpush2.msra.mxu0 0.0
    %4428 = vmatprep.subr.mxu0 0.0
    %4429 = vmatpush2.msra.mxu0 0.0
    %4430 = vmatprep.subr.mxu0 0.0
    %4431 = vmatpush2.msra.mxu0 0.0
    %4432 = vmatprep.subr.mxu0 0.0
    %4433 = vmatpush2.msra.mxu0 0.0
    %4434 = vmatprep.subr.mxu0 0.0
    %4435 = vmatpush2.msra.mxu0 0.0
    %4436 = vmatprep.subr.mxu0 0.0
    %4437 = vmatpush2.msra.mxu0 0.0
    %4438 = vmatprep.subr.mxu0 0.0
    %4439 = vmatpush2.msra.mxu0 0.0
    %4440 = vmatprep.subr.mxu0 0.0
    %4441 = vmatpush2.msra.mxu0 0.0
    %4442 = vmatprep.subr.mxu0 0.0
    %4443 = vmatpush2.msra.mxu0 0.0
    %4444 = vmatprep.subr.mxu0 0.0
    %4445 = vmatpush2.msra.mxu0 0.0
    %4446 = vmatprep.mubr.f32.mxu0 0.0
    %4447 = vmatmul.mubr.f32.gmra.mxu0 %v4309
    %v4448 = vpop.f32.mrf.mxu0
    %v4449 = vadd.f32 0.0, %v4448
    %v4450 = vpop.f32.mrf.mxu0
    %v4451 = vadd.f32 0.0, %v4450
    %4452 = vdwg.mxu0
    %4453 = vmatprep.subr.mxu0 0.0
    %4454 = vmatpush1.msra.mxu0 0.0
    %4455 = vmatprep.subr.mxu0 0.0
    %4456 = vmatpush1.msra.mxu0 0.0
    %4457 = vmatprep.subr.mxu0 0.0
    %4458 = vmatpush1.msra.mxu0 0.0
    %4459 = vmatprep.subr.mxu0 0.0
    %4460 = vmatpush1.msra.mxu0 0.0
    %4461 = vmatprep.subr.mxu0 0.0
    %4462 = vmatpush1.msra.mxu0 0.0
    %4463 = vmatprep.subr.mxu0 0.0
    %4464 = vmatpush1.msra.mxu0 0.0
    %4465 = vmatprep.subr.mxu0 0.0
    %4466 = vmatpush1.msra.mxu0 0.0
    %4467 = vmatprep.subr.mxu0 0.0
    %4468 = vmatpush1.msra.mxu0 0.0
    %4469 = vmatprep.subr.mxu0 0.0
    %4470 = vmatpush1.msra.mxu0 0.0
    %4471 = vmatprep.subr.mxu0 0.0
    %4472 = vmatpush1.msra.mxu0 0.0
    %4473 = vmatprep.subr.mxu0 0.0
    %4474 = vmatpush1.msra.mxu0 0.0
    %4475 = vmatprep.subr.mxu0 0.0
    %4476 = vmatpush1.msra.mxu0 0.0
    %4477 = vmatprep.subr.mxu0 %v2657
    %4478 = vmatpush1.msra.mxu0 %v2656
    %4479 = vmatprep.subr.mxu0 %v2648
    %4480 = vmatpush1.msra.mxu0 %v2647
    %4481 = vmatprep.subr.mxu0 %v2639
    %4482 = vmatpush1.msra.mxu0 %v2638
    %4483 = vmatprep.subr.mxu0 %v2630
    %4484 = vmatpush1.msra.mxu0 %v2629
    %4485 = vmatprep.subr.mxu0 0.0
    %4486 = vmatpush2.msra.mxu0 0.0
    %4487 = vmatprep.subr.mxu0 0.0
    %4488 = vmatpush2.msra.mxu0 0.0
    %4489 = vmatprep.subr.mxu0 0.0
    %4490 = vmatpush2.msra.mxu0 0.0
    %4491 = vmatprep.subr.mxu0 0.0
    %4492 = vmatpush2.msra.mxu0 0.0
    %4493 = vmatprep.subr.mxu0 0.0
    %4494 = vmatpush2.msra.mxu0 0.0
    %4495 = vmatprep.subr.mxu0 0.0
    %4496 = vmatpush2.msra.mxu0 0.0
    %4497 = vmatprep.subr.mxu0 0.0
    %4498 = vmatpush2.msra.mxu0 0.0
    %4499 = vmatprep.subr.mxu0 0.0
    %4500 = vmatpush2.msra.mxu0 0.0
    %4501 = vmatprep.subr.mxu0 0.0
    %4502 = vmatpush2.msra.mxu0 0.0
    %4503 = vmatprep.subr.mxu0 0.0
    %4504 = vmatpush2.msra.mxu0 0.0
    %4505 = vmatprep.subr.mxu0 0.0
    %4506 = vmatpush2.msra.mxu0 0.0
    %4507 = vmatprep.subr.mxu0 0.0
    %4508 = vmatpush2.msra.mxu0 0.0
    %4509 = vmatprep.subr.mxu0 0.0
    %4510 = vmatpush2.msra.mxu0 0.0
    %4511 = vmatprep.subr.mxu0 0.0
    %4512 = vmatpush2.msra.mxu0 0.0
    %4513 = vmatprep.subr.mxu0 0.0
    %4514 = vmatpush2.msra.mxu0 0.0
    %4515 = vmatprep.subr.mxu0 0.0
    %4516 = vmatpush2.msra.mxu0 0.0
    %4517 = vmatprep.mubr.f32.mxu0 0.0
    %4518 = vmatmul.mubr.f32.gmra.mxu0 %v4309
    %v4519 = vpop.f32.mrf.mxu0
    %v4520 = vadd.f32 0.0, %v4519
    %v4521 = vpop.f32.mrf.mxu0
    %v4522 = vadd.f32 0.0, %v4521
    %4523 = vdwg.mxu0
    %4524 = vmatprep.subr.mxu0 0.0
    %4525 = vmatpush1.msra.mxu0 0.0
    %4526 = vmatprep.subr.mxu0 0.0
    %4527 = vmatpush1.msra.mxu0 0.0
    %4528 = vmatprep.subr.mxu0 0.0
    %4529 = vmatpush1.msra.mxu0 0.0
    %4530 = vmatprep.subr.mxu0 0.0
    %4531 = vmatpush1.msra.mxu0 0.0
    %4532 = vmatprep.subr.mxu0 0.0
    %4533 = vmatpush1.msra.mxu0 0.0
    %4534 = vmatprep.subr.mxu0 0.0
    %4535 = vmatpush1.msra.mxu0 0.0
    %4536 = vmatprep.subr.mxu0 0.0
    %4537 = vmatpush1.msra.mxu0 0.0
    %4538 = vmatprep.subr.mxu0 0.0
    %4539 = vmatpush1.msra.mxu0 0.0
    %4540 = vmatprep.subr.mxu0 0.0
    %4541 = vmatpush1.msra.mxu0 0.0
    %4542 = vmatprep.subr.mxu0 0.0
    %4543 = vmatpush1.msra.mxu0 0.0
    %4544 = vmatprep.subr.mxu0 0.0
    %4545 = vmatpush1.msra.mxu0 0.0
    %4546 = vmatprep.subr.mxu0 0.0
    %4547 = vmatpush1.msra.mxu0 0.0
    %4548 = vmatprep.subr.mxu0 %v2659
    %4549 = vmatpush1.msra.mxu0 %v2658
    %4550 = vmatprep.subr.mxu0 %v2650
    %4551 = vmatpush1.msra.mxu0 %v2649
    %4552 = vmatprep.subr.mxu0 %v2641
    %4553 = vmatpush1.msra.mxu0 %v2640
    %4554 = vmatprep.subr.mxu0 %v2632
    %4555 = vmatpush1.msra.mxu0 %v2631
    %4556 = vmatprep.subr.mxu0 0.0
    %4557 = vmatpush2.msra.mxu0 0.0
    %4558 = vmatprep.subr.mxu0 0.0
    %4559 = vmatpush2.msra.mxu0 0.0
    %4560 = vmatprep.subr.mxu0 0.0
    %4561 = vmatpush2.msra.mxu0 0.0
    %4562 = vmatprep.subr.mxu0 0.0
    %4563 = vmatpush2.msra.mxu0 0.0
    %4564 = vmatprep.subr.mxu0 0.0
    %4565 = vmatpush2.msra.mxu0 0.0
    %4566 = vmatprep.subr.mxu0 0.0
    %4567 = vmatpush2.msra.mxu0 0.0
    %4568 = vmatprep.subr.mxu0 0.0
    %4569 = vmatpush2.msra.mxu0 0.0
    %4570 = vmatprep.subr.mxu0 0.0
    %4571 = vmatpush2.msra.mxu0 0.0
    %4572 = vmatprep.subr.mxu0 0.0
    %4573 = vmatpush2.msra.mxu0 0.0
    %4574 = vmatprep.subr.mxu0 0.0
    %4575 = vmatpush2.msra.mxu0 0.0
    %4576 = vmatprep.subr.mxu0 0.0
    %4577 = vmatpush2.msra.mxu0 0.0
    %4578 = vmatprep.subr.mxu0 0.0
    %4579 = vmatpush2.msra.mxu0 0.0
    %4580 = vmatprep.subr.mxu0 0.0
    %4581 = vmatpush2.msra.mxu0 0.0
    %4582 = vmatprep.subr.mxu0 0.0
    %4583 = vmatpush2.msra.mxu0 0.0
    %4584 = vmatprep.subr.mxu0 0.0
    %4585 = vmatpush2.msra.mxu0 0.0
    %4586 = vmatprep.subr.mxu0 0.0
    %4587 = vmatpush2.msra.mxu0 0.0
    %4588 = vmatprep.mubr.f32.mxu0 0.0
    %4589 = vmatmul.mubr.f32.gmra.mxu0 %v4309
    %v4590 = vpop.f32.mrf.mxu0
    %v4591 = vadd.f32 0.0, %v4590
    %v4592 = vpop.f32.mrf.mxu0
    %v4593 = vadd.f32 0.0, %v4592
    %4594 = vdwg.mxu0
    %4595 = vmatprep.subr.mxu0 0.0
    %4596 = vmatpush1.msra.mxu0 0.0
    %4597 = vmatprep.subr.mxu0 0.0
    %4598 = vmatpush1.msra.mxu0 0.0
    %4599 = vmatprep.subr.mxu0 0.0
    %4600 = vmatpush1.msra.mxu0 0.0
    %4601 = vmatprep.subr.mxu0 0.0
    %4602 = vmatpush1.msra.mxu0 0.0
    %4603 = vmatprep.subr.mxu0 0.0
    %4604 = vmatpush1.msra.mxu0 0.0
    %4605 = vmatprep.subr.mxu0 0.0
    %4606 = vmatpush1.msra.mxu0 0.0
    %4607 = vmatprep.subr.mxu0 0.0
    %4608 = vmatpush1.msra.mxu0 0.0
    %4609 = vmatprep.subr.mxu0 0.0
    %4610 = vmatpush1.msra.mxu0 0.0
    %4611 = vmatprep.subr.mxu0 0.0
    %4612 = vmatpush1.msra.mxu0 0.0
    %4613 = vmatprep.subr.mxu0 0.0
    %4614 = vmatpush1.msra.mxu0 0.0
    %4615 = vmatprep.subr.mxu0 0.0
    %4616 = vmatpush1.msra.mxu0 0.0
    %4617 = vmatprep.subr.mxu0 0.0
    %4618 = vmatpush1.msra.mxu0 0.0
    %4619 = vmatprep.subr.mxu0 0.0
    %4620 = vmatpush1.msra.mxu0 %v2660
    %4621 = vmatprep.subr.mxu0 0.0
    %4622 = vmatpush1.msra.mxu0 %v2651
    %4623 = vmatprep.subr.mxu0 0.0
    %4624 = vmatpush1.msra.mxu0 %v2642
    %4625 = vmatprep.subr.mxu0 0.0
    %4626 = vmatpush1.msra.mxu0 %v2633
    %4627 = vmatprep.subr.mxu0 0.0
    %4628 = vmatpush2.msra.mxu0 0.0
    %4629 = vmatprep.subr.mxu0 0.0
    %4630 = vmatpush2.msra.mxu0 0.0
    %4631 = vmatprep.subr.mxu0 0.0
    %4632 = vmatpush2.msra.mxu0 0.0
    %4633 = vmatprep.subr.mxu0 0.0
    %4634 = vmatpush2.msra.mxu0 0.0
    %4635 = vmatprep.subr.mxu0 0.0
    %4636 = vmatpush2.msra.mxu0 0.0
    %4637 = vmatprep.subr.mxu0 0.0
    %4638 = vmatpush2.msra.mxu0 0.0
    %4639 = vmatprep.subr.mxu0 0.0
    %4640 = vmatpush2.msra.mxu0 0.0
    %4641 = vmatprep.subr.mxu0 0.0
    %4642 = vmatpush2.msra.mxu0 0.0
    %4643 = vmatprep.subr.mxu0 0.0
    %4644 = vmatpush2.msra.mxu0 0.0
    %4645 = vmatprep.subr.mxu0 0.0
    %4646 = vmatpush2.msra.mxu0 0.0
    %4647 = vmatprep.subr.mxu0 0.0
    %4648 = vmatpush2.msra.mxu0 0.0
    %4649 = vmatprep.subr.mxu0 0.0
    %4650 = vmatpush2.msra.mxu0 0.0
    %4651 = vmatprep.subr.mxu0 0.0
    %4652 = vmatpush2.msra.mxu0 0.0
    %4653 = vmatprep.subr.mxu0 0.0
    %4654 = vmatpush2.msra.mxu0 0.0
    %4655 = vmatprep.subr.mxu0 0.0
    %4656 = vmatpush2.msra.mxu0 0.0
    %4657 = vmatprep.subr.mxu0 0.0
    %4658 = vmatpush2.msra.mxu0 0.0
    %4659 = vmatprep.mubr.f32.mxu0 0.0
    %4660 = vmatmul.mubr.f32.gmra.mxu0 %v4309
    %v4661 = vpop.f32.mrf.mxu0
    %v4662 = vadd.f32 0.0, %v4661
    %v4663 = vpop.f32.mrf.mxu0
    %4664 = vdwg.mxu0
    %v4665 = vlaneseq
    %v4666 = vshrl.u32 %v4665, 7
    %v4667 = vsub.s32 0, %v4666
    %v4668 = vrot.slane %v4378, %v4667
    %v4669 = vlaneseq
    %v4670 = vshrl.u32 %v4669, 7
    %v4671 = vsub.s32 0, %v4670
    %v4672 = vrot.slane %v4380, %v4671
    %v4673 = vlaneseq
    %v4674 = vshrl.u32 %v4673, 7
    %v4675 = vsub.s32 0, %v4674
    %v4676 = vrot.slane %v4449, %v4675
    %v4677 = vlaneseq
    %v4678 = vshrl.u32 %v4677, 7
    %v4679 = vsub.s32 0, %v4678
    %v4680 = vrot.slane %v4451, %v4679
    %v4681 = vlaneseq
    %v4682 = vshrl.u32 %v4681, 7
    %v4683 = vsub.s32 0, %v4682
    %v4684 = vrot.slane %v4520, %v4683
    %v4685 = vlaneseq
    %v4686 = vshrl.u32 %v4685, 7
    %v4687 = vsub.s32 0, %v4686
    %v4688 = vrot.slane %v4522, %v4687
    %v4689 = vlaneseq
    %v4690 = vshrl.u32 %v4689, 7
    %v4691 = vsub.s32 0, %v4690
    %v4692 = vrot.slane %v4591, %v4691
    %v4693 = vlaneseq
    %v4694 = vshrl.u32 %v4693, 7
    %v4695 = vsub.s32 0, %v4694
    %v4696 = vrot.slane %v4593, %v4695
    %v4697 = vlaneseq
    %v4698 = vshrl.u32 %v4697, 7
    %v4699 = vsub.s32 0, %v4698
    %v4700 = vrot.slane %v4662, %v4699
    %v4701 = vadd.f32 %v4299, %v4668
    %v4702 = vadd.f32 %v4300, %v4672
    %v4703 = vadd.f32 %v4301, %v4676
    %v4704 = vadd.f32 %v4302, %v4680
    %v4705 = vadd.f32 %v4303, %v4684
    %v4706 = vadd.f32 %v4304, %v4688
    %v4707 = vadd.f32 %v4305, %v4692
    %v4708 = vadd.f32 %v4306, %v4696
    %v4709 = vadd.f32 %v4307, %v4700
    %v4719 = vcombine.low %v4701, %v4702
    %v4720 = vcombine.low %v4703, %v4704
    %v4722 = vunpack.c.l.s4 1983009808
    %v4723 = vunpack.c.0.s8 %v4722
    %v4724 = vlaneseq
    %v4725 = vshrl.u32 %v4724, 7
    %v4726 = vsub.s32 %v4723, %v4725
    %v4727 = vrot.slane %v4719, %v4726
    %v4729 = vunpack.c.l.s4 1983009808
    %v4730 = vunpack.c.0.s8 %v4729
    %v4731 = vlaneseq
    %v4732 = vshrl.u32 %v4731, 7
    %v4733 = vsub.s32 %v4730, %v4732
    %v4734 = vrot.slane %v4720, %v4733
    %v4735 = vcombine.low %v4727, %v4734
    %v4736 = vcombine.low %v4705, %v4706
    %v4737 = vcombine.low %v4707, %v4708
    %v4739 = vunpack.c.l.s4 1983009808
    %v4740 = vunpack.c.0.s8 %v4739
    %v4741 = vlaneseq
    %v4742 = vshrl.u32 %v4741, 7
    %v4743 = vsub.s32 %v4740, %v4742
    %v4744 = vrot.slane %v4736, %v4743
    %v4746 = vunpack.c.l.s4 1983009808
    %v4747 = vunpack.c.0.s8 %v4746
    %v4748 = vlaneseq
    %v4749 = vshrl.u32 %v4748, 7
    %v4750 = vsub.s32 %v4747, %v4749
    %v4751 = vrot.slane %v4737, %v4750
    %v4752 = vcombine.low %v4744, %v4751
    %v4754 = vunpack.c.l.s4 1983009808
    %v4755 = vunpack.c.0.s8 %v4754
    %v4756 = vlaneseq
    %v4757 = vshrl.u32 %v4756, 7
    %v4758 = vsub.s32 %v4755, %v4757
    %v4759 = vrot.slane %v4709, %v4758
    %4763 = vst [vmem:[%s17] sm:$0xff] %v4735
    %4764 = vst [vmem:[%s17 + $0x8] sm:$0xff] %v4752
    %4765 = vst [vmem:[%s17 + $0x10] sm:$0x3] %v4759
    // Predicated region
    $region130: #{raw_image_decoder_forward.3} parent=1 // pred_check
      _
    $region131: #{raw_image_decoder_forward.3} parent=1 // pred_check_branch
      %4767 = sbr.rel (0) target = $region133
    $region132: #{raw_image_decoder_forward.3} parent=1 // pred_region
      _
    $region133: #{raw_image_decoder_forward.3} parent=1 // pred_fallthru
      _
    // Predicated region
    $region134: #{raw_image_decoder_forward.3} parent=1 // pred_check
      _
    $region135: #{raw_image_decoder_forward.3} parent=1 // pred_check_branch
      %4769 = sbr.rel (0) target = $region137
    $region136: #{raw_image_decoder_forward.3} parent=1 // pred_region
      _
    $region137: #{raw_image_decoder_forward.3} parent=1 // pred_fallthru
      _
    %4770 = vsyncpa [#allocation3], 1
    %4771 = vsyncpa [#allocation5], 1
    %4772 = vsyncpa [#allocation8], 1
    %4773 = vsyncpa [#allocation11], 1
    %4774 = vsyncpa [#allocation14], 1
    %4775 = vsyncpa [#allocation17], 1
    %4776 = vsyncpa [#allocation20], 1
    %4777 = vsyncpa [#allocation23], 1

// kernel: raw_image_decoder_forward.5
$region0: #{raw_image_decoder_forward.5}
  #allocation0 [shape = 'u32[]', space=smem, size = 0x4, offset = 0x4, fixed_abs, tag = 'smem constant byte address 0x4 - core index']
  #allocation1 [shape = 'u32[144,128]{1,0:T(1,128)}', space=vmem, size = 0x12000, scoped, tag = 'internal scratch']
  %s0 = inlined_call_operand.vmem [shape: bf16[2048,256], index: 0, kind: input, shape index: {}]
  %s1 = inlined_call_operand.vmem [shape: bf16[256,128], index: 1, kind: input, shape index: {}]
  %s2 = inlined_call_operand.vmem [shape: f32[1,128], index: 2, kind: input, shape index: {}]
  %s3 = inlined_call_operand.vmem [shape: bf16[2048,128], index: 3, kind: output, shape index: {}]
  %s4 = sld [smem:[#allocation0]]
  $region45: #{raw_image_decoder_forward.5} parent=0
    _
  %s6 = ssub.s32 1, %s4
  %s7 = scalar_select 0, %s6, %s4
  loop: start=0, step=1, limit=4
  $region2: #{raw_image_decoder_forward.5} parent=0 // loop_pre_header
    _
  $region3: #{raw_image_decoder_forward.5} parent=0 // loop_header
    %s9 = sphi 0, %s13
    %p10 = scmp.ge.s32.totalorder %s9, 4
    %s19 = sphi 0, %s21
    %s22 = sphi 0, %s19
    %s23 = sphi 0, %s22
    %s39 = sphi 0, %s23
    %s43 = sphi 0, %s43
    %s45 = sphi 0, %s43
    %s46 = sphi 0, %s45
    %s60 = sphi 0, %s46
    %s64 = sphi 0, %s64
    %s66 = sphi 0, %s64
    %s67 = sphi 0, %s66
    %s81 = sphi 0, %s67
    %s87 = sphi 0, %s89
    %s90 = sphi 0, %s87
    %s91 = sphi 0, %s90
    %s107 = sphi 0, %s91
  $region4: #{raw_image_decoder_forward.5} parent=0 // loop_header_branch
    %12 = sbr.rel (%p10) target = $region8
  $region5: #{raw_image_decoder_forward.5} parent=0 // loop_body
    %s14 = ssub.s32 %s9, 1
    %s15 = ssub.s32 %s9, 2
    %s16 = sadd.s32 %s9, 1
    %s17 = ssub.s32 %s9, %s16
    %p18 = scmp.eq.s32.totalorder %s17, 0
    %s20 = sadd.s32 %s19, 1
    %s21 = scalar_select %p18, %s19, %s20
    %p24 = pneg %p18
    %p25 = scmp.eq.s32.totalorder %s9, 1
    %p26 = por %p24, %p25
    %p27 = scmp.ne.s32.totalorder %s19, %s22
    %p28 = scmp.eq.s32.totalorder %s9, 0
    %p29 = por %p27, %p28
    %p30 = scmp.ne.s32.totalorder %s19, %s22
    %p31 = scmp.eq.s32.totalorder %s14, 1
    %p32 = por %p30, %p31
    %p33 = scmp.ne.s32.totalorder %s22, %s23
    %p34 = scmp.eq.s32.totalorder %s14, 0
    %p35 = por %p33, %p34
    %p36 = scmp.ne.s32.totalorder %s22, %s23
    %p37 = scmp.eq.s32.totalorder %s15, 1
    %p38 = por %p36, %p37
    %p40 = scmp.ne.s32.totalorder %s23, %s39
    %p41 = scmp.eq.s32.totalorder %s15, 0
    %p42 = por %p40, %p41
    %s44 = sadd.s32 %s43, 1
    %p47 = scmp.eq.s32.totalorder %s9, 1
    %p48 = scmp.ne.s32.totalorder %s43, %s45
    %p49 = scmp.eq.s32.totalorder %s9, 0
    %p50 = por %p48, %p49
    %p51 = scmp.ne.s32.totalorder %s43, %s45
    %p52 = scmp.eq.s32.totalorder %s14, 1
    %p53 = por %p51, %p52
    %p54 = scmp.ne.s32.totalorder %s45, %s46
    %p55 = scmp.eq.s32.totalorder %s14, 0
    %p56 = por %p54, %p55
    %p57 = scmp.ne.s32.totalorder %s45, %s46
    %p58 = scmp.eq.s32.totalorder %s15, 1
    %p59 = por %p57, %p58
    %p61 = scmp.ne.s32.totalorder %s46, %s60
    %p62 = scmp.eq.s32.totalorder %s15, 0
    %p63 = por %p61, %p62
    %s65 = sadd.s32 %s64, 1
    %p68 = scmp.eq.s32.totalorder %s9, 1
    %p69 = scmp.ne.s32.totalorder %s64, %s66
    %p70 = scmp.eq.s32.totalorder %s9, 0
    %p71 = por %p69, %p70
    %p72 = scmp.ne.s32.totalorder %s64, %s66
    %p73 = scmp.eq.s32.totalorder %s14, 1
    %p74 = por %p72, %p73
    %p75 = scmp.ne.s32.totalorder %s66, %s67
    %p76 = scmp.eq.s32.totalorder %s14, 0
    %p77 = por %p75, %p76
    %p78 = scmp.ne.s32.totalorder %s66, %s67
    %p79 = scmp.eq.s32.totalorder %s15, 1
    %p80 = por %p78, %p79
    %p82 = scmp.ne.s32.totalorder %s67, %s81
    %p83 = scmp.eq.s32.totalorder %s15, 0
    %p84 = por %p82, %p83
    %s85 = ssub.s32 %s9, %s16
    %p86 = scmp.eq.s32.totalorder %s85, 0
    %s88 = sadd.s32 %s87, 1
    %s89 = scalar_select %p86, %s87, %s88
    %p92 = pneg %p86
    %p93 = scmp.eq.s32.totalorder %s9, 1
    %p94 = por %p92, %p93
    %p95 = scmp.ne.s32.totalorder %s87, %s90
    %p96 = scmp.eq.s32.totalorder %s9, 0
    %p97 = por %p95, %p96
    %p98 = scmp.ne.s32.totalorder %s87, %s90
    %p99 = scmp.eq.s32.totalorder %s14, 1
    %p100 = por %p98, %p99
    %p101 = scmp.ne.s32.totalorder %s90, %s91
    %p102 = scmp.eq.s32.totalorder %s14, 0
    %p103 = por %p101, %p102
    %p104 = scmp.ne.s32.totalorder %s90, %s91
    %p105 = scmp.eq.s32.totalorder %s15, 1
    %p106 = por %p104, %p105
    %p108 = scmp.ne.s32.totalorder %s91, %s107
    %p109 = scmp.eq.s32.totalorder %s15, 0
    %p110 = por %p108, %p109
    %p111 = scmp.le.s32.totalorder 1, %s9
    %p112 = scmp.lt.s32.totalorder %s9, 3
    %p113 = pnand %p111, %p112
    %p114 = pneg %p113
    // Predicated region
    $region9: #{raw_image_decoder_forward.5} parent=5 // pred_check
      _
    $region10: #{raw_image_decoder_forward.5} parent=5 // pred_check_branch
      %116 = sbr.rel (%p113) target = $region12
    $region11: #{raw_image_decoder_forward.5} parent=5 // pred_region
      %s117 = ssub.s32 %s9, 1
      // Predicated region
      $region13: #{raw_image_decoder_forward.5} parent=11 // pred_check
        %p118 = pneg %p56
      $region14: #{raw_image_decoder_forward.5} parent=11 // pred_check_branch
        %120 = sbr.rel (%p118) target = $region16
      $region15: #{raw_image_decoder_forward.5} parent=11 // pred_region
        _
      $region16: #{raw_image_decoder_forward.5} parent=11 // pred_fallthru
        _
      // Predicated region
      $region17: #{raw_image_decoder_forward.5} parent=11 // pred_check
        %p121 = pneg %p77
      $region18: #{raw_image_decoder_forward.5} parent=11 // pred_check_branch
        %123 = sbr.rel (%p121) target = $region20
      $region19: #{raw_image_decoder_forward.5} parent=11 // pred_region
        _
      $region20: #{raw_image_decoder_forward.5} parent=11 // pred_fallthru
        _
    $region12: #{raw_image_decoder_forward.5} parent=5 // pred_fallthru
      _
    %p124 = scmp.lt.s32.totalorder %s9, 2
    // Predicated region
    $region21: #{raw_image_decoder_forward.5} parent=5 // pred_check
      %p125 = pneg %p124
    $region22: #{raw_image_decoder_forward.5} parent=5 // pred_check_branch
      %127 = sbr.rel (%p125) target = $region24
    $region23: #{raw_image_decoder_forward.5} parent=5 // pred_region
      // Predicated region
      $region25: #{raw_image_decoder_forward.5} parent=23 // pred_check
        %p128 = pneg %p29
      $region26: #{raw_image_decoder_forward.5} parent=23 // pred_check_branch
        %130 = sbr.rel (%p128) target = $region28
      $region27: #{raw_image_decoder_forward.5} parent=23 // pred_region
        %s131 = smul.u32 128, %s9
        %p132 = scmp.lt.s32.totalorder %s131, 255
        %s133 = scalar_select %p132, %s131, 255
        %s134 = smul.addr %s133, 2
        %s135 = smul.addr %s134, 4
        %s136 = scalar_lea.vmem %s0, %s135
        %s137 = smul.u32 128, %s9
      $region28: #{raw_image_decoder_forward.5} parent=23 // pred_fallthru
        _
    $region24: #{raw_image_decoder_forward.5} parent=5 // pred_fallthru
      _
    %p138 = scmp.le.s32.totalorder 1, %s9
    %p139 = scmp.lt.s32.totalorder %s9, 3
    %p140 = pnand %p138, %p139
    %p141 = pneg %p140
    // Predicated region
    $region29: #{raw_image_decoder_forward.5} parent=5 // pred_check
      _
    $region30: #{raw_image_decoder_forward.5} parent=5 // pred_check_branch
      %143 = sbr.rel (%p140) target = $region32
    $region31: #{raw_image_decoder_forward.5} parent=5 // pred_region
      %s144 = ssub.s32 %s9, 1
      %s145 = smul.u32 128, %s14
      %p146 = scmp.lt.s32.totalorder %s145, 255
      %s147 = scalar_select %p146, %s145, 255
      %s148 = smul.addr %s147, 2
      %s149 = smul.addr %s148, 4
      %s150 = scalar_lea.vmem %s0, %s149
      %p151 = pneg %p35
      %p152 = pneg %p32
      %p153 = pneg %p56
      %p154 = pneg %p53
      %p155 = pneg %p77
      %p156 = pneg %p74
      %p157 = pneg %p103
      %p158 = pneg %p100
      %s159 = smul.u32 128, %s14
      %p160 = scmp.lt.s32.totalorder %s159, 255
      %s161 = scalar_select %p160, %s159, 255
      %s162 = smul.addr %s161, 4
      %s163 = scalar_lea.vmem %s3, %s162
      %s164 = smul.u32 128, %s14
      %p165 = scmp.lt.s32.totalorder %s164, 255
      %s166 = scalar_select %p165, %s164, 255
      %s167 = smul.addr %s166, 2
      %s168 = smul.addr %s167, 4
      %s169 = scalar_lea.vmem %s0, %s168
      %s170 = smul.u32 128, %s14
      %s171 = smul.u32 128, %s14
      %p172 = scmp.lt.s32.totalorder %s171, 255
      %s173 = scalar_select %p172, %s171, 255
      %s174 = smul.addr %s173, 4
      %s175 = scalar_lea.vmem %s3, %s174
      %s176 = smul.u32 128, %s14
      %v178 = vld [vmem:[%s169] sm:$0xff]
      %v179 = vld [vmem:[%s169 + $0x8] sm:$0xff]
      %v180 = vld [vmem:[%s169 + $0x10] sm:$0xff]
      %v181 = vld [vmem:[%s169 + $0x18] sm:$0xff]
      %v182 = vld [vmem:[%s169 + $0x20] sm:$0xff]
      %v183 = vld [vmem:[%s169 + $0x28] sm:$0xff]
      %v184 = vld [vmem:[%s169 + $0x30] sm:$0xff]
      %v185 = vld [vmem:[%s169 + $0x38] sm:$0xff]
      %v186 = vld [vmem:[%s169 + $0x40] sm:$0xff]
      %v187 = vld [vmem:[%s169 + $0x48] sm:$0xff]
      %v188 = vld [vmem:[%s169 + $0x50] sm:$0xff]
      %v189 = vld [vmem:[%s169 + $0x58] sm:$0xff]
      %v190 = vld [vmem:[%s169 + $0x60] sm:$0xff]
      %v191 = vld [vmem:[%s169 + $0x68] sm:$0xff]
      %v192 = vld [vmem:[%s169 + $0x70] sm:$0xff]
      %v193 = vld [vmem:[%s169 + $0x78] sm:$0xff]
      %v194 = vld [vmem:[%s169 + $0x80] sm:$0xff]
      %v195 = vld [vmem:[%s169 + $0x88] sm:$0xff]
      %v196 = vld [vmem:[%s169 + $0x90] sm:$0xff]
      %v197 = vld [vmem:[%s169 + $0x98] sm:$0xff]
      %v198 = vld [vmem:[%s169 + $0xa0] sm:$0xff]
      %v199 = vld [vmem:[%s169 + $0xa8] sm:$0xff]
      %v200 = vld [vmem:[%s169 + $0xb0] sm:$0xff]
      %v201 = vld [vmem:[%s169 + $0xb8] sm:$0xff]
      %v202 = vld [vmem:[%s169 + $0xc0] sm:$0xff]
      %v203 = vld [vmem:[%s169 + $0xc8] sm:$0xff]
      %v204 = vld [vmem:[%s169 + $0xd0] sm:$0xff]
      %v205 = vld [vmem:[%s169 + $0xd8] sm:$0xff]
      %v206 = vld [vmem:[%s169 + $0xe0] sm:$0xff]
      %v207 = vld [vmem:[%s169 + $0xe8] sm:$0xff]
      %v208 = vld [vmem:[%s169 + $0xf0] sm:$0xff]
      %v209 = vld [vmem:[%s169 + $0xf8] sm:$0xff]
      %v210 = vld [vmem:[%s169 + $0x100] sm:$0xff]
      %v211 = vld [vmem:[%s169 + $0x108] sm:$0xff]
      %v212 = vld [vmem:[%s169 + $0x110] sm:$0xff]
      %v213 = vld [vmem:[%s169 + $0x118] sm:$0xff]
      %v214 = vld [vmem:[%s169 + $0x120] sm:$0xff]
      %v215 = vld [vmem:[%s169 + $0x128] sm:$0xff]
      %v216 = vld [vmem:[%s169 + $0x130] sm:$0xff]
      %v217 = vld [vmem:[%s169 + $0x138] sm:$0xff]
      %v218 = vld [vmem:[%s169 + $0x140] sm:$0xff]
      %v219 = vld [vmem:[%s169 + $0x148] sm:$0xff]
      %v220 = vld [vmem:[%s169 + $0x150] sm:$0xff]
      %v221 = vld [vmem:[%s169 + $0x158] sm:$0xff]
      %v222 = vld [vmem:[%s169 + $0x160] sm:$0xff]
      %v223 = vld [vmem:[%s169 + $0x168] sm:$0xff]
      %v224 = vld [vmem:[%s169 + $0x170] sm:$0xff]
      %v225 = vld [vmem:[%s169 + $0x178] sm:$0xff]
      %v226 = vld [vmem:[%s169 + $0x180] sm:$0xff]
      %v227 = vld [vmem:[%s169 + $0x188] sm:$0xff]
      %v228 = vld [vmem:[%s169 + $0x190] sm:$0xff]
      %v229 = vld [vmem:[%s169 + $0x198] sm:$0xff]
      %v230 = vld [vmem:[%s169 + $0x1a0] sm:$0xff]
      %v231 = vld [vmem:[%s169 + $0x1a8] sm:$0xff]
      %v232 = vld [vmem:[%s169 + $0x1b0] sm:$0xff]
      %v233 = vld [vmem:[%s169 + $0x1b8] sm:$0xff]
      %v234 = vld [vmem:[%s169 + $0x1c0] sm:$0xff]
      %v235 = vld [vmem:[%s169 + $0x1c8] sm:$0xff]
      %v236 = vld [vmem:[%s169 + $0x1d0] sm:$0xff]
      %v237 = vld [vmem:[%s169 + $0x1d8] sm:$0xff]
      %v238 = vld [vmem:[%s169 + $0x1e0] sm:$0xff]
      %v239 = vld [vmem:[%s169 + $0x1e8] sm:$0xff]
      %v240 = vld [vmem:[%s169 + $0x1f0] sm:$0xff]
      %v241 = vld [vmem:[%s169 + $0x1f8] sm:$0xff]
      %v242 = vld [vmem:[%s169 + $0x200] sm:$0xff]
      %v243 = vld [vmem:[%s169 + $0x208] sm:$0xff]
      %v244 = vld [vmem:[%s169 + $0x210] sm:$0xff]
      %v245 = vld [vmem:[%s169 + $0x218] sm:$0xff]
      %v246 = vld [vmem:[%s169 + $0x220] sm:$0xff]
      %v247 = vld [vmem:[%s169 + $0x228] sm:$0xff]
      %v248 = vld [vmem:[%s169 + $0x230] sm:$0xff]
      %v249 = vld [vmem:[%s169 + $0x238] sm:$0xff]
      %v250 = vld [vmem:[%s169 + $0x240] sm:$0xff]
      %v251 = vld [vmem:[%s169 + $0x248] sm:$0xff]
      %v252 = vld [vmem:[%s169 + $0x250] sm:$0xff]
      %v253 = vld [vmem:[%s169 + $0x258] sm:$0xff]
      %v254 = vld [vmem:[%s169 + $0x260] sm:$0xff]
      %v255 = vld [vmem:[%s169 + $0x268] sm:$0xff]
      %v256 = vld [vmem:[%s169 + $0x270] sm:$0xff]
      %v257 = vld [vmem:[%s169 + $0x278] sm:$0xff]
      %v258 = vld [vmem:[%s169 + $0x280] sm:$0xff]
      %v259 = vld [vmem:[%s169 + $0x288] sm:$0xff]
      %v260 = vld [vmem:[%s169 + $0x290] sm:$0xff]
      %v261 = vld [vmem:[%s169 + $0x298] sm:$0xff]
      %v262 = vld [vmem:[%s169 + $0x2a0] sm:$0xff]
      %v263 = vld [vmem:[%s169 + $0x2a8] sm:$0xff]
      %v264 = vld [vmem:[%s169 + $0x2b0] sm:$0xff]
      %v265 = vld [vmem:[%s169 + $0x2b8] sm:$0xff]
      %v266 = vld [vmem:[%s169 + $0x2c0] sm:$0xff]
      %v267 = vld [vmem:[%s169 + $0x2c8] sm:$0xff]
      %v268 = vld [vmem:[%s169 + $0x2d0] sm:$0xff]
      %v269 = vld [vmem:[%s169 + $0x2d8] sm:$0xff]
      %v270 = vld [vmem:[%s169 + $0x2e0] sm:$0xff]
      %v271 = vld [vmem:[%s169 + $0x2e8] sm:$0xff]
      %v272 = vld [vmem:[%s169 + $0x2f0] sm:$0xff]
      %v273 = vld [vmem:[%s169 + $0x2f8] sm:$0xff]
      %v274 = vld [vmem:[%s169 + $0x300] sm:$0xff]
      %v275 = vld [vmem:[%s169 + $0x308] sm:$0xff]
      %v276 = vld [vmem:[%s169 + $0x310] sm:$0xff]
      %v277 = vld [vmem:[%s169 + $0x318] sm:$0xff]
      %v278 = vld [vmem:[%s169 + $0x320] sm:$0xff]
      %v279 = vld [vmem:[%s169 + $0x328] sm:$0xff]
      %v280 = vld [vmem:[%s169 + $0x330] sm:$0xff]
      %v281 = vld [vmem:[%s169 + $0x338] sm:$0xff]
      %v282 = vld [vmem:[%s169 + $0x340] sm:$0xff]
      %v283 = vld [vmem:[%s169 + $0x348] sm:$0xff]
      %v284 = vld [vmem:[%s169 + $0x350] sm:$0xff]
      %v285 = vld [vmem:[%s169 + $0x358] sm:$0xff]
      %v286 = vld [vmem:[%s169 + $0x360] sm:$0xff]
      %v287 = vld [vmem:[%s169 + $0x368] sm:$0xff]
      %v288 = vld [vmem:[%s169 + $0x370] sm:$0xff]
      %v289 = vld [vmem:[%s169 + $0x378] sm:$0xff]
      %v290 = vld [vmem:[%s169 + $0x380] sm:$0xff]
      %v291 = vld [vmem:[%s169 + $0x388] sm:$0xff]
      %v292 = vld [vmem:[%s169 + $0x390] sm:$0xff]
      %v293 = vld [vmem:[%s169 + $0x398] sm:$0xff]
      %v294 = vld [vmem:[%s169 + $0x3a0] sm:$0xff]
      %v295 = vld [vmem:[%s169 + $0x3a8] sm:$0xff]
      %v296 = vld [vmem:[%s169 + $0x3b0] sm:$0xff]
      %v297 = vld [vmem:[%s169 + $0x3b8] sm:$0xff]
      %v298 = vld [vmem:[%s169 + $0x3c0] sm:$0xff]
      %v299 = vld [vmem:[%s169 + $0x3c8] sm:$0xff]
      %v300 = vld [vmem:[%s169 + $0x3d0] sm:$0xff]
      %v301 = vld [vmem:[%s169 + $0x3d8] sm:$0xff]
      %v302 = vld [vmem:[%s169 + $0x3e0] sm:$0xff]
      %v303 = vld [vmem:[%s169 + $0x3e8] sm:$0xff]
      %v304 = vld [vmem:[%s169 + $0x3f0] sm:$0xff]
      %v305 = vld [vmem:[%s169 + $0x3f8] sm:$0xff]
      %v306 = vld [vmem:[%s1] sm:$0xf]
      %v307 = vld [vmem:[%s1 + $0x4] sm:$0xf]
      %v308 = vld [vmem:[%s1 + $0x8] sm:$0xf]
      %v309 = vld [vmem:[%s1 + $0xc] sm:$0xf]
      %v310 = vld [vmem:[%s1 + $0x10] sm:$0xf]
      %v311 = vld [vmem:[%s1 + $0x14] sm:$0xf]
      %v312 = vld [vmem:[%s1 + $0x18] sm:$0xf]
      %v313 = vld [vmem:[%s1 + $0x1c] sm:$0xf]
      %v314 = vld [vmem:[%s1 + $0x20] sm:$0xf]
      %v315 = vld [vmem:[%s1 + $0x24] sm:$0xf]
      %v316 = vld [vmem:[%s1 + $0x28] sm:$0xf]
      %v317 = vld [vmem:[%s1 + $0x2c] sm:$0xf]
      %v318 = vld [vmem:[%s1 + $0x30] sm:$0xf]
      %v319 = vld [vmem:[%s1 + $0x34] sm:$0xf]
      %v320 = vld [vmem:[%s1 + $0x38] sm:$0xf]
      %v321 = vld [vmem:[%s1 + $0x3c] sm:$0xf]
      %v322 = vld [vmem:[%s1 + $0x40] sm:$0xf]
      %v323 = vld [vmem:[%s1 + $0x44] sm:$0xf]
      %v324 = vld [vmem:[%s1 + $0x48] sm:$0xf]
      %v325 = vld [vmem:[%s1 + $0x4c] sm:$0xf]
      %v326 = vld [vmem:[%s1 + $0x50] sm:$0xf]
      %v327 = vld [vmem:[%s1 + $0x54] sm:$0xf]
      %v328 = vld [vmem:[%s1 + $0x58] sm:$0xf]
      %v329 = vld [vmem:[%s1 + $0x5c] sm:$0xf]
      %v330 = vld [vmem:[%s1 + $0x60] sm:$0xf]
      %v331 = vld [vmem:[%s1 + $0x64] sm:$0xf]
      %v332 = vld [vmem:[%s1 + $0x68] sm:$0xf]
      %v333 = vld [vmem:[%s1 + $0x6c] sm:$0xf]
      %v334 = vld [vmem:[%s1 + $0x70] sm:$0xf]
      %v335 = vld [vmem:[%s1 + $0x74] sm:$0xf]
      %v336 = vld [vmem:[%s1 + $0x78] sm:$0xf]
      %v337 = vld [vmem:[%s1 + $0x7c] sm:$0xf]
      %v338 = vld [vmem:[%s2] sm:$0x1]
      %v340 = vlaneseq
      %v341 = vshrl.u32 %v340, 7
      %v342 = vsub.s32 0, %v341
      %v343 = vrot.slane %v338, %v342
      %v473 = vunpack.c.l.b16 %v178
      %v474 = vunpack.c.h.b16 %v178
      %v475 = vunpack.c.l.b16 %v179
      %v476 = vunpack.c.h.b16 %v179
      %v477 = vunpack.c.l.b16 %v180
      %v478 = vunpack.c.h.b16 %v180
      %v479 = vunpack.c.l.b16 %v181
      %v480 = vunpack.c.h.b16 %v181
      %v481 = vunpack.c.l.b16 %v182
      %v482 = vunpack.c.h.b16 %v182
      %v483 = vunpack.c.l.b16 %v183
      %v484 = vunpack.c.h.b16 %v183
      %v485 = vunpack.c.l.b16 %v184
      %v486 = vunpack.c.h.b16 %v184
      %v487 = vunpack.c.l.b16 %v185
      %v488 = vunpack.c.h.b16 %v185
      %v489 = vunpack.c.l.b16 %v186
      %v490 = vunpack.c.h.b16 %v186
      %v491 = vunpack.c.l.b16 %v187
      %v492 = vunpack.c.h.b16 %v187
      %v493 = vunpack.c.l.b16 %v188
      %v494 = vunpack.c.h.b16 %v188
      %v495 = vunpack.c.l.b16 %v189
      %v496 = vunpack.c.h.b16 %v189
      %v497 = vunpack.c.l.b16 %v190
      %v498 = vunpack.c.h.b16 %v190
      %v499 = vunpack.c.l.b16 %v191
      %v500 = vunpack.c.h.b16 %v191
      %v501 = vunpack.c.l.b16 %v192
      %v502 = vunpack.c.h.b16 %v192
      %v503 = vunpack.c.l.b16 %v193
      %v504 = vunpack.c.h.b16 %v193
      %v505 = vunpack.c.l.b16 %v194
      %v506 = vunpack.c.h.b16 %v194
      %v507 = vunpack.c.l.b16 %v195
      %v508 = vunpack.c.h.b16 %v195
      %v509 = vunpack.c.l.b16 %v196
      %v510 = vunpack.c.h.b16 %v196
      %v511 = vunpack.c.l.b16 %v197
      %v512 = vunpack.c.h.b16 %v197
      %v513 = vunpack.c.l.b16 %v198
      %v514 = vunpack.c.h.b16 %v198
      %v515 = vunpack.c.l.b16 %v199
      %v516 = vunpack.c.h.b16 %v199
      %v517 = vunpack.c.l.b16 %v200
      %v518 = vunpack.c.h.b16 %v200
      %v519 = vunpack.c.l.b16 %v201
      %v520 = vunpack.c.h.b16 %v201
      %v521 = vunpack.c.l.b16 %v202
      %v522 = vunpack.c.h.b16 %v202
      %v523 = vunpack.c.l.b16 %v203
      %v524 = vunpack.c.h.b16 %v203
      %v525 = vunpack.c.l.b16 %v204
      %v526 = vunpack.c.h.b16 %v204
      %v527 = vunpack.c.l.b16 %v205
      %v528 = vunpack.c.h.b16 %v205
      %v529 = vunpack.c.l.b16 %v206
      %v530 = vunpack.c.h.b16 %v206
      %v531 = vunpack.c.l.b16 %v207
      %v532 = vunpack.c.h.b16 %v207
      %v533 = vunpack.c.l.b16 %v208
      %v534 = vunpack.c.h.b16 %v208
      %v535 = vunpack.c.l.b16 %v209
      %v536 = vunpack.c.h.b16 %v209
      %v537 = vunpack.c.l.b16 %v210
      %v538 = vunpack.c.h.b16 %v210
      %v539 = vunpack.c.l.b16 %v211
      %v540 = vunpack.c.h.b16 %v211
      %v541 = vunpack.c.l.b16 %v212
      %v542 = vunpack.c.h.b16 %v212
      %v543 = vunpack.c.l.b16 %v213
      %v544 = vunpack.c.h.b16 %v213
      %v545 = vunpack.c.l.b16 %v214
      %v546 = vunpack.c.h.b16 %v214
      %v547 = vunpack.c.l.b16 %v215
      %v548 = vunpack.c.h.b16 %v215
      %v549 = vunpack.c.l.b16 %v216
      %v550 = vunpack.c.h.b16 %v216
      %v551 = vunpack.c.l.b16 %v217
      %v552 = vunpack.c.h.b16 %v217
      %v553 = vunpack.c.l.b16 %v218
      %v554 = vunpack.c.h.b16 %v218
      %v555 = vunpack.c.l.b16 %v219
      %v556 = vunpack.c.h.b16 %v219
      %v557 = vunpack.c.l.b16 %v220
      %v558 = vunpack.c.h.b16 %v220
      %v559 = vunpack.c.l.b16 %v221
      %v560 = vunpack.c.h.b16 %v221
      %v561 = vunpack.c.l.b16 %v222
      %v562 = vunpack.c.h.b16 %v222
      %v563 = vunpack.c.l.b16 %v223
      %v564 = vunpack.c.h.b16 %v223
      %v565 = vunpack.c.l.b16 %v224
      %v566 = vunpack.c.h.b16 %v224
      %v567 = vunpack.c.l.b16 %v225
      %v568 = vunpack.c.h.b16 %v225
      %v569 = vunpack.c.l.b16 %v226
      %v570 = vunpack.c.h.b16 %v226
      %v571 = vunpack.c.l.b16 %v227
      %v572 = vunpack.c.h.b16 %v227
      %v573 = vunpack.c.l.b16 %v228
      %v574 = vunpack.c.h.b16 %v228
      %v575 = vunpack.c.l.b16 %v229
      %v576 = vunpack.c.h.b16 %v229
      %v577 = vunpack.c.l.b16 %v230
      %v578 = vunpack.c.h.b16 %v230
      %v579 = vunpack.c.l.b16 %v231
      %v580 = vunpack.c.h.b16 %v231
      %v581 = vunpack.c.l.b16 %v232
      %v582 = vunpack.c.h.b16 %v232
      %v583 = vunpack.c.l.b16 %v233
      %v584 = vunpack.c.h.b16 %v233
      %v585 = vunpack.c.l.b16 %v234
      %v586 = vunpack.c.h.b16 %v234
      %v587 = vunpack.c.l.b16 %v235
      %v588 = vunpack.c.h.b16 %v235
      %v589 = vunpack.c.l.b16 %v236
      %v590 = vunpack.c.h.b16 %v236
      %v591 = vunpack.c.l.b16 %v237
      %v592 = vunpack.c.h.b16 %v237
      %v593 = vunpack.c.l.b16 %v238
      %v594 = vunpack.c.h.b16 %v238
      %v595 = vunpack.c.l.b16 %v239
      %v596 = vunpack.c.h.b16 %v239
      %v597 = vunpack.c.l.b16 %v240
      %v598 = vunpack.c.h.b16 %v240
      %v599 = vunpack.c.l.b16 %v241
      %v600 = vunpack.c.h.b16 %v241
      %v601 = vunpack.c.l.b16 %v242
      %v602 = vunpack.c.h.b16 %v242
      %v603 = vunpack.c.l.b16 %v243
      %v604 = vunpack.c.h.b16 %v243
      %v605 = vunpack.c.l.b16 %v244
      %v606 = vunpack.c.h.b16 %v244
      %v607 = vunpack.c.l.b16 %v245
      %v608 = vunpack.c.h.b16 %v245
      %v609 = vunpack.c.l.b16 %v246
      %v610 = vunpack.c.h.b16 %v246
      %v611 = vunpack.c.l.b16 %v247
      %v612 = vunpack.c.h.b16 %v247
      %v613 = vunpack.c.l.b16 %v248
      %v614 = vunpack.c.h.b16 %v248
      %v615 = vunpack.c.l.b16 %v249
      %v616 = vunpack.c.h.b16 %v249
      %v617 = vunpack.c.l.b16 %v250
      %v618 = vunpack.c.h.b16 %v250
      %v619 = vunpack.c.l.b16 %v251
      %v620 = vunpack.c.h.b16 %v251
      %v621 = vunpack.c.l.b16 %v252
      %v622 = vunpack.c.h.b16 %v252
      %v623 = vunpack.c.l.b16 %v253
      %v624 = vunpack.c.h.b16 %v253
      %v625 = vunpack.c.l.b16 %v254
      %v626 = vunpack.c.h.b16 %v254
      %v627 = vunpack.c.l.b16 %v255
      %v628 = vunpack.c.h.b16 %v255
      %v629 = vunpack.c.l.b16 %v256
      %v630 = vunpack.c.h.b16 %v256
      %v631 = vunpack.c.l.b16 %v257
      %v632 = vunpack.c.h.b16 %v257
      %v633 = vunpack.c.l.b16 %v258
      %v634 = vunpack.c.h.b16 %v258
      %v635 = vunpack.c.l.b16 %v259
      %v636 = vunpack.c.h.b16 %v259
      %v637 = vunpack.c.l.b16 %v260
      %v638 = vunpack.c.h.b16 %v260
      %v639 = vunpack.c.l.b16 %v261
      %v640 = vunpack.c.h.b16 %v261
      %v641 = vunpack.c.l.b16 %v262
      %v642 = vunpack.c.h.b16 %v262
      %v643 = vunpack.c.l.b16 %v263
      %v644 = vunpack.c.h.b16 %v263
      %v645 = vunpack.c.l.b16 %v264
      %v646 = vunpack.c.h.b16 %v264
      %v647 = vunpack.c.l.b16 %v265
      %v648 = vunpack.c.h.b16 %v265
      %v649 = vunpack.c.l.b16 %v266
      %v650 = vunpack.c.h.b16 %v266
      %v651 = vunpack.c.l.b16 %v267
      %v652 = vunpack.c.h.b16 %v267
      %v653 = vunpack.c.l.b16 %v268
      %v654 = vunpack.c.h.b16 %v268
      %v655 = vunpack.c.l.b16 %v269
      %v656 = vunpack.c.h.b16 %v269
      %v657 = vunpack.c.l.b16 %v270
      %v658 = vunpack.c.h.b16 %v270
      %v659 = vunpack.c.l.b16 %v271
      %v660 = vunpack.c.h.b16 %v271
      %v661 = vunpack.c.l.b16 %v272
      %v662 = vunpack.c.h.b16 %v272
      %v663 = vunpack.c.l.b16 %v273
      %v664 = vunpack.c.h.b16 %v273
      %v665 = vunpack.c.l.b16 %v274
      %v666 = vunpack.c.h.b16 %v274
      %v667 = vunpack.c.l.b16 %v275
      %v668 = vunpack.c.h.b16 %v275
      %v669 = vunpack.c.l.b16 %v276
      %v670 = vunpack.c.h.b16 %v276
      %v671 = vunpack.c.l.b16 %v277
      %v672 = vunpack.c.h.b16 %v277
      %v673 = vunpack.c.l.b16 %v278
      %v674 = vunpack.c.h.b16 %v278
      %v675 = vunpack.c.l.b16 %v279
      %v676 = vunpack.c.h.b16 %v279
      %v677 = vunpack.c.l.b16 %v280
      %v678 = vunpack.c.h.b16 %v280
      %v679 = vunpack.c.l.b16 %v281
      %v680 = vunpack.c.h.b16 %v281
      %v681 = vunpack.c.l.b16 %v282
      %v682 = vunpack.c.h.b16 %v282
      %v683 = vunpack.c.l.b16 %v283
      %v684 = vunpack.c.h.b16 %v283
      %v685 = vunpack.c.l.b16 %v284
      %v686 = vunpack.c.h.b16 %v284
      %v687 = vunpack.c.l.b16 %v285
      %v688 = vunpack.c.h.b16 %v285
      %v689 = vunpack.c.l.b16 %v286
      %v690 = vunpack.c.h.b16 %v286
      %v691 = vunpack.c.l.b16 %v287
      %v692 = vunpack.c.h.b16 %v287
      %v693 = vunpack.c.l.b16 %v288
      %v694 = vunpack.c.h.b16 %v288
      %v695 = vunpack.c.l.b16 %v289
      %v696 = vunpack.c.h.b16 %v289
      %v697 = vunpack.c.l.b16 %v290
      %v698 = vunpack.c.h.b16 %v290
      %v699 = vunpack.c.l.b16 %v291
      %v700 = vunpack.c.h.b16 %v291
      %v701 = vunpack.c.l.b16 %v292
      %v702 = vunpack.c.h.b16 %v292
      %v703 = vunpack.c.l.b16 %v293
      %v704 = vunpack.c.h.b16 %v293
      %v705 = vunpack.c.l.b16 %v294
      %v706 = vunpack.c.h.b16 %v294
      %v707 = vunpack.c.l.b16 %v295
      %v708 = vunpack.c.h.b16 %v295
      %v709 = vunpack.c.l.b16 %v296
      %v710 = vunpack.c.h.b16 %v296
      %v711 = vunpack.c.l.b16 %v297
      %v712 = vunpack.c.h.b16 %v297
      %v713 = vunpack.c.l.b16 %v298
      %v714 = vunpack.c.h.b16 %v298
      %v715 = vunpack.c.l.b16 %v299
      %v716 = vunpack.c.h.b16 %v299
      %v717 = vunpack.c.l.b16 %v300
      %v718 = vunpack.c.h.b16 %v300
      %v719 = vunpack.c.l.b16 %v301
      %v720 = vunpack.c.h.b16 %v301
      %v721 = vunpack.c.l.b16 %v302
      %v722 = vunpack.c.h.b16 %v302
      %v723 = vunpack.c.l.b16 %v303
      %v724 = vunpack.c.h.b16 %v303
      %v725 = vunpack.c.l.b16 %v304
      %v726 = vunpack.c.h.b16 %v304
      %v727 = vunpack.c.l.b16 %v305
      %v728 = vunpack.c.h.b16 %v305
      %v729 = vpack.c.b16 %v475, %v473
      %v730 = vpack.c.b16 %v476, %v474
      %v731 = vpack.c.b16 %v479, %v477
      %v732 = vpack.c.b16 %v480, %v478
      %v733 = vpack.c.b16 %v483, %v481
      %v734 = vpack.c.b16 %v484, %v482
      %v735 = vpack.c.b16 %v487, %v485
      %v736 = vpack.c.b16 %v488, %v486
      %v737 = vpack.c.b16 %v491, %v489
      %v738 = vpack.c.b16 %v492, %v490
      %v739 = vpack.c.b16 %v495, %v493
      %v740 = vpack.c.b16 %v496, %v494
      %v741 = vpack.c.b16 %v499, %v497
      %v742 = vpack.c.b16 %v500, %v498
      %v743 = vpack.c.b16 %v503, %v501
      %v744 = vpack.c.b16 %v504, %v502
      %v745 = vpack.c.b16 %v507, %v505
      %v746 = vpack.c.b16 %v508, %v506
      %v747 = vpack.c.b16 %v511, %v509
      %v748 = vpack.c.b16 %v512, %v510
      %v749 = vpack.c.b16 %v515, %v513
      %v750 = vpack.c.b16 %v516, %v514
      %v751 = vpack.c.b16 %v519, %v517
      %v752 = vpack.c.b16 %v520, %v518
      %v753 = vpack.c.b16 %v523, %v521
      %v754 = vpack.c.b16 %v524, %v522
      %v755 = vpack.c.b16 %v527, %v525
      %v756 = vpack.c.b16 %v528, %v526
      %v757 = vpack.c.b16 %v531, %v529
      %v758 = vpack.c.b16 %v532, %v530
      %v759 = vpack.c.b16 %v535, %v533
      %v760 = vpack.c.b16 %v536, %v534
      %v761 = vpack.c.b16 %v539, %v537
      %v762 = vpack.c.b16 %v540, %v538
      %v763 = vpack.c.b16 %v543, %v541
      %v764 = vpack.c.b16 %v544, %v542
      %v765 = vpack.c.b16 %v547, %v545
      %v766 = vpack.c.b16 %v548, %v546
      %v767 = vpack.c.b16 %v551, %v549
      %v768 = vpack.c.b16 %v552, %v550
      %v769 = vpack.c.b16 %v555, %v553
      %v770 = vpack.c.b16 %v556, %v554
      %v771 = vpack.c.b16 %v559, %v557
      %v772 = vpack.c.b16 %v560, %v558
      %v773 = vpack.c.b16 %v563, %v561
      %v774 = vpack.c.b16 %v564, %v562
      %v775 = vpack.c.b16 %v567, %v565
      %v776 = vpack.c.b16 %v568, %v566
      %v777 = vpack.c.b16 %v571, %v569
      %v778 = vpack.c.b16 %v572, %v570
      %v779 = vpack.c.b16 %v575, %v573
      %v780 = vpack.c.b16 %v576, %v574
      %v781 = vpack.c.b16 %v579, %v577
      %v782 = vpack.c.b16 %v580, %v578
      %v783 = vpack.c.b16 %v583, %v581
      %v784 = vpack.c.b16 %v584, %v582
      %v785 = vpack.c.b16 %v587, %v585
      %v786 = vpack.c.b16 %v588, %v586
      %v787 = vpack.c.b16 %v591, %v589
      %v788 = vpack.c.b16 %v592, %v590
      %v789 = vpack.c.b16 %v595, %v593
      %v790 = vpack.c.b16 %v596, %v594
      %v791 = vpack.c.b16 %v599, %v597
      %v792 = vpack.c.b16 %v600, %v598
      %v793 = vpack.c.b16 %v603, %v601
      %v794 = vpack.c.b16 %v604, %v602
      %v795 = vpack.c.b16 %v607, %v605
      %v796 = vpack.c.b16 %v608, %v606
      %v797 = vpack.c.b16 %v611, %v609
      %v798 = vpack.c.b16 %v612, %v610
      %v799 = vpack.c.b16 %v615, %v613
      %v800 = vpack.c.b16 %v616, %v614
      %v801 = vpack.c.b16 %v619, %v617
      %v802 = vpack.c.b16 %v620, %v618
      %v803 = vpack.c.b16 %v623, %v621
      %v804 = vpack.c.b16 %v624, %v622
      %v805 = vpack.c.b16 %v627, %v625
      %v806 = vpack.c.b16 %v628, %v626
      %v807 = vpack.c.b16 %v631, %v629
      %v808 = vpack.c.b16 %v632, %v630
      %v809 = vpack.c.b16 %v635, %v633
      %v810 = vpack.c.b16 %v636, %v634
      %v811 = vpack.c.b16 %v639, %v637
      %v812 = vpack.c.b16 %v640, %v638
      %v813 = vpack.c.b16 %v643, %v641
      %v814 = vpack.c.b16 %v644, %v642
      %v815 = vpack.c.b16 %v647, %v645
      %v816 = vpack.c.b16 %v648, %v646
      %v817 = vpack.c.b16 %v651, %v649
      %v818 = vpack.c.b16 %v652, %v650
      %v819 = vpack.c.b16 %v655, %v653
      %v820 = vpack.c.b16 %v656, %v654
      %v821 = vpack.c.b16 %v659, %v657
      %v822 = vpack.c.b16 %v660, %v658
      %v823 = vpack.c.b16 %v663, %v661
      %v824 = vpack.c.b16 %v664, %v662
      %v825 = vpack.c.b16 %v667, %v665
      %v826 = vpack.c.b16 %v668, %v666
      %v827 = vpack.c.b16 %v671, %v669
      %v828 = vpack.c.b16 %v672, %v670
      %v829 = vpack.c.b16 %v675, %v673
      %v830 = vpack.c.b16 %v676, %v674
      %v831 = vpack.c.b16 %v679, %v677
      %v832 = vpack.c.b16 %v680, %v678
      %v833 = vpack.c.b16 %v683, %v681
      %v834 = vpack.c.b16 %v684, %v682
      %v835 = vpack.c.b16 %v687, %v685
      %v836 = vpack.c.b16 %v688, %v686
      %v837 = vpack.c.b16 %v691, %v689
      %v838 = vpack.c.b16 %v692, %v690
      %v839 = vpack.c.b16 %v695, %v693
      %v840 = vpack.c.b16 %v696, %v694
      %v841 = vpack.c.b16 %v699, %v697
      %v842 = vpack.c.b16 %v700, %v698
      %v843 = vpack.c.b16 %v703, %v701
      %v844 = vpack.c.b16 %v704, %v702
      %v845 = vpack.c.b16 %v707, %v705
      %v846 = vpack.c.b16 %v708, %v706
      %v847 = vpack.c.b16 %v711, %v709
      %v848 = vpack.c.b16 %v712, %v710
      %v849 = vpack.c.b16 %v715, %v713
      %v850 = vpack.c.b16 %v716, %v714
      %v851 = vpack.c.b16 %v719, %v717
      %v852 = vpack.c.b16 %v720, %v718
      %v853 = vpack.c.b16 %v723, %v721
      %v854 = vpack.c.b16 %v724, %v722
      %v855 = vpack.c.b16 %v727, %v725
      %v856 = vpack.c.b16 %v728, %v726
      %v1017 = vunpack.c.l.b16 %v306
      %v1018 = vunpack.c.l.b16 %v307
      %v1019 = vunpack.c.l.b16 %v308
      %v1020 = vunpack.c.l.b16 %v309
      %v1021 = vunpack.c.l.b16 %v310
      %v1022 = vunpack.c.l.b16 %v311
      %v1023 = vunpack.c.l.b16 %v312
      %v1024 = vunpack.c.l.b16 %v313
      %v1025 = vunpack.c.l.b16 %v314
      %v1026 = vunpack.c.l.b16 %v315
      %v1027 = vunpack.c.l.b16 %v316
      %v1028 = vunpack.c.l.b16 %v317
      %v1029 = vunpack.c.l.b16 %v318
      %v1030 = vunpack.c.l.b16 %v319
      %v1031 = vunpack.c.l.b16 %v320
      %v1032 = vunpack.c.l.b16 %v321
      %v1033 = vunpack.c.l.b16 %v322
      %v1034 = vunpack.c.l.b16 %v323
      %v1035 = vunpack.c.l.b16 %v324
      %v1036 = vunpack.c.l.b16 %v325
      %v1037 = vunpack.c.l.b16 %v326
      %v1038 = vunpack.c.l.b16 %v327
      %v1039 = vunpack.c.l.b16 %v328
      %v1040 = vunpack.c.l.b16 %v329
      %v1041 = vunpack.c.l.b16 %v330
      %v1042 = vunpack.c.l.b16 %v331
      %v1043 = vunpack.c.l.b16 %v332
      %v1044 = vunpack.c.l.b16 %v333
      %v1045 = vunpack.c.l.b16 %v334
      %v1046 = vunpack.c.l.b16 %v335
      %v1047 = vunpack.c.l.b16 %v336
      %v1048 = vunpack.c.l.b16 %v337
      %v1049 = vpack.c.b16 %v1018, %v1017
      %v1050 = vpack.c.b16 %v1020, %v1019
      %v1051 = vpack.c.b16 %v1022, %v1021
      %v1052 = vpack.c.b16 %v1024, %v1023
      %v1053 = vpack.c.b16 %v1026, %v1025
      %v1054 = vpack.c.b16 %v1028, %v1027
      %v1055 = vpack.c.b16 %v1030, %v1029
      %v1056 = vpack.c.b16 %v1032, %v1031
      %v1057 = vpack.c.b16 %v1034, %v1033
      %v1058 = vpack.c.b16 %v1036, %v1035
      %v1059 = vpack.c.b16 %v1038, %v1037
      %v1060 = vpack.c.b16 %v1040, %v1039
      %v1061 = vpack.c.b16 %v1042, %v1041
      %v1062 = vpack.c.b16 %v1044, %v1043
      %v1063 = vpack.c.b16 %v1046, %v1045
      %v1064 = vpack.c.b16 %v1048, %v1047
      %1081 = vmatprep.subr.bf16.mxu0 0
      %1082 = vmatpush1.bf16.msra.mxu0 %v1056
      %1083 = vmatprep.subr.bf16.mxu0 0
      %1084 = vmatpush1.bf16.msra.mxu0 %v1055
      %1085 = vmatprep.subr.bf16.mxu0 0
      %1086 = vmatpush1.bf16.msra.mxu0 %v1054
      %1087 = vmatprep.subr.bf16.mxu0 0
      %1088 = vmatpush1.bf16.msra.mxu0 %v1053
      %1089 = vmatprep.subr.bf16.mxu0 0
      %1090 = vmatpush1.bf16.msra.mxu0 %v1052
      %1091 = vmatprep.subr.bf16.mxu0 0
      %1092 = vmatpush1.bf16.msra.mxu0 %v1051
      %1093 = vmatprep.subr.bf16.mxu0 0
      %1094 = vmatpush1.bf16.msra.mxu0 %v1050
      %1095 = vmatprep.subr.bf16.mxu0 0
      %1096 = vmatpush1.bf16.msra.mxu0 %v1049
      %1097 = vmatprep.subr.bf16.mxu0 0
      %1098 = vmatpush2.bf16.msra.mxu0 %v1064
      %1099 = vmatprep.subr.bf16.mxu0 0
      %1100 = vmatpush2.bf16.msra.mxu0 %v1063
      %1101 = vmatprep.subr.bf16.mxu0 0
      %1102 = vmatpush2.bf16.msra.mxu0 %v1062
      %1103 = vmatprep.subr.bf16.mxu0 0
      %1104 = vmatpush2.bf16.msra.mxu0 %v1061
      %1105 = vmatprep.subr.bf16.mxu0 0
      %1106 = vmatpush2.bf16.msra.mxu0 %v1060
      %1107 = vmatprep.subr.bf16.mxu0 0
      %1108 = vmatpush2.bf16.msra.mxu0 %v1059
      %1109 = vmatprep.subr.bf16.mxu0 0
      %1110 = vmatpush2.bf16.msra.mxu0 %v1058
      %1111 = vmatprep.subr.bf16.mxu0 0
      %1112 = vmatpush2.bf16.msra.mxu0 %v1057
      %1113 = vmatprep.mubr.bf16.mxu0 %v730
      %1114 = vmatmul.mubr.bf16.gmra.mxu0 %v729
      %v1115 = vpop.f32.mrf.mxu0
      %v1116 = vadd.f32 %v343, %v1115
      %v1117 = vpop.f32.mrf.mxu0
      %v1118 = vpop.f32.mrf.mxu0
      %v1119 = vadd.f32 %v343, %v1118
      %v1120 = vpop.f32.mrf.mxu0
      %1121 = vmatprep.mubr.bf16.mxu0 %v732
      %1122 = vmatmul.mubr.bf16.gmra.mxu0 %v731
      %v1123 = vpop.f32.mrf.mxu0
      %v1124 = vadd.f32 %v343, %v1123
      %v1125 = vpop.f32.mrf.mxu0
      %v1126 = vpop.f32.mrf.mxu0
      %v1127 = vadd.f32 %v343, %v1126
      %v1128 = vpop.f32.mrf.mxu0
      %1129 = vmatprep.mubr.bf16.mxu0 %v734
      %1130 = vmatmul.mubr.bf16.gmra.mxu0 %v733
      %v1131 = vpop.f32.mrf.mxu0
      %v1132 = vadd.f32 %v343, %v1131
      %v1133 = vpop.f32.mrf.mxu0
      %v1134 = vpop.f32.mrf.mxu0
      %v1135 = vadd.f32 %v343, %v1134
      %v1136 = vpop.f32.mrf.mxu0
      %1137 = vmatprep.mubr.bf16.mxu0 %v736
      %1138 = vmatmul.mubr.bf16.gmra.mxu0 %v735
      %v1139 = vpop.f32.mrf.mxu0
      %v1140 = vadd.f32 %v343, %v1139
      %v1141 = vpop.f32.mrf.mxu0
      %v1142 = vpop.f32.mrf.mxu0
      %v1143 = vadd.f32 %v343, %v1142
      %v1144 = vpop.f32.mrf.mxu0
      %1145 = vmatprep.mubr.bf16.mxu0 %v738
      %1146 = vmatmul.mubr.bf16.gmra.mxu0 %v737
      %v1147 = vpop.f32.mrf.mxu0
      %v1148 = vadd.f32 %v343, %v1147
      %v1149 = vpop.f32.mrf.mxu0
      %v1150 = vpop.f32.mrf.mxu0
      %v1151 = vadd.f32 %v343, %v1150
      %v1152 = vpop.f32.mrf.mxu0
      %1153 = vmatprep.mubr.bf16.mxu0 %v740
      %1154 = vmatmul.mubr.bf16.gmra.mxu0 %v739
      %v1155 = vpop.f32.mrf.mxu0
      %v1156 = vadd.f32 %v343, %v1155
      %v1157 = vpop.f32.mrf.mxu0
      %v1158 = vpop.f32.mrf.mxu0
      %v1159 = vadd.f32 %v343, %v1158
      %v1160 = vpop.f32.mrf.mxu0
      %1161 = vmatprep.mubr.bf16.mxu0 %v742
      %1162 = vmatmul.mubr.bf16.gmra.mxu0 %v741
      %v1163 = vpop.f32.mrf.mxu0
      %v1164 = vadd.f32 %v343, %v1163
      %v1165 = vpop.f32.mrf.mxu0
      %v1166 = vpop.f32.mrf.mxu0
      %v1167 = vadd.f32 %v343, %v1166
      %v1168 = vpop.f32.mrf.mxu0
      %1169 = vmatprep.mubr.bf16.mxu0 %v744
      %1170 = vmatmul.mubr.bf16.gmra.mxu0 %v743
      %v1171 = vpop.f32.mrf.mxu0
      %v1172 = vadd.f32 %v343, %v1171
      %v1173 = vpop.f32.mrf.mxu0
      %v1174 = vpop.f32.mrf.mxu0
      %v1175 = vadd.f32 %v343, %v1174
      %v1176 = vpop.f32.mrf.mxu0
      %1177 = vmatprep.mubr.bf16.mxu0 %v746
      %1178 = vmatmul.mubr.bf16.gmra.mxu0 %v745
      %v1179 = vpop.f32.mrf.mxu0
      %v1180 = vadd.f32 %v343, %v1179
      %v1181 = vpop.f32.mrf.mxu0
      %v1182 = vpop.f32.mrf.mxu0
      %v1183 = vadd.f32 %v343, %v1182
      %v1184 = vpop.f32.mrf.mxu0
      %1185 = vmatprep.mubr.bf16.mxu0 %v748
      %1186 = vmatmul.mubr.bf16.gmra.mxu0 %v747
      %v1187 = vpop.f32.mrf.mxu0
      %v1188 = vadd.f32 %v343, %v1187
      %v1189 = vpop.f32.mrf.mxu0
      %v1190 = vpop.f32.mrf.mxu0
      %v1191 = vadd.f32 %v343, %v1190
      %v1192 = vpop.f32.mrf.mxu0
      %1193 = vmatprep.mubr.bf16.mxu0 %v750
      %1194 = vmatmul.mubr.bf16.gmra.mxu0 %v749
      %v1195 = vpop.f32.mrf.mxu0
      %v1196 = vadd.f32 %v343, %v1195
      %v1197 = vpop.f32.mrf.mxu0
      %v1198 = vpop.f32.mrf.mxu0
      %v1199 = vadd.f32 %v343, %v1198
      %v1200 = vpop.f32.mrf.mxu0
      %1201 = vmatprep.mubr.bf16.mxu0 %v752
      %1202 = vmatmul.mubr.bf16.gmra.mxu0 %v751
      %v1203 = vpop.f32.mrf.mxu0
      %v1204 = vadd.f32 %v343, %v1203
      %v1205 = vpop.f32.mrf.mxu0
      %v1206 = vpop.f32.mrf.mxu0
      %v1207 = vadd.f32 %v343, %v1206
      %v1208 = vpop.f32.mrf.mxu0
      %1209 = vmatprep.mubr.bf16.mxu0 %v754
      %1210 = vmatmul.mubr.bf16.gmra.mxu0 %v753
      %v1211 = vpop.f32.mrf.mxu0
      %v1212 = vadd.f32 %v343, %v1211
      %v1213 = vpop.f32.mrf.mxu0
      %v1214 = vpop.f32.mrf.mxu0
      %v1215 = vadd.f32 %v343, %v1214
      %v1216 = vpop.f32.mrf.mxu0
      %1217 = vmatprep.mubr.bf16.mxu0 %v756
      %1218 = vmatmul.mubr.bf16.gmra.mxu0 %v755
      %v1219 = vpop.f32.mrf.mxu0
      %v1220 = vadd.f32 %v343, %v1219
      %v1221 = vpop.f32.mrf.mxu0
      %v1222 = vpop.f32.mrf.mxu0
      %v1223 = vadd.f32 %v343, %v1222
      %v1224 = vpop.f32.mrf.mxu0
      %1225 = vmatprep.mubr.bf16.mxu0 %v758
      %1226 = vmatmul.mubr.bf16.gmra.mxu0 %v757
      %v1227 = vpop.f32.mrf.mxu0
      %v1228 = vadd.f32 %v343, %v1227
      %v1229 = vpop.f32.mrf.mxu0
      %v1230 = vpop.f32.mrf.mxu0
      %v1231 = vadd.f32 %v343, %v1230
      %v1232 = vpop.f32.mrf.mxu0
      %1233 = vmatprep.mubr.bf16.mxu0 %v760
      %1234 = vmatmul.mubr.bf16.gmra.mxu0 %v759
      %v1235 = vpop.f32.mrf.mxu0
      %v1236 = vadd.f32 %v343, %v1235
      %v1237 = vpop.f32.mrf.mxu0
      %v1238 = vpop.f32.mrf.mxu0
      %v1239 = vadd.f32 %v343, %v1238
      %v1240 = vpop.f32.mrf.mxu0
      %1241 = vmatprep.mubr.bf16.mxu0 %v762
      %1242 = vmatmul.mubr.bf16.gmra.mxu0 %v761
      %v1243 = vpop.f32.mrf.mxu0
      %v1244 = vadd.f32 %v343, %v1243
      %v1245 = vpop.f32.mrf.mxu0
      %v1246 = vpop.f32.mrf.mxu0
      %v1247 = vadd.f32 %v343, %v1246
      %v1248 = vpop.f32.mrf.mxu0
      %1249 = vmatprep.mubr.bf16.mxu0 %v764
      %1250 = vmatmul.mubr.bf16.gmra.mxu0 %v763
      %v1251 = vpop.f32.mrf.mxu0
      %v1252 = vadd.f32 %v343, %v1251
      %v1253 = vpop.f32.mrf.mxu0
      %v1254 = vpop.f32.mrf.mxu0
      %v1255 = vadd.f32 %v343, %v1254
      %v1256 = vpop.f32.mrf.mxu0
      %1257 = vmatprep.mubr.bf16.mxu0 %v766
      %1258 = vmatmul.mubr.bf16.gmra.mxu0 %v765
      %v1259 = vpop.f32.mrf.mxu0
      %v1260 = vadd.f32 %v343, %v1259
      %v1261 = vpop.f32.mrf.mxu0
      %v1262 = vpop.f32.mrf.mxu0
      %v1263 = vadd.f32 %v343, %v1262
      %v1264 = vpop.f32.mrf.mxu0
      %1265 = vmatprep.mubr.bf16.mxu0 %v768
      %1266 = vmatmul.mubr.bf16.gmra.mxu0 %v767
      %v1267 = vpop.f32.mrf.mxu0
      %v1268 = vadd.f32 %v343, %v1267
      %v1269 = vpop.f32.mrf.mxu0
      %v1270 = vpop.f32.mrf.mxu0
      %v1271 = vadd.f32 %v343, %v1270
      %v1272 = vpop.f32.mrf.mxu0
      %1273 = vmatprep.mubr.bf16.mxu0 %v770
      %1274 = vmatmul.mubr.bf16.gmra.mxu0 %v769
      %v1275 = vpop.f32.mrf.mxu0
      %v1276 = vadd.f32 %v343, %v1275
      %v1277 = vpop.f32.mrf.mxu0
      %v1278 = vpop.f32.mrf.mxu0
      %v1279 = vadd.f32 %v343, %v1278
      %v1280 = vpop.f32.mrf.mxu0
      %1281 = vmatprep.mubr.bf16.mxu0 %v772
      %1282 = vmatmul.mubr.bf16.gmra.mxu0 %v771
      %v1283 = vpop.f32.mrf.mxu0
      %v1284 = vadd.f32 %v343, %v1283
      %v1285 = vpop.f32.mrf.mxu0
      %v1286 = vpop.f32.mrf.mxu0
      %v1287 = vadd.f32 %v343, %v1286
      %v1288 = vpop.f32.mrf.mxu0
      %1289 = vmatprep.mubr.bf16.mxu0 %v774
      %1290 = vmatmul.mubr.bf16.gmra.mxu0 %v773
      %v1291 = vpop.f32.mrf.mxu0
      %v1292 = vadd.f32 %v343, %v1291
      %v1293 = vpop.f32.mrf.mxu0
      %v1294 = vpop.f32.mrf.mxu0
      %v1295 = vadd.f32 %v343, %v1294
      %v1296 = vpop.f32.mrf.mxu0
      %1297 = vmatprep.mubr.bf16.mxu0 %v776
      %1298 = vmatmul.mubr.bf16.gmra.mxu0 %v775
      %v1299 = vpop.f32.mrf.mxu0
      %v1300 = vadd.f32 %v343, %v1299
      %v1301 = vpop.f32.mrf.mxu0
      %v1302 = vpop.f32.mrf.mxu0
      %v1303 = vadd.f32 %v343, %v1302
      %v1304 = vpop.f32.mrf.mxu0
      %1305 = vmatprep.mubr.bf16.mxu0 %v778
      %1306 = vmatmul.mubr.bf16.gmra.mxu0 %v777
      %v1307 = vpop.f32.mrf.mxu0
      %v1308 = vadd.f32 %v343, %v1307
      %v1309 = vpop.f32.mrf.mxu0
      %v1310 = vpop.f32.mrf.mxu0
      %v1311 = vadd.f32 %v343, %v1310
      %v1312 = vpop.f32.mrf.mxu0
      %1313 = vmatprep.mubr.bf16.mxu0 %v780
      %1314 = vmatmul.mubr.bf16.gmra.mxu0 %v779
      %v1315 = vpop.f32.mrf.mxu0
      %v1316 = vadd.f32 %v343, %v1315
      %v1317 = vpop.f32.mrf.mxu0
      %v1318 = vpop.f32.mrf.mxu0
      %v1319 = vadd.f32 %v343, %v1318
      %v1320 = vpop.f32.mrf.mxu0
      %1321 = vmatprep.mubr.bf16.mxu0 %v782
      %1322 = vmatmul.mubr.bf16.gmra.mxu0 %v781
      %v1323 = vpop.f32.mrf.mxu0
      %v1324 = vadd.f32 %v343, %v1323
      %v1325 = vpop.f32.mrf.mxu0
      %v1326 = vpop.f32.mrf.mxu0
      %v1327 = vadd.f32 %v343, %v1326
      %v1328 = vpop.f32.mrf.mxu0
      %1329 = vmatprep.mubr.bf16.mxu0 %v784
      %1330 = vmatmul.mubr.bf16.gmra.mxu0 %v783
      %v1331 = vpop.f32.mrf.mxu0
      %v1332 = vadd.f32 %v343, %v1331
      %v1333 = vpop.f32.mrf.mxu0
      %v1334 = vpop.f32.mrf.mxu0
      %v1335 = vadd.f32 %v343, %v1334
      %v1336 = vpop.f32.mrf.mxu0
      %1337 = vmatprep.mubr.bf16.mxu0 %v786
      %1338 = vmatmul.mubr.bf16.gmra.mxu0 %v785
      %v1339 = vpop.f32.mrf.mxu0
      %v1340 = vadd.f32 %v343, %v1339
      %v1341 = vpop.f32.mrf.mxu0
      %v1342 = vpop.f32.mrf.mxu0
      %v1343 = vadd.f32 %v343, %v1342
      %v1344 = vpop.f32.mrf.mxu0
      %1345 = vmatprep.mubr.bf16.mxu0 %v788
      %1346 = vmatmul.mubr.bf16.gmra.mxu0 %v787
      %v1347 = vpop.f32.mrf.mxu0
      %v1348 = vadd.f32 %v343, %v1347
      %v1349 = vpop.f32.mrf.mxu0
      %v1350 = vpop.f32.mrf.mxu0
      %v1351 = vadd.f32 %v343, %v1350
      %v1352 = vpop.f32.mrf.mxu0
      %1353 = vmatprep.mubr.bf16.mxu0 %v790
      %1354 = vmatmul.mubr.bf16.gmra.mxu0 %v789
      %v1355 = vpop.f32.mrf.mxu0
      %v1356 = vadd.f32 %v343, %v1355
      %v1357 = vpop.f32.mrf.mxu0
      %v1358 = vpop.f32.mrf.mxu0
      %v1359 = vadd.f32 %v343, %v1358
      %v1360 = vpop.f32.mrf.mxu0
      %1361 = vmatprep.mubr.bf16.mxu0 %v792
      %1362 = vmatmul.mubr.bf16.gmra.mxu0 %v791
      %v1363 = vpop.f32.mrf.mxu0
      %v1364 = vadd.f32 %v343, %v1363
      %v1365 = vpop.f32.mrf.mxu0
      %v1366 = vpop.f32.mrf.mxu0
      %v1367 = vadd.f32 %v343, %v1366
      %v1368 = vpop.f32.mrf.mxu0
      %1369 = vmatprep.mubr.bf16.mxu0 %v794
      %1370 = vmatmul.mubr.bf16.gmra.mxu0 %v793
      %v1371 = vpop.f32.mrf.mxu0
      %v1372 = vadd.f32 %v343, %v1371
      %v1373 = vpop.f32.mrf.mxu0
      %v1374 = vpop.f32.mrf.mxu0
      %v1375 = vadd.f32 %v343, %v1374
      %v1376 = vpop.f32.mrf.mxu0
      %1377 = vmatprep.mubr.bf16.mxu0 %v796
      %1378 = vmatmul.mubr.bf16.gmra.mxu0 %v795
      %v1379 = vpop.f32.mrf.mxu0
      %v1380 = vadd.f32 %v343, %v1379
      %v1381 = vpop.f32.mrf.mxu0
      %v1382 = vpop.f32.mrf.mxu0
      %v1383 = vadd.f32 %v343, %v1382
      %v1384 = vpop.f32.mrf.mxu0
      %1385 = vmatprep.mubr.bf16.mxu0 %v798
      %1386 = vmatmul.mubr.bf16.gmra.mxu0 %v797
      %v1387 = vpop.f32.mrf.mxu0
      %v1388 = vadd.f32 %v343, %v1387
      %v1389 = vpop.f32.mrf.mxu0
      %v1390 = vpop.f32.mrf.mxu0
      %v1391 = vadd.f32 %v343, %v1390
      %v1392 = vpop.f32.mrf.mxu0
      %1393 = vmatprep.mubr.bf16.mxu0 %v800
      %1394 = vmatmul.mubr.bf16.gmra.mxu0 %v799
      %v1395 = vpop.f32.mrf.mxu0
      %v1396 = vadd.f32 %v343, %v1395
      %v1397 = vpop.f32.mrf.mxu0
      %v1398 = vpop.f32.mrf.mxu0
      %v1399 = vadd.f32 %v343, %v1398
      %v1400 = vpop.f32.mrf.mxu0
      %1401 = vmatprep.mubr.bf16.mxu0 %v802
      %1402 = vmatmul.mubr.bf16.gmra.mxu0 %v801
      %v1403 = vpop.f32.mrf.mxu0
      %v1404 = vadd.f32 %v343, %v1403
      %v1405 = vpop.f32.mrf.mxu0
      %v1406 = vpop.f32.mrf.mxu0
      %v1407 = vadd.f32 %v343, %v1406
      %v1408 = vpop.f32.mrf.mxu0
      %1409 = vmatprep.mubr.bf16.mxu0 %v804
      %1410 = vmatmul.mubr.bf16.gmra.mxu0 %v803
      %v1411 = vpop.f32.mrf.mxu0
      %v1412 = vadd.f32 %v343, %v1411
      %v1413 = vpop.f32.mrf.mxu0
      %v1414 = vpop.f32.mrf.mxu0
      %v1415 = vadd.f32 %v343, %v1414
      %v1416 = vpop.f32.mrf.mxu0
      %1417 = vmatprep.mubr.bf16.mxu0 %v806
      %1418 = vmatmul.mubr.bf16.gmra.mxu0 %v805
      %v1419 = vpop.f32.mrf.mxu0
      %v1420 = vadd.f32 %v343, %v1419
      %v1421 = vpop.f32.mrf.mxu0
      %v1422 = vpop.f32.mrf.mxu0
      %v1423 = vadd.f32 %v343, %v1422
      %v1424 = vpop.f32.mrf.mxu0
      %1425 = vmatprep.mubr.bf16.mxu0 %v808
      %1426 = vmatmul.mubr.bf16.gmra.mxu0 %v807
      %v1427 = vpop.f32.mrf.mxu0
      %v1428 = vadd.f32 %v343, %v1427
      %v1429 = vpop.f32.mrf.mxu0
      %v1430 = vpop.f32.mrf.mxu0
      %v1431 = vadd.f32 %v343, %v1430
      %v1432 = vpop.f32.mrf.mxu0
      %1433 = vmatprep.mubr.bf16.mxu0 %v810
      %1434 = vmatmul.mubr.bf16.gmra.mxu0 %v809
      %v1435 = vpop.f32.mrf.mxu0
      %v1436 = vadd.f32 %v343, %v1435
      %v1437 = vpop.f32.mrf.mxu0
      %v1438 = vpop.f32.mrf.mxu0
      %v1439 = vadd.f32 %v343, %v1438
      %v1440 = vpop.f32.mrf.mxu0
      %1441 = vmatprep.mubr.bf16.mxu0 %v812
      %1442 = vmatmul.mubr.bf16.gmra.mxu0 %v811
      %v1443 = vpop.f32.mrf.mxu0
      %v1444 = vadd.f32 %v343, %v1443
      %v1445 = vpop.f32.mrf.mxu0
      %v1446 = vpop.f32.mrf.mxu0
      %v1447 = vadd.f32 %v343, %v1446
      %v1448 = vpop.f32.mrf.mxu0
      %1449 = vmatprep.mubr.bf16.mxu0 %v814
      %1450 = vmatmul.mubr.bf16.gmra.mxu0 %v813
      %v1451 = vpop.f32.mrf.mxu0
      %v1452 = vadd.f32 %v343, %v1451
      %v1453 = vpop.f32.mrf.mxu0
      %v1454 = vpop.f32.mrf.mxu0
      %v1455 = vadd.f32 %v343, %v1454
      %v1456 = vpop.f32.mrf.mxu0
      %1457 = vmatprep.mubr.bf16.mxu0 %v816
      %1458 = vmatmul.mubr.bf16.gmra.mxu0 %v815
      %v1459 = vpop.f32.mrf.mxu0
      %v1460 = vadd.f32 %v343, %v1459
      %v1461 = vpop.f32.mrf.mxu0
      %v1462 = vpop.f32.mrf.mxu0
      %v1463 = vadd.f32 %v343, %v1462
      %v1464 = vpop.f32.mrf.mxu0
      %1465 = vmatprep.mubr.bf16.mxu0 %v818
      %1466 = vmatmul.mubr.bf16.gmra.mxu0 %v817
      %v1467 = vpop.f32.mrf.mxu0
      %v1468 = vadd.f32 %v343, %v1467
      %v1469 = vpop.f32.mrf.mxu0
      %v1470 = vpop.f32.mrf.mxu0
      %v1471 = vadd.f32 %v343, %v1470
      %v1472 = vpop.f32.mrf.mxu0
      %1473 = vmatprep.mubr.bf16.mxu0 %v820
      %1474 = vmatmul.mubr.bf16.gmra.mxu0 %v819
      %v1475 = vpop.f32.mrf.mxu0
      %v1476 = vadd.f32 %v343, %v1475
      %v1477 = vpop.f32.mrf.mxu0
      %v1478 = vpop.f32.mrf.mxu0
      %v1479 = vadd.f32 %v343, %v1478
      %v1480 = vpop.f32.mrf.mxu0
      %1481 = vmatprep.mubr.bf16.mxu0 %v822
      %1482 = vmatmul.mubr.bf16.gmra.mxu0 %v821
      %v1483 = vpop.f32.mrf.mxu0
      %v1484 = vadd.f32 %v343, %v1483
      %v1485 = vpop.f32.mrf.mxu0
      %v1486 = vpop.f32.mrf.mxu0
      %v1487 = vadd.f32 %v343, %v1486
      %v1488 = vpop.f32.mrf.mxu0
      %1489 = vmatprep.mubr.bf16.mxu0 %v824
      %1490 = vmatmul.mubr.bf16.gmra.mxu0 %v823
      %v1491 = vpop.f32.mrf.mxu0
      %v1492 = vadd.f32 %v343, %v1491
      %v1493 = vpop.f32.mrf.mxu0
      %v1494 = vpop.f32.mrf.mxu0
      %v1495 = vadd.f32 %v343, %v1494
      %v1496 = vpop.f32.mrf.mxu0
      %1497 = vmatprep.mubr.bf16.mxu0 %v826
      %1498 = vmatmul.mubr.bf16.gmra.mxu0 %v825
      %v1499 = vpop.f32.mrf.mxu0
      %v1500 = vadd.f32 %v343, %v1499
      %v1501 = vpop.f32.mrf.mxu0
      %v1502 = vpop.f32.mrf.mxu0
      %v1503 = vadd.f32 %v343, %v1502
      %v1504 = vpop.f32.mrf.mxu0
      %1505 = vmatprep.mubr.bf16.mxu0 %v828
      %1506 = vmatmul.mubr.bf16.gmra.mxu0 %v827
      %v1507 = vpop.f32.mrf.mxu0
      %v1508 = vadd.f32 %v343, %v1507
      %v1509 = vpop.f32.mrf.mxu0
      %v1510 = vpop.f32.mrf.mxu0
      %v1511 = vadd.f32 %v343, %v1510
      %v1512 = vpop.f32.mrf.mxu0
      %1513 = vmatprep.mubr.bf16.mxu0 %v830
      %1514 = vmatmul.mubr.bf16.gmra.mxu0 %v829
      %v1515 = vpop.f32.mrf.mxu0
      %v1516 = vadd.f32 %v343, %v1515
      %v1517 = vpop.f32.mrf.mxu0
      %v1518 = vpop.f32.mrf.mxu0
      %v1519 = vadd.f32 %v343, %v1518
      %v1520 = vpop.f32.mrf.mxu0
      %1521 = vmatprep.mubr.bf16.mxu0 %v832
      %1522 = vmatmul.mubr.bf16.gmra.mxu0 %v831
      %v1523 = vpop.f32.mrf.mxu0
      %v1524 = vadd.f32 %v343, %v1523
      %v1525 = vpop.f32.mrf.mxu0
      %v1526 = vpop.f32.mrf.mxu0
      %v1527 = vadd.f32 %v343, %v1526
      %v1528 = vpop.f32.mrf.mxu0
      %1529 = vmatprep.mubr.bf16.mxu0 %v834
      %1530 = vmatmul.mubr.bf16.gmra.mxu0 %v833
      %v1531 = vpop.f32.mrf.mxu0
      %v1532 = vadd.f32 %v343, %v1531
      %v1533 = vpop.f32.mrf.mxu0
      %v1534 = vpop.f32.mrf.mxu0
      %v1535 = vadd.f32 %v343, %v1534
      %v1536 = vpop.f32.mrf.mxu0
      %1537 = vmatprep.mubr.bf16.mxu0 %v836
      %1538 = vmatmul.mubr.bf16.gmra.mxu0 %v835
      %v1539 = vpop.f32.mrf.mxu0
      %v1540 = vadd.f32 %v343, %v1539
      %v1541 = vpop.f32.mrf.mxu0
      %v1542 = vpop.f32.mrf.mxu0
      %v1543 = vadd.f32 %v343, %v1542
      %v1544 = vpop.f32.mrf.mxu0
      %1545 = vmatprep.mubr.bf16.mxu0 %v838
      %1546 = vmatmul.mubr.bf16.gmra.mxu0 %v837
      %v1547 = vpop.f32.mrf.mxu0
      %v1548 = vadd.f32 %v343, %v1547
      %v1549 = vpop.f32.mrf.mxu0
      %v1550 = vpop.f32.mrf.mxu0
      %v1551 = vadd.f32 %v343, %v1550
      %v1552 = vpop.f32.mrf.mxu0
      %1553 = vmatprep.mubr.bf16.mxu0 %v840
      %1554 = vmatmul.mubr.bf16.gmra.mxu0 %v839
      %v1555 = vpop.f32.mrf.mxu0
      %v1556 = vadd.f32 %v343, %v1555
      %v1557 = vpop.f32.mrf.mxu0
      %v1558 = vpop.f32.mrf.mxu0
      %v1559 = vadd.f32 %v343, %v1558
      %v1560 = vpop.f32.mrf.mxu0
      %1561 = vmatprep.mubr.bf16.mxu0 %v842
      %1562 = vmatmul.mubr.bf16.gmra.mxu0 %v841
      %v1563 = vpop.f32.mrf.mxu0
      %v1564 = vadd.f32 %v343, %v1563
      %v1565 = vpop.f32.mrf.mxu0
      %v1566 = vpop.f32.mrf.mxu0
      %v1567 = vadd.f32 %v343, %v1566
      %v1568 = vpop.f32.mrf.mxu0
      %1569 = vmatprep.mubr.bf16.mxu0 %v844
      %1570 = vmatmul.mubr.bf16.gmra.mxu0 %v843
      %v1571 = vpop.f32.mrf.mxu0
      %v1572 = vadd.f32 %v343, %v1571
      %v1573 = vpop.f32.mrf.mxu0
      %v1574 = vpop.f32.mrf.mxu0
      %v1575 = vadd.f32 %v343, %v1574
      %v1576 = vpop.f32.mrf.mxu0
      %1577 = vmatprep.mubr.bf16.mxu0 %v846
      %1578 = vmatmul.mubr.bf16.gmra.mxu0 %v845
      %v1579 = vpop.f32.mrf.mxu0
      %v1580 = vadd.f32 %v343, %v1579
      %v1581 = vpop.f32.mrf.mxu0
      %v1582 = vpop.f32.mrf.mxu0
      %v1583 = vadd.f32 %v343, %v1582
      %v1584 = vpop.f32.mrf.mxu0
      %1585 = vmatprep.mubr.bf16.mxu0 %v848
      %1586 = vmatmul.mubr.bf16.gmra.mxu0 %v847
      %v1587 = vpop.f32.mrf.mxu0
      %v1588 = vadd.f32 %v343, %v1587
      %v1589 = vpop.f32.mrf.mxu0
      %v1590 = vpop.f32.mrf.mxu0
      %v1591 = vadd.f32 %v343, %v1590
      %v1592 = vpop.f32.mrf.mxu0
      %1593 = vmatprep.mubr.bf16.mxu0 %v850
      %1594 = vmatmul.mubr.bf16.gmra.mxu0 %v849
      %v1595 = vpop.f32.mrf.mxu0
      %v1596 = vadd.f32 %v343, %v1595
      %v1597 = vpop.f32.mrf.mxu0
      %v1598 = vpop.f32.mrf.mxu0
      %v1599 = vadd.f32 %v343, %v1598
      %v1600 = vpop.f32.mrf.mxu0
      %1601 = vmatprep.mubr.bf16.mxu0 %v852
      %1602 = vmatmul.mubr.bf16.gmra.mxu0 %v851
      %v1603 = vpop.f32.mrf.mxu0
      %v1604 = vadd.f32 %v343, %v1603
      %v1605 = vpop.f32.mrf.mxu0
      %v1606 = vpop.f32.mrf.mxu0
      %v1607 = vadd.f32 %v343, %v1606
      %v1608 = vpop.f32.mrf.mxu0
      %1609 = vmatprep.mubr.bf16.mxu0 %v854
      %1610 = vmatmul.mubr.bf16.gmra.mxu0 %v853
      %v1611 = vpop.f32.mrf.mxu0
      %v1612 = vadd.f32 %v343, %v1611
      %v1613 = vpop.f32.mrf.mxu0
      %v1614 = vpop.f32.mrf.mxu0
      %v1615 = vadd.f32 %v343, %v1614
      %v1616 = vpop.f32.mrf.mxu0
      %1617 = vmatprep.mubr.bf16.mxu0 %v856
      %1618 = vmatmul.mubr.bf16.gmra.mxu0 %v855
      %v1619 = vpop.f32.mrf.mxu0
      %v1620 = vadd.f32 %v343, %v1619
      %v1621 = vpop.f32.mrf.mxu0
      %v1622 = vpop.f32.mrf.mxu0
      %v1623 = vadd.f32 %v343, %v1622
      %v1624 = vpop.f32.mrf.mxu0
      %1625 = vdwg.mxu0
      %v1626 = vsub.f32 0.0, %v1116
      %v1627 = vsub.f32 0.0, %v1119
      %v1628 = vsub.f32 0.0, %v1124
      %v1629 = vsub.f32 0.0, %v1127
      %v1630 = vsub.f32 0.0, %v1132
      %v1631 = vsub.f32 0.0, %v1135
      %v1632 = vsub.f32 0.0, %v1140
      %v1633 = vsub.f32 0.0, %v1143
      %v1634 = vsub.f32 0.0, %v1148
      %v1635 = vsub.f32 0.0, %v1151
      %v1636 = vsub.f32 0.0, %v1156
      %v1637 = vsub.f32 0.0, %v1159
      %v1638 = vsub.f32 0.0, %v1164
      %v1639 = vsub.f32 0.0, %v1167
      %v1640 = vsub.f32 0.0, %v1172
      %v1641 = vsub.f32 0.0, %v1175
      %v1642 = vsub.f32 0.0, %v1180
      %v1643 = vsub.f32 0.0, %v1183
      %v1644 = vsub.f32 0.0, %v1188
      %v1645 = vsub.f32 0.0, %v1191
      %v1646 = vsub.f32 0.0, %v1196
      %v1647 = vsub.f32 0.0, %v1199
      %v1648 = vsub.f32 0.0, %v1204
      %v1649 = vsub.f32 0.0, %v1207
      %v1650 = vsub.f32 0.0, %v1212
      %v1651 = vsub.f32 0.0, %v1215
      %v1652 = vsub.f32 0.0, %v1220
      %v1653 = vsub.f32 0.0, %v1223
      %v1654 = vsub.f32 0.0, %v1228
      %v1655 = vsub.f32 0.0, %v1231
      %v1656 = vsub.f32 0.0, %v1236
      %v1657 = vsub.f32 0.0, %v1239
      %v1658 = vsub.f32 0.0, %v1244
      %v1659 = vsub.f32 0.0, %v1247
      %v1660 = vsub.f32 0.0, %v1252
      %v1661 = vsub.f32 0.0, %v1255
      %v1662 = vsub.f32 0.0, %v1260
      %v1663 = vsub.f32 0.0, %v1263
      %v1664 = vsub.f32 0.0, %v1268
      %v1665 = vsub.f32 0.0, %v1271
      %v1666 = vsub.f32 0.0, %v1276
      %v1667 = vsub.f32 0.0, %v1279
      %v1668 = vsub.f32 0.0, %v1284
      %v1669 = vsub.f32 0.0, %v1287
      %v1670 = vsub.f32 0.0, %v1292
      %v1671 = vsub.f32 0.0, %v1295
      %v1672 = vsub.f32 0.0, %v1300
      %v1673 = vsub.f32 0.0, %v1303
      %v1674 = vsub.f32 0.0, %v1308
      %v1675 = vsub.f32 0.0, %v1311
      %v1676 = vsub.f32 0.0, %v1316
      %v1677 = vsub.f32 0.0, %v1319
      %v1678 = vsub.f32 0.0, %v1324
      %v1679 = vsub.f32 0.0, %v1327
      %v1680 = vsub.f32 0.0, %v1332
      %v1681 = vsub.f32 0.0, %v1335
      %v1682 = vsub.f32 0.0, %v1340
      %v1683 = vsub.f32 0.0, %v1343
      %v1684 = vsub.f32 0.0, %v1348
      %v1685 = vsub.f32 0.0, %v1351
      %v1686 = vsub.f32 0.0, %v1356
      %v1687 = vsub.f32 0.0, %v1359
      %v1688 = vsub.f32 0.0, %v1364
      %v1689 = vsub.f32 0.0, %v1367
      %v1690 = vsub.f32 0.0, %v1372
      %v1691 = vsub.f32 0.0, %v1375
      %v1692 = vsub.f32 0.0, %v1380
      %v1693 = vsub.f32 0.0, %v1383
      %v1694 = vsub.f32 0.0, %v1388
      %v1695 = vsub.f32 0.0, %v1391
      %v1696 = vsub.f32 0.0, %v1396
      %v1697 = vsub.f32 0.0, %v1399
      %v1698 = vsub.f32 0.0, %v1404
      %v1699 = vsub.f32 0.0, %v1407
      %v1700 = vsub.f32 0.0, %v1412
      %v1701 = vsub.f32 0.0, %v1415
      %v1702 = vsub.f32 0.0, %v1420
      %v1703 = vsub.f32 0.0, %v1423
      %v1704 = vsub.f32 0.0, %v1428
      %v1705 = vsub.f32 0.0, %v1431
      %v1706 = vsub.f32 0.0, %v1436
      %v1707 = vsub.f32 0.0, %v1439
      %v1708 = vsub.f32 0.0, %v1444
      %v1709 = vsub.f32 0.0, %v1447
      %v1710 = vsub.f32 0.0, %v1452
      %v1711 = vsub.f32 0.0, %v1455
      %v1712 = vsub.f32 0.0, %v1460
      %v1713 = vsub.f32 0.0, %v1463
      %v1714 = vsub.f32 0.0, %v1468
      %v1715 = vsub.f32 0.0, %v1471
      %v1716 = vsub.f32 0.0, %v1476
      %v1717 = vsub.f32 0.0, %v1479
      %v1718 = vsub.f32 0.0, %v1484
      %v1719 = vsub.f32 0.0, %v1487
      %v1720 = vsub.f32 0.0, %v1492
      %v1721 = vsub.f32 0.0, %v1495
      %v1722 = vsub.f32 0.0, %v1500
      %v1723 = vsub.f32 0.0, %v1503
      %v1724 = vsub.f32 0.0, %v1508
      %v1725 = vsub.f32 0.0, %v1511
      %v1726 = vsub.f32 0.0, %v1516
      %v1727 = vsub.f32 0.0, %v1519
      %v1728 = vsub.f32 0.0, %v1524
      %v1729 = vsub.f32 0.0, %v1527
      %v1730 = vsub.f32 0.0, %v1532
      %v1731 = vsub.f32 0.0, %v1535
      %v1732 = vsub.f32 0.0, %v1540
      %v1733 = vsub.f32 0.0, %v1543
      %v1734 = vsub.f32 0.0, %v1548
      %v1735 = vsub.f32 0.0, %v1551
      %v1736 = vsub.f32 0.0, %v1556
      %v1737 = vsub.f32 0.0, %v1559
      %v1738 = vsub.f32 0.0, %v1564
      %v1739 = vsub.f32 0.0, %v1567
      %v1740 = vsub.f32 0.0, %v1572
      %v1741 = vsub.f32 0.0, %v1575
      %v1742 = vsub.f32 0.0, %v1580
      %v1743 = vsub.f32 0.0, %v1583
      %v1744 = vsub.f32 0.0, %v1588
      %v1745 = vsub.f32 0.0, %v1591
      %v1746 = vsub.f32 0.0, %v1596
      %v1747 = vsub.f32 0.0, %v1599
      %v1748 = vsub.f32 0.0, %v1604
      %v1749 = vsub.f32 0.0, %v1607
      %v1750 = vsub.f32 0.0, %v1612
      %v1751 = vsub.f32 0.0, %v1615
      %v1752 = vsub.f32 0.0, %v1620
      %v1753 = vsub.f32 0.0, %v1623
      %v1754 = vmul.f32 %v1626, 1.442695
      %v1755 = vpow.pop %v1754
      %v1756 = vmul.f32 %v1627, 1.442695
      %v1757 = vpow.pop %v1756
      %v1758 = vmul.f32 %v1628, 1.442695
      %v1759 = vpow.pop %v1758
      %v1760 = vmul.f32 %v1629, 1.442695
      %v1761 = vpow.pop %v1760
      %v1762 = vmul.f32 %v1630, 1.442695
      %v1763 = vpow.pop %v1762
      %v1764 = vmul.f32 %v1631, 1.442695
      %v1765 = vpow.pop %v1764
      %v1766 = vmul.f32 %v1632, 1.442695
      %v1767 = vpow.pop %v1766
      %v1768 = vmul.f32 %v1633, 1.442695
      %v1769 = vpow.pop %v1768
      %v1770 = vmul.f32 %v1634, 1.442695
      %v1771 = vpow.pop %v1770
      %v1772 = vmul.f32 %v1635, 1.442695
      %v1773 = vpow.pop %v1772
      %v1774 = vmul.f32 %v1636, 1.442695
      %v1775 = vpow.pop %v1774
      %v1776 = vmul.f32 %v1637, 1.442695
      %v1777 = vpow.pop %v1776
      %v1778 = vmul.f32 %v1638, 1.442695
      %v1779 = vpow.pop %v1778
      %v1780 = vmul.f32 %v1639, 1.442695
      %v1781 = vpow.pop %v1780
      %v1782 = vmul.f32 %v1640, 1.442695
      %v1783 = vpow.pop %v1782
      %v1784 = vmul.f32 %v1641, 1.442695
      %v1785 = vpow.pop %v1784
      %v1786 = vmul.f32 %v1642, 1.442695
      %v1787 = vpow.pop %v1786
      %v1788 = vmul.f32 %v1643, 1.442695
      %v1789 = vpow.pop %v1788
      %v1790 = vmul.f32 %v1644, 1.442695
      %v1791 = vpow.pop %v1790
      %v1792 = vmul.f32 %v1645, 1.442695
      %v1793 = vpow.pop %v1792
      %v1794 = vmul.f32 %v1646, 1.442695
      %v1795 = vpow.pop %v1794
      %v1796 = vmul.f32 %v1647, 1.442695
      %v1797 = vpow.pop %v1796
      %v1798 = vmul.f32 %v1648, 1.442695
      %v1799 = vpow.pop %v1798
      %v1800 = vmul.f32 %v1649, 1.442695
      %v1801 = vpow.pop %v1800
      %v1802 = vmul.f32 %v1650, 1.442695
      %v1803 = vpow.pop %v1802
      %v1804 = vmul.f32 %v1651, 1.442695
      %v1805 = vpow.pop %v1804
      %v1806 = vmul.f32 %v1652, 1.442695
      %v1807 = vpow.pop %v1806
      %v1808 = vmul.f32 %v1653, 1.442695
      %v1809 = vpow.pop %v1808
      %v1810 = vmul.f32 %v1654, 1.442695
      %v1811 = vpow.pop %v1810
      %v1812 = vmul.f32 %v1655, 1.442695
      %v1813 = vpow.pop %v1812
      %v1814 = vmul.f32 %v1656, 1.442695
      %v1815 = vpow.pop %v1814
      %v1816 = vmul.f32 %v1657, 1.442695
      %v1817 = vpow.pop %v1816
      %v1818 = vmul.f32 %v1658, 1.442695
      %v1819 = vpow.pop %v1818
      %v1820 = vmul.f32 %v1659, 1.442695
      %v1821 = vpow.pop %v1820
      %v1822 = vmul.f32 %v1660, 1.442695
      %v1823 = vpow.pop %v1822
      %v1824 = vmul.f32 %v1661, 1.442695
      %v1825 = vpow.pop %v1824
      %v1826 = vmul.f32 %v1662, 1.442695
      %v1827 = vpow.pop %v1826
      %v1828 = vmul.f32 %v1663, 1.442695
      %v1829 = vpow.pop %v1828
      %v1830 = vmul.f32 %v1664, 1.442695
      %v1831 = vpow.pop %v1830
      %v1832 = vmul.f32 %v1665, 1.442695
      %v1833 = vpow.pop %v1832
      %v1834 = vmul.f32 %v1666, 1.442695
      %v1835 = vpow.pop %v1834
      %v1836 = vmul.f32 %v1667, 1.442695
      %v1837 = vpow.pop %v1836
      %v1838 = vmul.f32 %v1668, 1.442695
      %v1839 = vpow.pop %v1838
      %v1840 = vmul.f32 %v1669, 1.442695
      %v1841 = vpow.pop %v1840
      %v1842 = vmul.f32 %v1670, 1.442695
      %v1843 = vpow.pop %v1842
      %v1844 = vmul.f32 %v1671, 1.442695
      %v1845 = vpow.pop %v1844
      %v1846 = vmul.f32 %v1672, 1.442695
      %v1847 = vpow.pop %v1846
      %v1848 = vmul.f32 %v1673, 1.442695
      %v1849 = vpow.pop %v1848
      %v1850 = vmul.f32 %v1674, 1.442695
      %v1851 = vpow.pop %v1850
      %v1852 = vmul.f32 %v1675, 1.442695
      %v1853 = vpow.pop %v1852
      %v1854 = vmul.f32 %v1676, 1.442695
      %v1855 = vpow.pop %v1854
      %v1856 = vmul.f32 %v1677, 1.442695
      %v1857 = vpow.pop %v1856
      %v1858 = vmul.f32 %v1678, 1.442695
      %v1859 = vpow.pop %v1858
      %v1860 = vmul.f32 %v1679, 1.442695
      %v1861 = vpow.pop %v1860
      %v1862 = vmul.f32 %v1680, 1.442695
      %v1863 = vpow.pop %v1862
      %v1864 = vmul.f32 %v1681, 1.442695
      %v1865 = vpow.pop %v1864
      %v1866 = vmul.f32 %v1682, 1.442695
      %v1867 = vpow.pop %v1866
      %v1868 = vmul.f32 %v1683, 1.442695
      %v1869 = vpow.pop %v1868
      %v1870 = vmul.f32 %v1684, 1.442695
      %v1871 = vpow.pop %v1870
      %v1872 = vmul.f32 %v1685, 1.442695
      %v1873 = vpow.pop %v1872
      %v1874 = vmul.f32 %v1686, 1.442695
      %v1875 = vpow.pop %v1874
      %v1876 = vmul.f32 %v1687, 1.442695
      %v1877 = vpow.pop %v1876
      %v1878 = vmul.f32 %v1688, 1.442695
      %v1879 = vpow.pop %v1878
      %v1880 = vmul.f32 %v1689, 1.442695
      %v1881 = vpow.pop %v1880
      %v1882 = vmul.f32 %v1690, 1.442695
      %v1883 = vpow.pop %v1882
      %v1884 = vmul.f32 %v1691, 1.442695
      %v1885 = vpow.pop %v1884
      %v1886 = vmul.f32 %v1692, 1.442695
      %v1887 = vpow.pop %v1886
      %v1888 = vmul.f32 %v1693, 1.442695
      %v1889 = vpow.pop %v1888
      %v1890 = vmul.f32 %v1694, 1.442695
      %v1891 = vpow.pop %v1890
      %v1892 = vmul.f32 %v1695, 1.442695
      %v1893 = vpow.pop %v1892
      %v1894 = vmul.f32 %v1696, 1.442695
      %v1895 = vpow.pop %v1894
      %v1896 = vmul.f32 %v1697, 1.442695
      %v1897 = vpow.pop %v1896
      %v1898 = vmul.f32 %v1698, 1.442695
      %v1899 = vpow.pop %v1898
      %v1900 = vmul.f32 %v1699, 1.442695
      %v1901 = vpow.pop %v1900
      %v1902 = vmul.f32 %v1700, 1.442695
      %v1903 = vpow.pop %v1902
      %v1904 = vmul.f32 %v1701, 1.442695
      %v1905 = vpow.pop %v1904
      %v1906 = vmul.f32 %v1702, 1.442695
      %v1907 = vpow.pop %v1906
      %v1908 = vmul.f32 %v1703, 1.442695
      %v1909 = vpow.pop %v1908
      %v1910 = vmul.f32 %v1704, 1.442695
      %v1911 = vpow.pop %v1910
      %v1912 = vmul.f32 %v1705, 1.442695
      %v1913 = vpow.pop %v1912
      %v1914 = vmul.f32 %v1706, 1.442695
      %v1915 = vpow.pop %v1914
      %v1916 = vmul.f32 %v1707, 1.442695
      %v1917 = vpow.pop %v1916
      %v1918 = vmul.f32 %v1708, 1.442695
      %v1919 = vpow.pop %v1918
      %v1920 = vmul.f32 %v1709, 1.442695
      %v1921 = vpow.pop %v1920
      %v1922 = vmul.f32 %v1710, 1.442695
      %v1923 = vpow.pop %v1922
      %v1924 = vmul.f32 %v1711, 1.442695
      %v1925 = vpow.pop %v1924
      %v1926 = vmul.f32 %v1712, 1.442695
      %v1927 = vpow.pop %v1926
      %v1928 = vmul.f32 %v1713, 1.442695
      %v1929 = vpow.pop %v1928
      %v1930 = vmul.f32 %v1714, 1.442695
      %v1931 = vpow.pop %v1930
      %v1932 = vmul.f32 %v1715, 1.442695
      %v1933 = vpow.pop %v1932
      %v1934 = vmul.f32 %v1716, 1.442695
      %v1935 = vpow.pop %v1934
      %v1936 = vmul.f32 %v1717, 1.442695
      %v1937 = vpow.pop %v1936
      %v1938 = vmul.f32 %v1718, 1.442695
      %v1939 = vpow.pop %v1938
      %v1940 = vmul.f32 %v1719, 1.442695
      %v1941 = vpow.pop %v1940
      %v1942 = vmul.f32 %v1720, 1.442695
      %v1943 = vpow.pop %v1942
      %v1944 = vmul.f32 %v1721, 1.442695
      %v1945 = vpow.pop %v1944
      %v1946 = vmul.f32 %v1722, 1.442695
      %v1947 = vpow.pop %v1946
      %v1948 = vmul.f32 %v1723, 1.442695
      %v1949 = vpow.pop %v1948
      %v1950 = vmul.f32 %v1724, 1.442695
      %v1951 = vpow.pop %v1950
      %v1952 = vmul.f32 %v1725, 1.442695
      %v1953 = vpow.pop %v1952
      %v1954 = vmul.f32 %v1726, 1.442695
      %v1955 = vpow.pop %v1954
      %v1956 = vmul.f32 %v1727, 1.442695
      %v1957 = vpow.pop %v1956
      %v1958 = vmul.f32 %v1728, 1.442695
      %v1959 = vpow.pop %v1958
      %v1960 = vmul.f32 %v1729, 1.442695
      %v1961 = vpow.pop %v1960
      %v1962 = vmul.f32 %v1730, 1.442695
      %v1963 = vpow.pop %v1962
      %v1964 = vmul.f32 %v1731, 1.442695
      %v1965 = vpow.pop %v1964
      %v1966 = vmul.f32 %v1732, 1.442695
      %v1967 = vpow.pop %v1966
      %v1968 = vmul.f32 %v1733, 1.442695
      %v1969 = vpow.pop %v1968
      %v1970 = vmul.f32 %v1734, 1.442695
      %v1971 = vpow.pop %v1970
      %v1972 = vmul.f32 %v1735, 1.442695
      %v1973 = vpow.pop %v1972
      %v1974 = vmul.f32 %v1736, 1.442695
      %v1975 = vpow.pop %v1974
      %v1976 = vmul.f32 %v1737, 1.442695
      %v1977 = vpow.pop %v1976
      %v1978 = vmul.f32 %v1738, 1.442695
      %v1979 = vpow.pop %v1978
      %v1980 = vmul.f32 %v1739, 1.442695
      %v1981 = vpow.pop %v1980
      %v1982 = vmul.f32 %v1740, 1.442695
      %v1983 = vpow.pop %v1982
      %v1984 = vmul.f32 %v1741, 1.442695
      %v1985 = vpow.pop %v1984
      %v1986 = vmul.f32 %v1742, 1.442695
      %v1987 = vpow.pop %v1986
      %v1988 = vmul.f32 %v1743, 1.442695
      %v1989 = vpow.pop %v1988
      %v1990 = vmul.f32 %v1744, 1.442695
      %v1991 = vpow.pop %v1990
      %v1992 = vmul.f32 %v1745, 1.442695
      %v1993 = vpow.pop %v1992
      %v1994 = vmul.f32 %v1746, 1.442695
      %v1995 = vpow.pop %v1994
      %v1996 = vmul.f32 %v1747, 1.442695
      %v1997 = vpow.pop %v1996
      %v1998 = vmul.f32 %v1748, 1.442695
      %v1999 = vpow.pop %v1998
      %v2000 = vmul.f32 %v1749, 1.442695
      %v2001 = vpow.pop %v2000
      %v2002 = vmul.f32 %v1750, 1.442695
      %v2003 = vpow.pop %v2002
      %v2004 = vmul.f32 %v1751, 1.442695
      %v2005 = vpow.pop %v2004
      %v2006 = vmul.f32 %v1752, 1.442695
      %v2007 = vpow.pop %v2006
      %v2008 = vmul.f32 %v1753, 1.442695
      %v2009 = vpow.pop %v2008
      %v2010 = vadd.f32 %v1755, 1.0
      %v2011 = vadd.f32 %v1757, 1.0
      %v2012 = vadd.f32 %v1759, 1.0
      %v2013 = vadd.f32 %v1761, 1.0
      %v2014 = vadd.f32 %v1763, 1.0
      %v2015 = vadd.f32 %v1765, 1.0
      %v2016 = vadd.f32 %v1767, 1.0
      %v2017 = vadd.f32 %v1769, 1.0
      %v2018 = vadd.f32 %v1771, 1.0
      %v2019 = vadd.f32 %v1773, 1.0
      %v2020 = vadd.f32 %v1775, 1.0
      %v2021 = vadd.f32 %v1777, 1.0
      %v2022 = vadd.f32 %v1779, 1.0
      %v2023 = vadd.f32 %v1781, 1.0
      %v2024 = vadd.f32 %v1783, 1.0
      %v2025 = vadd.f32 %v1785, 1.0
      %v2026 = vadd.f32 %v1787, 1.0
      %v2027 = vadd.f32 %v1789, 1.0
      %v2028 = vadd.f32 %v1791, 1.0
      %v2029 = vadd.f32 %v1793, 1.0
      %v2030 = vadd.f32 %v1795, 1.0
      %v2031 = vadd.f32 %v1797, 1.0
      %v2032 = vadd.f32 %v1799, 1.0
      %v2033 = vadd.f32 %v1801, 1.0
      %v2034 = vadd.f32 %v1803, 1.0
      %v2035 = vadd.f32 %v1805, 1.0
      %v2036 = vadd.f32 %v1807, 1.0
      %v2037 = vadd.f32 %v1809, 1.0
      %v2038 = vadd.f32 %v1811, 1.0
      %v2039 = vadd.f32 %v1813, 1.0
      %v2040 = vadd.f32 %v1815, 1.0
      %v2041 = vadd.f32 %v1817, 1.0
      %v2042 = vadd.f32 %v1819, 1.0
      %v2043 = vadd.f32 %v1821, 1.0
      %v2044 = vadd.f32 %v1823, 1.0
      %v2045 = vadd.f32 %v1825, 1.0
      %v2046 = vadd.f32 %v1827, 1.0
      %v2047 = vadd.f32 %v1829, 1.0
      %v2048 = vadd.f32 %v1831, 1.0
      %v2049 = vadd.f32 %v1833, 1.0
      %v2050 = vadd.f32 %v1835, 1.0
      %v2051 = vadd.f32 %v1837, 1.0
      %v2052 = vadd.f32 %v1839, 1.0
      %v2053 = vadd.f32 %v1841, 1.0
      %v2054 = vadd.f32 %v1843, 1.0
      %v2055 = vadd.f32 %v1845, 1.0
      %v2056 = vadd.f32 %v1847, 1.0
      %v2057 = vadd.f32 %v1849, 1.0
      %v2058 = vadd.f32 %v1851, 1.0
      %v2059 = vadd.f32 %v1853, 1.0
      %v2060 = vadd.f32 %v1855, 1.0
      %v2061 = vadd.f32 %v1857, 1.0
      %v2062 = vadd.f32 %v1859, 1.0
      %v2063 = vadd.f32 %v1861, 1.0
      %v2064 = vadd.f32 %v1863, 1.0
      %v2065 = vadd.f32 %v1865, 1.0
      %v2066 = vadd.f32 %v1867, 1.0
      %v2067 = vadd.f32 %v1869, 1.0
      %v2068 = vadd.f32 %v1871, 1.0
      %v2069 = vadd.f32 %v1873, 1.0
      %v2070 = vadd.f32 %v1875, 1.0
      %v2071 = vadd.f32 %v1877, 1.0
      %v2072 = vadd.f32 %v1879, 1.0
      %v2073 = vadd.f32 %v1881, 1.0
      %v2074 = vadd.f32 %v1883, 1.0
      %v2075 = vadd.f32 %v1885, 1.0
      %v2076 = vadd.f32 %v1887, 1.0
      %v2077 = vadd.f32 %v1889, 1.0
      %v2078 = vadd.f32 %v1891, 1.0
      %v2079 = vadd.f32 %v1893, 1.0
      %v2080 = vadd.f32 %v1895, 1.0
      %v2081 = vadd.f32 %v1897, 1.0
      %v2082 = vadd.f32 %v1899, 1.0
      %v2083 = vadd.f32 %v1901, 1.0
      %v2084 = vadd.f32 %v1903, 1.0
      %v2085 = vadd.f32 %v1905, 1.0
      %v2086 = vadd.f32 %v1907, 1.0
      %v2087 = vadd.f32 %v1909, 1.0
      %v2088 = vadd.f32 %v1911, 1.0
      %v2089 = vadd.f32 %v1913, 1.0
      %v2090 = vadd.f32 %v1915, 1.0
      %v2091 = vadd.f32 %v1917, 1.0
      %v2092 = vadd.f32 %v1919, 1.0
      %v2093 = vadd.f32 %v1921, 1.0
      %v2094 = vadd.f32 %v1923, 1.0
      %v2095 = vadd.f32 %v1925, 1.0
      %v2096 = vadd.f32 %v1927, 1.0
      %v2097 = vadd.f32 %v1929, 1.0
      %v2098 = vadd.f32 %v1931, 1.0
      %v2099 = vadd.f32 %v1933, 1.0
      %v2100 = vadd.f32 %v1935, 1.0
      %v2101 = vadd.f32 %v1937, 1.0
      %v2102 = vadd.f32 %v1939, 1.0
      %v2103 = vadd.f32 %v1941, 1.0
      %v2104 = vadd.f32 %v1943, 1.0
      %v2105 = vadd.f32 %v1945, 1.0
      %v2106 = vadd.f32 %v1947, 1.0
      %v2107 = vadd.f32 %v1949, 1.0
      %v2108 = vadd.f32 %v1951, 1.0
      %v2109 = vadd.f32 %v1953, 1.0
      %v2110 = vadd.f32 %v1955, 1.0
      %v2111 = vadd.f32 %v1957, 1.0
      %v2112 = vadd.f32 %v1959, 1.0
      %v2113 = vadd.f32 %v1961, 1.0
      %v2114 = vadd.f32 %v1963, 1.0
      %v2115 = vadd.f32 %v1965, 1.0
      %v2116 = vadd.f32 %v1967, 1.0
      %v2117 = vadd.f32 %v1969, 1.0
      %v2118 = vadd.f32 %v1971, 1.0
      %v2119 = vadd.f32 %v1973, 1.0
      %v2120 = vadd.f32 %v1975, 1.0
      %v2121 = vadd.f32 %v1977, 1.0
      %v2122 = vadd.f32 %v1979, 1.0
      %v2123 = vadd.f32 %v1981, 1.0
      %v2124 = vadd.f32 %v1983, 1.0
      %v2125 = vadd.f32 %v1985, 1.0
      %v2126 = vadd.f32 %v1987, 1.0
      %v2127 = vadd.f32 %v1989, 1.0
      %v2128 = vadd.f32 %v1991, 1.0
      %v2129 = vadd.f32 %v1993, 1.0
      %v2130 = vadd.f32 %v1995, 1.0
      %v2131 = vadd.f32 %v1997, 1.0
      %v2132 = vadd.f32 %v1999, 1.0
      %v2133 = vadd.f32 %v2001, 1.0
      %v2134 = vadd.f32 %v2003, 1.0
      %v2135 = vadd.f32 %v2005, 1.0
      %v2136 = vadd.f32 %v2007, 1.0
      %v2137 = vadd.f32 %v2009, 1.0
      %v2138 = vrcp.pop %v2010
      %v2139 = vrcp.pop %v2011
      %v2140 = vrcp.pop %v2012
      %v2141 = vrcp.pop %v2013
      %v2142 = vrcp.pop %v2014
      %v2143 = vrcp.pop %v2015
      %v2144 = vrcp.pop %v2016
      %v2145 = vrcp.pop %v2017
      %v2146 = vrcp.pop %v2018
      %v2147 = vrcp.pop %v2019
      %v2148 = vrcp.pop %v2020
      %v2149 = vrcp.pop %v2021
      %v2150 = vrcp.pop %v2022
      %v2151 = vrcp.pop %v2023
      %v2152 = vrcp.pop %v2024
      %v2153 = vrcp.pop %v2025
      %v2154 = vrcp.pop %v2026
      %v2155 = vrcp.pop %v2027
      %v2156 = vrcp.pop %v2028
      %v2157 = vrcp.pop %v2029
      %v2158 = vrcp.pop %v2030
      %v2159 = vrcp.pop %v2031
      %v2160 = vrcp.pop %v2032
      %v2161 = vrcp.pop %v2033
      %v2162 = vrcp.pop %v2034
      %v2163 = vrcp.pop %v2035
      %v2164 = vrcp.pop %v2036
      %v2165 = vrcp.pop %v2037
      %v2166 = vrcp.pop %v2038
      %v2167 = vrcp.pop %v2039
      %v2168 = vrcp.pop %v2040
      %v2169 = vrcp.pop %v2041
      %v2170 = vrcp.pop %v2042
      %v2171 = vrcp.pop %v2043
      %v2172 = vrcp.pop %v2044
      %v2173 = vrcp.pop %v2045
      %v2174 = vrcp.pop %v2046
      %v2175 = vrcp.pop %v2047
      %v2176 = vrcp.pop %v2048
      %v2177 = vrcp.pop %v2049
      %v2178 = vrcp.pop %v2050
      %v2179 = vrcp.pop %v2051
      %v2180 = vrcp.pop %v2052
      %v2181 = vrcp.pop %v2053
      %v2182 = vrcp.pop %v2054
      %v2183 = vrcp.pop %v2055
      %v2184 = vrcp.pop %v2056
      %v2185 = vrcp.pop %v2057
      %v2186 = vrcp.pop %v2058
      %v2187 = vrcp.pop %v2059
      %v2188 = vrcp.pop %v2060
      %v2189 = vrcp.pop %v2061
      %v2190 = vrcp.pop %v2062
      %v2191 = vrcp.pop %v2063
      %v2192 = vrcp.pop %v2064
      %v2193 = vrcp.pop %v2065
      %v2194 = vrcp.pop %v2066
      %v2195 = vrcp.pop %v2067
      %v2196 = vrcp.pop %v2068
      %v2197 = vrcp.pop %v2069
      %v2198 = vrcp.pop %v2070
      %v2199 = vrcp.pop %v2071
      %v2200 = vrcp.pop %v2072
      %v2201 = vrcp.pop %v2073
      %v2202 = vrcp.pop %v2074
      %v2203 = vrcp.pop %v2075
      %v2204 = vrcp.pop %v2076
      %v2205 = vrcp.pop %v2077
      %v2206 = vrcp.pop %v2078
      %v2207 = vrcp.pop %v2079
      %v2208 = vrcp.pop %v2080
      %v2209 = vrcp.pop %v2081
      %v2210 = vrcp.pop %v2082
      %v2211 = vrcp.pop %v2083
      %v2212 = vrcp.pop %v2084
      %v2213 = vrcp.pop %v2085
      %v2214 = vrcp.pop %v2086
      %v2215 = vrcp.pop %v2087
      %v2216 = vrcp.pop %v2088
      %v2217 = vrcp.pop %v2089
      %v2218 = vrcp.pop %v2090
      %v2219 = vrcp.pop %v2091
      %v2220 = vrcp.pop %v2092
      %v2221 = vrcp.pop %v2093
      %v2222 = vrcp.pop %v2094
      %v2223 = vrcp.pop %v2095
      %v2224 = vrcp.pop %v2096
      %v2225 = vrcp.pop %v2097
      %v2226 = vrcp.pop %v2098
      %v2227 = vrcp.pop %v2099
      %v2228 = vrcp.pop %v2100
      %v2229 = vrcp.pop %v2101
      %v2230 = vrcp.pop %v2102
      %v2231 = vrcp.pop %v2103
      %v2232 = vrcp.pop %v2104
      %v2233 = vrcp.pop %v2105
      %v2234 = vrcp.pop %v2106
      %v2235 = vrcp.pop %v2107
      %v2236 = vrcp.pop %v2108
      %v2237 = vrcp.pop %v2109
      %v2238 = vrcp.pop %v2110
      %v2239 = vrcp.pop %v2111
      %v2240 = vrcp.pop %v2112
      %v2241 = vrcp.pop %v2113
      %v2242 = vrcp.pop %v2114
      %v2243 = vrcp.pop %v2115
      %v2244 = vrcp.pop %v2116
      %v2245 = vrcp.pop %v2117
      %v2246 = vrcp.pop %v2118
      %v2247 = vrcp.pop %v2119
      %v2248 = vrcp.pop %v2120
      %v2249 = vrcp.pop %v2121
      %v2250 = vrcp.pop %v2122
      %v2251 = vrcp.pop %v2123
      %v2252 = vrcp.pop %v2124
      %v2253 = vrcp.pop %v2125
      %v2254 = vrcp.pop %v2126
      %v2255 = vrcp.pop %v2127
      %v2256 = vrcp.pop %v2128
      %v2257 = vrcp.pop %v2129
      %v2258 = vrcp.pop %v2130
      %v2259 = vrcp.pop %v2131
      %v2260 = vrcp.pop %v2132
      %v2261 = vrcp.pop %v2133
      %v2262 = vrcp.pop %v2134
      %v2263 = vrcp.pop %v2135
      %v2264 = vrcp.pop %v2136
      %v2265 = vrcp.pop %v2137
      %v2266 = vpack.c.bf16 %v2139, %v2138
      %v2267 = vpack.c.bf16 %v2141, %v2140
      %v2268 = vpack.c.bf16 %v2143, %v2142
      %v2269 = vpack.c.bf16 %v2145, %v2144
      %v2270 = vpack.c.bf16 %v2147, %v2146
      %v2271 = vpack.c.bf16 %v2149, %v2148
      %v2272 = vpack.c.bf16 %v2151, %v2150
      %v2273 = vpack.c.bf16 %v2153, %v2152
      %v2274 = vpack.c.bf16 %v2155, %v2154
      %v2275 = vpack.c.bf16 %v2157, %v2156
      %v2276 = vpack.c.bf16 %v2159, %v2158
      %v2277 = vpack.c.bf16 %v2161, %v2160
      %v2278 = vpack.c.bf16 %v2163, %v2162
      %v2279 = vpack.c.bf16 %v2165, %v2164
      %v2280 = vpack.c.bf16 %v2167, %v2166
      %v2281 = vpack.c.bf16 %v2169, %v2168
      %v2282 = vpack.c.bf16 %v2171, %v2170
      %v2283 = vpack.c.bf16 %v2173, %v2172
      %v2284 = vpack.c.bf16 %v2175, %v2174
      %v2285 = vpack.c.bf16 %v2177, %v2176
      %v2286 = vpack.c.bf16 %v2179, %v2178
      %v2287 = vpack.c.bf16 %v2181, %v2180
      %v2288 = vpack.c.bf16 %v2183, %v2182
      %v2289 = vpack.c.bf16 %v2185, %v2184
      %v2290 = vpack.c.bf16 %v2187, %v2186
      %v2291 = vpack.c.bf16 %v2189, %v2188
      %v2292 = vpack.c.bf16 %v2191, %v2190
      %v2293 = vpack.c.bf16 %v2193, %v2192
      %v2294 = vpack.c.bf16 %v2195, %v2194
      %v2295 = vpack.c.bf16 %v2197, %v2196
      %v2296 = vpack.c.bf16 %v2199, %v2198
      %v2297 = vpack.c.bf16 %v2201, %v2200
      %v2298 = vpack.c.bf16 %v2203, %v2202
      %v2299 = vpack.c.bf16 %v2205, %v2204
      %v2300 = vpack.c.bf16 %v2207, %v2206
      %v2301 = vpack.c.bf16 %v2209, %v2208
      %v2302 = vpack.c.bf16 %v2211, %v2210
      %v2303 = vpack.c.bf16 %v2213, %v2212
      %v2304 = vpack.c.bf16 %v2215, %v2214
      %v2305 = vpack.c.bf16 %v2217, %v2216
      %v2306 = vpack.c.bf16 %v2219, %v2218
      %v2307 = vpack.c.bf16 %v2221, %v2220
      %v2308 = vpack.c.bf16 %v2223, %v2222
      %v2309 = vpack.c.bf16 %v2225, %v2224
      %v2310 = vpack.c.bf16 %v2227, %v2226
      %v2311 = vpack.c.bf16 %v2229, %v2228
      %v2312 = vpack.c.bf16 %v2231, %v2230
      %v2313 = vpack.c.bf16 %v2233, %v2232
      %v2314 = vpack.c.bf16 %v2235, %v2234
      %v2315 = vpack.c.bf16 %v2237, %v2236
      %v2316 = vpack.c.bf16 %v2239, %v2238
      %v2317 = vpack.c.bf16 %v2241, %v2240
      %v2318 = vpack.c.bf16 %v2243, %v2242
      %v2319 = vpack.c.bf16 %v2245, %v2244
      %v2320 = vpack.c.bf16 %v2247, %v2246
      %v2321 = vpack.c.bf16 %v2249, %v2248
      %v2322 = vpack.c.bf16 %v2251, %v2250
      %v2323 = vpack.c.bf16 %v2253, %v2252
      %v2324 = vpack.c.bf16 %v2255, %v2254
      %v2325 = vpack.c.bf16 %v2257, %v2256
      %v2326 = vpack.c.bf16 %v2259, %v2258
      %v2327 = vpack.c.bf16 %v2261, %v2260
      %v2328 = vpack.c.bf16 %v2263, %v2262
      %v2329 = vpack.c.bf16 %v2265, %v2264
      %v2394 = vunpack.c.l.b16 %v2266
      %v2395 = vunpack.c.h.b16 %v2266
      %v2396 = vunpack.c.l.b16 %v2267
      %v2397 = vunpack.c.h.b16 %v2267
      %v2398 = vunpack.c.l.b16 %v2268
      %v2399 = vunpack.c.h.b16 %v2268
      %v2400 = vunpack.c.l.b16 %v2269
      %v2401 = vunpack.c.h.b16 %v2269
      %v2402 = vunpack.c.l.b16 %v2270
      %v2403 = vunpack.c.h.b16 %v2270
      %v2404 = vunpack.c.l.b16 %v2271
      %v2405 = vunpack.c.h.b16 %v2271
      %v2406 = vunpack.c.l.b16 %v2272
      %v2407 = vunpack.c.h.b16 %v2272
      %v2408 = vunpack.c.l.b16 %v2273
      %v2409 = vunpack.c.h.b16 %v2273
      %v2410 = vunpack.c.l.b16 %v2274
      %v2411 = vunpack.c.h.b16 %v2274
      %v2412 = vunpack.c.l.b16 %v2275
      %v2413 = vunpack.c.h.b16 %v2275
      %v2414 = vunpack.c.l.b16 %v2276
      %v2415 = vunpack.c.h.b16 %v2276
      %v2416 = vunpack.c.l.b16 %v2277
      %v2417 = vunpack.c.h.b16 %v2277
      %v2418 = vunpack.c.l.b16 %v2278
      %v2419 = vunpack.c.h.b16 %v2278
      %v2420 = vunpack.c.l.b16 %v2279
      %v2421 = vunpack.c.h.b16 %v2279
      %v2422 = vunpack.c.l.b16 %v2280
      %v2423 = vunpack.c.h.b16 %v2280
      %v2424 = vunpack.c.l.b16 %v2281
      %v2425 = vunpack.c.h.b16 %v2281
      %v2426 = vunpack.c.l.b16 %v2282
      %v2427 = vunpack.c.h.b16 %v2282
      %v2428 = vunpack.c.l.b16 %v2283
      %v2429 = vunpack.c.h.b16 %v2283
      %v2430 = vunpack.c.l.b16 %v2284
      %v2431 = vunpack.c.h.b16 %v2284
      %v2432 = vunpack.c.l.b16 %v2285
      %v2433 = vunpack.c.h.b16 %v2285
      %v2434 = vunpack.c.l.b16 %v2286
      %v2435 = vunpack.c.h.b16 %v2286
      %v2436 = vunpack.c.l.b16 %v2287
      %v2437 = vunpack.c.h.b16 %v2287
      %v2438 = vunpack.c.l.b16 %v2288
      %v2439 = vunpack.c.h.b16 %v2288
      %v2440 = vunpack.c.l.b16 %v2289
      %v2441 = vunpack.c.h.b16 %v2289
      %v2442 = vunpack.c.l.b16 %v2290
      %v2443 = vunpack.c.h.b16 %v2290
      %v2444 = vunpack.c.l.b16 %v2291
      %v2445 = vunpack.c.h.b16 %v2291
      %v2446 = vunpack.c.l.b16 %v2292
      %v2447 = vunpack.c.h.b16 %v2292
      %v2448 = vunpack.c.l.b16 %v2293
      %v2449 = vunpack.c.h.b16 %v2293
      %v2450 = vunpack.c.l.b16 %v2294
      %v2451 = vunpack.c.h.b16 %v2294
      %v2452 = vunpack.c.l.b16 %v2295
      %v2453 = vunpack.c.h.b16 %v2295
      %v2454 = vunpack.c.l.b16 %v2296
      %v2455 = vunpack.c.h.b16 %v2296
      %v2456 = vunpack.c.l.b16 %v2297
      %v2457 = vunpack.c.h.b16 %v2297
      %v2458 = vunpack.c.l.b16 %v2298
      %v2459 = vunpack.c.h.b16 %v2298
      %v2460 = vunpack.c.l.b16 %v2299
      %v2461 = vunpack.c.h.b16 %v2299
      %v2462 = vunpack.c.l.b16 %v2300
      %v2463 = vunpack.c.h.b16 %v2300
      %v2464 = vunpack.c.l.b16 %v2301
      %v2465 = vunpack.c.h.b16 %v2301
      %v2466 = vunpack.c.l.b16 %v2302
      %v2467 = vunpack.c.h.b16 %v2302
      %v2468 = vunpack.c.l.b16 %v2303
      %v2469 = vunpack.c.h.b16 %v2303
      %v2470 = vunpack.c.l.b16 %v2304
      %v2471 = vunpack.c.h.b16 %v2304
      %v2472 = vunpack.c.l.b16 %v2305
      %v2473 = vunpack.c.h.b16 %v2305
      %v2474 = vunpack.c.l.b16 %v2306
      %v2475 = vunpack.c.h.b16 %v2306
      %v2476 = vunpack.c.l.b16 %v2307
      %v2477 = vunpack.c.h.b16 %v2307
      %v2478 = vunpack.c.l.b16 %v2308
      %v2479 = vunpack.c.h.b16 %v2308
      %v2480 = vunpack.c.l.b16 %v2309
      %v2481 = vunpack.c.h.b16 %v2309
      %v2482 = vunpack.c.l.b16 %v2310
      %v2483 = vunpack.c.h.b16 %v2310
      %v2484 = vunpack.c.l.b16 %v2311
      %v2485 = vunpack.c.h.b16 %v2311
      %v2486 = vunpack.c.l.b16 %v2312
      %v2487 = vunpack.c.h.b16 %v2312
      %v2488 = vunpack.c.l.b16 %v2313
      %v2489 = vunpack.c.h.b16 %v2313
      %v2490 = vunpack.c.l.b16 %v2314
      %v2491 = vunpack.c.h.b16 %v2314
      %v2492 = vunpack.c.l.b16 %v2315
      %v2493 = vunpack.c.h.b16 %v2315
      %v2494 = vunpack.c.l.b16 %v2316
      %v2495 = vunpack.c.h.b16 %v2316
      %v2496 = vunpack.c.l.b16 %v2317
      %v2497 = vunpack.c.h.b16 %v2317
      %v2498 = vunpack.c.l.b16 %v2318
      %v2499 = vunpack.c.h.b16 %v2318
      %v2500 = vunpack.c.l.b16 %v2319
      %v2501 = vunpack.c.h.b16 %v2319
      %v2502 = vunpack.c.l.b16 %v2320
      %v2503 = vunpack.c.h.b16 %v2320
      %v2504 = vunpack.c.l.b16 %v2321
      %v2505 = vunpack.c.h.b16 %v2321
      %v2506 = vunpack.c.l.b16 %v2322
      %v2507 = vunpack.c.h.b16 %v2322
      %v2508 = vunpack.c.l.b16 %v2323
      %v2509 = vunpack.c.h.b16 %v2323
      %v2510 = vunpack.c.l.b16 %v2324
      %v2511 = vunpack.c.h.b16 %v2324
      %v2512 = vunpack.c.l.b16 %v2325
      %v2513 = vunpack.c.h.b16 %v2325
      %v2514 = vunpack.c.l.b16 %v2326
      %v2515 = vunpack.c.h.b16 %v2326
      %v2516 = vunpack.c.l.b16 %v2327
      %v2517 = vunpack.c.h.b16 %v2327
      %v2518 = vunpack.c.l.b16 %v2328
      %v2519 = vunpack.c.h.b16 %v2328
      %v2520 = vunpack.c.l.b16 %v2329
      %v2521 = vunpack.c.h.b16 %v2329
      %v2522 = vpack.c.b16 %v2394, %v2394
      %v2523 = vpack.c.b16 %v2395, %v2395
      %v2524 = vpack.c.b16 %v2396, %v2396
      %v2525 = vpack.c.b16 %v2397, %v2397
      %v2526 = vpack.c.b16 %v2398, %v2398
      %v2527 = vpack.c.b16 %v2399, %v2399
      %v2528 = vpack.c.b16 %v2400, %v2400
      %v2529 = vpack.c.b16 %v2401, %v2401
      %v2530 = vpack.c.b16 %v2402, %v2402
      %v2531 = vpack.c.b16 %v2403, %v2403
      %v2532 = vpack.c.b16 %v2404, %v2404
      %v2533 = vpack.c.b16 %v2405, %v2405
      %v2534 = vpack.c.b16 %v2406, %v2406
      %v2535 = vpack.c.b16 %v2407, %v2407
      %v2536 = vpack.c.b16 %v2408, %v2408
      %v2537 = vpack.c.b16 %v2409, %v2409
      %v2538 = vpack.c.b16 %v2410, %v2410
      %v2539 = vpack.c.b16 %v2411, %v2411
      %v2540 = vpack.c.b16 %v2412, %v2412
      %v2541 = vpack.c.b16 %v2413, %v2413
      %v2542 = vpack.c.b16 %v2414, %v2414
      %v2543 = vpack.c.b16 %v2415, %v2415
      %v2544 = vpack.c.b16 %v2416, %v2416
      %v2545 = vpack.c.b16 %v2417, %v2417
      %v2546 = vpack.c.b16 %v2418, %v2418
      %v2547 = vpack.c.b16 %v2419, %v2419
      %v2548 = vpack.c.b16 %v2420, %v2420
      %v2549 = vpack.c.b16 %v2421, %v2421
      %v2550 = vpack.c.b16 %v2422, %v2422
      %v2551 = vpack.c.b16 %v2423, %v2423
      %v2552 = vpack.c.b16 %v2424, %v2424
      %v2553 = vpack.c.b16 %v2425, %v2425
      %v2554 = vpack.c.b16 %v2426, %v2426
      %v2555 = vpack.c.b16 %v2427, %v2427
      %v2556 = vpack.c.b16 %v2428, %v2428
      %v2557 = vpack.c.b16 %v2429, %v2429
      %v2558 = vpack.c.b16 %v2430, %v2430
      %v2559 = vpack.c.b16 %v2431, %v2431
      %v2560 = vpack.c.b16 %v2432, %v2432
      %v2561 = vpack.c.b16 %v2433, %v2433
      %v2562 = vpack.c.b16 %v2434, %v2434
      %v2563 = vpack.c.b16 %v2435, %v2435
      %v2564 = vpack.c.b16 %v2436, %v2436
      %v2565 = vpack.c.b16 %v2437, %v2437
      %v2566 = vpack.c.b16 %v2438, %v2438
      %v2567 = vpack.c.b16 %v2439, %v2439
      %v2568 = vpack.c.b16 %v2440, %v2440
      %v2569 = vpack.c.b16 %v2441, %v2441
      %v2570 = vpack.c.b16 %v2442, %v2442
      %v2571 = vpack.c.b16 %v2443, %v2443
      %v2572 = vpack.c.b16 %v2444, %v2444
      %v2573 = vpack.c.b16 %v2445, %v2445
      %v2574 = vpack.c.b16 %v2446, %v2446
      %v2575 = vpack.c.b16 %v2447, %v2447
      %v2576 = vpack.c.b16 %v2448, %v2448
      %v2577 = vpack.c.b16 %v2449, %v2449
      %v2578 = vpack.c.b16 %v2450, %v2450
      %v2579 = vpack.c.b16 %v2451, %v2451
      %v2580 = vpack.c.b16 %v2452, %v2452
      %v2581 = vpack.c.b16 %v2453, %v2453
      %v2582 = vpack.c.b16 %v2454, %v2454
      %v2583 = vpack.c.b16 %v2455, %v2455
      %v2584 = vpack.c.b16 %v2456, %v2456
      %v2585 = vpack.c.b16 %v2457, %v2457
      %v2586 = vpack.c.b16 %v2458, %v2458
      %v2587 = vpack.c.b16 %v2459, %v2459
      %v2588 = vpack.c.b16 %v2460, %v2460
      %v2589 = vpack.c.b16 %v2461, %v2461
      %v2590 = vpack.c.b16 %v2462, %v2462
      %v2591 = vpack.c.b16 %v2463, %v2463
      %v2592 = vpack.c.b16 %v2464, %v2464
      %v2593 = vpack.c.b16 %v2465, %v2465
      %v2594 = vpack.c.b16 %v2466, %v2466
      %v2595 = vpack.c.b16 %v2467, %v2467
      %v2596 = vpack.c.b16 %v2468, %v2468
      %v2597 = vpack.c.b16 %v2469, %v2469
      %v2598 = vpack.c.b16 %v2470, %v2470
      %v2599 = vpack.c.b16 %v2471, %v2471
      %v2600 = vpack.c.b16 %v2472, %v2472
      %v2601 = vpack.c.b16 %v2473, %v2473
      %v2602 = vpack.c.b16 %v2474, %v2474
      %v2603 = vpack.c.b16 %v2475, %v2475
      %v2604 = vpack.c.b16 %v2476, %v2476
      %v2605 = vpack.c.b16 %v2477, %v2477
      %v2606 = vpack.c.b16 %v2478, %v2478
      %v2607 = vpack.c.b16 %v2479, %v2479
      %v2608 = vpack.c.b16 %v2480, %v2480
      %v2609 = vpack.c.b16 %v2481, %v2481
      %v2610 = vpack.c.b16 %v2482, %v2482
      %v2611 = vpack.c.b16 %v2483, %v2483
      %v2612 = vpack.c.b16 %v2484, %v2484
      %v2613 = vpack.c.b16 %v2485, %v2485
      %v2614 = vpack.c.b16 %v2486, %v2486
      %v2615 = vpack.c.b16 %v2487, %v2487
      %v2616 = vpack.c.b16 %v2488, %v2488
      %v2617 = vpack.c.b16 %v2489, %v2489
      %v2618 = vpack.c.b16 %v2490, %v2490
      %v2619 = vpack.c.b16 %v2491, %v2491
      %v2620 = vpack.c.b16 %v2492, %v2492
      %v2621 = vpack.c.b16 %v2493, %v2493
      %v2622 = vpack.c.b16 %v2494, %v2494
      %v2623 = vpack.c.b16 %v2495, %v2495
      %v2624 = vpack.c.b16 %v2496, %v2496
      %v2625 = vpack.c.b16 %v2497, %v2497
      %v2626 = vpack.c.b16 %v2498, %v2498
      %v2627 = vpack.c.b16 %v2499, %v2499
      %v2628 = vpack.c.b16 %v2500, %v2500
      %v2629 = vpack.c.b16 %v2501, %v2501
      %v2630 = vpack.c.b16 %v2502, %v2502
      %v2631 = vpack.c.b16 %v2503, %v2503
      %v2632 = vpack.c.b16 %v2504, %v2504
      %v2633 = vpack.c.b16 %v2505, %v2505
      %v2634 = vpack.c.b16 %v2506, %v2506
      %v2635 = vpack.c.b16 %v2507, %v2507
      %v2636 = vpack.c.b16 %v2508, %v2508
      %v2637 = vpack.c.b16 %v2509, %v2509
      %v2638 = vpack.c.b16 %v2510, %v2510
      %v2639 = vpack.c.b16 %v2511, %v2511
      %v2640 = vpack.c.b16 %v2512, %v2512
      %v2641 = vpack.c.b16 %v2513, %v2513
      %v2642 = vpack.c.b16 %v2514, %v2514
      %v2643 = vpack.c.b16 %v2515, %v2515
      %v2644 = vpack.c.b16 %v2516, %v2516
      %v2645 = vpack.c.b16 %v2517, %v2517
      %v2646 = vpack.c.b16 %v2518, %v2518
      %v2647 = vpack.c.b16 %v2519, %v2519
      %v2648 = vpack.c.b16 %v2520, %v2520
      %v2649 = vpack.c.b16 %v2521, %v2521
      %2778 = vst [vmem:[%s175] sm:$0xf] %v2522
      %2779 = vst [vmem:[%s175 + $0x4] sm:$0xf] %v2523
      %2780 = vst [vmem:[%s175 + $0x8] sm:$0xf] %v2524
      %2781 = vst [vmem:[%s175 + $0xc] sm:$0xf] %v2525
      %2782 = vst [vmem:[%s175 + $0x10] sm:$0xf] %v2526
      %2783 = vst [vmem:[%s175 + $0x14] sm:$0xf] %v2527
      %2784 = vst [vmem:[%s175 + $0x18] sm:$0xf] %v2528
      %2785 = vst [vmem:[%s175 + $0x1c] sm:$0xf] %v2529
      %2786 = vst [vmem:[%s175 + $0x20] sm:$0xf] %v2530
      %2787 = vst [vmem:[%s175 + $0x24] sm:$0xf] %v2531
      %2788 = vst [vmem:[%s175 + $0x28] sm:$0xf] %v2532
      %2789 = vst [vmem:[%s175 + $0x2c] sm:$0xf] %v2533
      %2790 = vst [vmem:[%s175 + $0x30] sm:$0xf] %v2534
      %2791 = vst [vmem:[%s175 + $0x34] sm:$0xf] %v2535
      %2792 = vst [vmem:[%s175 + $0x38] sm:$0xf] %v2536
      %2793 = vst [vmem:[%s175 + $0x3c] sm:$0xf] %v2537
      %2794 = vst [vmem:[%s175 + $0x40] sm:$0xf] %v2538
      %2795 = vst [vmem:[%s175 + $0x44] sm:$0xf] %v2539
      %2796 = vst [vmem:[%s175 + $0x48] sm:$0xf] %v2540
      %2797 = vst [vmem:[%s175 + $0x4c] sm:$0xf] %v2541
      %2798 = vst [vmem:[%s175 + $0x50] sm:$0xf] %v2542
      %2799 = vst [vmem:[%s175 + $0x54] sm:$0xf] %v2543
      %2800 = vst [vmem:[%s175 + $0x58] sm:$0xf] %v2544
      %2801 = vst [vmem:[%s175 + $0x5c] sm:$0xf] %v2545
      %2802 = vst [vmem:[%s175 + $0x60] sm:$0xf] %v2546
      %2803 = vst [vmem:[%s175 + $0x64] sm:$0xf] %v2547
      %2804 = vst [vmem:[%s175 + $0x68] sm:$0xf] %v2548
      %2805 = vst [vmem:[%s175 + $0x6c] sm:$0xf] %v2549
      %2806 = vst [vmem:[%s175 + $0x70] sm:$0xf] %v2550
      %2807 = vst [vmem:[%s175 + $0x74] sm:$0xf] %v2551
      %2808 = vst [vmem:[%s175 + $0x78] sm:$0xf] %v2552
      %2809 = vst [vmem:[%s175 + $0x7c] sm:$0xf] %v2553
      %2810 = vst [vmem:[%s175 + $0x80] sm:$0xf] %v2554
      %2811 = vst [vmem:[%s175 + $0x84] sm:$0xf] %v2555
      %2812 = vst [vmem:[%s175 + $0x88] sm:$0xf] %v2556
      %2813 = vst [vmem:[%s175 + $0x8c] sm:$0xf] %v2557
      %2814 = vst [vmem:[%s175 + $0x90] sm:$0xf] %v2558
      %2815 = vst [vmem:[%s175 + $0x94] sm:$0xf] %v2559
      %2816 = vst [vmem:[%s175 + $0x98] sm:$0xf] %v2560
      %2817 = vst [vmem:[%s175 + $0x9c] sm:$0xf] %v2561
      %2818 = vst [vmem:[%s175 + $0xa0] sm:$0xf] %v2562
      %2819 = vst [vmem:[%s175 + $0xa4] sm:$0xf] %v2563
      %2820 = vst [vmem:[%s175 + $0xa8] sm:$0xf] %v2564
      %2821 = vst [vmem:[%s175 + $0xac] sm:$0xf] %v2565
      %2822 = vst [vmem:[%s175 + $0xb0] sm:$0xf] %v2566
      %2823 = vst [vmem:[%s175 + $0xb4] sm:$0xf] %v2567
      %2824 = vst [vmem:[%s175 + $0xb8] sm:$0xf] %v2568
      %2825 = vst [vmem:[%s175 + $0xbc] sm:$0xf] %v2569
      %2826 = vst [vmem:[%s175 + $0xc0] sm:$0xf] %v2570
      %2827 = vst [vmem:[%s175 + $0xc4] sm:$0xf] %v2571
      %2828 = vst [vmem:[%s175 + $0xc8] sm:$0xf] %v2572
      %2829 = vst [vmem:[%s175 + $0xcc] sm:$0xf] %v2573
      %2830 = vst [vmem:[%s175 + $0xd0] sm:$0xf] %v2574
      %2831 = vst [vmem:[%s175 + $0xd4] sm:$0xf] %v2575
      %2832 = vst [vmem:[%s175 + $0xd8] sm:$0xf] %v2576
      %2833 = vst [vmem:[%s175 + $0xdc] sm:$0xf] %v2577
      %2834 = vst [vmem:[%s175 + $0xe0] sm:$0xf] %v2578
      %2835 = vst [vmem:[%s175 + $0xe4] sm:$0xf] %v2579
      %2836 = vst [vmem:[%s175 + $0xe8] sm:$0xf] %v2580
      %2837 = vst [vmem:[%s175 + $0xec] sm:$0xf] %v2581
      %2838 = vst [vmem:[%s175 + $0xf0] sm:$0xf] %v2582
      %2839 = vst [vmem:[%s175 + $0xf4] sm:$0xf] %v2583
      %2840 = vst [vmem:[%s175 + $0xf8] sm:$0xf] %v2584
      %2841 = vst [vmem:[%s175 + $0xfc] sm:$0xf] %v2585
      %2842 = vst [vmem:[%s175 + $0x100] sm:$0xf] %v2586
      %2843 = vst [vmem:[%s175 + $0x104] sm:$0xf] %v2587
      %2844 = vst [vmem:[%s175 + $0x108] sm:$0xf] %v2588
      %2845 = vst [vmem:[%s175 + $0x10c] sm:$0xf] %v2589
      %2846 = vst [vmem:[%s175 + $0x110] sm:$0xf] %v2590
      %2847 = vst [vmem:[%s175 + $0x114] sm:$0xf] %v2591
      %2848 = vst [vmem:[%s175 + $0x118] sm:$0xf] %v2592
      %2849 = vst [vmem:[%s175 + $0x11c] sm:$0xf] %v2593
      %2850 = vst [vmem:[%s175 + $0x120] sm:$0xf] %v2594
      %2851 = vst [vmem:[%s175 + $0x124] sm:$0xf] %v2595
      %2852 = vst [vmem:[%s175 + $0x128] sm:$0xf] %v2596
      %2853 = vst [vmem:[%s175 + $0x12c] sm:$0xf] %v2597
      %2854 = vst [vmem:[%s175 + $0x130] sm:$0xf] %v2598
      %2855 = vst [vmem:[%s175 + $0x134] sm:$0xf] %v2599
      %2856 = vst [vmem:[%s175 + $0x138] sm:$0xf] %v2600
      %2857 = vst [vmem:[%s175 + $0x13c] sm:$0xf] %v2601
      %2858 = vst [vmem:[%s175 + $0x140] sm:$0xf] %v2602
      %2859 = vst [vmem:[%s175 + $0x144] sm:$0xf] %v2603
      %2860 = vst [vmem:[%s175 + $0x148] sm:$0xf] %v2604
      %2861 = vst [vmem:[%s175 + $0x14c] sm:$0xf] %v2605
      %2862 = vst [vmem:[%s175 + $0x150] sm:$0xf] %v2606
      %2863 = vst [vmem:[%s175 + $0x154] sm:$0xf] %v2607
      %2864 = vst [vmem:[%s175 + $0x158] sm:$0xf] %v2608
      %2865 = vst [vmem:[%s175 + $0x15c] sm:$0xf] %v2609
      %2866 = vst [vmem:[%s175 + $0x160] sm:$0xf] %v2610
      %2867 = vst [vmem:[%s175 + $0x164] sm:$0xf] %v2611
      %2868 = vst [vmem:[%s175 + $0x168] sm:$0xf] %v2612
      %2869 = vst [vmem:[%s175 + $0x16c] sm:$0xf] %v2613
      %2870 = vst [vmem:[%s175 + $0x170] sm:$0xf] %v2614
      %2871 = vst [vmem:[%s175 + $0x174] sm:$0xf] %v2615
      %2872 = vst [vmem:[%s175 + $0x178] sm:$0xf] %v2616
      %2873 = vst [vmem:[%s175 + $0x17c] sm:$0xf] %v2617
      %2874 = vst [vmem:[%s175 + $0x180] sm:$0xf] %v2618
      %2875 = vst [vmem:[%s175 + $0x184] sm:$0xf] %v2619
      %2876 = vst [vmem:[%s175 + $0x188] sm:$0xf] %v2620
      %2877 = vst [vmem:[%s175 + $0x18c] sm:$0xf] %v2621
      %2878 = vst [vmem:[%s175 + $0x190] sm:$0xf] %v2622
      %2879 = vst [vmem:[%s175 + $0x194] sm:$0xf] %v2623
      %2880 = vst [vmem:[%s175 + $0x198] sm:$0xf] %v2624
      %2881 = vst [vmem:[%s175 + $0x19c] sm:$0xf] %v2625
      %2882 = vst [vmem:[%s175 + $0x1a0] sm:$0xf] %v2626
      %2883 = vst [vmem:[%s175 + $0x1a4] sm:$0xf] %v2627
      %2884 = vst [vmem:[%s175 + $0x1a8] sm:$0xf] %v2628
      %2885 = vst [vmem:[%s175 + $0x1ac] sm:$0xf] %v2629
      %2886 = vst [vmem:[%s175 + $0x1b0] sm:$0xf] %v2630
      %2887 = vst [vmem:[%s175 + $0x1b4] sm:$0xf] %v2631
      %2888 = vst [vmem:[%s175 + $0x1b8] sm:$0xf] %v2632
      %2889 = vst [vmem:[%s175 + $0x1bc] sm:$0xf] %v2633
      %2890 = vst [vmem:[%s175 + $0x1c0] sm:$0xf] %v2634
      %2891 = vst [vmem:[%s175 + $0x1c4] sm:$0xf] %v2635
      %2892 = vst [vmem:[%s175 + $0x1c8] sm:$0xf] %v2636
      %2893 = vst [vmem:[%s175 + $0x1cc] sm:$0xf] %v2637
      %2894 = vst [vmem:[%s175 + $0x1d0] sm:$0xf] %v2638
      %2895 = vst [vmem:[%s175 + $0x1d4] sm:$0xf] %v2639
      %2896 = vst [vmem:[%s175 + $0x1d8] sm:$0xf] %v2640
      %2897 = vst [vmem:[%s175 + $0x1dc] sm:$0xf] %v2641
      %2898 = vst [vmem:[%s175 + $0x1e0] sm:$0xf] %v2642
      %2899 = vst [vmem:[%s175 + $0x1e4] sm:$0xf] %v2643
      %2900 = vst [vmem:[%s175 + $0x1e8] sm:$0xf] %v2644
      %2901 = vst [vmem:[%s175 + $0x1ec] sm:$0xf] %v2645
      %2902 = vst [vmem:[%s175 + $0x1f0] sm:$0xf] %v2646
      %2903 = vst [vmem:[%s175 + $0x1f4] sm:$0xf] %v2647
      %2904 = vst [vmem:[%s175 + $0x1f8] sm:$0xf] %v2648
      %2905 = vst [vmem:[%s175 + $0x1fc] sm:$0xf] %v2649
      %s2906 = smul.u32 128, %s14
      %p2907 = scmp.lt.s32.totalorder %s2906, 255
      %s2908 = scalar_select %p2907, %s2906, 255
      %s2909 = smul.addr %s2908, 4
      %s2910 = scalar_lea.vmem %s3, %s2909
      // Predicated region
      $region33: #{raw_image_decoder_forward.5} parent=31 // pred_check
        %p2911 = pneg %p100
      $region34: #{raw_image_decoder_forward.5} parent=31 // pred_check_branch
        %2913 = sbr.rel (%p2911) target = $region36
      $region35: #{raw_image_decoder_forward.5} parent=31 // pred_region
        %s2914 = smul.u32 128, %s14
      $region36: #{raw_image_decoder_forward.5} parent=31 // pred_fallthru
        _
    $region32: #{raw_image_decoder_forward.5} parent=5 // pred_fallthru
      _
    %p2915 = scmp.le.s32.totalorder 2, %s9
    // Predicated region
    $region37: #{raw_image_decoder_forward.5} parent=5 // pred_check
      %p2916 = pneg %p2915
    $region38: #{raw_image_decoder_forward.5} parent=5 // pred_check_branch
      %2918 = sbr.rel (%p2916) target = $region40
    $region39: #{raw_image_decoder_forward.5} parent=5 // pred_region
      %s2919 = ssub.s32 %s9, 2
      // Predicated region
      $region41: #{raw_image_decoder_forward.5} parent=39 // pred_check
        %p2920 = pneg %p106
      $region42: #{raw_image_decoder_forward.5} parent=39 // pred_check_branch
        %2922 = sbr.rel (%p2920) target = $region44
      $region43: #{raw_image_decoder_forward.5} parent=39 // pred_region
        %s2923 = smul.u32 128, %s15
        %p2924 = scmp.lt.s32.totalorder %s2923, 255
        %s2925 = scalar_select %p2924, %s2923, 255
        %s2926 = smul.addr %s2925, 4
        %s2927 = scalar_lea.vmem %s3, %s2926
      $region44: #{raw_image_decoder_forward.5} parent=39 // pred_fallthru
        _
    $region40: #{raw_image_decoder_forward.5} parent=5 // pred_fallthru
      _
  $region6: #{raw_image_decoder_forward.5} parent=0 // loop_footer
    %s13 = sadd.s32 1, %s9
  $region7: #{raw_image_decoder_forward.5} parent=0 // loop_footer_branch
    %8 = sbr.rel target = $region3
  $region8: #{raw_image_decoder_forward.5} parent=0 // loop_exit
    _

</llo_original>
